<compile_context>
chip_gen: v7x
topology: tpu7x:2x2x1
jax: 0.10.0
libtpu: 0.0.40
codegen_flags: <defaults>
</compile_context>

<pallas_src>
import functools

import jax
import jax.numpy as jnp
from jax import lax
from jax.experimental import pallas as pl
from jax.experimental.pallas import tpu as pltpu


# ----------------------------- Pallas kernels -----------------------------


def _conv_bn_relu_kernel(p_ref, w_ref, g_ref, b_ref, pool_ref, o_ref, s_ref, *,
                         count, eps, n_imgs, n_blocks):
    """Fused conv matmul per row block + train-mode BatchNorm + ReLU.

    p_ref   : (1, 1, D, L)        im2col patches for this (image, row block), bf16
    w_ref   : (Coutp, D)          fused conv weights (phase-major channels), bf16
    g_ref   : (Coutp, 1)          BN gamma (tiled over phases), f32
    b_ref   : (Coutp, 1)          BN beta  (tiled over phases), f32
    pool_ref: (Coutp, Coutp)      phase-group pooling matrix (0/1), f32
    o_ref   : (N, nb, Coutp, L)   resident output, f32
    s_ref   : (Coutp, 1)          VMEM scratch: running per-channel sum
    """
    n = pl.program_id(0)
    j = pl.program_id(1)
    first = jnp.logical_and(n == 0, j == 0)
    last = jnp.logical_and(n == pl.num_programs(0) - 1,
                           j == pl.num_programs(1) - 1)

    @pl.when(first)
    def _():
        s_ref[...] = jnp.zeros_like(s_ref)

    # single deep contraction per row block: (Coutp, D) @ (D, L)
    acc = jnp.dot(w_ref[...], p_ref[0, 0], preferred_element_type=jnp.float32)
    o_ref[n, j, :, :] = acc
    s_ref[...] += jnp.sum(acc, axis=1, keepdims=True)

    @pl.when(last)
    def _():
        inv_count = 1.0 / count
        # per-channel mean, pooled across the sub-pixel phase groups
        mean = jnp.dot(pool_ref[...], s_ref[...],
                       preferred_element_type=jnp.float32) * inv_count
        # true two-pass (centered) variance: avoids E[x^2]-E[x]^2 cancellation
        ss = jnp.zeros(s_ref.shape, jnp.float32)
        for nn in range(n_imgs):
            for jj in range(n_blocks):
                d = o_ref[nn, jj] - mean
                ss = ss + jnp.sum(d * d, axis=1, keepdims=True)
        var = jnp.dot(pool_ref[...], ss,
                      preferred_element_type=jnp.float32) * inv_count
        scale = g_ref[...] * lax.rsqrt(var + eps)
        shift = b_ref[...] - mean * scale
        for nn in range(n_imgs):
            for jj in range(n_blocks):
                o_ref[nn, jj] = jnp.maximum(o_ref[nn, jj] * scale + shift, 0.0)


def _conv_tanh_kernel(p_ref, w_ref, o_ref):
    """Final block: fused conv matmul + Tanh (no BN), fully pipelined."""
    acc = jnp.dot(w_ref[...], p_ref[0, 0], preferred_element_type=jnp.float32)
    o_ref[0, 0] = jnp.tanh(acc)


# --------------------------- wrapper-side layout ---------------------------


def _im2col(xp, k):
    """xp: (N, Hp, Cin, Wp) -> patches (N, Ho, k*k*Cin, Wo), tap-major rows."""
    n, hp, cin, wp = xp.shape
    ho, wo = hp - k + 1, wp - k + 1
    taps = [xp[:, a:a + ho, :, b:b + wo] for a in range(k) for b in range(k)]
    p = jnp.stack(taps, axis=2)                       # (N, Ho, k*k, Cin, Wo)
    return p.reshape(n, ho, k * k * cin, wo)


def _block_rows(p, r):
    """(N, Ho, D, Wo) -> (N, Ho//r, D, r*Wo): r rows concatenated along lanes."""
    n, ho, d, wo = p.shape
    nb = ho // r
    p = p.reshape(n, nb, r, d, wo).transpose(0, 1, 3, 2, 4)
    return p.reshape(n, nb, d, r * wo)


def _unblock_rows(o, r, wo):
    """(N, nb, C, r*Wo) -> (N, nb*r, C, Wo)."""
    n, nb, c, _ = o.shape
    o = o.reshape(n, nb, c, r, wo).transpose(0, 1, 3, 2, 4)
    return o.reshape(n, nb * r, c, wo)


def _w_flipped_matrix(w_pt, k):
    """(Cin, Cout, k, k) -> (Cout, k*k*Cin) for a stride-1 VALID conv."""
    cin, cout = w_pt.shape[0], w_pt.shape[1]
    wfl = jnp.flip(w_pt, axis=(2, 3))        # [ci, co, a, b] = w[ci, co, K-1-a, K-1-b]
    return wfl.transpose(1, 2, 3, 0).reshape(cout, k * k * cin)


def _w_subpixel_matrix(w_pt):
    """Stride-2 / pad-1 / K=4 ConvTranspose -> equivalent stride-1 3x3 conv
    producing the 4 output sub-pixel phases as 4*Cout channels (phase-major)."""
    cin, cout = w_pt.shape[0], w_pt.shape[1]
    phase_rows = []
    for rh in (0, 1):
        for rw in (0, 1):
            taps = []
            for a in range(3):
                for b in range(3):
                    kh, kw = 3 - 2 * a + rh, 3 - 2 * b + rw
                    if 0 <= kh < 4 and 0 <= kw < 4:
                        taps.append(w_pt[:, :, kh, kw].T)          # (Cout, Cin)
                    else:
                        taps.append(jnp.zeros((cout, cin), w_pt.dtype))
            phase_rows.append(jnp.concatenate(taps, axis=1))       # (Cout, 9*Cin)
    return jnp.concatenate(phase_rows, axis=0)                     # (4*Cout, 9*Cin)


def _pick_row_block(ho, wo, max_lanes=1536):
    """Largest divisor r of ho with r*wo <= max_lanes (lane-dense row slabs)."""
    r = 1
    for cand in range(1, ho + 1):
        if ho % cand == 0 and cand * wo <= max_lanes:
            r = cand
    return r


# ------------------------------ layer wrapper ------------------------------


def conv_transpose_layer(x, w_pt, gamma, beta, *, stride, padding,
                         output_padding, activation, out_layout, eps=1e-5):
    """x: (N, H, Cin, W) internal layout, f32.  w_pt: (Cin, Cout, K, K)."""
    n_im, h, cin, w = x.shape
    cout, k = w_pt.shape[1], w_pt.shape[2]

    subpixel = (stride == 2 and padding == 1 and output_padding == 0 and k == 4)
    if subpixel:
        # 4-phase sub-pixel decomposition: no interior zeros anywhere.
        xp = jnp.pad(x, ((0, 0), (1, 1), (0, 0), (1, 1)))
        ke, n_phase = 3, 4
        w2 = _w_subpixel_matrix(w_pt)
    else:
        # generic path (1x1->3x3 layer and the output_padding=1 layer, tiny):
        # zero-dilate + pad, then a stride-1 VALID conv with the flipped kernel.
        lo = k - 1 - padding
        hi = k - 1 - padding + output_padding
        xp = lax.pad(x.astype(jnp.float32), jnp.float32(0.0),
                     [(0, 0, 0), (lo, hi, stride - 1),
                      (0, 0, 0), (lo, hi, stride - 1)])
        ke, n_phase = k, 1
        w2 = _w_flipped_matrix(w_pt, k)

    coutp = n_phase * cout
    patches = _im2col(xp, ke)                        # (N, Ho, D, Wo)
    _, ho, d, wo = patches.shape
    r = _pick_row_block(ho, wo)
    nb = ho // r
    lanes = r * wo

    p_blk = _block_rows(patches, r).astype(jnp.bfloat16)
    w2 = w2.astype(jnp.bfloat16)

    out_shape = jax.ShapeDtypeStruct((n_im, nb, coutp, lanes), jnp.float32)
    patch_spec = pl.BlockSpec((1, 1, d, lanes), lambda i, j: (i, j, 0, 0))
    w_spec = pl.BlockSpec((coutp, d), lambda i, j: (0, 0))

    if activation == "relu":
        g = jnp.tile(gamma.reshape(cout, 1).astype(jnp.float32), (n_phase, 1))
        b = jnp.tile(beta.reshape(cout, 1).astype(jnp.float32), (n_phase, 1))
        ch = jnp.arange(coutp) % cout
        pool = (ch[:, None] == ch[None, :]).astype(jnp.float32)   # phase pooling
        kern = functools.partial(
            _conv_bn_relu_kernel,
            count=float(n_phase * n_im * nb * lanes), eps=eps,
            n_imgs=n_im, n_blocks=nb)
        o = pl.pallas_call(
            kern,
            out_shape=out_shape,
            grid=(n_im, nb),
            in_specs=[patch_spec, w_spec,
                      pl.BlockSpec((coutp, 1), lambda i, j: (0, 0)),
                      pl.BlockSpec((coutp, 1), lambda i, j: (0, 0)),
                      pl.BlockSpec((coutp, coutp), lambda i, j: (0, 0))],
            # BN needs global batch stats -> keep the (small) conv output
            # VMEM-resident and normalize in place at the last grid step.
            out_specs=pl.BlockSpec((n_im, nb, coutp, lanes),
                                   lambda i, j: (0, 0, 0, 0)),
            scratch_shapes=[pltpu.VMEM((coutp, 1), jnp.float32)],
            compiler_params=pltpu.CompilerParams(
                dimension_semantics=("arbitrary", "arbitrary")),
        )(p_blk, w2, g, b, pool)
    else:  # tanh, no BN: fully pipelined, megacore-parallel
        o = pl.pallas_call(
            _conv_tanh_kernel,
            out_shape=out_shape,
            grid=(n_im, nb),
            in_specs=[patch_spec, w_spec],
            out_specs=pl.BlockSpec((1, 1, coutp, lanes),
                                   lambda i, j: (i, j, 0, 0)),
            compiler_params=pltpu.CompilerParams(
                dimension_semantics=("parallel", "parallel")),
        )(p_blk, w2)

    o = _unblock_rows(o, r, wo)                      # (N, Ho, Coutp, Wo)

    if subpixel:
        # interleave the 4 phases back into the full-resolution image
        o = o.reshape(n_im, ho, 2, 2, cout, wo)      # (n, q, rh, rw, co, rcol)
        if out_layout == "nchw":
            o = o.transpose(0, 4, 1, 2, 5, 3).reshape(n_im, cout, 2 * ho, 2 * wo)
        else:                                        # internal (N, H, C, W)
            o = o.transpose(0, 1, 2, 4, 5, 3).reshape(n_im, 2 * ho, cout, 2 * wo)
    elif out_layout == "nchw":
        o = o.transpose(0, 2, 1, 3)
    return o


# ------------------------------ decoder model ------------------------------


_LAYER_CFGS = (
    dict(k=3, s=1, p=0, op=0, act="relu"),   # 1x1 -> 3x3
    dict(k=4, s=2, p=1, op=1, act="relu"),   # 3   -> 7
    dict(k=4, s=2, p=1, op=0, act="relu"),   # 7   -> 14
    dict(k=4, s=2, p=1, op=0, act="relu"),   # 14  -> 28
    dict(k=4, s=2, p=1, op=0, act="relu"),   # 28  -> 56
    dict(k=4, s=2, p=1, op=0, act="relu"),   # 56  -> 112
    dict(k=4, s=2, p=1, op=0, act="tanh"),   # 112 -> 224
)


def init_decoder_params(key, num_domains, num_contents, latent_size, feature_size):
    c0 = latent_size + num_domains + num_contents
    f = feature_size
    chans = [c0, f * 32, f * 16, f * 8, f * 4, f * 2, f, 3]
    params = []
    for i, cfg in enumerate(_LAYER_CFGS):
        cin, cout = chans[i], chans[i + 1]
        key, kw_, kg, kb = jax.random.split(key, 4)
        w = 0.05 * jax.random.normal(kw_, (cin, cout, cfg["k"], cfg["k"]),
                                     jnp.float32)
        if cfg["act"] == "relu":
            gamma = 1.0 + 0.01 * jax.random.normal(kg, (cout,), jnp.float32)
            beta = 0.01 * jax.random.normal(kb, (cout,), jnp.float32)
        else:
            gamma = beta = None          # last block: ConvTranspose + Tanh only
        params.append(dict(w=w, gamma=gamma, beta=beta))
    return params


def decoder_forward(params, codes, domains, contents):
    # torch: x = cat((codes, domains, contents), dim=1).view(-1, C0, 1, 1)
    x = jnp.concatenate([codes, domains, contents], axis=1).astype(jnp.float32)
    n_im, c0 = x.shape
    x = x.reshape(n_im, 1, c0, 1)                    # internal (N, H, C, W)
    n_layers = len(_LAYER_CFGS)
    for i, (p, cfg) in enumerate(zip(params, _LAYER_CFGS)):
        x = conv_transpose_layer(
            x, p["w"], p["gamma"], p["beta"],
            stride=cfg["s"], padding=cfg["p"], output_padding=cfg["op"],
            activation=cfg["act"],
            out_layout="nchw" if i == n_layers - 1 else "internal")
    return x                                          # (N, 3, 224, 224) NCHW


# ----------------------------------- main -----------------------------------


if __name__ == "__main__":
    num_domains, num_contents, latent_size, feature_size = 2, 3, 8, 2
    batch = 2

    key = jax.random.PRNGKey(0)
    kp, kc, kd, kn = jax.random.split(key, 4)

    params = init_decoder_params(kp, num_domains, num_contents,
                                 latent_size, feature_size)

    codes = jax.random.normal(kc, (batch, latent_size), jnp.float32)
    domains = jax.nn.one_hot(
        jax.random.randint(kd, (batch,), 0, num_domains), num_domains,
        dtype=jnp.float32)
    contents = jax.nn.one_hot(
        jax.random.randint(kn, (batch,), 0, num_contents), num_contents,
        dtype=jnp.float32)

    fwd = jax.jit(decoder_forward)
    out = jax.block_until_ready(fwd(params, codes, domains, contents))

    assert out.shape == (batch, 3, 224, 224), out.shape
    assert bool(jnp.all(jnp.isfinite(out)))
    assert bool(jnp.all(jnp.abs(out) <= 1.0 + 1e-6))   # tanh output range

    print("KERNEL_OK")
</pallas_src>

<mosaic_0001>
module attributes {stable_mosaic.version = 11 : i64} {
  func.func @_conv_bn_relu_kernel(%arg0: i32, %arg1: i32, %arg2: memref<1x1x117x9xbf16, #tpu.memory_space<vmem>>, %arg3: memref<64x117xbf16, #tpu.memory_space<vmem>>, %arg4: memref<64x1xf32, #tpu.memory_space<vmem>>, %arg5: memref<64x1xf32, #tpu.memory_space<vmem>>, %arg6: memref<64x64xf32, #tpu.memory_space<vmem>>, %arg7: memref<2x1x64x9xf32, #tpu.memory_space<vmem>>, %arg8: memref<64x1xf32, #tpu.memory_space<vmem>>) attributes {dimension_semantics = [#tpu.dimension_semantics<arbitrary>, #tpu.dimension_semantics<arbitrary>], iteration_bounds = array<i64: 2, 1>, scalar_prefetch = 0 : i64, scratch_operands = 1 : i64, tpu.core_type = #tpu.core_type<tc>, window_params = [{transform_indices = @transform_0, window_bounds = array<i64: 1, 1, 117, 9>}, {pipeline_mode = #tpu.pipeline_mode<synchronous>, transform_indices = @transform_1, window_bounds = array<i64: 64, 117>}, {pipeline_mode = #tpu.pipeline_mode<synchronous>, transform_indices = @transform_2, window_bounds = array<i64: 64, 1>}, {pipeline_mode = #tpu.pipeline_mode<synchronous>, transform_indices = @transform_3, window_bounds = array<i64: 64, 1>}, {pipeline_mode = #tpu.pipeline_mode<synchronous>, transform_indices = @transform_4, window_bounds = array<i64: 64, 64>}, {pipeline_mode = #tpu.pipeline_mode<synchronous>, transform_indices = @transform_5, window_bounds = array<i64: 2, 1, 64, 9>}]} {
    %c0_i32 = arith.constant 0 : i32
    %0 = arith.cmpi eq, %arg0, %c0_i32 : i32
    %c0_i32_0 = arith.constant 0 : i32
    %1 = arith.cmpi eq, %arg1, %c0_i32_0 : i32
    %2 = arith.andi %0, %1 : i1
    %c1_i32 = arith.constant 1 : i32
    %3 = arith.cmpi eq, %arg0, %c1_i32 : i32
    %c0_i32_1 = arith.constant 0 : i32
    %4 = arith.cmpi eq, %arg1, %c0_i32_1 : i32
    %5 = arith.andi %3, %4 : i1
    %6 = arith.extui %2 : i1 to i32
    %c0_i32_2 = arith.constant 0 : i32
    %7 = arith.cmpi ne, %6, %c0_i32_2 : i32
    scf.if %7 {
      %cst_16 = arith.constant 0.000000e+00 : f32
      %24 = vector.broadcast %cst_16 : f32 to vector<64x1xf32>
      %c0_17 = arith.constant 0 : index
      %c0_18 = arith.constant 0 : index
      %25 = vector.load %arg8[%c0_17, %c0_18] : memref<64x1xf32, #tpu.memory_space<vmem>>, vector<64x1xf32>
      tpu.vector_store %arg8[%c0_17, %c0_18], %24 {strides = array<i32>} : memref<64x1xf32, #tpu.memory_space<vmem>>, vector<64x1xf32>,
    } else {
    }
    %c0 = arith.constant 0 : index
    %c0_3 = arith.constant 0 : index
    %8 = vector.load %arg3[%c0, %c0_3] : memref<64x117xbf16, #tpu.memory_space<vmem>>, vector<64x117xbf16>
    %c0_4 = arith.constant 0 : index
    %c0_5 = arith.constant 0 : index
    %c0_6 = arith.constant 0 : index
    %c0_7 = arith.constant 0 : index
    %9 = vector.load %arg2[%c0_4, %c0_5, %c0_6, %c0_7] : memref<1x1x117x9xbf16, #tpu.memory_space<vmem>>, vector<1x1x117x9xbf16>
    %10 = vector.shape_cast %9 : vector<1x1x117x9xbf16> to vector<117x9xbf16>
    %cst = arith.constant dense<0.000000e+00> : vector<64x9xf32>
    %11 = tpu.matmul %8, %10, %cst {dimension_numbers = #tpu.dot_dimension_numbers<[1], [0], [0], [1], [0, 0, 1, 1], [], []>} : vector<64x117xbf16>, vector<117x9xbf16>, vector<64x9xf32> -> vector<64x9xf32>
    %12 = arith.index_cast %arg0 : i32 to index
    %13 = arith.index_cast %arg1 : i32 to index
    %c0_8 = arith.constant 0 : index
    %c0_9 = arith.constant 0 : index
    %14 = vector.load %arg7[%12, %13, %c0_8, %c0_9] : memref<2x1x64x9xf32, #tpu.memory_space<vmem>>, vector<1x1x64x9xf32>
    %15 = vector.shape_cast %14 : vector<1x1x64x9xf32> to vector<64x9xf32>
    %16 = vector.shape_cast %11 : vector<64x9xf32> to vector<1x1x64x9xf32>
    tpu.vector_store %arg7[%12, %13, %c0_8, %c0_9], %16 {strides = array<i32>} : memref<2x1x64x9xf32, #tpu.memory_space<vmem>>, vector<1x1x64x9xf32>,
    %c0_10 = arith.constant 0 : index
    %c0_11 = arith.constant 0 : index
    %17 = vector.load %arg8[%c0_10, %c0_11] : memref<64x1xf32, #tpu.memory_space<vmem>>, vector<64x1xf32>
    %cst_12 = arith.constant dense<0.000000e+00> : vector<64xf32>
    %18 = vector.multi_reduction <add>, %11, %cst_12 [1] : vector<64x9xf32> to vector<64xf32>
    %19 = vector.shape_cast %18 : vector<64xf32> to vector<64x1xf32>
    %20 = arith.addf %17, %19 : vector<64x1xf32>
    %c0_13 = arith.constant 0 : index
    %c0_14 = arith.constant 0 : index
    %21 = vector.load %arg8[%c0_13, %c0_14] : memref<64x1xf32, #tpu.memory_space<vmem>>, vector<64x1xf32>
    tpu.vector_store %arg8[%c0_13, %c0_14], %20 {strides = array<i32>} : memref<64x1xf32, #tpu.memory_space<vmem>>, vector<64x1xf32>,
    %22 = arith.extui %5 : i1 to i32
    %c0_i32_15 = arith.constant 0 : i32
    %23 = arith.cmpi ne, %22, %c0_i32_15 : i32
    scf.if %23 {
      %c0_16 = arith.constant 0 : index
      %c0_17 = arith.constant 0 : index
      %24 = vector.load %arg6[%c0_16, %c0_17] : memref<64x64xf32, #tpu.memory_space<vmem>>, vector<64x64xf32>
      %c0_18 = arith.constant 0 : index
      %c0_19 = arith.constant 0 : index
      %25 = vector.load %arg8[%c0_18, %c0_19] : memref<64x1xf32, #tpu.memory_space<vmem>>, vector<64x1xf32>
      %cst_20 = arith.constant dense<0.000000e+00> : vector<64x1xf32>
      %26 = tpu.matmul %24, %25, %cst_20 {dimension_numbers = #tpu.dot_dimension_numbers<[1], [0], [0], [1], [0, 0, 1, 1], [], []>} : vector<64x64xf32>, vector<64x1xf32>, vector<64x1xf32> -> vector<64x1xf32>
      %cst_21 = arith.constant 0.055555556 : f32
      %27 = vector.broadcast %cst_21 : f32 to vector<64x1xf32>
      %28 = arith.mulf %26, %27 : vector<64x1xf32>
      %cst_22 = arith.constant 0.000000e+00 : f32
      %29 = vector.broadcast %cst_22 : f32 to vector<64x1xf32>
      %c0_23 = arith.constant 0 : index
      %c0_24 = arith.constant 0 : index
      %c0_25 = arith.constant 0 : index
      %c0_26 = arith.constant 0 : index
      %30 = vector.load %arg7[%c0_23, %c0_24, %c0_25, %c0_26] : memref<2x1x64x9xf32, #tpu.memory_space<vmem>>, vector<1x1x64x9xf32>
      %31 = vector.shape_cast %30 : vector<1x1x64x9xf32> to vector<64x9xf32>
      %32 = vector.broadcast %28 : vector<64x1xf32> to vector<64x9xf32>
      %33 = arith.subf %31, %32 : vector<64x9xf32>
      %34 = arith.mulf %33, %33 : vector<64x9xf32>
      %cst_27 = arith.constant dense<0.000000e+00> : vector<64xf32>
      %35 = vector.multi_reduction <add>, %34, %cst_27 [1] : vector<64x9xf32> to vector<64xf32>
      %36 = vector.shape_cast %35 : vector<64xf32> to vector<64x1xf32>
      %37 = arith.addf %29, %36 : vector<64x1xf32>
      %c1 = arith.constant 1 : index
      %c0_28 = arith.constant 0 : index
      %c0_29 = arith.constant 0 : index
      %c0_30 = arith.constant 0 : index
      %38 = vector.load %arg7[%c1, %c0_28, %c0_29, %c0_30] : memref<2x1x64x9xf32, #tpu.memory_space<vmem>>, vector<1x1x64x9xf32>
      %39 = vector.shape_cast %38 : vector<1x1x64x9xf32> to vector<64x9xf32>
      %40 = vector.broadcast %28 : vector<64x1xf32> to vector<64x9xf32>
      %41 = arith.subf %39, %40 : vector<64x9xf32>
      %42 = arith.mulf %41, %41 : vector<64x9xf32>
      %cst_31 = arith.constant dense<0.000000e+00> : vector<64xf32>
      %43 = vector.multi_reduction <add>, %42, %cst_31 [1] : vector<64x9xf32> to vector<64xf32>
      %44 = vector.shape_cast %43 : vector<64xf32> to vector<64x1xf32>
      %45 = arith.addf %37, %44 : vector<64x1xf32>
      %c0_32 = arith.constant 0 : index
      %c0_33 = arith.constant 0 : index
      %46 = vector.load %arg6[%c0_32, %c0_33] : memref<64x64xf32, #tpu.memory_space<vmem>>, vector<64x64xf32>
      %cst_34 = arith.constant dense<0.000000e+00> : vector<64x1xf32>
      %47 = tpu.matmul %46, %45, %cst_34 {dimension_numbers = #tpu.dot_dimension_numbers<[1], [0], [0], [1], [0, 0, 1, 1], [], []>} : vector<64x64xf32>, vector<64x1xf32>, vector<64x1xf32> -> vector<64x1xf32>
      %cst_35 = arith.constant 0.055555556 : f32
      %48 = vector.broadcast %cst_35 : f32 to vector<64x1xf32>
      %49 = arith.mulf %47, %48 : vector<64x1xf32>
      %c0_36 = arith.constant 0 : index
      %c0_37 = arith.constant 0 : index
      %50 = vector.load %arg4[%c0_36, %c0_37] : memref<64x1xf32, #tpu.memory_space<vmem>>, vector<64x1xf32>
      %cst_38 = arith.constant 9.99999974E-6 : f32
      %51 = vector.broadcast %cst_38 : f32 to vector<64x1xf32>
      %52 = arith.addf %49, %51 : vector<64x1xf32>
      %53 = math.rsqrt %52 : vector<64x1xf32>
      %54 = arith.mulf %50, %53 : vector<64x1xf32>
      %c0_39 = arith.constant 0 : index
      %c0_40 = arith.constant 0 : index
      %55 = vector.load %arg5[%c0_39, %c0_40] : memref<64x1xf32, #tpu.memory_space<vmem>>, vector<64x1xf32>
      %56 = arith.mulf %28, %54 : vector<64x1xf32>
      %57 = arith.subf %55, %56 : vector<64x1xf32>
      %c0_41 = arith.constant 0 : index
      %c0_42 = arith.constant 0 : index
      %c0_43 = arith.constant 0 : index
      %c0_44 = arith.constant 0 : index
      %58 = vector.load %arg7[%c0_41, %c0_42, %c0_43, %c0_44] : memref<2x1x64x9xf32, #tpu.memory_space<vmem>>, vector<1x1x64x9xf32>
      %59 = vector.shape_cast %58 : vector<1x1x64x9xf32> to vector<64x9xf32>
      %60 = vector.broadcast %54 : vector<64x1xf32> to vector<64x9xf32>
      %61 = arith.mulf %59, %60 : vector<64x9xf32>
      %62 = vector.broadcast %57 : vector<64x1xf32> to vector<64x9xf32>
      %63 = arith.addf %61, %62 : vector<64x9xf32>
      %cst_45 = arith.constant 0.000000e+00 : f32
      %64 = vector.broadcast %cst_45 : f32 to vector<64x9xf32>
      %65 = arith.maximumf %63, %64 : vector<64x9xf32>
      %c0_46 = arith.constant 0 : index
      %c0_47 = arith.constant 0 : index
      %c0_48 = arith.constant 0 : index
      %c0_49 = arith.constant 0 : index
      %66 = vector.load %arg7[%c0_46, %c0_47, %c0_48, %c0_49] : memref<2x1x64x9xf32, #tpu.memory_space<vmem>>, vector<1x1x64x9xf32>
      %67 = vector.shape_cast %66 : vector<1x1x64x9xf32> to vector<64x9xf32>
      %68 = vector.shape_cast %65 : vector<64x9xf32> to vector<1x1x64x9xf32>
      tpu.vector_store %arg7[%c0_46, %c0_47, %c0_48, %c0_49], %68 {strides = array<i32>} : memref<2x1x64x9xf32, #tpu.memory_space<vmem>>, vector<1x1x64x9xf32>,
      %c1_50 = arith.constant 1 : index
      %c0_51 = arith.constant 0 : index
      %c0_52 = arith.constant 0 : index
      %c0_53 = arith.constant 0 : index
      %69 = vector.load %arg7[%c1_50, %c0_51, %c0_52, %c0_53] : memref<2x1x64x9xf32, #tpu.memory_space<vmem>>, vector<1x1x64x9xf32>
      %70 = vector.shape_cast %69 : vector<1x1x64x9xf32> to vector<64x9xf32>
      %71 = vector.broadcast %54 : vector<64x1xf32> to vector<64x9xf32>
      %72 = arith.mulf %70, %71 : vector<64x9xf32>
      %73 = vector.broadcast %57 : vector<64x1xf32> to vector<64x9xf32>
      %74 = arith.addf %72, %73 : vector<64x9xf32>
      %cst_54 = arith.constant 0.000000e+00 : f32
      %75 = vector.broadcast %cst_54 : f32 to vector<64x9xf32>
      %76 = arith.maximumf %74, %75 : vector<64x9xf32>
      %c1_55 = arith.constant 1 : index
      %c0_56 = arith.constant 0 : index
      %c0_57 = arith.constant 0 : index
      %c0_58 = arith.constant 0 : index
      %77 = vector.load %arg7[%c1_55, %c0_56, %c0_57, %c0_58] : memref<2x1x64x9xf32, #tpu.memory_space<vmem>>, vector<1x1x64x9xf32>
      %78 = vector.shape_cast %77 : vector<1x1x64x9xf32> to vector<64x9xf32>
      %79 = vector.shape_cast %76 : vector<64x9xf32> to vector<1x1x64x9xf32>
      tpu.vector_store %arg7[%c1_55, %c0_56, %c0_57, %c0_58], %79 {strides = array<i32>} : memref<2x1x64x9xf32, #tpu.memory_space<vmem>>, vector<1x1x64x9xf32>,
    } else {
    }
    return
  }
  func.func @transform_0(%arg0: i32, %arg1: i32) -> (i32, i32, i32, i32) {
    %c0_i32 = arith.constant 0 : i32
    %c0_i32_0 = arith.constant 0 : i32
    %c0_i32_1 = arith.constant 0 : i32
    return %arg0, %arg1, %c0_i32, %c0_i32_0 : i32, i32, i32, i32
  }
  func.func @transform_1(%arg0: i32, %arg1: i32) -> (i32, i32) {
    %c0_i32 = arith.constant 0 : i32
    %c0_i32_0 = arith.constant 0 : i32
    %c0_i32_1 = arith.constant 0 : i32
    return %c0_i32, %c0_i32_0 : i32, i32
  }
  func.func @transform_2(%arg0: i32, %arg1: i32) -> (i32, i32) {
    %c0_i32 = arith.constant 0 : i32
    %c0_i32_0 = arith.constant 0 : i32
    %c0_i32_1 = arith.constant 0 : i32
    return %c0_i32, %c0_i32_0 : i32, i32
  }
  func.func @transform_3(%arg0: i32, %arg1: i32) -> (i32, i32) {
    %c0_i32 = arith.constant 0 : i32
    %c0_i32_0 = arith.constant 0 : i32
    %c0_i32_1 = arith.constant 0 : i32
    return %c0_i32, %c0_i32_0 : i32, i32
  }
  func.func @transform_4(%arg0: i32, %arg1: i32) -> (i32, i32) {
    %c0_i32 = arith.constant 0 : i32
    %c0_i32_0 = arith.constant 0 : i32
    %c0_i32_1 = arith.constant 0 : i32
    return %c0_i32, %c0_i32_0 : i32, i32
  }
  func.func @transform_5(%arg0: i32, %arg1: i32) -> (i32, i32, i32, i32) {
    %c0_i32 = arith.constant 0 : i32
    %c0_i32_0 = arith.constant 0 : i32
    %c0_i32_1 = arith.constant 0 : i32
    %c0_i32_2 = arith.constant 0 : i32
    %c0_i32_3 = arith.constant 0 : i32
    return %c0_i32, %c0_i32_0, %c0_i32_1, %c0_i32_2 : i32, i32, i32, i32
  }
}

module attributes {stable_mosaic.version = 11 : i64} {
  func.func @_conv_bn_relu_kernel(%arg0: i32, %arg1: i32, %arg2: memref<1x1x1024x49xbf16, #tpu.memory_space<vmem>>, %arg3: memref<32x1024xbf16, #tpu.memory_space<vmem>>, %arg4: memref<32x1xf32, #tpu.memory_space<vmem>>, %arg5: memref<32x1xf32, #tpu.memory_space<vmem>>, %arg6: memref<32x32xf32, #tpu.memory_space<vmem>>, %arg7: memref<2x1x32x49xf32, #tpu.memory_space<vmem>>, %arg8: memref<32x1xf32, #tpu.memory_space<vmem>>) attributes {dimension_semantics = [#tpu.dimension_semantics<arbitrary>, #tpu.dimension_semantics<arbitrary>], iteration_bounds = array<i64: 2, 1>, scalar_prefetch = 0 : i64, scratch_operands = 1 : i64, tpu.core_type = #tpu.core_type<tc>, window_params = [{transform_indices = @transform_0, window_bounds = array<i64: 1, 1, 1024, 49>}, {pipeline_mode = #tpu.pipeline_mode<synchronous>, transform_indices = @transform_1, window_bounds = array<i64: 32, 1024>}, {pipeline_mode = #tpu.pipeline_mode<synchronous>, transform_indices = @transform_2, window_bounds = array<i64: 32, 1>}, {pipeline_mode = #tpu.pipeline_mode<synchronous>, transform_indices = @transform_3, window_bounds = array<i64: 32, 1>}, {pipeline_mode = #tpu.pipeline_mode<synchronous>, transform_indices = @transform_4, window_bounds = array<i64: 32, 32>}, {pipeline_mode = #tpu.pipeline_mode<synchronous>, transform_indices = @transform_5, window_bounds = array<i64: 2, 1, 32, 49>}]} {
    %c0_i32 = arith.constant 0 : i32
    %0 = arith.cmpi eq, %arg0, %c0_i32 : i32
    %c0_i32_0 = arith.constant 0 : i32
    %1 = arith.cmpi eq, %arg1, %c0_i32_0 : i32
    %2 = arith.andi %0, %1 : i1
    %c1_i32 = arith.constant 1 : i32
    %3 = arith.cmpi eq, %arg0, %c1_i32 : i32
    %c0_i32_1 = arith.constant 0 : i32
    %4 = arith.cmpi eq, %arg1, %c0_i32_1 : i32
    %5 = arith.andi %3, %4 : i1
    %6 = arith.extui %2 : i1 to i32
    %c0_i32_2 = arith.constant 0 : i32
    %7 = arith.cmpi ne, %6, %c0_i32_2 : i32
    scf.if %7 {
      %cst_16 = arith.constant 0.000000e+00 : f32
      %24 = vector.broadcast %cst_16 : f32 to vector<32x1xf32>
      %c0_17 = arith.constant 0 : index
      %c0_18 = arith.constant 0 : index
      %25 = vector.load %arg8[%c0_17, %c0_18] : memref<32x1xf32, #tpu.memory_space<vmem>>, vector<32x1xf32>
      tpu.vector_store %arg8[%c0_17, %c0_18], %24 {strides = array<i32>} : memref<32x1xf32, #tpu.memory_space<vmem>>, vector<32x1xf32>,
    } else {
    }
    %c0 = arith.constant 0 : index
    %c0_3 = arith.constant 0 : index
    %8 = vector.load %arg3[%c0, %c0_3] : memref<32x1024xbf16, #tpu.memory_space<vmem>>, vector<32x1024xbf16>
    %c0_4 = arith.constant 0 : index
    %c0_5 = arith.constant 0 : index
    %c0_6 = arith.constant 0 : index
    %c0_7 = arith.constant 0 : index
    %9 = vector.load %arg2[%c0_4, %c0_5, %c0_6, %c0_7] : memref<1x1x1024x49xbf16, #tpu.memory_space<vmem>>, vector<1x1x1024x49xbf16>
    %10 = vector.shape_cast %9 : vector<1x1x1024x49xbf16> to vector<1024x49xbf16>
    %cst = arith.constant dense<0.000000e+00> : vector<32x49xf32>
    %11 = tpu.matmul %8, %10, %cst {dimension_numbers = #tpu.dot_dimension_numbers<[1], [0], [0], [1], [0, 0, 1, 1], [], []>} : vector<32x1024xbf16>, vector<1024x49xbf16>, vector<32x49xf32> -> vector<32x49xf32>
    %12 = arith.index_cast %arg0 : i32 to index
    %13 = arith.index_cast %arg1 : i32 to index
    %c0_8 = arith.constant 0 : index
    %c0_9 = arith.constant 0 : index
    %14 = vector.load %arg7[%12, %13, %c0_8, %c0_9] : memref<2x1x32x49xf32, #tpu.memory_space<vmem>>, vector<1x1x32x49xf32>
    %15 = vector.shape_cast %14 : vector<1x1x32x49xf32> to vector<32x49xf32>
    %16 = vector.shape_cast %11 : vector<32x49xf32> to vector<1x1x32x49xf32>
    tpu.vector_store %arg7[%12, %13, %c0_8, %c0_9], %16 {strides = array<i32>} : memref<2x1x32x49xf32, #tpu.memory_space<vmem>>, vector<1x1x32x49xf32>,
    %c0_10 = arith.constant 0 : index
    %c0_11 = arith.constant 0 : index
    %17 = vector.load %arg8[%c0_10, %c0_11] : memref<32x1xf32, #tpu.memory_space<vmem>>, vector<32x1xf32>
    %cst_12 = arith.constant dense<0.000000e+00> : vector<32xf32>
    %18 = vector.multi_reduction <add>, %11, %cst_12 [1] : vector<32x49xf32> to vector<32xf32>
    %19 = vector.shape_cast %18 : vector<32xf32> to vector<32x1xf32>
    %20 = arith.addf %17, %19 : vector<32x1xf32>
    %c0_13 = arith.constant 0 : index
    %c0_14 = arith.constant 0 : index
    %21 = vector.load %arg8[%c0_13, %c0_14] : memref<32x1xf32, #tpu.memory_space<vmem>>, vector<32x1xf32>
    tpu.vector_store %arg8[%c0_13, %c0_14], %20 {strides = array<i32>} : memref<32x1xf32, #tpu.memory_space<vmem>>, vector<32x1xf32>,
    %22 = arith.extui %5 : i1 to i32
    %c0_i32_15 = arith.constant 0 : i32
    %23 = arith.cmpi ne, %22, %c0_i32_15 : i32
    scf.if %23 {
      %c0_16 = arith.constant 0 : index
      %c0_17 = arith.constant 0 : index
      %24 = vector.load %arg6[%c0_16, %c0_17] : memref<32x32xf32, #tpu.memory_space<vmem>>, vector<32x32xf32>
      %c0_18 = arith.constant 0 : index
      %c0_19 = arith.constant 0 : index
      %25 = vector.load %arg8[%c0_18, %c0_19] : memref<32x1xf32, #tpu.memory_space<vmem>>, vector<32x1xf32>
      %cst_20 = arith.constant dense<0.000000e+00> : vector<32x1xf32>
      %26 = tpu.matmul %24, %25, %cst_20 {dimension_numbers = #tpu.dot_dimension_numbers<[1], [0], [0], [1], [0, 0, 1, 1], [], []>} : vector<32x32xf32>, vector<32x1xf32>, vector<32x1xf32> -> vector<32x1xf32>
      %cst_21 = arith.constant 0.0102040814 : f32
      %27 = vector.broadcast %cst_21 : f32 to vector<32x1xf32>
      %28 = arith.mulf %26, %27 : vector<32x1xf32>
      %cst_22 = arith.constant 0.000000e+00 : f32
      %29 = vector.broadcast %cst_22 : f32 to vector<32x1xf32>
      %c0_23 = arith.constant 0 : index
      %c0_24 = arith.constant 0 : index
      %c0_25 = arith.constant 0 : index
      %c0_26 = arith.constant 0 : index
      %30 = vector.load %arg7[%c0_23, %c0_24, %c0_25, %c0_26] : memref<2x1x32x49xf32, #tpu.memory_space<vmem>>, vector<1x1x32x49xf32>
      %31 = vector.shape_cast %30 : vector<1x1x32x49xf32> to vector<32x49xf32>
      %32 = vector.broadcast %28 : vector<32x1xf32> to vector<32x49xf32>
      %33 = arith.subf %31, %32 : vector<32x49xf32>
      %34 = arith.mulf %33, %33 : vector<32x49xf32>
      %cst_27 = arith.constant dense<0.000000e+00> : vector<32xf32>
      %35 = vector.multi_reduction <add>, %34, %cst_27 [1] : vector<32x49xf32> to vector<32xf32>
      %36 = vector.shape_cast %35 : vector<32xf32> to vector<32x1xf32>
      %37 = arith.addf %29, %36 : vector<32x1xf32>
      %c1 = arith.constant 1 : index
      %c0_28 = arith.constant 0 : index
      %c0_29 = arith.constant 0 : index
      %c0_30 = arith.constant 0 : index
      %38 = vector.load %arg7[%c1, %c0_28, %c0_29, %c0_30] : memref<2x1x32x49xf32, #tpu.memory_space<vmem>>, vector<1x1x32x49xf32>
      %39 = vector.shape_cast %38 : vector<1x1x32x49xf32> to vector<32x49xf32>
      %40 = vector.broadcast %28 : vector<32x1xf32> to vector<32x49xf32>
      %41 = arith.subf %39, %40 : vector<32x49xf32>
      %42 = arith.mulf %41, %41 : vector<32x49xf32>
      %cst_31 = arith.constant dense<0.000000e+00> : vector<32xf32>
      %43 = vector.multi_reduction <add>, %42, %cst_31 [1] : vector<32x49xf32> to vector<32xf32>
      %44 = vector.shape_cast %43 : vector<32xf32> to vector<32x1xf32>
      %45 = arith.addf %37, %44 : vector<32x1xf32>
      %c0_32 = arith.constant 0 : index
      %c0_33 = arith.constant 0 : index
      %46 = vector.load %arg6[%c0_32, %c0_33] : memref<32x32xf32, #tpu.memory_space<vmem>>, vector<32x32xf32>
      %cst_34 = arith.constant dense<0.000000e+00> : vector<32x1xf32>
      %47 = tpu.matmul %46, %45, %cst_34 {dimension_numbers = #tpu.dot_dimension_numbers<[1], [0], [0], [1], [0, 0, 1, 1], [], []>} : vector<32x32xf32>, vector<32x1xf32>, vector<32x1xf32> -> vector<32x1xf32>
      %cst_35 = arith.constant 0.0102040814 : f32
      %48 = vector.broadcast %cst_35 : f32 to vector<32x1xf32>
      %49 = arith.mulf %47, %48 : vector<32x1xf32>
      %c0_36 = arith.constant 0 : index
      %c0_37 = arith.constant 0 : index
      %50 = vector.load %arg4[%c0_36, %c0_37] : memref<32x1xf32, #tpu.memory_space<vmem>>, vector<32x1xf32>
      %cst_38 = arith.constant 9.99999974E-6 : f32
      %51 = vector.broadcast %cst_38 : f32 to vector<32x1xf32>
      %52 = arith.addf %49, %51 : vector<32x1xf32>
      %53 = math.rsqrt %52 : vector<32x1xf32>
      %54 = arith.mulf %50, %53 : vector<32x1xf32>
      %c0_39 = arith.constant 0 : index
      %c0_40 = arith.constant 0 : index
      %55 = vector.load %arg5[%c0_39, %c0_40] : memref<32x1xf32, #tpu.memory_space<vmem>>, vector<32x1xf32>
      %56 = arith.mulf %28, %54 : vector<32x1xf32>
      %57 = arith.subf %55, %56 : vector<32x1xf32>
      %c0_41 = arith.constant 0 : index
      %c0_42 = arith.constant 0 : index
      %c0_43 = arith.constant 0 : index
      %c0_44 = arith.constant 0 : index
      %58 = vector.load %arg7[%c0_41, %c0_42, %c0_43, %c0_44] : memref<2x1x32x49xf32, #tpu.memory_space<vmem>>, vector<1x1x32x49xf32>
      %59 = vector.shape_cast %58 : vector<1x1x32x49xf32> to vector<32x49xf32>
      %60 = vector.broadcast %54 : vector<32x1xf32> to vector<32x49xf32>
      %61 = arith.mulf %59, %60 : vector<32x49xf32>
      %62 = vector.broadcast %57 : vector<32x1xf32> to vector<32x49xf32>
      %63 = arith.addf %61, %62 : vector<32x49xf32>
      %cst_45 = arith.constant 0.000000e+00 : f32
      %64 = vector.broadcast %cst_45 : f32 to vector<32x49xf32>
      %65 = arith.maximumf %63, %64 : vector<32x49xf32>
      %c0_46 = arith.constant 0 : index
      %c0_47 = arith.constant 0 : index
      %c0_48 = arith.constant 0 : index
      %c0_49 = arith.constant 0 : index
      %66 = vector.load %arg7[%c0_46, %c0_47, %c0_48, %c0_49] : memref<2x1x32x49xf32, #tpu.memory_space<vmem>>, vector<1x1x32x49xf32>
      %67 = vector.shape_cast %66 : vector<1x1x32x49xf32> to vector<32x49xf32>
      %68 = vector.shape_cast %65 : vector<32x49xf32> to vector<1x1x32x49xf32>
      tpu.vector_store %arg7[%c0_46, %c0_47, %c0_48, %c0_49], %68 {strides = array<i32>} : memref<2x1x32x49xf32, #tpu.memory_space<vmem>>, vector<1x1x32x49xf32>,
      %c1_50 = arith.constant 1 : index
      %c0_51 = arith.constant 0 : index
      %c0_52 = arith.constant 0 : index
      %c0_53 = arith.constant 0 : index
      %69 = vector.load %arg7[%c1_50, %c0_51, %c0_52, %c0_53] : memref<2x1x32x49xf32, #tpu.memory_space<vmem>>, vector<1x1x32x49xf32>
      %70 = vector.shape_cast %69 : vector<1x1x32x49xf32> to vector<32x49xf32>
      %71 = vector.broadcast %54 : vector<32x1xf32> to vector<32x49xf32>
      %72 = arith.mulf %70, %71 : vector<32x49xf32>
      %73 = vector.broadcast %57 : vector<32x1xf32> to vector<32x49xf32>
      %74 = arith.addf %72, %73 : vector<32x49xf32>
      %cst_54 = arith.constant 0.000000e+00 : f32
      %75 = vector.broadcast %cst_54 : f32 to vector<32x49xf32>
      %76 = arith.maximumf %74, %75 : vector<32x49xf32>
      %c1_55 = arith.constant 1 : index
      %c0_56 = arith.constant 0 : index
      %c0_57 = arith.constant 0 : index
      %c0_58 = arith.constant 0 : index
      %77 = vector.load %arg7[%c1_55, %c0_56, %c0_57, %c0_58] : memref<2x1x32x49xf32, #tpu.memory_space<vmem>>, vector<1x1x32x49xf32>
      %78 = vector.shape_cast %77 : vector<1x1x32x49xf32> to vector<32x49xf32>
      %79 = vector.shape_cast %76 : vector<32x49xf32> to vector<1x1x32x49xf32>
      tpu.vector_store %arg7[%c1_55, %c0_56, %c0_57, %c0_58], %79 {strides = array<i32>} : memref<2x1x32x49xf32, #tpu.memory_space<vmem>>, vector<1x1x32x49xf32>,
    } else {
    }
    return
  }
  func.func @transform_0(%arg0: i32, %arg1: i32) -> (i32, i32, i32, i32) {
    %c0_i32 = arith.constant 0 : i32
    %c0_i32_0 = arith.constant 0 : i32
    %c0_i32_1 = arith.constant 0 : i32
    return %arg0, %arg1, %c0_i32, %c0_i32_0 : i32, i32, i32, i32
  }
  func.func @transform_1(%arg0: i32, %arg1: i32) -> (i32, i32) {
    %c0_i32 = arith.constant 0 : i32
    %c0_i32_0 = arith.constant 0 : i32
    %c0_i32_1 = arith.constant 0 : i32
    return %c0_i32, %c0_i32_0 : i32, i32
  }
  func.func @transform_2(%arg0: i32, %arg1: i32) -> (i32, i32) {
    %c0_i32 = arith.constant 0 : i32
    %c0_i32_0 = arith.constant 0 : i32
    %c0_i32_1 = arith.constant 0 : i32
    return %c0_i32, %c0_i32_0 : i32, i32
  }
  func.func @transform_3(%arg0: i32, %arg1: i32) -> (i32, i32) {
    %c0_i32 = arith.constant 0 : i32
    %c0_i32_0 = arith.constant 0 : i32
    %c0_i32_1 = arith.constant 0 : i32
    return %c0_i32, %c0_i32_0 : i32, i32
  }
  func.func @transform_4(%arg0: i32, %arg1: i32) -> (i32, i32) {
    %c0_i32 = arith.constant 0 : i32
    %c0_i32_0 = arith.constant 0 : i32
    %c0_i32_1 = arith.constant 0 : i32
    return %c0_i32, %c0_i32_0 : i32, i32
  }
  func.func @transform_5(%arg0: i32, %arg1: i32) -> (i32, i32, i32, i32) {
    %c0_i32 = arith.constant 0 : i32
    %c0_i32_0 = arith.constant 0 : i32
    %c0_i32_1 = arith.constant 0 : i32
    %c0_i32_2 = arith.constant 0 : i32
    %c0_i32_3 = arith.constant 0 : i32
    return %c0_i32, %c0_i32_0, %c0_i32_1, %c0_i32_2 : i32, i32, i32, i32
  }
}

module attributes {stable_mosaic.version = 11 : i64} {
  func.func @_conv_bn_relu_kernel(%arg0: i32, %arg1: i32, %arg2: memref<1x1x288x49xbf16, #tpu.memory_space<vmem>>, %arg3: memref<64x288xbf16, #tpu.memory_space<vmem>>, %arg4: memref<64x1xf32, #tpu.memory_space<vmem>>, %arg5: memref<64x1xf32, #tpu.memory_space<vmem>>, %arg6: memref<64x64xf32, #tpu.memory_space<vmem>>, %arg7: memref<2x1x64x49xf32, #tpu.memory_space<vmem>>, %arg8: memref<64x1xf32, #tpu.memory_space<vmem>>) attributes {dimension_semantics = [#tpu.dimension_semantics<arbitrary>, #tpu.dimension_semantics<arbitrary>], iteration_bounds = array<i64: 2, 1>, scalar_prefetch = 0 : i64, scratch_operands = 1 : i64, tpu.core_type = #tpu.core_type<tc>, window_params = [{transform_indices = @transform_0, window_bounds = array<i64: 1, 1, 288, 49>}, {pipeline_mode = #tpu.pipeline_mode<synchronous>, transform_indices = @transform_1, window_bounds = array<i64: 64, 288>}, {pipeline_mode = #tpu.pipeline_mode<synchronous>, transform_indices = @transform_2, window_bounds = array<i64: 64, 1>}, {pipeline_mode = #tpu.pipeline_mode<synchronous>, transform_indices = @transform_3, window_bounds = array<i64: 64, 1>}, {pipeline_mode = #tpu.pipeline_mode<synchronous>, transform_indices = @transform_4, window_bounds = array<i64: 64, 64>}, {pipeline_mode = #tpu.pipeline_mode<synchronous>, transform_indices = @transform_5, window_bounds = array<i64: 2, 1, 64, 49>}]} {
    %c0_i32 = arith.constant 0 : i32
    %0 = arith.cmpi eq, %arg0, %c0_i32 : i32
    %c0_i32_0 = arith.constant 0 : i32
    %1 = arith.cmpi eq, %arg1, %c0_i32_0 : i32
    %2 = arith.andi %0, %1 : i1
    %c1_i32 = arith.constant 1 : i32
    %3 = arith.cmpi eq, %arg0, %c1_i32 : i32
    %c0_i32_1 = arith.constant 0 : i32
    %4 = arith.cmpi eq, %arg1, %c0_i32_1 : i32
    %5 = arith.andi %3, %4 : i1
    %6 = arith.extui %2 : i1 to i32
    %c0_i32_2 = arith.constant 0 : i32
    %7 = arith.cmpi ne, %6, %c0_i32_2 : i32
    scf.if %7 {
      %cst_16 = arith.constant 0.000000e+00 : f32
      %24 = vector.broadcast %cst_16 : f32 to vector<64x1xf32>
      %c0_17 = arith.constant 0 : index
      %c0_18 = arith.constant 0 : index
      %25 = vector.load %arg8[%c0_17, %c0_18] : memref<64x1xf32, #tpu.memory_space<vmem>>, vector<64x1xf32>
      tpu.vector_store %arg8[%c0_17, %c0_18], %24 {strides = array<i32>} : memref<64x1xf32, #tpu.memory_space<vmem>>, vector<64x1xf32>,
    } else {
    }
    %c0 = arith.constant 0 : index
    %c0_3 = arith.constant 0 : index
    %8 = vector.load %arg3[%c0, %c0_3] : memref<64x288xbf16, #tpu.memory_space<vmem>>, vector<64x288xbf16>
    %c0_4 = arith.constant 0 : index
    %c0_5 = arith.constant 0 : index
    %c0_6 = arith.constant 0 : index
    %c0_7 = arith.constant 0 : index
    %9 = vector.load %arg2[%c0_4, %c0_5, %c0_6, %c0_7] : memref<1x1x288x49xbf16, #tpu.memory_space<vmem>>, vector<1x1x288x49xbf16>
    %10 = vector.shape_cast %9 : vector<1x1x288x49xbf16> to vector<288x49xbf16>
    %cst = arith.constant dense<0.000000e+00> : vector<64x49xf32>
    %11 = tpu.matmul %8, %10, %cst {dimension_numbers = #tpu.dot_dimension_numbers<[1], [0], [0], [1], [0, 0, 1, 1], [], []>} : vector<64x288xbf16>, vector<288x49xbf16>, vector<64x49xf32> -> vector<64x49xf32>
    %12 = arith.index_cast %arg0 : i32 to index
    %13 = arith.index_cast %arg1 : i32 to index
    %c0_8 = arith.constant 0 : index
    %c0_9 = arith.constant 0 : index
    %14 = vector.load %arg7[%12, %13, %c0_8, %c0_9] : memref<2x1x64x49xf32, #tpu.memory_space<vmem>>, vector<1x1x64x49xf32>
    %15 = vector.shape_cast %14 : vector<1x1x64x49xf32> to vector<64x49xf32>
    %16 = vector.shape_cast %11 : vector<64x49xf32> to vector<1x1x64x49xf32>
    tpu.vector_store %arg7[%12, %13, %c0_8, %c0_9], %16 {strides = array<i32>} : memref<2x1x64x49xf32, #tpu.memory_space<vmem>>, vector<1x1x64x49xf32>,
    %c0_10 = arith.constant 0 : index
    %c0_11 = arith.constant 0 : index
    %17 = vector.load %arg8[%c0_10, %c0_11] : memref<64x1xf32, #tpu.memory_space<vmem>>, vector<64x1xf32>
    %cst_12 = arith.constant dense<0.000000e+00> : vector<64xf32>
    %18 = vector.multi_reduction <add>, %11, %cst_12 [1] : vector<64x49xf32> to vector<64xf32>
    %19 = vector.shape_cast %18 : vector<64xf32> to vector<64x1xf32>
    %20 = arith.addf %17, %19 : vector<64x1xf32>
    %c0_13 = arith.constant 0 : index
    %c0_14 = arith.constant 0 : index
    %21 = vector.load %arg8[%c0_13, %c0_14] : memref<64x1xf32, #tpu.memory_space<vmem>>, vector<64x1xf32>
    tpu.vector_store %arg8[%c0_13, %c0_14], %20 {strides = array<i32>} : memref<64x1xf32, #tpu.memory_space<vmem>>, vector<64x1xf32>,
    %22 = arith.extui %5 : i1 to i32
    %c0_i32_15 = arith.constant 0 : i32
    %23 = arith.cmpi ne, %22, %c0_i32_15 : i32
    scf.if %23 {
      %c0_16 = arith.constant 0 : index
      %c0_17 = arith.constant 0 : index
      %24 = vector.load %arg6[%c0_16, %c0_17] : memref<64x64xf32, #tpu.memory_space<vmem>>, vector<64x64xf32>
      %c0_18 = arith.constant 0 : index
      %c0_19 = arith.constant 0 : index
      %25 = vector.load %arg8[%c0_18, %c0_19] : memref<64x1xf32, #tpu.memory_space<vmem>>, vector<64x1xf32>
      %cst_20 = arith.constant dense<0.000000e+00> : vector<64x1xf32>
      %26 = tpu.matmul %24, %25, %cst_20 {dimension_numbers = #tpu.dot_dimension_numbers<[1], [0], [0], [1], [0, 0, 1, 1], [], []>} : vector<64x64xf32>, vector<64x1xf32>, vector<64x1xf32> -> vector<64x1xf32>
      %cst_21 = arith.constant 0.00255102036 : f32
      %27 = vector.broadcast %cst_21 : f32 to vector<64x1xf32>
      %28 = arith.mulf %26, %27 : vector<64x1xf32>
      %cst_22 = arith.constant 0.000000e+00 : f32
      %29 = vector.broadcast %cst_22 : f32 to vector<64x1xf32>
      %c0_23 = arith.constant 0 : index
      %c0_24 = arith.constant 0 : index
      %c0_25 = arith.constant 0 : index
      %c0_26 = arith.constant 0 : index
      %30 = vector.load %arg7[%c0_23, %c0_24, %c0_25, %c0_26] : memref<2x1x64x49xf32, #tpu.memory_space<vmem>>, vector<1x1x64x49xf32>
      %31 = vector.shape_cast %30 : vector<1x1x64x49xf32> to vector<64x49xf32>
      %32 = vector.broadcast %28 : vector<64x1xf32> to vector<64x49xf32>
      %33 = arith.subf %31, %32 : vector<64x49xf32>
      %34 = arith.mulf %33, %33 : vector<64x49xf32>
      %cst_27 = arith.constant dense<0.000000e+00> : vector<64xf32>
      %35 = vector.multi_reduction <add>, %34, %cst_27 [1] : vector<64x49xf32> to vector<64xf32>
      %36 = vector.shape_cast %35 : vector<64xf32> to vector<64x1xf32>
      %37 = arith.addf %29, %36 : vector<64x1xf32>
      %c1 = arith.constant 1 : index
      %c0_28 = arith.constant 0 : index
      %c0_29 = arith.constant 0 : index
      %c0_30 = arith.constant 0 : index
      %38 = vector.load %arg7[%c1, %c0_28, %c0_29, %c0_30] : memref<2x1x64x49xf32, #tpu.memory_space<vmem>>, vector<1x1x64x49xf32>
      %39 = vector.shape_cast %38 : vector<1x1x64x49xf32> to vector<64x49xf32>
      %40 = vector.broadcast %28 : vector<64x1xf32> to vector<64x49xf32>
      %41 = arith.subf %39, %40 : vector<64x49xf32>
      %42 = arith.mulf %41, %41 : vector<64x49xf32>
      %cst_31 = arith.constant dense<0.000000e+00> : vector<64xf32>
      %43 = vector.multi_reduction <add>, %42, %cst_31 [1] : vector<64x49xf32> to vector<64xf32>
      %44 = vector.shape_cast %43 : vector<64xf32> to vector<64x1xf32>
      %45 = arith.addf %37, %44 : vector<64x1xf32>
      %c0_32 = arith.constant 0 : index
      %c0_33 = arith.constant 0 : index
      %46 = vector.load %arg6[%c0_32, %c0_33] : memref<64x64xf32, #tpu.memory_space<vmem>>, vector<64x64xf32>
      %cst_34 = arith.constant dense<0.000000e+00> : vector<64x1xf32>
      %47 = tpu.matmul %46, %45, %cst_34 {dimension_numbers = #tpu.dot_dimension_numbers<[1], [0], [0], [1], [0, 0, 1, 1], [], []>} : vector<64x64xf32>, vector<64x1xf32>, vector<64x1xf32> -> vector<64x1xf32>
      %cst_35 = arith.constant 0.00255102036 : f32
      %48 = vector.broadcast %cst_35 : f32 to vector<64x1xf32>
      %49 = arith.mulf %47, %48 : vector<64x1xf32>
      %c0_36 = arith.constant 0 : index
      %c0_37 = arith.constant 0 : index
      %50 = vector.load %arg4[%c0_36, %c0_37] : memref<64x1xf32, #tpu.memory_space<vmem>>, vector<64x1xf32>
      %cst_38 = arith.constant 9.99999974E-6 : f32
      %51 = vector.broadcast %cst_38 : f32 to vector<64x1xf32>
      %52 = arith.addf %49, %51 : vector<64x1xf32>
      %53 = math.rsqrt %52 : vector<64x1xf32>
      %54 = arith.mulf %50, %53 : vector<64x1xf32>
      %c0_39 = arith.constant 0 : index
      %c0_40 = arith.constant 0 : index
      %55 = vector.load %arg5[%c0_39, %c0_40] : memref<64x1xf32, #tpu.memory_space<vmem>>, vector<64x1xf32>
      %56 = arith.mulf %28, %54 : vector<64x1xf32>
      %57 = arith.subf %55, %56 : vector<64x1xf32>
      %c0_41 = arith.constant 0 : index
      %c0_42 = arith.constant 0 : index
      %c0_43 = arith.constant 0 : index
      %c0_44 = arith.constant 0 : index
      %58 = vector.load %arg7[%c0_41, %c0_42, %c0_43, %c0_44] : memref<2x1x64x49xf32, #tpu.memory_space<vmem>>, vector<1x1x64x49xf32>
      %59 = vector.shape_cast %58 : vector<1x1x64x49xf32> to vector<64x49xf32>
      %60 = vector.broadcast %54 : vector<64x1xf32> to vector<64x49xf32>
      %61 = arith.mulf %59, %60 : vector<64x49xf32>
      %62 = vector.broadcast %57 : vector<64x1xf32> to vector<64x49xf32>
      %63 = arith.addf %61, %62 : vector<64x49xf32>
      %cst_45 = arith.constant 0.000000e+00 : f32
      %64 = vector.broadcast %cst_45 : f32 to vector<64x49xf32>
      %65 = arith.maximumf %63, %64 : vector<64x49xf32>
      %c0_46 = arith.constant 0 : index
      %c0_47 = arith.constant 0 : index
      %c0_48 = arith.constant 0 : index
      %c0_49 = arith.constant 0 : index
      %66 = vector.load %arg7[%c0_46, %c0_47, %c0_48, %c0_49] : memref<2x1x64x49xf32, #tpu.memory_space<vmem>>, vector<1x1x64x49xf32>
      %67 = vector.shape_cast %66 : vector<1x1x64x49xf32> to vector<64x49xf32>
      %68 = vector.shape_cast %65 : vector<64x49xf32> to vector<1x1x64x49xf32>
      tpu.vector_store %arg7[%c0_46, %c0_47, %c0_48, %c0_49], %68 {strides = array<i32>} : memref<2x1x64x49xf32, #tpu.memory_space<vmem>>, vector<1x1x64x49xf32>,
      %c1_50 = arith.constant 1 : index
      %c0_51 = arith.constant 0 : index
      %c0_52 = arith.constant 0 : index
      %c0_53 = arith.constant 0 : index
      %69 = vector.load %arg7[%c1_50, %c0_51, %c0_52, %c0_53] : memref<2x1x64x49xf32, #tpu.memory_space<vmem>>, vector<1x1x64x49xf32>
      %70 = vector.shape_cast %69 : vector<1x1x64x49xf32> to vector<64x49xf32>
      %71 = vector.broadcast %54 : vector<64x1xf32> to vector<64x49xf32>
      %72 = arith.mulf %70, %71 : vector<64x49xf32>
      %73 = vector.broadcast %57 : vector<64x1xf32> to vector<64x49xf32>
      %74 = arith.addf %72, %73 : vector<64x49xf32>
      %cst_54 = arith.constant 0.000000e+00 : f32
      %75 = vector.broadcast %cst_54 : f32 to vector<64x49xf32>
      %76 = arith.maximumf %74, %75 : vector<64x49xf32>
      %c1_55 = arith.constant 1 : index
      %c0_56 = arith.constant 0 : index
      %c0_57 = arith.constant 0 : index
      %c0_58 = arith.constant 0 : index
      %77 = vector.load %arg7[%c1_55, %c0_56, %c0_57, %c0_58] : memref<2x1x64x49xf32, #tpu.memory_space<vmem>>, vector<1x1x64x49xf32>
      %78 = vector.shape_cast %77 : vector<1x1x64x49xf32> to vector<64x49xf32>
      %79 = vector.shape_cast %76 : vector<64x49xf32> to vector<1x1x64x49xf32>
      tpu.vector_store %arg7[%c1_55, %c0_56, %c0_57, %c0_58], %79 {strides = array<i32>} : memref<2x1x64x49xf32, #tpu.memory_space<vmem>>, vector<1x1x64x49xf32>,
    } else {
    }
    return
  }
  func.func @transform_0(%arg0: i32, %arg1: i32) -> (i32, i32, i32, i32) {
    %c0_i32 = arith.constant 0 : i32
    %c0_i32_0 = arith.constant 0 : i32
    %c0_i32_1 = arith.constant 0 : i32
    return %arg0, %arg1, %c0_i32, %c0_i32_0 : i32, i32, i32, i32
  }
  func.func @transform_1(%arg0: i32, %arg1: i32) -> (i32, i32) {
    %c0_i32 = arith.constant 0 : i32
    %c0_i32_0 = arith.constant 0 : i32
    %c0_i32_1 = arith.constant 0 : i32
    return %c0_i32, %c0_i32_0 : i32, i32
  }
  func.func @transform_2(%arg0: i32, %arg1: i32) -> (i32, i32) {
    %c0_i32 = arith.constant 0 : i32
    %c0_i32_0 = arith.constant 0 : i32
    %c0_i32_1 = arith.constant 0 : i32
    return %c0_i32, %c0_i32_0 : i32, i32
  }
  func.func @transform_3(%arg0: i32, %arg1: i32) -> (i32, i32) {
    %c0_i32 = arith.constant 0 : i32
    %c0_i32_0 = arith.constant 0 : i32
    %c0_i32_1 = arith.constant 0 : i32
    return %c0_i32, %c0_i32_0 : i32, i32
  }
  func.func @transform_4(%arg0: i32, %arg1: i32) -> (i32, i32) {
    %c0_i32 = arith.constant 0 : i32
    %c0_i32_0 = arith.constant 0 : i32
    %c0_i32_1 = arith.constant 0 : i32
    return %c0_i32, %c0_i32_0 : i32, i32
  }
  func.func @transform_5(%arg0: i32, %arg1: i32) -> (i32, i32, i32, i32) {
    %c0_i32 = arith.constant 0 : i32
    %c0_i32_0 = arith.constant 0 : i32
    %c0_i32_1 = arith.constant 0 : i32
    %c0_i32_2 = arith.constant 0 : i32
    %c0_i32_3 = arith.constant 0 : i32
    return %c0_i32, %c0_i32_0, %c0_i32_1, %c0_i32_2 : i32, i32, i32, i32
  }
}

module attributes {stable_mosaic.version = 11 : i64} {
  func.func @_conv_bn_relu_kernel(%arg0: i32, %arg1: i32, %arg2: memref<1x1x144x196xbf16, #tpu.memory_space<vmem>>, %arg3: memref<32x144xbf16, #tpu.memory_space<vmem>>, %arg4: memref<32x1xf32, #tpu.memory_space<vmem>>, %arg5: memref<32x1xf32, #tpu.memory_space<vmem>>, %arg6: memref<32x32xf32, #tpu.memory_space<vmem>>, %arg7: memref<2x1x32x196xf32, #tpu.memory_space<vmem>>, %arg8: memref<32x1xf32, #tpu.memory_space<vmem>>) attributes {dimension_semantics = [#tpu.dimension_semantics<arbitrary>, #tpu.dimension_semantics<arbitrary>], iteration_bounds = array<i64: 2, 1>, scalar_prefetch = 0 : i64, scratch_operands = 1 : i64, tpu.core_type = #tpu.core_type<tc>, window_params = [{transform_indices = @transform_0, window_bounds = array<i64: 1, 1, 144, 196>}, {pipeline_mode = #tpu.pipeline_mode<synchronous>, transform_indices = @transform_1, window_bounds = array<i64: 32, 144>}, {pipeline_mode = #tpu.pipeline_mode<synchronous>, transform_indices = @transform_2, window_bounds = array<i64: 32, 1>}, {pipeline_mode = #tpu.pipeline_mode<synchronous>, transform_indices = @transform_3, window_bounds = array<i64: 32, 1>}, {pipeline_mode = #tpu.pipeline_mode<synchronous>, transform_indices = @transform_4, window_bounds = array<i64: 32, 32>}, {pipeline_mode = #tpu.pipeline_mode<synchronous>, transform_indices = @transform_5, window_bounds = array<i64: 2, 1, 32, 196>}]} {
    %c0_i32 = arith.constant 0 : i32
    %0 = arith.cmpi eq, %arg0, %c0_i32 : i32
    %c0_i32_0 = arith.constant 0 : i32
    %1 = arith.cmpi eq, %arg1, %c0_i32_0 : i32
    %2 = arith.andi %0, %1 : i1
    %c1_i32 = arith.constant 1 : i32
    %3 = arith.cmpi eq, %arg0, %c1_i32 : i32
    %c0_i32_1 = arith.constant 0 : i32
    %4 = arith.cmpi eq, %arg1, %c0_i32_1 : i32
    %5 = arith.andi %3, %4 : i1
    %6 = arith.extui %2 : i1 to i32
    %c0_i32_2 = arith.constant 0 : i32
    %7 = arith.cmpi ne, %6, %c0_i32_2 : i32
    scf.if %7 {
      %cst_16 = arith.constant 0.000000e+00 : f32
      %24 = vector.broadcast %cst_16 : f32 to vector<32x1xf32>
      %c0_17 = arith.constant 0 : index
      %c0_18 = arith.constant 0 : index
      %25 = vector.load %arg8[%c0_17, %c0_18] : memref<32x1xf32, #tpu.memory_space<vmem>>, vector<32x1xf32>
      tpu.vector_store %arg8[%c0_17, %c0_18], %24 {strides = array<i32>} : memref<32x1xf32, #tpu.memory_space<vmem>>, vector<32x1xf32>,
    } else {
    }
    %c0 = arith.constant 0 : index
    %c0_3 = arith.constant 0 : index
    %8 = vector.load %arg3[%c0, %c0_3] : memref<32x144xbf16, #tpu.memory_space<vmem>>, vector<32x144xbf16>
    %c0_4 = arith.constant 0 : index
    %c0_5 = arith.constant 0 : index
    %c0_6 = arith.constant 0 : index
    %c0_7 = arith.constant 0 : index
    %9 = vector.load %arg2[%c0_4, %c0_5, %c0_6, %c0_7] : memref<1x1x144x196xbf16, #tpu.memory_space<vmem>>, vector<1x1x144x196xbf16>
    %10 = vector.shape_cast %9 : vector<1x1x144x196xbf16> to vector<144x196xbf16>
    %cst = arith.constant dense<0.000000e+00> : vector<32x196xf32>
    %11 = tpu.matmul %8, %10, %cst {dimension_numbers = #tpu.dot_dimension_numbers<[1], [0], [0], [1], [0, 0, 1, 1], [], []>} : vector<32x144xbf16>, vector<144x196xbf16>, vector<32x196xf32> -> vector<32x196xf32>
    %12 = arith.index_cast %arg0 : i32 to index
    %13 = arith.index_cast %arg1 : i32 to index
    %c0_8 = arith.constant 0 : index
    %c0_9 = arith.constant 0 : index
    %14 = vector.load %arg7[%12, %13, %c0_8, %c0_9] : memref<2x1x32x196xf32, #tpu.memory_space<vmem>>, vector<1x1x32x196xf32>
    %15 = vector.shape_cast %14 : vector<1x1x32x196xf32> to vector<32x196xf32>
    %16 = vector.shape_cast %11 : vector<32x196xf32> to vector<1x1x32x196xf32>
    tpu.vector_store %arg7[%12, %13, %c0_8, %c0_9], %16 {strides = array<i32>} : memref<2x1x32x196xf32, #tpu.memory_space<vmem>>, vector<1x1x32x196xf32>,
    %c0_10 = arith.constant 0 : index
    %c0_11 = arith.constant 0 : index
    %17 = vector.load %arg8[%c0_10, %c0_11] : memref<32x1xf32, #tpu.memory_space<vmem>>, vector<32x1xf32>
    %cst_12 = arith.constant dense<0.000000e+00> : vector<32xf32>
    %18 = vector.multi_reduction <add>, %11, %cst_12 [1] : vector<32x196xf32> to vector<32xf32>
    %19 = vector.shape_cast %18 : vector<32xf32> to vector<32x1xf32>
    %20 = arith.addf %17, %19 : vector<32x1xf32>
    %c0_13 = arith.constant 0 : index
    %c0_14 = arith.constant 0 : index
    %21 = vector.load %arg8[%c0_13, %c0_14] : memref<32x1xf32, #tpu.memory_space<vmem>>, vector<32x1xf32>
    tpu.vector_store %arg8[%c0_13, %c0_14], %20 {strides = array<i32>} : memref<32x1xf32, #tpu.memory_space<vmem>>, vector<32x1xf32>,
    %22 = arith.extui %5 : i1 to i32
    %c0_i32_15 = arith.constant 0 : i32
    %23 = arith.cmpi ne, %22, %c0_i32_15 : i32
    scf.if %23 {
      %c0_16 = arith.constant 0 : index
      %c0_17 = arith.constant 0 : index
      %24 = vector.load %arg6[%c0_16, %c0_17] : memref<32x32xf32, #tpu.memory_space<vmem>>, vector<32x32xf32>
      %c0_18 = arith.constant 0 : index
      %c0_19 = arith.constant 0 : index
      %25 = vector.load %arg8[%c0_18, %c0_19] : memref<32x1xf32, #tpu.memory_space<vmem>>, vector<32x1xf32>
      %cst_20 = arith.constant dense<0.000000e+00> : vector<32x1xf32>
      %26 = tpu.matmul %24, %25, %cst_20 {dimension_numbers = #tpu.dot_dimension_numbers<[1], [0], [0], [1], [0, 0, 1, 1], [], []>} : vector<32x32xf32>, vector<32x1xf32>, vector<32x1xf32> -> vector<32x1xf32>
      %cst_21 = arith.constant 6.37755089E-4 : f32
      %27 = vector.broadcast %cst_21 : f32 to vector<32x1xf32>
      %28 = arith.mulf %26, %27 : vector<32x1xf32>
      %cst_22 = arith.constant 0.000000e+00 : f32
      %29 = vector.broadcast %cst_22 : f32 to vector<32x1xf32>
      %c0_23 = arith.constant 0 : index
      %c0_24 = arith.constant 0 : index
      %c0_25 = arith.constant 0 : index
      %c0_26 = arith.constant 0 : index
      %30 = vector.load %arg7[%c0_23, %c0_24, %c0_25, %c0_26] : memref<2x1x32x196xf32, #tpu.memory_space<vmem>>, vector<1x1x32x196xf32>
      %31 = vector.shape_cast %30 : vector<1x1x32x196xf32> to vector<32x196xf32>
      %32 = vector.broadcast %28 : vector<32x1xf32> to vector<32x196xf32>
      %33 = arith.subf %31, %32 : vector<32x196xf32>
      %34 = arith.mulf %33, %33 : vector<32x196xf32>
      %cst_27 = arith.constant dense<0.000000e+00> : vector<32xf32>
      %35 = vector.multi_reduction <add>, %34, %cst_27 [1] : vector<32x196xf32> to vector<32xf32>
      %36 = vector.shape_cast %35 : vector<32xf32> to vector<32x1xf32>
      %37 = arith.addf %29, %36 : vector<32x1xf32>
      %c1 = arith.constant 1 : index
      %c0_28 = arith.constant 0 : index
      %c0_29 = arith.constant 0 : index
      %c0_30 = arith.constant 0 : index
      %38 = vector.load %arg7[%c1, %c0_28, %c0_29, %c0_30] : memref<2x1x32x196xf32, #tpu.memory_space<vmem>>, vector<1x1x32x196xf32>
      %39 = vector.shape_cast %38 : vector<1x1x32x196xf32> to vector<32x196xf32>
      %40 = vector.broadcast %28 : vector<32x1xf32> to vector<32x196xf32>
      %41 = arith.subf %39, %40 : vector<32x196xf32>
      %42 = arith.mulf %41, %41 : vector<32x196xf32>
      %cst_31 = arith.constant dense<0.000000e+00> : vector<32xf32>
      %43 = vector.multi_reduction <add>, %42, %cst_31 [1] : vector<32x196xf32> to vector<32xf32>
      %44 = vector.shape_cast %43 : vector<32xf32> to vector<32x1xf32>
      %45 = arith.addf %37, %44 : vector<32x1xf32>
      %c0_32 = arith.constant 0 : index
      %c0_33 = arith.constant 0 : index
      %46 = vector.load %arg6[%c0_32, %c0_33] : memref<32x32xf32, #tpu.memory_space<vmem>>, vector<32x32xf32>
      %cst_34 = arith.constant dense<0.000000e+00> : vector<32x1xf32>
      %47 = tpu.matmul %46, %45, %cst_34 {dimension_numbers = #tpu.dot_dimension_numbers<[1], [0], [0], [1], [0, 0, 1, 1], [], []>} : vector<32x32xf32>, vector<32x1xf32>, vector<32x1xf32> -> vector<32x1xf32>
      %cst_35 = arith.constant 6.37755089E-4 : f32
      %48 = vector.broadcast %cst_35 : f32 to vector<32x1xf32>
      %49 = arith.mulf %47, %48 : vector<32x1xf32>
      %c0_36 = arith.constant 0 : index
      %c0_37 = arith.constant 0 : index
      %50 = vector.load %arg4[%c0_36, %c0_37] : memref<32x1xf32, #tpu.memory_space<vmem>>, vector<32x1xf32>
      %cst_38 = arith.constant 9.99999974E-6 : f32
      %51 = vector.broadcast %cst_38 : f32 to vector<32x1xf32>
      %52 = arith.addf %49, %51 : vector<32x1xf32>
      %53 = math.rsqrt %52 : vector<32x1xf32>
      %54 = arith.mulf %50, %53 : vector<32x1xf32>
      %c0_39 = arith.constant 0 : index
      %c0_40 = arith.constant 0 : index
      %55 = vector.load %arg5[%c0_39, %c0_40] : memref<32x1xf32, #tpu.memory_space<vmem>>, vector<32x1xf32>
      %56 = arith.mulf %28, %54 : vector<32x1xf32>
      %57 = arith.subf %55, %56 : vector<32x1xf32>
      %c0_41 = arith.constant 0 : index
      %c0_42 = arith.constant 0 : index
      %c0_43 = arith.constant 0 : index
      %c0_44 = arith.constant 0 : index
      %58 = vector.load %arg7[%c0_41, %c0_42, %c0_43, %c0_44] : memref<2x1x32x196xf32, #tpu.memory_space<vmem>>, vector<1x1x32x196xf32>
      %59 = vector.shape_cast %58 : vector<1x1x32x196xf32> to vector<32x196xf32>
      %60 = vector.broadcast %54 : vector<32x1xf32> to vector<32x196xf32>
      %61 = arith.mulf %59, %60 : vector<32x196xf32>
      %62 = vector.broadcast %57 : vector<32x1xf32> to vector<32x196xf32>
      %63 = arith.addf %61, %62 : vector<32x196xf32>
      %cst_45 = arith.constant 0.000000e+00 : f32
      %64 = vector.broadcast %cst_45 : f32 to vector<32x196xf32>
      %65 = arith.maximumf %63, %64 : vector<32x196xf32>
      %c0_46 = arith.constant 0 : index
      %c0_47 = arith.constant 0 : index
      %c0_48 = arith.constant 0 : index
      %c0_49 = arith.constant 0 : index
      %66 = vector.load %arg7[%c0_46, %c0_47, %c0_48, %c0_49] : memref<2x1x32x196xf32, #tpu.memory_space<vmem>>, vector<1x1x32x196xf32>
      %67 = vector.shape_cast %66 : vector<1x1x32x196xf32> to vector<32x196xf32>
      %68 = vector.shape_cast %65 : vector<32x196xf32> to vector<1x1x32x196xf32>
      tpu.vector_store %arg7[%c0_46, %c0_47, %c0_48, %c0_49], %68 {strides = array<i32>} : memref<2x1x32x196xf32, #tpu.memory_space<vmem>>, vector<1x1x32x196xf32>,
      %c1_50 = arith.constant 1 : index
      %c0_51 = arith.constant 0 : index
      %c0_52 = arith.constant 0 : index
      %c0_53 = arith.constant 0 : index
      %69 = vector.load %arg7[%c1_50, %c0_51, %c0_52, %c0_53] : memref<2x1x32x196xf32, #tpu.memory_space<vmem>>, vector<1x1x32x196xf32>
      %70 = vector.shape_cast %69 : vector<1x1x32x196xf32> to vector<32x196xf32>
      %71 = vector.broadcast %54 : vector<32x1xf32> to vector<32x196xf32>
      %72 = arith.mulf %70, %71 : vector<32x196xf32>
      %73 = vector.broadcast %57 : vector<32x1xf32> to vector<32x196xf32>
      %74 = arith.addf %72, %73 : vector<32x196xf32>
      %cst_54 = arith.constant 0.000000e+00 : f32
      %75 = vector.broadcast %cst_54 : f32 to vector<32x196xf32>
      %76 = arith.maximumf %74, %75 : vector<32x196xf32>
      %c1_55 = arith.constant 1 : index
      %c0_56 = arith.constant 0 : index
      %c0_57 = arith.constant 0 : index
      %c0_58 = arith.constant 0 : index
      %77 = vector.load %arg7[%c1_55, %c0_56, %c0_57, %c0_58] : memref<2x1x32x196xf32, #tpu.memory_space<vmem>>, vector<1x1x32x196xf32>
      %78 = vector.shape_cast %77 : vector<1x1x32x196xf32> to vector<32x196xf32>
      %79 = vector.shape_cast %76 : vector<32x196xf32> to vector<1x1x32x196xf32>
      tpu.vector_store %arg7[%c1_55, %c0_56, %c0_57, %c0_58], %79 {strides = array<i32>} : memref<2x1x32x196xf32, #tpu.memory_space<vmem>>, vector<1x1x32x196xf32>,
    } else {
    }
    return
  }
  func.func @transform_0(%arg0: i32, %arg1: i32) -> (i32, i32, i32, i32) {
    %c0_i32 = arith.constant 0 : i32
    %c0_i32_0 = arith.constant 0 : i32
    %c0_i32_1 = arith.constant 0 : i32
    return %arg0, %arg1, %c0_i32, %c0_i32_0 : i32, i32, i32, i32
  }
  func.func @transform_1(%arg0: i32, %arg1: i32) -> (i32, i32) {
    %c0_i32 = arith.constant 0 : i32
    %c0_i32_0 = arith.constant 0 : i32
    %c0_i32_1 = arith.constant 0 : i32
    return %c0_i32, %c0_i32_0 : i32, i32
  }
  func.func @transform_2(%arg0: i32, %arg1: i32) -> (i32, i32) {
    %c0_i32 = arith.constant 0 : i32
    %c0_i32_0 = arith.constant 0 : i32
    %c0_i32_1 = arith.constant 0 : i32
    return %c0_i32, %c0_i32_0 : i32, i32
  }
  func.func @transform_3(%arg0: i32, %arg1: i32) -> (i32, i32) {
    %c0_i32 = arith.constant 0 : i32
    %c0_i32_0 = arith.constant 0 : i32
    %c0_i32_1 = arith.constant 0 : i32
    return %c0_i32, %c0_i32_0 : i32, i32
  }
  func.func @transform_4(%arg0: i32, %arg1: i32) -> (i32, i32) {
    %c0_i32 = arith.constant 0 : i32
    %c0_i32_0 = arith.constant 0 : i32
    %c0_i32_1 = arith.constant 0 : i32
    return %c0_i32, %c0_i32_0 : i32, i32
  }
  func.func @transform_5(%arg0: i32, %arg1: i32) -> (i32, i32, i32, i32) {
    %c0_i32 = arith.constant 0 : i32
    %c0_i32_0 = arith.constant 0 : i32
    %c0_i32_1 = arith.constant 0 : i32
    %c0_i32_2 = arith.constant 0 : i32
    %c0_i32_3 = arith.constant 0 : i32
    return %c0_i32, %c0_i32_0, %c0_i32_1, %c0_i32_2 : i32, i32, i32, i32
  }
}

module attributes {stable_mosaic.version = 11 : i64} {
  func.func @_conv_bn_relu_kernel(%arg0: i32, %arg1: i32, %arg2: memref<1x1x72x784xbf16, #tpu.memory_space<vmem>>, %arg3: memref<16x72xbf16, #tpu.memory_space<vmem>>, %arg4: memref<16x1xf32, #tpu.memory_space<vmem>>, %arg5: memref<16x1xf32, #tpu.memory_space<vmem>>, %arg6: memref<16x16xf32, #tpu.memory_space<vmem>>, %arg7: memref<2x1x16x784xf32, #tpu.memory_space<vmem>>, %arg8: memref<16x1xf32, #tpu.memory_space<vmem>>) attributes {dimension_semantics = [#tpu.dimension_semantics<arbitrary>, #tpu.dimension_semantics<arbitrary>], iteration_bounds = array<i64: 2, 1>, scalar_prefetch = 0 : i64, scratch_operands = 1 : i64, tpu.core_type = #tpu.core_type<tc>, window_params = [{transform_indices = @transform_0, window_bounds = array<i64: 1, 1, 72, 784>}, {pipeline_mode = #tpu.pipeline_mode<synchronous>, transform_indices = @transform_1, window_bounds = array<i64: 16, 72>}, {pipeline_mode = #tpu.pipeline_mode<synchronous>, transform_indices = @transform_2, window_bounds = array<i64: 16, 1>}, {pipeline_mode = #tpu.pipeline_mode<synchronous>, transform_indices = @transform_3, window_bounds = array<i64: 16, 1>}, {pipeline_mode = #tpu.pipeline_mode<synchronous>, transform_indices = @transform_4, window_bounds = array<i64: 16, 16>}, {pipeline_mode = #tpu.pipeline_mode<synchronous>, transform_indices = @transform_5, window_bounds = array<i64: 2, 1, 16, 784>}]} {
    %c0_i32 = arith.constant 0 : i32
    %0 = arith.cmpi eq, %arg0, %c0_i32 : i32
    %c0_i32_0 = arith.constant 0 : i32
    %1 = arith.cmpi eq, %arg1, %c0_i32_0 : i32
    %2 = arith.andi %0, %1 : i1
    %c1_i32 = arith.constant 1 : i32
    %3 = arith.cmpi eq, %arg0, %c1_i32 : i32
    %c0_i32_1 = arith.constant 0 : i32
    %4 = arith.cmpi eq, %arg1, %c0_i32_1 : i32
    %5 = arith.andi %3, %4 : i1
    %6 = arith.extui %2 : i1 to i32
    %c0_i32_2 = arith.constant 0 : i32
    %7 = arith.cmpi ne, %6, %c0_i32_2 : i32
    scf.if %7 {
      %cst_16 = arith.constant 0.000000e+00 : f32
      %24 = vector.broadcast %cst_16 : f32 to vector<16x1xf32>
      %c0_17 = arith.constant 0 : index
      %c0_18 = arith.constant 0 : index
      %25 = vector.load %arg8[%c0_17, %c0_18] : memref<16x1xf32, #tpu.memory_space<vmem>>, vector<16x1xf32>
      tpu.vector_store %arg8[%c0_17, %c0_18], %24 {strides = array<i32>} : memref<16x1xf32, #tpu.memory_space<vmem>>, vector<16x1xf32>,
    } else {
    }
    %c0 = arith.constant 0 : index
    %c0_3 = arith.constant 0 : index
    %8 = vector.load %arg3[%c0, %c0_3] : memref<16x72xbf16, #tpu.memory_space<vmem>>, vector<16x72xbf16>
    %c0_4 = arith.constant 0 : index
    %c0_5 = arith.constant 0 : index
    %c0_6 = arith.constant 0 : index
    %c0_7 = arith.constant 0 : index
    %9 = vector.load %arg2[%c0_4, %c0_5, %c0_6, %c0_7] : memref<1x1x72x784xbf16, #tpu.memory_space<vmem>>, vector<1x1x72x784xbf16>
    %10 = vector.shape_cast %9 : vector<1x1x72x784xbf16> to vector<72x784xbf16>
    %cst = arith.constant dense<0.000000e+00> : vector<16x784xf32>
    %11 = tpu.matmul %8, %10, %cst {dimension_numbers = #tpu.dot_dimension_numbers<[1], [0], [0], [1], [0, 0, 1, 1], [], []>} : vector<16x72xbf16>, vector<72x784xbf16>, vector<16x784xf32> -> vector<16x784xf32>
    %12 = arith.index_cast %arg0 : i32 to index
    %13 = arith.index_cast %arg1 : i32 to index
    %c0_8 = arith.constant 0 : index
    %c0_9 = arith.constant 0 : index
    %14 = vector.load %arg7[%12, %13, %c0_8, %c0_9] : memref<2x1x16x784xf32, #tpu.memory_space<vmem>>, vector<1x1x16x784xf32>
    %15 = vector.shape_cast %14 : vector<1x1x16x784xf32> to vector<16x784xf32>
    %16 = vector.shape_cast %11 : vector<16x784xf32> to vector<1x1x16x784xf32>
    tpu.vector_store %arg7[%12, %13, %c0_8, %c0_9], %16 {strides = array<i32>} : memref<2x1x16x784xf32, #tpu.memory_space<vmem>>, vector<1x1x16x784xf32>,
    %c0_10 = arith.constant 0 : index
    %c0_11 = arith.constant 0 : index
    %17 = vector.load %arg8[%c0_10, %c0_11] : memref<16x1xf32, #tpu.memory_space<vmem>>, vector<16x1xf32>
    %cst_12 = arith.constant dense<0.000000e+00> : vector<16xf32>
    %18 = vector.multi_reduction <add>, %11, %cst_12 [1] : vector<16x784xf32> to vector<16xf32>
    %19 = vector.shape_cast %18 : vector<16xf32> to vector<16x1xf32>
    %20 = arith.addf %17, %19 : vector<16x1xf32>
    %c0_13 = arith.constant 0 : index
    %c0_14 = arith.constant 0 : index
    %21 = vector.load %arg8[%c0_13, %c0_14] : memref<16x1xf32, #tpu.memory_space<vmem>>, vector<16x1xf32>
    tpu.vector_store %arg8[%c0_13, %c0_14], %20 {strides = array<i32>} : memref<16x1xf32, #tpu.memory_space<vmem>>, vector<16x1xf32>,
    %22 = arith.extui %5 : i1 to i32
    %c0_i32_15 = arith.constant 0 : i32
    %23 = arith.cmpi ne, %22, %c0_i32_15 : i32
    scf.if %23 {
      %c0_16 = arith.constant 0 : index
      %c0_17 = arith.constant 0 : index
      %24 = vector.load %arg6[%c0_16, %c0_17] : memref<16x16xf32, #tpu.memory_space<vmem>>, vector<16x16xf32>
      %c0_18 = arith.constant 0 : index
      %c0_19 = arith.constant 0 : index
      %25 = vector.load %arg8[%c0_18, %c0_19] : memref<16x1xf32, #tpu.memory_space<vmem>>, vector<16x1xf32>
      %cst_20 = arith.constant dense<0.000000e+00> : vector<16x1xf32>
      %26 = tpu.matmul %24, %25, %cst_20 {dimension_numbers = #tpu.dot_dimension_numbers<[1], [0], [0], [1], [0, 0, 1, 1], [], []>} : vector<16x16xf32>, vector<16x1xf32>, vector<16x1xf32> -> vector<16x1xf32>
      %cst_21 = arith.constant 1.59438772E-4 : f32
      %27 = vector.broadcast %cst_21 : f32 to vector<16x1xf32>
      %28 = arith.mulf %26, %27 : vector<16x1xf32>
      %cst_22 = arith.constant 0.000000e+00 : f32
      %29 = vector.broadcast %cst_22 : f32 to vector<16x1xf32>
      %c0_23 = arith.constant 0 : index
      %c0_24 = arith.constant 0 : index
      %c0_25 = arith.constant 0 : index
      %c0_26 = arith.constant 0 : index
      %30 = vector.load %arg7[%c0_23, %c0_24, %c0_25, %c0_26] : memref<2x1x16x784xf32, #tpu.memory_space<vmem>>, vector<1x1x16x784xf32>
      %31 = vector.shape_cast %30 : vector<1x1x16x784xf32> to vector<16x784xf32>
      %32 = vector.broadcast %28 : vector<16x1xf32> to vector<16x784xf32>
      %33 = arith.subf %31, %32 : vector<16x784xf32>
      %34 = arith.mulf %33, %33 : vector<16x784xf32>
      %cst_27 = arith.constant dense<0.000000e+00> : vector<16xf32>
      %35 = vector.multi_reduction <add>, %34, %cst_27 [1] : vector<16x784xf32> to vector<16xf32>
      %36 = vector.shape_cast %35 : vector<16xf32> to vector<16x1xf32>
      %37 = arith.addf %29, %36 : vector<16x1xf32>
      %c1 = arith.constant 1 : index
      %c0_28 = arith.constant 0 : index
      %c0_29 = arith.constant 0 : index
      %c0_30 = arith.constant 0 : index
      %38 = vector.load %arg7[%c1, %c0_28, %c0_29, %c0_30] : memref<2x1x16x784xf32, #tpu.memory_space<vmem>>, vector<1x1x16x784xf32>
      %39 = vector.shape_cast %38 : vector<1x1x16x784xf32> to vector<16x784xf32>
      %40 = vector.broadcast %28 : vector<16x1xf32> to vector<16x784xf32>
      %41 = arith.subf %39, %40 : vector<16x784xf32>
      %42 = arith.mulf %41, %41 : vector<16x784xf32>
      %cst_31 = arith.constant dense<0.000000e+00> : vector<16xf32>
      %43 = vector.multi_reduction <add>, %42, %cst_31 [1] : vector<16x784xf32> to vector<16xf32>
      %44 = vector.shape_cast %43 : vector<16xf32> to vector<16x1xf32>
      %45 = arith.addf %37, %44 : vector<16x1xf32>
      %c0_32 = arith.constant 0 : index
      %c0_33 = arith.constant 0 : index
      %46 = vector.load %arg6[%c0_32, %c0_33] : memref<16x16xf32, #tpu.memory_space<vmem>>, vector<16x16xf32>
      %cst_34 = arith.constant dense<0.000000e+00> : vector<16x1xf32>
      %47 = tpu.matmul %46, %45, %cst_34 {dimension_numbers = #tpu.dot_dimension_numbers<[1], [0], [0], [1], [0, 0, 1, 1], [], []>} : vector<16x16xf32>, vector<16x1xf32>, vector<16x1xf32> -> vector<16x1xf32>
      %cst_35 = arith.constant 1.59438772E-4 : f32
      %48 = vector.broadcast %cst_35 : f32 to vector<16x1xf32>
      %49 = arith.mulf %47, %48 : vector<16x1xf32>
      %c0_36 = arith.constant 0 : index
      %c0_37 = arith.constant 0 : index
      %50 = vector.load %arg4[%c0_36, %c0_37] : memref<16x1xf32, #tpu.memory_space<vmem>>, vector<16x1xf32>
      %cst_38 = arith.constant 9.99999974E-6 : f32
      %51 = vector.broadcast %cst_38 : f32 to vector<16x1xf32>
      %52 = arith.addf %49, %51 : vector<16x1xf32>
      %53 = math.rsqrt %52 : vector<16x1xf32>
      %54 = arith.mulf %50, %53 : vector<16x1xf32>
      %c0_39 = arith.constant 0 : index
      %c0_40 = arith.constant 0 : index
      %55 = vector.load %arg5[%c0_39, %c0_40] : memref<16x1xf32, #tpu.memory_space<vmem>>, vector<16x1xf32>
      %56 = arith.mulf %28, %54 : vector<16x1xf32>
      %57 = arith.subf %55, %56 : vector<16x1xf32>
      %c0_41 = arith.constant 0 : index
      %c0_42 = arith.constant 0 : index
      %c0_43 = arith.constant 0 : index
      %c0_44 = arith.constant 0 : index
      %58 = vector.load %arg7[%c0_41, %c0_42, %c0_43, %c0_44] : memref<2x1x16x784xf32, #tpu.memory_space<vmem>>, vector<1x1x16x784xf32>
      %59 = vector.shape_cast %58 : vector<1x1x16x784xf32> to vector<16x784xf32>
      %60 = vector.broadcast %54 : vector<16x1xf32> to vector<16x784xf32>
      %61 = arith.mulf %59, %60 : vector<16x784xf32>
      %62 = vector.broadcast %57 : vector<16x1xf32> to vector<16x784xf32>
      %63 = arith.addf %61, %62 : vector<16x784xf32>
      %cst_45 = arith.constant 0.000000e+00 : f32
      %64 = vector.broadcast %cst_45 : f32 to vector<16x784xf32>
      %65 = arith.maximumf %63, %64 : vector<16x784xf32>
      %c0_46 = arith.constant 0 : index
      %c0_47 = arith.constant 0 : index
      %c0_48 = arith.constant 0 : index
      %c0_49 = arith.constant 0 : index
      %66 = vector.load %arg7[%c0_46, %c0_47, %c0_48, %c0_49] : memref<2x1x16x784xf32, #tpu.memory_space<vmem>>, vector<1x1x16x784xf32>
      %67 = vector.shape_cast %66 : vector<1x1x16x784xf32> to vector<16x784xf32>
      %68 = vector.shape_cast %65 : vector<16x784xf32> to vector<1x1x16x784xf32>
      tpu.vector_store %arg7[%c0_46, %c0_47, %c0_48, %c0_49], %68 {strides = array<i32>} : memref<2x1x16x784xf32, #tpu.memory_space<vmem>>, vector<1x1x16x784xf32>,
      %c1_50 = arith.constant 1 : index
      %c0_51 = arith.constant 0 : index
      %c0_52 = arith.constant 0 : index
      %c0_53 = arith.constant 0 : index
      %69 = vector.load %arg7[%c1_50, %c0_51, %c0_52, %c0_53] : memref<2x1x16x784xf32, #tpu.memory_space<vmem>>, vector<1x1x16x784xf32>
      %70 = vector.shape_cast %69 : vector<1x1x16x784xf32> to vector<16x784xf32>
      %71 = vector.broadcast %54 : vector<16x1xf32> to vector<16x784xf32>
      %72 = arith.mulf %70, %71 : vector<16x784xf32>
      %73 = vector.broadcast %57 : vector<16x1xf32> to vector<16x784xf32>
      %74 = arith.addf %72, %73 : vector<16x784xf32>
      %cst_54 = arith.constant 0.000000e+00 : f32
      %75 = vector.broadcast %cst_54 : f32 to vector<16x784xf32>
      %76 = arith.maximumf %74, %75 : vector<16x784xf32>
      %c1_55 = arith.constant 1 : index
      %c0_56 = arith.constant 0 : index
      %c0_57 = arith.constant 0 : index
      %c0_58 = arith.constant 0 : index
      %77 = vector.load %arg7[%c1_55, %c0_56, %c0_57, %c0_58] : memref<2x1x16x784xf32, #tpu.memory_space<vmem>>, vector<1x1x16x784xf32>
      %78 = vector.shape_cast %77 : vector<1x1x16x784xf32> to vector<16x784xf32>
      %79 = vector.shape_cast %76 : vector<16x784xf32> to vector<1x1x16x784xf32>
      tpu.vector_store %arg7[%c1_55, %c0_56, %c0_57, %c0_58], %79 {strides = array<i32>} : memref<2x1x16x784xf32, #tpu.memory_space<vmem>>, vector<1x1x16x784xf32>,
    } else {
    }
    return
  }
  func.func @transform_0(%arg0: i32, %arg1: i32) -> (i32, i32, i32, i32) {
    %c0_i32 = arith.constant 0 : i32
    %c0_i32_0 = arith.constant 0 : i32
    %c0_i32_1 = arith.constant 0 : i32
    return %arg0, %arg1, %c0_i32, %c0_i32_0 : i32, i32, i32, i32
  }
  func.func @transform_1(%arg0: i32, %arg1: i32) -> (i32, i32) {
    %c0_i32 = arith.constant 0 : i32
    %c0_i32_0 = arith.constant 0 : i32
    %c0_i32_1 = arith.constant 0 : i32
    return %c0_i32, %c0_i32_0 : i32, i32
  }
  func.func @transform_2(%arg0: i32, %arg1: i32) -> (i32, i32) {
    %c0_i32 = arith.constant 0 : i32
    %c0_i32_0 = arith.constant 0 : i32
    %c0_i32_1 = arith.constant 0 : i32
    return %c0_i32, %c0_i32_0 : i32, i32
  }
  func.func @transform_3(%arg0: i32, %arg1: i32) -> (i32, i32) {
    %c0_i32 = arith.constant 0 : i32
    %c0_i32_0 = arith.constant 0 : i32
    %c0_i32_1 = arith.constant 0 : i32
    return %c0_i32, %c0_i32_0 : i32, i32
  }
  func.func @transform_4(%arg0: i32, %arg1: i32) -> (i32, i32) {
    %c0_i32 = arith.constant 0 : i32
    %c0_i32_0 = arith.constant 0 : i32
    %c0_i32_1 = arith.constant 0 : i32
    return %c0_i32, %c0_i32_0 : i32, i32
  }
  func.func @transform_5(%arg0: i32, %arg1: i32) -> (i32, i32, i32, i32) {
    %c0_i32 = arith.constant 0 : i32
    %c0_i32_0 = arith.constant 0 : i32
    %c0_i32_1 = arith.constant 0 : i32
    %c0_i32_2 = arith.constant 0 : i32
    %c0_i32_3 = arith.constant 0 : i32
    return %c0_i32, %c0_i32_0, %c0_i32_1, %c0_i32_2 : i32, i32, i32, i32
  }
}

module attributes {stable_mosaic.version = 11 : i64} {
  func.func @_conv_bn_relu_kernel(%arg0: i32, %arg1: i32, %arg2: memref<1x1x36x784xbf16, #tpu.memory_space<vmem>>, %arg3: memref<8x36xbf16, #tpu.memory_space<vmem>>, %arg4: memref<8x1xf32, #tpu.memory_space<vmem>>, %arg5: memref<8x1xf32, #tpu.memory_space<vmem>>, %arg6: memref<8x8xf32, #tpu.memory_space<vmem>>, %arg7: memref<2x4x8x784xf32, #tpu.memory_space<vmem>>, %arg8: memref<8x1xf32, #tpu.memory_space<vmem>>) attributes {dimension_semantics = [#tpu.dimension_semantics<arbitrary>, #tpu.dimension_semantics<arbitrary>], iteration_bounds = array<i64: 2, 4>, scalar_prefetch = 0 : i64, scratch_operands = 1 : i64, tpu.core_type = #tpu.core_type<tc>, window_params = [{transform_indices = @transform_0, window_bounds = array<i64: 1, 1, 36, 784>}, {pipeline_mode = #tpu.pipeline_mode<synchronous>, transform_indices = @transform_1, window_bounds = array<i64: 8, 36>}, {pipeline_mode = #tpu.pipeline_mode<synchronous>, transform_indices = @transform_2, window_bounds = array<i64: 8, 1>}, {pipeline_mode = #tpu.pipeline_mode<synchronous>, transform_indices = @transform_3, window_bounds = array<i64: 8, 1>}, {pipeline_mode = #tpu.pipeline_mode<synchronous>, transform_indices = @transform_4, window_bounds = array<i64: 8, 8>}, {pipeline_mode = #tpu.pipeline_mode<synchronous>, transform_indices = @transform_5, window_bounds = array<i64: 2, 4, 8, 784>}]} {
    %c0_i32 = arith.constant 0 : i32
    %0 = arith.cmpi eq, %arg0, %c0_i32 : i32
    %c0_i32_0 = arith.constant 0 : i32
    %1 = arith.cmpi eq, %arg1, %c0_i32_0 : i32
    %2 = arith.andi %0, %1 : i1
    %c1_i32 = arith.constant 1 : i32
    %3 = arith.cmpi eq, %arg0, %c1_i32 : i32
    %c3_i32 = arith.constant 3 : i32
    %4 = arith.cmpi eq, %arg1, %c3_i32 : i32
    %5 = arith.andi %3, %4 : i1
    %6 = arith.extui %2 : i1 to i32
    %c0_i32_1 = arith.constant 0 : i32
    %7 = arith.cmpi ne, %6, %c0_i32_1 : i32
    scf.if %7 {
      %cst_15 = arith.constant 0.000000e+00 : f32
      %24 = vector.broadcast %cst_15 : f32 to vector<8x1xf32>
      %c0_16 = arith.constant 0 : index
      %c0_17 = arith.constant 0 : index
      %25 = vector.load %arg8[%c0_16, %c0_17] : memref<8x1xf32, #tpu.memory_space<vmem>>, vector<8x1xf32>
      tpu.vector_store %arg8[%c0_16, %c0_17], %24 {strides = array<i32>} : memref<8x1xf32, #tpu.memory_space<vmem>>, vector<8x1xf32>,
    } else {
    }
    %c0 = arith.constant 0 : index
    %c0_2 = arith.constant 0 : index
    %8 = vector.load %arg3[%c0, %c0_2] : memref<8x36xbf16, #tpu.memory_space<vmem>>, vector<8x36xbf16>
    %c0_3 = arith.constant 0 : index
    %c0_4 = arith.constant 0 : index
    %c0_5 = arith.constant 0 : index
    %c0_6 = arith.constant 0 : index
    %9 = vector.load %arg2[%c0_3, %c0_4, %c0_5, %c0_6] : memref<1x1x36x784xbf16, #tpu.memory_space<vmem>>, vector<1x1x36x784xbf16>
    %10 = vector.shape_cast %9 : vector<1x1x36x784xbf16> to vector<36x784xbf16>
    %cst = arith.constant dense<0.000000e+00> : vector<8x784xf32>
    %11 = tpu.matmul %8, %10, %cst {dimension_numbers = #tpu.dot_dimension_numbers<[1], [0], [0], [1], [0, 0, 1, 1], [], []>} : vector<8x36xbf16>, vector<36x784xbf16>, vector<8x784xf32> -> vector<8x784xf32>
    %12 = arith.index_cast %arg0 : i32 to index
    %13 = arith.index_cast %arg1 : i32 to index
    %c0_7 = arith.constant 0 : index
    %c0_8 = arith.constant 0 : index
    %14 = vector.load %arg7[%12, %13, %c0_7, %c0_8] : memref<2x4x8x784xf32, #tpu.memory_space<vmem>>, vector<1x1x8x784xf32>
    %15 = vector.shape_cast %14 : vector<1x1x8x784xf32> to vector<8x784xf32>
    %16 = vector.shape_cast %11 : vector<8x784xf32> to vector<1x1x8x784xf32>
    tpu.vector_store %arg7[%12, %13, %c0_7, %c0_8], %16 {strides = array<i32>} : memref<2x4x8x784xf32, #tpu.memory_space<vmem>>, vector<1x1x8x784xf32>,
    %c0_9 = arith.constant 0 : index
    %c0_10 = arith.constant 0 : index
    %17 = vector.load %arg8[%c0_9, %c0_10] : memref<8x1xf32, #tpu.memory_space<vmem>>, vector<8x1xf32>
    %cst_11 = arith.constant dense<0.000000e+00> : vector<8xf32>
    %18 = vector.multi_reduction <add>, %11, %cst_11 [1] : vector<8x784xf32> to vector<8xf32>
    %19 = vector.shape_cast %18 : vector<8xf32> to vector<8x1xf32>
    %20 = arith.addf %17, %19 : vector<8x1xf32>
    %c0_12 = arith.constant 0 : index
    %c0_13 = arith.constant 0 : index
    %21 = vector.load %arg8[%c0_12, %c0_13] : memref<8x1xf32, #tpu.memory_space<vmem>>, vector<8x1xf32>
    tpu.vector_store %arg8[%c0_12, %c0_13], %20 {strides = array<i32>} : memref<8x1xf32, #tpu.memory_space<vmem>>, vector<8x1xf32>,
    %22 = arith.extui %5 : i1 to i32
    %c0_i32_14 = arith.constant 0 : i32
    %23 = arith.cmpi ne, %22, %c0_i32_14 : i32
    scf.if %23 {
      %c0_15 = arith.constant 0 : index
      %c0_16 = arith.constant 0 : index
      %24 = vector.load %arg6[%c0_15, %c0_16] : memref<8x8xf32, #tpu.memory_space<vmem>>, vector<8x8xf32>
      %c0_17 = arith.constant 0 : index
      %c0_18 = arith.constant 0 : index
      %25 = vector.load %arg8[%c0_17, %c0_18] : memref<8x1xf32, #tpu.memory_space<vmem>>, vector<8x1xf32>
      %cst_19 = arith.constant dense<0.000000e+00> : vector<8x1xf32>
      %26 = tpu.matmul %24, %25, %cst_19 {dimension_numbers = #tpu.dot_dimension_numbers<[1], [0], [0], [1], [0, 0, 1, 1], [], []>} : vector<8x8xf32>, vector<8x1xf32>, vector<8x1xf32> -> vector<8x1xf32>
      %cst_20 = arith.constant 3.98596931E-5 : f32
      %27 = vector.broadcast %cst_20 : f32 to vector<8x1xf32>
      %28 = arith.mulf %26, %27 : vector<8x1xf32>
      %cst_21 = arith.constant 0.000000e+00 : f32
      %29 = vector.broadcast %cst_21 : f32 to vector<8x1xf32>
      %c0_22 = arith.constant 0 : index
      %c0_23 = arith.constant 0 : index
      %c0_24 = arith.constant 0 : index
      %c0_25 = arith.constant 0 : index
      %30 = vector.load %arg7[%c0_22, %c0_23, %c0_24, %c0_25] : memref<2x4x8x784xf32, #tpu.memory_space<vmem>>, vector<1x1x8x784xf32>
      %31 = vector.shape_cast %30 : vector<1x1x8x784xf32> to vector<8x784xf32>
      %32 = vector.broadcast %28 : vector<8x1xf32> to vector<8x784xf32>
      %33 = arith.subf %31, %32 : vector<8x784xf32>
      %34 = arith.mulf %33, %33 : vector<8x784xf32>
      %cst_26 = arith.constant dense<0.000000e+00> : vector<8xf32>
      %35 = vector.multi_reduction <add>, %34, %cst_26 [1] : vector<8x784xf32> to vector<8xf32>
      %36 = vector.shape_cast %35 : vector<8xf32> to vector<8x1xf32>
      %37 = arith.addf %29, %36 : vector<8x1xf32>
      %c0_27 = arith.constant 0 : index
      %c1 = arith.constant 1 : index
      %c0_28 = arith.constant 0 : index
      %c0_29 = arith.constant 0 : index
      %38 = vector.load %arg7[%c0_27, %c1, %c0_28, %c0_29] : memref<2x4x8x784xf32, #tpu.memory_space<vmem>>, vector<1x1x8x784xf32>
      %39 = vector.shape_cast %38 : vector<1x1x8x784xf32> to vector<8x784xf32>
      %40 = vector.broadcast %28 : vector<8x1xf32> to vector<8x784xf32>
      %41 = arith.subf %39, %40 : vector<8x784xf32>
      %42 = arith.mulf %41, %41 : vector<8x784xf32>
      %cst_30 = arith.constant dense<0.000000e+00> : vector<8xf32>
      %43 = vector.multi_reduction <add>, %42, %cst_30 [1] : vector<8x784xf32> to vector<8xf32>
      %44 = vector.shape_cast %43 : vector<8xf32> to vector<8x1xf32>
      %45 = arith.addf %37, %44 : vector<8x1xf32>
      %c0_31 = arith.constant 0 : index
      %c2 = arith.constant 2 : index
      %c0_32 = arith.constant 0 : index
      %c0_33 = arith.constant 0 : index
      %46 = vector.load %arg7[%c0_31, %c2, %c0_32, %c0_33] : memref<2x4x8x784xf32, #tpu.memory_space<vmem>>, vector<1x1x8x784xf32>
      %47 = vector.shape_cast %46 : vector<1x1x8x784xf32> to vector<8x784xf32>
      %48 = vector.broadcast %28 : vector<8x1xf32> to vector<8x784xf32>
      %49 = arith.subf %47, %48 : vector<8x784xf32>
      %50 = arith.mulf %49, %49 : vector<8x784xf32>
      %cst_34 = arith.constant dense<0.000000e+00> : vector<8xf32>
      %51 = vector.multi_reduction <add>, %50, %cst_34 [1] : vector<8x784xf32> to vector<8xf32>
      %52 = vector.shape_cast %51 : vector<8xf32> to vector<8x1xf32>
      %53 = arith.addf %45, %52 : vector<8x1xf32>
      %c0_35 = arith.constant 0 : index
      %c3 = arith.constant 3 : index
      %c0_36 = arith.constant 0 : index
      %c0_37 = arith.constant 0 : index
      %54 = vector.load %arg7[%c0_35, %c3, %c0_36, %c0_37] : memref<2x4x8x784xf32, #tpu.memory_space<vmem>>, vector<1x1x8x784xf32>
      %55 = vector.shape_cast %54 : vector<1x1x8x784xf32> to vector<8x784xf32>
      %56 = vector.broadcast %28 : vector<8x1xf32> to vector<8x784xf32>
      %57 = arith.subf %55, %56 : vector<8x784xf32>
      %58 = arith.mulf %57, %57 : vector<8x784xf32>
      %cst_38 = arith.constant dense<0.000000e+00> : vector<8xf32>
      %59 = vector.multi_reduction <add>, %58, %cst_38 [1] : vector<8x784xf32> to vector<8xf32>
      %60 = vector.shape_cast %59 : vector<8xf32> to vector<8x1xf32>
      %61 = arith.addf %53, %60 : vector<8x1xf32>
      %c1_39 = arith.constant 1 : index
      %c0_40 = arith.constant 0 : index
      %c0_41 = arith.constant 0 : index
      %c0_42 = arith.constant 0 : index
      %62 = vector.load %arg7[%c1_39, %c0_40, %c0_41, %c0_42] : memref<2x4x8x784xf32, #tpu.memory_space<vmem>>, vector<1x1x8x784xf32>
      %63 = vector.shape_cast %62 : vector<1x1x8x784xf32> to vector<8x784xf32>
      %64 = vector.broadcast %28 : vector<8x1xf32> to vector<8x784xf32>
      %65 = arith.subf %63, %64 : vector<8x784xf32>
      %66 = arith.mulf %65, %65 : vector<8x784xf32>
      %cst_43 = arith.constant dense<0.000000e+00> : vector<8xf32>
      %67 = vector.multi_reduction <add>, %66, %cst_43 [1] : vector<8x784xf32> to vector<8xf32>
      %68 = vector.shape_cast %67 : vector<8xf32> to vector<8x1xf32>
      %69 = arith.addf %61, %68 : vector<8x1xf32>
      %c1_44 = arith.constant 1 : index
      %c1_45 = arith.constant 1 : index
      %c0_46 = arith.constant 0 : index
      %c0_47 = arith.constant 0 : index
      %70 = vector.load %arg7[%c1_44, %c1_45, %c0_46, %c0_47] : memref<2x4x8x784xf32, #tpu.memory_space<vmem>>, vector<1x1x8x784xf32>
      %71 = vector.shape_cast %70 : vector<1x1x8x784xf32> to vector<8x784xf32>
      %72 = vector.broadcast %28 : vector<8x1xf32> to vector<8x784xf32>
      %73 = arith.subf %71, %72 : vector<8x784xf32>
      %74 = arith.mulf %73, %73 : vector<8x784xf32>
      %cst_48 = arith.constant dense<0.000000e+00> : vector<8xf32>
      %75 = vector.multi_reduction <add>, %74, %cst_48 [1] : vector<8x784xf32> to vector<8xf32>
      %76 = vector.shape_cast %75 : vector<8xf32> to vector<8x1xf32>
      %77 = arith.addf %69, %76 : vector<8x1xf32>
      %c1_49 = arith.constant 1 : index
      %c2_50 = arith.constant 2 : index
      %c0_51 = arith.constant 0 : index
      %c0_52 = arith.constant 0 : index
      %78 = vector.load %arg7[%c1_49, %c2_50, %c0_51, %c0_52] : memref<2x4x8x784xf32, #tpu.memory_space<vmem>>, vector<1x1x8x784xf32>
      %79 = vector.shape_cast %78 : vector<1x1x8x784xf32> to vector<8x784xf32>
      %80 = vector.broadcast %28 : vector<8x1xf32> to vector<8x784xf32>
      %81 = arith.subf %79, %80 : vector<8x784xf32>
      %82 = arith.mulf %81, %81 : vector<8x784xf32>
      %cst_53 = arith.constant dense<0.000000e+00> : vector<8xf32>
      %83 = vector.multi_reduction <add>, %82, %cst_53 [1] : vector<8x784xf32> to vector<8xf32>
      %84 = vector.shape_cast %83 : vector<8xf32> to vector<8x1xf32>
      %85 = arith.addf %77, %84 : vector<8x1xf32>
      %c1_54 = arith.constant 1 : index
      %c3_55 = arith.constant 3 : index
      %c0_56 = arith.constant 0 : index
      %c0_57 = arith.constant 0 : index
      %86 = vector.load %arg7[%c1_54, %c3_55, %c0_56, %c0_57] : memref<2x4x8x784xf32, #tpu.memory_space<vmem>>, vector<1x1x8x784xf32>
      %87 = vector.shape_cast %86 : vector<1x1x8x784xf32> to vector<8x784xf32>
      %88 = vector.broadcast %28 : vector<8x1xf32> to vector<8x784xf32>
      %89 = arith.subf %87, %88 : vector<8x784xf32>
      %90 = arith.mulf %89, %89 : vector<8x784xf32>
      %cst_58 = arith.constant dense<0.000000e+00> : vector<8xf32>
      %91 = vector.multi_reduction <add>, %90, %cst_58 [1] : vector<8x784xf32> to vector<8xf32>
      %92 = vector.shape_cast %91 : vector<8xf32> to vector<8x1xf32>
      %93 = arith.addf %85, %92 : vector<8x1xf32>
      %c0_59 = arith.constant 0 : index
      %c0_60 = arith.constant 0 : index
      %94 = vector.load %arg6[%c0_59, %c0_60] : memref<8x8xf32, #tpu.memory_space<vmem>>, vector<8x8xf32>
      %cst_61 = arith.constant dense<0.000000e+00> : vector<8x1xf32>
      %95 = tpu.matmul %94, %93, %cst_61 {dimension_numbers = #tpu.dot_dimension_numbers<[1], [0], [0], [1], [0, 0, 1, 1], [], []>} : vector<8x8xf32>, vector<8x1xf32>, vector<8x1xf32> -> vector<8x1xf32>
      %cst_62 = arith.constant 3.98596931E-5 : f32
      %96 = vector.broadcast %cst_62 : f32 to vector<8x1xf32>
      %97 = arith.mulf %95, %96 : vector<8x1xf32>
      %c0_63 = arith.constant 0 : index
      %c0_64 = arith.constant 0 : index
      %98 = vector.load %arg4[%c0_63, %c0_64] : memref<8x1xf32, #tpu.memory_space<vmem>>, vector<8x1xf32>
      %cst_65 = arith.constant 9.99999974E-6 : f32
      %99 = vector.broadcast %cst_65 : f32 to vector<8x1xf32>
      %100 = arith.addf %97, %99 : vector<8x1xf32>
      %101 = math.rsqrt %100 : vector<8x1xf32>
      %102 = arith.mulf %98, %101 : vector<8x1xf32>
      %c0_66 = arith.constant 0 : index
      %c0_67 = arith.constant 0 : index
      %103 = vector.load %arg5[%c0_66, %c0_67] : memref<8x1xf32, #tpu.memory_space<vmem>>, vector<8x1xf32>
      %104 = arith.mulf %28, %102 : vector<8x1xf32>
      %105 = arith.subf %103, %104 : vector<8x1xf32>
      %c0_68 = arith.constant 0 : index
      %c0_69 = arith.constant 0 : index
      %c0_70 = arith.constant 0 : index
      %c0_71 = arith.constant 0 : index
      %106 = vector.load %arg7[%c0_68, %c0_69, %c0_70, %c0_71] : memref<2x4x8x784xf32, #tpu.memory_space<vmem>>, vector<1x1x8x784xf32>
      %107 = vector.shape_cast %106 : vector<1x1x8x784xf32> to vector<8x784xf32>
      %108 = vector.broadcast %102 : vector<8x1xf32> to vector<8x784xf32>
      %109 = arith.mulf %107, %108 : vector<8x784xf32>
      %110 = vector.broadcast %105 : vector<8x1xf32> to vector<8x784xf32>
      %111 = arith.addf %109, %110 : vector<8x784xf32>
      %cst_72 = arith.constant 0.000000e+00 : f32
      %112 = vector.broadcast %cst_72 : f32 to vector<8x784xf32>
      %113 = arith.maximumf %111, %112 : vector<8x784xf32>
      %c0_73 = arith.constant 0 : index
      %c0_74 = arith.constant 0 : index
      %c0_75 = arith.constant 0 : index
      %c0_76 = arith.constant 0 : index
      %114 = vector.load %arg7[%c0_73, %c0_74, %c0_75, %c0_76] : memref<2x4x8x784xf32, #tpu.memory_space<vmem>>, vector<1x1x8x784xf32>
      %115 = vector.shape_cast %114 : vector<1x1x8x784xf32> to vector<8x784xf32>
      %116 = vector.shape_cast %113 : vector<8x784xf32> to vector<1x1x8x784xf32>
      tpu.vector_store %arg7[%c0_73, %c0_74, %c0_75, %c0_76], %116 {strides = array<i32>} : memref<2x4x8x784xf32, #tpu.memory_space<vmem>>, vector<1x1x8x784xf32>,
      %c0_77 = arith.constant 0 : index
      %c1_78 = arith.constant 1 : index
      %c0_79 = arith.constant 0 : index
      %c0_80 = arith.constant 0 : index
      %117 = vector.load %arg7[%c0_77, %c1_78, %c0_79, %c0_80] : memref<2x4x8x784xf32, #tpu.memory_space<vmem>>, vector<1x1x8x784xf32>
      %118 = vector.shape_cast %117 : vector<1x1x8x784xf32> to vector<8x784xf32>
      %119 = vector.broadcast %102 : vector<8x1xf32> to vector<8x784xf32>
      %120 = arith.mulf %118, %119 : vector<8x784xf32>
      %121 = vector.broadcast %105 : vector<8x1xf32> to vector<8x784xf32>
      %122 = arith.addf %120, %121 : vector<8x784xf32>
      %cst_81 = arith.constant 0.000000e+00 : f32
      %123 = vector.broadcast %cst_81 : f32 to vector<8x784xf32>
      %124 = arith.maximumf %122, %123 : vector<8x784xf32>
      %c0_82 = arith.constant 0 : index
      %c1_83 = arith.constant 1 : index
      %c0_84 = arith.constant 0 : index
      %c0_85 = arith.constant 0 : index
      %125 = vector.load %arg7[%c0_82, %c1_83, %c0_84, %c0_85] : memref<2x4x8x784xf32, #tpu.memory_space<vmem>>, vector<1x1x8x784xf32>
      %126 = vector.shape_cast %125 : vector<1x1x8x784xf32> to vector<8x784xf32>
      %127 = vector.shape_cast %124 : vector<8x784xf32> to vector<1x1x8x784xf32>
      tpu.vector_store %arg7[%c0_82, %c1_83, %c0_84, %c0_85], %127 {strides = array<i32>} : memref<2x4x8x784xf32, #tpu.memory_space<vmem>>, vector<1x1x8x784xf32>,
      %c0_86 = arith.constant 0 : index
      %c2_87 = arith.constant 2 : index
      %c0_88 = arith.constant 0 : index
      %c0_89 = arith.constant 0 : index
      %128 = vector.load %arg7[%c0_86, %c2_87, %c0_88, %c0_89] : memref<2x4x8x784xf32, #tpu.memory_space<vmem>>, vector<1x1x8x784xf32>
      %129 = vector.shape_cast %128 : vector<1x1x8x784xf32> to vector<8x784xf32>
      %130 = vector.broadcast %102 : vector<8x1xf32> to vector<8x784xf32>
      %131 = arith.mulf %129, %130 : vector<8x784xf32>
      %132 = vector.broadcast %105 : vector<8x1xf32> to vector<8x784xf32>
      %133 = arith.addf %131, %132 : vector<8x784xf32>
      %cst_90 = arith.constant 0.000000e+00 : f32
      %134 = vector.broadcast %cst_90 : f32 to vector<8x784xf32>
      %135 = arith.maximumf %133, %134 : vector<8x784xf32>
      %c0_91 = arith.constant 0 : index
      %c2_92 = arith.constant 2 : index
      %c0_93 = arith.constant 0 : index
      %c0_94 = arith.constant 0 : index
      %136 = vector.load %arg7[%c0_91, %c2_92, %c0_93, %c0_94] : memref<2x4x8x784xf32, #tpu.memory_space<vmem>>, vector<1x1x8x784xf32>
      %137 = vector.shape_cast %136 : vector<1x1x8x784xf32> to vector<8x784xf32>
      %138 = vector.shape_cast %135 : vector<8x784xf32> to vector<1x1x8x784xf32>
      tpu.vector_store %arg7[%c0_91, %c2_92, %c0_93, %c0_94], %138 {strides = array<i32>} : memref<2x4x8x784xf32, #tpu.memory_space<vmem>>, vector<1x1x8x784xf32>,
      %c0_95 = arith.constant 0 : index
      %c3_96 = arith.constant 3 : index
      %c0_97 = arith.constant 0 : index
      %c0_98 = arith.constant 0 : index
      %139 = vector.load %arg7[%c0_95, %c3_96, %c0_97, %c0_98] : memref<2x4x8x784xf32, #tpu.memory_space<vmem>>, vector<1x1x8x784xf32>
      %140 = vector.shape_cast %139 : vector<1x1x8x784xf32> to vector<8x784xf32>
      %141 = vector.broadcast %102 : vector<8x1xf32> to vector<8x784xf32>
      %142 = arith.mulf %140, %141 : vector<8x784xf32>
      %143 = vector.broadcast %105 : vector<8x1xf32> to vector<8x784xf32>
      %144 = arith.addf %142, %143 : vector<8x784xf32>
      %cst_99 = arith.constant 0.000000e+00 : f32
      %145 = vector.broadcast %cst_99 : f32 to vector<8x784xf32>
      %146 = arith.maximumf %144, %145 : vector<8x784xf32>
      %c0_100 = arith.constant 0 : index
      %c3_101 = arith.constant 3 : index
      %c0_102 = arith.constant 0 : index
      %c0_103 = arith.constant 0 : index
      %147 = vector.load %arg7[%c0_100, %c3_101, %c0_102, %c0_103] : memref<2x4x8x784xf32, #tpu.memory_space<vmem>>, vector<1x1x8x784xf32>
      %148 = vector.shape_cast %147 : vector<1x1x8x784xf32> to vector<8x784xf32>
      %149 = vector.shape_cast %146 : vector<8x784xf32> to vector<1x1x8x784xf32>
      tpu.vector_store %arg7[%c0_100, %c3_101, %c0_102, %c0_103], %149 {strides = array<i32>} : memref<2x4x8x784xf32, #tpu.memory_space<vmem>>, vector<1x1x8x784xf32>,
      %c1_104 = arith.constant 1 : index
      %c0_105 = arith.constant 0 : index
      %c0_106 = arith.constant 0 : index
      %c0_107 = arith.constant 0 : index
      %150 = vector.load %arg7[%c1_104, %c0_105, %c0_106, %c0_107] : memref<2x4x8x784xf32, #tpu.memory_space<vmem>>, vector<1x1x8x784xf32>
      %151 = vector.shape_cast %150 : vector<1x1x8x784xf32> to vector<8x784xf32>
      %152 = vector.broadcast %102 : vector<8x1xf32> to vector<8x784xf32>
      %153 = arith.mulf %151, %152 : vector<8x784xf32>
      %154 = vector.broadcast %105 : vector<8x1xf32> to vector<8x784xf32>
      %155 = arith.addf %153, %154 : vector<8x784xf32>
      %cst_108 = arith.constant 0.000000e+00 : f32
      %156 = vector.broadcast %cst_108 : f32 to vector<8x784xf32>
      %157 = arith.maximumf %155, %156 : vector<8x784xf32>
      %c1_109 = arith.constant 1 : index
      %c0_110 = arith.constant 0 : index
      %c0_111 = arith.constant 0 : index
      %c0_112 = arith.constant 0 : index
      %158 = vector.load %arg7[%c1_109, %c0_110, %c0_111, %c0_112] : memref<2x4x8x784xf32, #tpu.memory_space<vmem>>, vector<1x1x8x784xf32>
      %159 = vector.shape_cast %158 : vector<1x1x8x784xf32> to vector<8x784xf32>
      %160 = vector.shape_cast %157 : vector<8x784xf32> to vector<1x1x8x784xf32>
      tpu.vector_store %arg7[%c1_109, %c0_110, %c0_111, %c0_112], %160 {strides = array<i32>} : memref<2x4x8x784xf32, #tpu.memory_space<vmem>>, vector<1x1x8x784xf32>,
      %c1_113 = arith.constant 1 : index
      %c1_114 = arith.constant 1 : index
      %c0_115 = arith.constant 0 : index
      %c0_116 = arith.constant 0 : index
      %161 = vector.load %arg7[%c1_113, %c1_114, %c0_115, %c0_116] : memref<2x4x8x784xf32, #tpu.memory_space<vmem>>, vector<1x1x8x784xf32>
      %162 = vector.shape_cast %161 : vector<1x1x8x784xf32> to vector<8x784xf32>
      %163 = vector.broadcast %102 : vector<8x1xf32> to vector<8x784xf32>
      %164 = arith.mulf %162, %163 : vector<8x784xf32>
      %165 = vector.broadcast %105 : vector<8x1xf32> to vector<8x784xf32>
      %166 = arith.addf %164, %165 : vector<8x784xf32>
      %cst_117 = arith.constant 0.000000e+00 : f32
      %167 = vector.broadcast %cst_117 : f32 to vector<8x784xf32>
      %168 = arith.maximumf %166, %167 : vector<8x784xf32>
      %c1_118 = arith.constant 1 : index
      %c1_119 = arith.constant 1 : index
      %c0_120 = arith.constant 0 : index
      %c0_121 = arith.constant 0 : index
      %169 = vector.load %arg7[%c1_118, %c1_119, %c0_120, %c0_121] : memref<2x4x8x784xf32, #tpu.memory_space<vmem>>, vector<1x1x8x784xf32>
      %170 = vector.shape_cast %169 : vector<1x1x8x784xf32> to vector<8x784xf32>
      %171 = vector.shape_cast %168 : vector<8x784xf32> to vector<1x1x8x784xf32>
      tpu.vector_store %arg7[%c1_118, %c1_119, %c0_120, %c0_121], %171 {strides = array<i32>} : memref<2x4x8x784xf32, #tpu.memory_space<vmem>>, vector<1x1x8x784xf32>,
      %c1_122 = arith.constant 1 : index
      %c2_123 = arith.constant 2 : index
      %c0_124 = arith.constant 0 : index
      %c0_125 = arith.constant 0 : index
      %172 = vector.load %arg7[%c1_122, %c2_123, %c0_124, %c0_125] : memref<2x4x8x784xf32, #tpu.memory_space<vmem>>, vector<1x1x8x784xf32>
      %173 = vector.shape_cast %172 : vector<1x1x8x784xf32> to vector<8x784xf32>
      %174 = vector.broadcast %102 : vector<8x1xf32> to vector<8x784xf32>
      %175 = arith.mulf %173, %174 : vector<8x784xf32>
      %176 = vector.broadcast %105 : vector<8x1xf32> to vector<8x784xf32>
      %177 = arith.addf %175, %176 : vector<8x784xf32>
      %cst_126 = arith.constant 0.000000e+00 : f32
      %178 = vector.broadcast %cst_126 : f32 to vector<8x784xf32>
      %179 = arith.maximumf %177, %178 : vector<8x784xf32>
      %c1_127 = arith.constant 1 : index
      %c2_128 = arith.constant 2 : index
      %c0_129 = arith.constant 0 : index
      %c0_130 = arith.constant 0 : index
      %180 = vector.load %arg7[%c1_127, %c2_128, %c0_129, %c0_130] : memref<2x4x8x784xf32, #tpu.memory_space<vmem>>, vector<1x1x8x784xf32>
      %181 = vector.shape_cast %180 : vector<1x1x8x784xf32> to vector<8x784xf32>
      %182 = vector.shape_cast %179 : vector<8x784xf32> to vector<1x1x8x784xf32>
      tpu.vector_store %arg7[%c1_127, %c2_128, %c0_129, %c0_130], %182 {strides = array<i32>} : memref<2x4x8x784xf32, #tpu.memory_space<vmem>>, vector<1x1x8x784xf32>,
      %c1_131 = arith.constant 1 : index
      %c3_132 = arith.constant 3 : index
      %c0_133 = arith.constant 0 : index
      %c0_134 = arith.constant 0 : index
      %183 = vector.load %arg7[%c1_131, %c3_132, %c0_133, %c0_134] : memref<2x4x8x784xf32, #tpu.memory_space<vmem>>, vector<1x1x8x784xf32>
      %184 = vector.shape_cast %183 : vector<1x1x8x784xf32> to vector<8x784xf32>
      %185 = vector.broadcast %102 : vector<8x1xf32> to vector<8x784xf32>
      %186 = arith.mulf %184, %185 : vector<8x784xf32>
      %187 = vector.broadcast %105 : vector<8x1xf32> to vector<8x784xf32>
      %188 = arith.addf %186, %187 : vector<8x784xf32>
      %cst_135 = arith.constant 0.000000e+00 : f32
      %189 = vector.broadcast %cst_135 : f32 to vector<8x784xf32>
      %190 = arith.maximumf %188, %189 : vector<8x784xf32>
      %c1_136 = arith.constant 1 : index
      %c3_137 = arith.constant 3 : index
      %c0_138 = arith.constant 0 : index
      %c0_139 = arith.constant 0 : index
      %191 = vector.load %arg7[%c1_136, %c3_137, %c0_138, %c0_139] : memref<2x4x8x784xf32, #tpu.memory_space<vmem>>, vector<1x1x8x784xf32>
      %192 = vector.shape_cast %191 : vector<1x1x8x784xf32> to vector<8x784xf32>
      %193 = vector.shape_cast %190 : vector<8x784xf32> to vector<1x1x8x784xf32>
      tpu.vector_store %arg7[%c1_136, %c3_137, %c0_138, %c0_139], %193 {strides = array<i32>} : memref<2x4x8x784xf32, #tpu.memory_space<vmem>>, vector<1x1x8x784xf32>,
    } else {
    }
    return
  }
  func.func @transform_0(%arg0: i32, %arg1: i32) -> (i32, i32, i32, i32) {
    %c0_i32 = arith.constant 0 : i32
    %c0_i32_0 = arith.constant 0 : i32
    %c0_i32_1 = arith.constant 0 : i32
    return %arg0, %arg1, %c0_i32, %c0_i32_0 : i32, i32, i32, i32
  }
  func.func @transform_1(%arg0: i32, %arg1: i32) -> (i32, i32) {
    %c0_i32 = arith.constant 0 : i32
    %c0_i32_0 = arith.constant 0 : i32
    %c0_i32_1 = arith.constant 0 : i32
    return %c0_i32, %c0_i32_0 : i32, i32
  }
  func.func @transform_2(%arg0: i32, %arg1: i32) -> (i32, i32) {
    %c0_i32 = arith.constant 0 : i32
    %c0_i32_0 = arith.constant 0 : i32
    %c0_i32_1 = arith.constant 0 : i32
    return %c0_i32, %c0_i32_0 : i32, i32
  }
  func.func @transform_3(%arg0: i32, %arg1: i32) -> (i32, i32) {
    %c0_i32 = arith.constant 0 : i32
    %c0_i32_0 = arith.constant 0 : i32
    %c0_i32_1 = arith.constant 0 : i32
    return %c0_i32, %c0_i32_0 : i32, i32
  }
  func.func @transform_4(%arg0: i32, %arg1: i32) -> (i32, i32) {
    %c0_i32 = arith.constant 0 : i32
    %c0_i32_0 = arith.constant 0 : i32
    %c0_i32_1 = arith.constant 0 : i32
    return %c0_i32, %c0_i32_0 : i32, i32
  }
  func.func @transform_5(%arg0: i32, %arg1: i32) -> (i32, i32, i32, i32) {
    %c0_i32 = arith.constant 0 : i32
    %c0_i32_0 = arith.constant 0 : i32
    %c0_i32_1 = arith.constant 0 : i32
    %c0_i32_2 = arith.constant 0 : i32
    %c0_i32_3 = arith.constant 0 : i32
    return %c0_i32, %c0_i32_0, %c0_i32_1, %c0_i32_2 : i32, i32, i32, i32
  }
}

module attributes {stable_mosaic.version = 11 : i64} {
  func.func @_conv_tanh_kernel(%arg0: i32, %arg1: i32, %arg2: memref<1x1x18x896xbf16, #tpu.memory_space<vmem>>, %arg3: memref<12x18xbf16, #tpu.memory_space<vmem>>, %arg4: memref<1x1x12x896xf32, #tpu.memory_space<vmem>>) attributes {dimension_semantics = [#tpu.dimension_semantics<parallel>, #tpu.dimension_semantics<parallel>], iteration_bounds = array<i64: 2, 14>, scalar_prefetch = 0 : i64, scratch_operands = 0 : i64, tpu.core_type = #tpu.core_type<tc>, window_params = [{transform_indices = @transform_0, window_bounds = array<i64: 1, 1, 18, 896>}, {pipeline_mode = #tpu.pipeline_mode<synchronous>, transform_indices = @transform_1, window_bounds = array<i64: 12, 18>}, {transform_indices = @transform_2, window_bounds = array<i64: 1, 1, 12, 896>}]} {
    %c0 = arith.constant 0 : index
    %c0_0 = arith.constant 0 : index
    %0 = vector.load %arg3[%c0, %c0_0] : memref<12x18xbf16, #tpu.memory_space<vmem>>, vector<12x18xbf16>
    %c0_1 = arith.constant 0 : index
    %c0_2 = arith.constant 0 : index
    %c0_3 = arith.constant 0 : index
    %c0_4 = arith.constant 0 : index
    %1 = vector.load %arg2[%c0_1, %c0_2, %c0_3, %c0_4] : memref<1x1x18x896xbf16, #tpu.memory_space<vmem>>, vector<1x1x18x896xbf16>
    %2 = vector.shape_cast %1 : vector<1x1x18x896xbf16> to vector<18x896xbf16>
    %cst = arith.constant dense<0.000000e+00> : vector<12x896xf32>
    %3 = tpu.matmul %0, %2, %cst {dimension_numbers = #tpu.dot_dimension_numbers<[1], [0], [0], [1], [0, 0, 1, 1], [], []>} : vector<12x18xbf16>, vector<18x896xbf16>, vector<12x896xf32> -> vector<12x896xf32>
    %4 = math.tanh %3 : vector<12x896xf32>
    %c0_5 = arith.constant 0 : index
    %c0_6 = arith.constant 0 : index
    %c0_7 = arith.constant 0 : index
    %c0_8 = arith.constant 0 : index
    %5 = vector.load %arg4[%c0_5, %c0_6, %c0_7, %c0_8] : memref<1x1x12x896xf32, #tpu.memory_space<vmem>>, vector<1x1x12x896xf32>
    %6 = vector.shape_cast %5 : vector<1x1x12x896xf32> to vector<12x896xf32>
    %7 = vector.shape_cast %4 : vector<12x896xf32> to vector<1x1x12x896xf32>
    tpu.vector_store %arg4[%c0_5, %c0_6, %c0_7, %c0_8], %7 {strides = array<i32>} : memref<1x1x12x896xf32, #tpu.memory_space<vmem>>, vector<1x1x12x896xf32>,
    return
  }
  func.func @transform_0(%arg0: i32, %arg1: i32) -> (i32, i32, i32, i32) {
    %c0_i32 = arith.constant 0 : i32
    %c0_i32_0 = arith.constant 0 : i32
    %c0_i32_1 = arith.constant 0 : i32
    return %arg0, %arg1, %c0_i32, %c0_i32_0 : i32, i32, i32, i32
  }
  func.func @transform_1(%arg0: i32, %arg1: i32) -> (i32, i32) {
    %c0_i32 = arith.constant 0 : i32
    %c0_i32_0 = arith.constant 0 : i32
    %c0_i32_1 = arith.constant 0 : i32
    return %c0_i32, %c0_i32_0 : i32, i32
  }
  func.func @transform_2(%arg0: i32, %arg1: i32) -> (i32, i32, i32, i32) {
    %c0_i32 = arith.constant 0 : i32
    %c0_i32_0 = arith.constant 0 : i32
    %c0_i32_1 = arith.constant 0 : i32
    return %arg0, %arg1, %c0_i32, %c0_i32_0 : i32, i32, i32, i32
  }
}

</mosaic_0001>

<llo_original>
// kernel: decoder_forward.7
$region0: #{decoder_forward.7}
  #allocation0 [shape = 'u32[]', space=smem, size = 0x4, offset = 0x4, fixed_abs, tag = 'smem constant byte address 0x4 - core index']
  #allocation1 [shape = 'u32[144,128]{1,0:T(1,128)}', space=vmem, size = 0x12000, scoped, tag = 'internal scratch']
  #allocation2 [shape = 'f32[64,1]{1,0:T(8,128)}', space=vmem, size = 0x8000, scoped, tag = 'scratch operand']
  %s0 = inlined_call_operand.vmem [shape: bf16[2,1,117,9], index: 0, kind: input, shape index: {}]
  %s1 = inlined_call_operand.vmem [shape: bf16[64,117], index: 1, kind: input, shape index: {}]
  %s2 = inlined_call_operand.vmem [shape: f32[64,1], index: 2, kind: input, shape index: {}]
  %s3 = inlined_call_operand.vmem [shape: f32[64,1], index: 3, kind: input, shape index: {}]
  %s4 = inlined_call_operand.vmem [shape: f32[64,64], index: 4, kind: input, shape index: {}]
  %s5 = inlined_call_operand.vmem [shape: f32[2,1,64,9], index: 5, kind: output, shape index: {}]
  %s6 = sld [smem:[#allocation0]]
  $region61: #{decoder_forward.7} parent=0
    _
  %s8 = ssub.s32 1, %s6
  %s9 = scalar_select 0, %s8, %s6
  loop: start=0, step=1, limit=4
  $region2: #{decoder_forward.7} parent=0 // loop_pre_header
    _
  $region3: #{decoder_forward.7} parent=0 // loop_header
    %s11 = sphi 0, %s15
    %p12 = scmp.ge.s32.totalorder %s11, 4
    %s18 = sphi 0, %s30
    %s19 = sphi 0, %s26
    %s20 = sphi 0, %s18
    %s21 = sphi 0, %s19
    %s22 = sphi 0, %s20
    %s23 = sphi 0, %s21
    %s35 = sphi 0, %s37
    %s38 = sphi 0, %s35
    %s39 = sphi 0, %s38
    %s55 = sphi 0, %s39
    %s59 = sphi 0, %s59
    %s61 = sphi 0, %s59
    %s62 = sphi 0, %s61
    %s76 = sphi 0, %s62
    %s80 = sphi 0, %s80
    %s82 = sphi 0, %s80
    %s83 = sphi 0, %s82
    %s97 = sphi 0, %s83
    %s101 = sphi 0, %s101
    %s103 = sphi 0, %s101
    %s104 = sphi 0, %s103
    %s118 = sphi 0, %s104
    %s122 = sphi 0, %s122
    %s124 = sphi 0, %s122
    %s125 = sphi 0, %s124
    %s139 = sphi 0, %s125
    %s143 = sphi 0, %s143
    %s145 = sphi 0, %s143
    %s146 = sphi 0, %s145
    %s160 = sphi 0, %s146
  $region4: #{decoder_forward.7} parent=0 // loop_header_branch
    %14 = sbr.rel (%p12) target = $region8
  $region5: #{decoder_forward.7} parent=0 // loop_body
    %s16 = ssub.s32 %s11, 1
    %s17 = ssub.s32 %s11, 2
    %s24 = sadd.s32 1, %s19
    %p25 = scmp.ge.s32.totalorder %s24, 1
    %s26 = scalar_select %p25, 0, %s24
    %s27 = sadd.s32 1, %s18
    %s28 = scalar_select %p25, %s27, %s18
    %p29 = scmp.ge.s32.totalorder %s28, 2
    %s30 = scalar_select %p29, 0, %s28
    %s31 = ssub.s32 %s18, %s30
    %s32 = ssub.s32 %s19, %s26
    %s33 = sor.u32 %s31, %s32
    %p34 = scmp.eq.s32.totalorder %s33, 0
    %s36 = sadd.s32 %s35, 1
    %s37 = scalar_select %p34, %s35, %s36
    %p40 = pneg %p34
    %p41 = scmp.eq.s32.totalorder %s11, 1
    %p42 = por %p40, %p41
    %p43 = scmp.ne.s32.totalorder %s35, %s38
    %p44 = scmp.eq.s32.totalorder %s11, 0
    %p45 = por %p43, %p44
    %p46 = scmp.ne.s32.totalorder %s35, %s38
    %p47 = scmp.eq.s32.totalorder %s16, 1
    %p48 = por %p46, %p47
    %p49 = scmp.ne.s32.totalorder %s38, %s39
    %p50 = scmp.eq.s32.totalorder %s16, 0
    %p51 = por %p49, %p50
    %p52 = scmp.ne.s32.totalorder %s38, %s39
    %p53 = scmp.eq.s32.totalorder %s17, 1
    %p54 = por %p52, %p53
    %p56 = scmp.ne.s32.totalorder %s39, %s55
    %p57 = scmp.eq.s32.totalorder %s17, 0
    %p58 = por %p56, %p57
    %s60 = sadd.s32 %s59, 1
    %p63 = scmp.eq.s32.totalorder %s11, 1
    %p64 = scmp.ne.s32.totalorder %s59, %s61
    %p65 = scmp.eq.s32.totalorder %s11, 0
    %p66 = por %p64, %p65
    %p67 = scmp.ne.s32.totalorder %s59, %s61
    %p68 = scmp.eq.s32.totalorder %s16, 1
    %p69 = por %p67, %p68
    %p70 = scmp.ne.s32.totalorder %s61, %s62
    %p71 = scmp.eq.s32.totalorder %s16, 0
    %p72 = por %p70, %p71
    %p73 = scmp.ne.s32.totalorder %s61, %s62
    %p74 = scmp.eq.s32.totalorder %s17, 1
    %p75 = por %p73, %p74
    %p77 = scmp.ne.s32.totalorder %s62, %s76
    %p78 = scmp.eq.s32.totalorder %s17, 0
    %p79 = por %p77, %p78
    %s81 = sadd.s32 %s80, 1
    %p84 = scmp.eq.s32.totalorder %s11, 1
    %p85 = scmp.ne.s32.totalorder %s80, %s82
    %p86 = scmp.eq.s32.totalorder %s11, 0
    %p87 = por %p85, %p86
    %p88 = scmp.ne.s32.totalorder %s80, %s82
    %p89 = scmp.eq.s32.totalorder %s16, 1
    %p90 = por %p88, %p89
    %p91 = scmp.ne.s32.totalorder %s82, %s83
    %p92 = scmp.eq.s32.totalorder %s16, 0
    %p93 = por %p91, %p92
    %p94 = scmp.ne.s32.totalorder %s82, %s83
    %p95 = scmp.eq.s32.totalorder %s17, 1
    %p96 = por %p94, %p95
    %p98 = scmp.ne.s32.totalorder %s83, %s97
    %p99 = scmp.eq.s32.totalorder %s17, 0
    %p100 = por %p98, %p99
    %s102 = sadd.s32 %s101, 1
    %p105 = scmp.eq.s32.totalorder %s11, 1
    %p106 = scmp.ne.s32.totalorder %s101, %s103
    %p107 = scmp.eq.s32.totalorder %s11, 0
    %p108 = por %p106, %p107
    %p109 = scmp.ne.s32.totalorder %s101, %s103
    %p110 = scmp.eq.s32.totalorder %s16, 1
    %p111 = por %p109, %p110
    %p112 = scmp.ne.s32.totalorder %s103, %s104
    %p113 = scmp.eq.s32.totalorder %s16, 0
    %p114 = por %p112, %p113
    %p115 = scmp.ne.s32.totalorder %s103, %s104
    %p116 = scmp.eq.s32.totalorder %s17, 1
    %p117 = por %p115, %p116
    %p119 = scmp.ne.s32.totalorder %s104, %s118
    %p120 = scmp.eq.s32.totalorder %s17, 0
    %p121 = por %p119, %p120
    %s123 = sadd.s32 %s122, 1
    %p126 = scmp.eq.s32.totalorder %s11, 1
    %p127 = scmp.ne.s32.totalorder %s122, %s124
    %p128 = scmp.eq.s32.totalorder %s11, 0
    %p129 = por %p127, %p128
    %p130 = scmp.ne.s32.totalorder %s122, %s124
    %p131 = scmp.eq.s32.totalorder %s16, 1
    %p132 = por %p130, %p131
    %p133 = scmp.ne.s32.totalorder %s124, %s125
    %p134 = scmp.eq.s32.totalorder %s16, 0
    %p135 = por %p133, %p134
    %p136 = scmp.ne.s32.totalorder %s124, %s125
    %p137 = scmp.eq.s32.totalorder %s17, 1
    %p138 = por %p136, %p137
    %p140 = scmp.ne.s32.totalorder %s125, %s139
    %p141 = scmp.eq.s32.totalorder %s17, 0
    %p142 = por %p140, %p141
    %s144 = sadd.s32 %s143, 1
    %p147 = scmp.eq.s32.totalorder %s11, 1
    %p148 = scmp.ne.s32.totalorder %s143, %s145
    %p149 = scmp.eq.s32.totalorder %s11, 0
    %p150 = por %p148, %p149
    %p151 = scmp.ne.s32.totalorder %s143, %s145
    %p152 = scmp.eq.s32.totalorder %s16, 1
    %p153 = por %p151, %p152
    %p154 = scmp.ne.s32.totalorder %s145, %s146
    %p155 = scmp.eq.s32.totalorder %s16, 0
    %p156 = por %p154, %p155
    %p157 = scmp.ne.s32.totalorder %s145, %s146
    %p158 = scmp.eq.s32.totalorder %s17, 1
    %p159 = por %p157, %p158
    %p161 = scmp.ne.s32.totalorder %s146, %s160
    %p162 = scmp.eq.s32.totalorder %s17, 0
    %p163 = por %p161, %p162
    %p164 = scmp.le.s32.totalorder 1, %s11
    %p165 = scmp.lt.s32.totalorder %s11, 3
    %p166 = pnand %p164, %p165
    %p167 = pneg %p166
    // Predicated region
    $region9: #{decoder_forward.7} parent=5 // pred_check
      _
    $region10: #{decoder_forward.7} parent=5 // pred_check_branch
      %169 = sbr.rel (%p166) target = $region12
    $region11: #{decoder_forward.7} parent=5 // pred_region
      %s170 = ssub.s32 %s11, 1
      // Predicated region
      $region13: #{decoder_forward.7} parent=11 // pred_check
        %p171 = pneg %p72
      $region14: #{decoder_forward.7} parent=11 // pred_check_branch
        %173 = sbr.rel (%p171) target = $region16
      $region15: #{decoder_forward.7} parent=11 // pred_region
        _
      $region16: #{decoder_forward.7} parent=11 // pred_fallthru
        _
      // Predicated region
      $region17: #{decoder_forward.7} parent=11 // pred_check
        %p174 = pneg %p93
      $region18: #{decoder_forward.7} parent=11 // pred_check_branch
        %176 = sbr.rel (%p174) target = $region20
      $region19: #{decoder_forward.7} parent=11 // pred_region
        _
      $region20: #{decoder_forward.7} parent=11 // pred_fallthru
        _
      // Predicated region
      $region21: #{decoder_forward.7} parent=11 // pred_check
        %p177 = pneg %p114
      $region22: #{decoder_forward.7} parent=11 // pred_check_branch
        %179 = sbr.rel (%p177) target = $region24
      $region23: #{decoder_forward.7} parent=11 // pred_region
        _
      $region24: #{decoder_forward.7} parent=11 // pred_fallthru
        _
      // Predicated region
      $region25: #{decoder_forward.7} parent=11 // pred_check
        %p180 = pneg %p135
      $region26: #{decoder_forward.7} parent=11 // pred_check_branch
        %182 = sbr.rel (%p180) target = $region28
      $region27: #{decoder_forward.7} parent=11 // pred_region
        _
      $region28: #{decoder_forward.7} parent=11 // pred_fallthru
        _
    $region12: #{decoder_forward.7} parent=5 // pred_fallthru
      _
    %p183 = scmp.lt.s32.totalorder %s11, 2
    // Predicated region
    $region29: #{decoder_forward.7} parent=5 // pred_check
      %p184 = pneg %p183
    $region30: #{decoder_forward.7} parent=5 // pred_check_branch
      %186 = sbr.rel (%p184) target = $region32
    $region31: #{decoder_forward.7} parent=5 // pred_region
      // Predicated region
      $region33: #{decoder_forward.7} parent=31 // pred_check
        %p187 = pneg %p45
      $region34: #{decoder_forward.7} parent=31 // pred_check_branch
        %189 = sbr.rel (%p187) target = $region36
      $region35: #{decoder_forward.7} parent=31 // pred_region
        %p190 = scmp.lt.s32.totalorder %s18, 1
        %s191 = scalar_select %p190, %s18, 1
        %p192 = scmp.lt.s32.totalorder %s19, 0
        %s193 = scalar_select %p192, %s19, 0
        %s194 = smul.addr %s193, 15
        %s195 = smul.addr %s191, 15
        %s196 = sadd.s32 %s194, %s195
        %s197 = smul.addr %s196, 4
        %s198 = scalar_lea.vmem %s0, %s197
      $region36: #{decoder_forward.7} parent=31 // pred_fallthru
        _
    $region32: #{decoder_forward.7} parent=5 // pred_fallthru
      _
    %p199 = scmp.le.s32.totalorder 1, %s11
    %p200 = scmp.lt.s32.totalorder %s11, 3
    %p201 = pnand %p199, %p200
    %p202 = pneg %p201
    // Predicated region
    $region37: #{decoder_forward.7} parent=5 // pred_check
      _
    $region38: #{decoder_forward.7} parent=5 // pred_check_branch
      %204 = sbr.rel (%p201) target = $region40
    $region39: #{decoder_forward.7} parent=5 // pred_region
      %s205 = ssub.s32 %s11, 1
      %p206 = scmp.lt.s32.totalorder %s20, 1
      %s207 = scalar_select %p206, %s20, 1
      %p208 = scmp.lt.s32.totalorder %s21, 0
      %s209 = scalar_select %p208, %s21, 0
      %s210 = smul.addr %s209, 15
      %s211 = smul.addr %s207, 15
      %s212 = sadd.s32 %s210, %s211
      %s213 = smul.addr %s212, 4
      %s214 = scalar_lea.vmem %s0, %s213
      %p215 = pneg %p51
      %p216 = pneg %p48
      %p217 = pneg %p72
      %p218 = pneg %p69
      %p219 = pneg %p93
      %p220 = pneg %p90
      %p221 = pneg %p114
      %p222 = pneg %p111
      %p223 = pneg %p135
      %p224 = pneg %p132
      %p225 = pneg %p156
      %p226 = pneg %p153
      %p227 = scmp.lt.s32.totalorder %s20, 1
      %s228 = scalar_select %p227, %s20, 1
      %p229 = scmp.lt.s32.totalorder %s21, 0
      %s230 = scalar_select %p229, %s21, 0
      %s231 = smul.addr %s230, 15
      %s232 = smul.addr %s228, 15
      %s233 = sadd.s32 %s231, %s232
      %s234 = smul.addr %s233, 4
      %s235 = scalar_lea.vmem %s0, %s234
      %p237 = scmp.eq.s32.totalorder %s20, 0
      %p238 = scmp.eq.s32.totalorder %s21, 0
      %p239 = pnand %p237, %p238
      %p240 = pneg %p239
      %p241 = scmp.eq.s32.totalorder %s20, 1
      %p242 = pnand %p241, %p238
      %p243 = pneg %p242
      // Predicated region
      $region41: #{decoder_forward.7} parent=39 // pred_check
        _
      $region42: #{decoder_forward.7} parent=39 // pred_check_branch
        %245 = sbr.rel (%p239) target = $region44
      $region43: #{decoder_forward.7} parent=39 // pred_region
        %vm246 = vcmask 7168
        %247 = vst.msk [vmem:[#allocation2] sm:$0xff] %vm246, 0.0
        %248 = vst.msk [vmem:[#allocation2 + $0x8] sm:$0xff] %vm246, 0.0
        %249 = vst.msk [vmem:[#allocation2 + $0x10] sm:$0xff] %vm246, 0.0
        %250 = vst.msk [vmem:[#allocation2 + $0x18] sm:$0xff] %vm246, 0.0
        %251 = vst.msk [vmem:[#allocation2 + $0x20] sm:$0xff] %vm246, 0.0
        %252 = vst.msk [vmem:[#allocation2 + $0x28] sm:$0xff] %vm246, 0.0
        %253 = vst.msk [vmem:[#allocation2 + $0x30] sm:$0xff] %vm246, 0.0
        %254 = vst.msk [vmem:[#allocation2 + $0x38] sm:$0xff] %vm246, 0.0
      $region44: #{decoder_forward.7} parent=39 // pred_fallthru
        _
      %v255 = vld [vmem:[%s1] sm:$0xf]
      %v256 = vld [vmem:[%s1 + $0x4] sm:$0xf]
      %v257 = vld [vmem:[%s1 + $0x8] sm:$0xf]
      %v258 = vld [vmem:[%s1 + $0xc] sm:$0xf]
      %v259 = vld [vmem:[%s1 + $0x10] sm:$0xf]
      %v260 = vld [vmem:[%s1 + $0x14] sm:$0xf]
      %v261 = vld [vmem:[%s1 + $0x18] sm:$0xf]
      %v262 = vld [vmem:[%s1 + $0x1c] sm:$0xf]
      %v263 = vld [vmem:[%s235] sm:$0xf]
      %v264 = vld [vmem:[%s235 + $0x4] sm:$0xf]
      %v265 = vld [vmem:[%s235 + $0x8] sm:$0xf]
      %v266 = vld [vmem:[%s235 + $0xc] sm:$0xf]
      %v267 = vld [vmem:[%s235 + $0x10] sm:$0xf]
      %v268 = vld [vmem:[%s235 + $0x14] sm:$0xf]
      %v269 = vld [vmem:[%s235 + $0x18] sm:$0xf]
      %v270 = vld [vmem:[%s235 + $0x1c] sm:$0xf]
      %v271 = vld [vmem:[%s235 + $0x20] sm:$0xf]
      %v272 = vld [vmem:[%s235 + $0x24] sm:$0xf]
      %v273 = vld [vmem:[%s235 + $0x28] sm:$0xf]
      %v274 = vld [vmem:[%s235 + $0x2c] sm:$0xf]
      %v275 = vld [vmem:[%s235 + $0x30] sm:$0xf]
      %v276 = vld [vmem:[%s235 + $0x34] sm:$0xf]
      %v277 = vld [vmem:[%s235 + $0x38] sm:$0x7]
      %v286 = vunpack.c.l.b16 %v255
      %v287 = vunpack.c.l.b16 %v256
      %v288 = vunpack.c.l.b16 %v257
      %v289 = vunpack.c.l.b16 %v258
      %v290 = vunpack.c.l.b16 %v259
      %v291 = vunpack.c.l.b16 %v260
      %v292 = vunpack.c.l.b16 %v261
      %v293 = vunpack.c.l.b16 %v262
      %v294 = vpack.c.b16 %v287, %v286
      %v295 = vpack.c.b16 %v289, %v288
      %v296 = vpack.c.b16 %v291, %v290
      %v297 = vpack.c.b16 %v293, %v292
      %v313 = vunpack.c.l.b16 %v263
      %v314 = vunpack.c.l.b16 %v264
      %v315 = vunpack.c.l.b16 %v265
      %v316 = vunpack.c.l.b16 %v266
      %v317 = vunpack.c.l.b16 %v267
      %v318 = vunpack.c.l.b16 %v268
      %v319 = vunpack.c.l.b16 %v269
      %v320 = vunpack.c.l.b16 %v270
      %v321 = vunpack.c.l.b16 %v271
      %v322 = vunpack.c.l.b16 %v272
      %v323 = vunpack.c.l.b16 %v273
      %v324 = vunpack.c.l.b16 %v274
      %v325 = vunpack.c.l.b16 %v275
      %v326 = vunpack.c.l.b16 %v276
      %v327 = vunpack.c.l.b16 %v277
      %v328 = vpack.c.b16 %v314, %v313
      %v329 = vpack.c.b16 %v316, %v315
      %v330 = vpack.c.b16 %v318, %v317
      %v331 = vpack.c.b16 %v320, %v319
      %v332 = vpack.c.b16 %v322, %v321
      %v333 = vpack.c.b16 %v324, %v323
      %v334 = vpack.c.b16 %v326, %v325
      %v335 = vpack.c.b16 %v327, %v327
      %vm343 = vcmask 957440
      %v345 = vsel %vm343, %v294, 0
      %v348 = vsel %vm343, %v295, 0
      %v351 = vsel %vm343, %v296, 0
      %v354 = vsel %vm343, %v297, 0
      %vm356 = vcmask 1041408
      %vm357 = vcmask 1042432
      %v358 = vsel %vm356, 4294967295, 65535
      %v359 = vsel %vm357, %v358, 0
      %v361 = vand.u32 %v335, %v359
      %363 = vmatprep.subr.bf16.mxu0 0
      %364 = vmatpush1.bf16.msra.mxu0 %v328
      %365 = vmatprep.subr.bf16.mxu0 0
      %366 = vmatpush1.bf16.msra.mxu0 %v329
      %367 = vmatprep.subr.bf16.mxu0 0
      %368 = vmatpush1.bf16.msra.mxu0 %v330
      %369 = vmatprep.subr.bf16.mxu0 0
      %370 = vmatpush1.bf16.msra.mxu0 %v331
      %371 = vmatprep.subr.bf16.mxu0 0
      %372 = vmatpush1.bf16.msra.mxu0 %v332
      %373 = vmatprep.subr.bf16.mxu0 0
      %374 = vmatpush1.bf16.msra.mxu0 %v333
      %375 = vmatprep.subr.bf16.mxu0 0
      %376 = vmatpush1.bf16.msra.mxu0 %v334
      %377 = vmatprep.subr.bf16.mxu0 0
      %378 = vmatpush1.bf16.msra.mxu0 %v361
      %379 = vmatprep.subr.bf16.mxu0 0
      %380 = vmatpush1.bf16.msra.mxu0 0
      %381 = vmatprep.subr.bf16.mxu0 0
      %382 = vmatpush1.bf16.msra.mxu0 0
      %383 = vmatprep.subr.bf16.mxu0 0
      %384 = vmatpush1.bf16.msra.mxu0 0
      %385 = vmatprep.subr.bf16.mxu0 0
      %386 = vmatpush1.bf16.msra.mxu0 0
      %387 = vmatprep.subr.bf16.mxu0 0
      %388 = vmatpush1.bf16.msra.mxu0 0
      %389 = vmatprep.subr.bf16.mxu0 0
      %390 = vmatpush1.bf16.msra.mxu0 0
      %391 = vmatprep.subr.bf16.mxu0 0
      %392 = vmatpush1.bf16.msra.mxu0 0
      %393 = vmatprep.subr.bf16.mxu0 0
      %394 = vmatpush1.bf16.msra.mxu0 0
      %395 = vmatprep.mubr.bf16.mxu0 0
      %396 = vmatmul.mubr.bf16.gmra.mrb[0].mxu0 %v345
      %v397 = vpop.f32.mrb[0].mxu0
      %v398 = vadd.f32 0.0, %v397
      %v399 = vpop.f32.mrb[0].mxu0
      %v400 = vpop.f32.mrb[0].mxu0
      %v401 = vadd.f32 0.0, %v400
      %v402 = vpop.f32.mrb[0].mxu0
      %403 = vmatprep.mubr.bf16.mxu0 0
      %404 = vmatmul.mubr.bf16.gmra.mrb[0].mxu0 %v348
      %v405 = vpop.f32.mrb[0].mxu0
      %v406 = vadd.f32 0.0, %v405
      %v407 = vpop.f32.mrb[0].mxu0
      %v408 = vpop.f32.mrb[0].mxu0
      %v409 = vadd.f32 0.0, %v408
      %v410 = vpop.f32.mrb[0].mxu0
      %411 = vmatprep.mubr.bf16.mxu0 0
      %412 = vmatmul.mubr.bf16.gmra.mrb[0].mxu0 %v351
      %v413 = vpop.f32.mrb[0].mxu0
      %v414 = vadd.f32 0.0, %v413
      %v415 = vpop.f32.mrb[0].mxu0
      %v416 = vpop.f32.mrb[0].mxu0
      %v417 = vadd.f32 0.0, %v416
      %v418 = vpop.f32.mrb[0].mxu0
      %419 = vmatprep.mubr.bf16.mxu0 0
      %420 = vmatmul.mubr.bf16.gmra.mrb[0].mxu0 %v354
      %v421 = vpop.f32.mrb[0].mxu0
      %v422 = vadd.f32 0.0, %v421
      %v423 = vpop.f32.mrb[0].mxu0
      %v424 = vpop.f32.mrb[0].mxu0
      %v425 = vadd.f32 0.0, %v424
      %v426 = vpop.f32.mrb[0].mxu0
      %427 = vdwg.mxu0
      %s428 = smul.u32 %s21, 64
      %s429 = smul.u32 %s20, 64
      %s430 = sadd.s32 %s428, %s429
      %s431 = scalar_lea.vmem %s5, %s430
      %vm432 = vcmask 72704
      %433 = vst.msk [vmem:[%s431] sm:$0xff] %vm432, %v398
      %434 = vst.msk [vmem:[%s431 + $0x8] sm:$0xff] %vm432, %v401
      %435 = vst.msk [vmem:[%s431 + $0x10] sm:$0xff] %vm432, %v406
      %436 = vst.msk [vmem:[%s431 + $0x18] sm:$0xff] %vm432, %v409
      %437 = vst.msk [vmem:[%s431 + $0x20] sm:$0xff] %vm432, %v414
      %438 = vst.msk [vmem:[%s431 + $0x28] sm:$0xff] %vm432, %v417
      %439 = vst.msk [vmem:[%s431 + $0x30] sm:$0xff] %vm432, %v422
      %440 = vst.msk [vmem:[%s431 + $0x38] sm:$0xff] %vm432, %v425
      %v441 = vld [vmem:[#allocation2] sm:$0xff]
      %v442 = vld [vmem:[#allocation2 + $0x8] sm:$0xff]
      %v443 = vld [vmem:[#allocation2 + $0x10] sm:$0xff]
      %v444 = vld [vmem:[#allocation2 + $0x18] sm:$0xff]
      %v445 = vld [vmem:[#allocation2 + $0x20] sm:$0xff]
      %v446 = vld [vmem:[#allocation2 + $0x28] sm:$0xff]
      %v447 = vld [vmem:[#allocation2 + $0x30] sm:$0xff]
      %v448 = vld [vmem:[#allocation2 + $0x38] sm:$0xff]
      %v449 = vsel %vm432, %v398, 0.0
      %450 = vadd.xlane.f32.xlu0 %v449
      %v451 = vpop.xlane.xlu0 %450
      %v452 = vsel %vm432, %v401, 0.0
      %453 = vadd.xlane.f32.xlu0 %v452
      %v454 = vpop.xlane.xlu0 %453
      %v455 = vsel %vm432, %v406, 0.0
      %456 = vadd.xlane.f32.xlu0 %v455
      %v457 = vpop.xlane.xlu0 %456
      %v458 = vsel %vm432, %v409, 0.0
      %459 = vadd.xlane.f32.xlu0 %v458
      %v460 = vpop.xlane.xlu0 %459
      %v461 = vsel %vm432, %v414, 0.0
      %462 = vadd.xlane.f32.xlu0 %v461
      %v463 = vpop.xlane.xlu0 %462
      %v464 = vsel %vm432, %v417, 0.0
      %465 = vadd.xlane.f32.xlu0 %v464
      %v466 = vpop.xlane.xlu0 %465
      %v467 = vsel %vm432, %v422, 0.0
      %468 = vadd.xlane.f32.xlu0 %v467
      %v469 = vpop.xlane.xlu0 %468
      %v470 = vsel %vm432, %v425, 0.0
      %471 = vadd.xlane.f32.xlu0 %v470
      %v472 = vpop.xlane.xlu0 %471
      %v473 = vadd.f32 %v441, %v451
      %v474 = vadd.f32 %v442, %v454
      %v475 = vadd.f32 %v443, %v457
      %v476 = vadd.f32 %v444, %v460
      %v477 = vadd.f32 %v445, %v463
      %v478 = vadd.f32 %v446, %v466
      %v479 = vadd.f32 %v447, %v469
      %v480 = vadd.f32 %v448, %v472
      %vm481 = vcmask 7168
      %482 = vst.msk [vmem:[#allocation2] sm:$0xff] %vm481, %v473
      %483 = vst.msk [vmem:[#allocation2 + $0x8] sm:$0xff] %vm481, %v474
      %484 = vst.msk [vmem:[#allocation2 + $0x10] sm:$0xff] %vm481, %v475
      %485 = vst.msk [vmem:[#allocation2 + $0x18] sm:$0xff] %vm481, %v476
      %486 = vst.msk [vmem:[#allocation2 + $0x20] sm:$0xff] %vm481, %v477
      %487 = vst.msk [vmem:[#allocation2 + $0x28] sm:$0xff] %vm481, %v478
      %488 = vst.msk [vmem:[#allocation2 + $0x30] sm:$0xff] %vm481, %v479
      %489 = vst.msk [vmem:[#allocation2 + $0x38] sm:$0xff] %vm481, %v480
      // Predicated region
      $region45: #{decoder_forward.7} parent=39 // pred_check
        _
      $region46: #{decoder_forward.7} parent=39 // pred_check_branch
        %491 = sbr.rel (%p242) target = $region48
      $region47: #{decoder_forward.7} parent=39 // pred_region
        %v492 = vld [vmem:[%s4] sm:$0xff]
        %v493 = vld [vmem:[%s4 + $0x8] sm:$0xff]
        %v494 = vld [vmem:[%s4 + $0x10] sm:$0xff]
        %v495 = vld [vmem:[%s4 + $0x18] sm:$0xff]
        %v496 = vld [vmem:[%s4 + $0x20] sm:$0xff]
        %v497 = vld [vmem:[%s4 + $0x28] sm:$0xff]
        %v498 = vld [vmem:[%s4 + $0x30] sm:$0xff]
        %v499 = vld [vmem:[%s4 + $0x38] sm:$0xff]
        %v500 = vld [vmem:[#allocation2] sm:$0xff]
        %v501 = vld [vmem:[#allocation2 + $0x8] sm:$0xff]
        %v502 = vld [vmem:[#allocation2 + $0x10] sm:$0xff]
        %v503 = vld [vmem:[#allocation2 + $0x18] sm:$0xff]
        %v504 = vld [vmem:[#allocation2 + $0x20] sm:$0xff]
        %v505 = vld [vmem:[#allocation2 + $0x28] sm:$0xff]
        %v506 = vld [vmem:[#allocation2 + $0x30] sm:$0xff]
        %v507 = vld [vmem:[#allocation2 + $0x38] sm:$0xff]
        %vm508 = vcmask 523264
        %v510 = vsel %vm508, %v492, 0
        %v513 = vsel %vm508, %v493, 0
        %v516 = vsel %vm508, %v494, 0
        %v519 = vsel %vm508, %v495, 0
        %v522 = vsel %vm508, %v496, 0
        %v525 = vsel %vm508, %v497, 0
        %v528 = vsel %vm508, %v498, 0
        %v531 = vsel %vm508, %v499, 0
        %533 = vmatprep.subr.mxu0 0.0
        %534 = vmatpush1.msra.mxu0 %v500
        %535 = vmatprep.subr.mxu0 0.0
        %536 = vmatpush1.msra.mxu0 %v501
        %537 = vmatprep.subr.mxu0 0.0
        %538 = vmatpush1.msra.mxu0 %v502
        %539 = vmatprep.subr.mxu0 0.0
        %540 = vmatpush1.msra.mxu0 %v503
        %541 = vmatprep.subr.mxu0 0.0
        %542 = vmatpush1.msra.mxu0 %v504
        %543 = vmatprep.subr.mxu0 0.0
        %544 = vmatpush1.msra.mxu0 %v505
        %545 = vmatprep.subr.mxu0 0.0
        %546 = vmatpush1.msra.mxu0 %v506
        %547 = vmatprep.subr.mxu0 0.0
        %548 = vmatpush1.msra.mxu0 %v507
        %549 = vmatprep.subr.mxu0 0.0
        %550 = vmatpush1.msra.mxu0 0.0
        %551 = vmatprep.subr.mxu0 0.0
        %552 = vmatpush1.msra.mxu0 0.0
        %553 = vmatprep.subr.mxu0 0.0
        %554 = vmatpush1.msra.mxu0 0.0
        %555 = vmatprep.subr.mxu0 0.0
        %556 = vmatpush1.msra.mxu0 0.0
        %557 = vmatprep.subr.mxu0 0.0
        %558 = vmatpush1.msra.mxu0 0.0
        %559 = vmatprep.subr.mxu0 0.0
        %560 = vmatpush1.msra.mxu0 0.0
        %561 = vmatprep.subr.mxu0 0.0
        %562 = vmatpush1.msra.mxu0 0.0
        %563 = vmatprep.subr.mxu0 0.0
        %564 = vmatpush1.msra.mxu0 0.0
        %565 = vmatprep.subr.mxu0 0.0
        %566 = vmatpush1.msra.mxu0 0.0
        %567 = vmatprep.subr.mxu0 0.0
        %568 = vmatpush1.msra.mxu0 0.0
        %569 = vmatprep.subr.mxu0 0.0
        %570 = vmatpush1.msra.mxu0 0.0
        %571 = vmatprep.subr.mxu0 0.0
        %572 = vmatpush1.msra.mxu0 0.0
        %573 = vmatprep.subr.mxu0 0.0
        %574 = vmatpush1.msra.mxu0 0.0
        %575 = vmatprep.subr.mxu0 0.0
        %576 = vmatpush1.msra.mxu0 0.0
        %577 = vmatprep.subr.mxu0 0.0
        %578 = vmatpush1.msra.mxu0 0.0
        %579 = vmatprep.subr.mxu0 0.0
        %580 = vmatpush1.msra.mxu0 0.0
        %581 = vmatprep.subr.mxu0 0.0
        %582 = vmatpush1.msra.mxu0 0.0
        %583 = vmatprep.subr.mxu0 0.0
        %584 = vmatpush1.msra.mxu0 0.0
        %585 = vmatprep.subr.mxu0 0.0
        %586 = vmatpush1.msra.mxu0 0.0
        %587 = vmatprep.subr.mxu0 0.0
        %588 = vmatpush1.msra.mxu0 0.0
        %589 = vmatprep.subr.mxu0 0.0
        %590 = vmatpush1.msra.mxu0 0.0
        %591 = vmatprep.subr.mxu0 0.0
        %592 = vmatpush1.msra.mxu0 0.0
        %593 = vmatprep.subr.mxu0 0.0
        %594 = vmatpush1.msra.mxu0 0.0
        %595 = vmatprep.subr.mxu0 0.0
        %596 = vmatpush1.msra.mxu0 0.0
        %597 = vmatprep.mubr.f32.mxu0 0.0
        %598 = vmatmul.mubr.f32.gmra.mrb[0].mxu0 %v510
        %v599 = vpop.f32.mrb[0].mxu0
        %v600 = vadd.f32 0.0, %v599
        %v601 = vpop.f32.mrb[0].mxu0
        %602 = vmatprep.mubr.f32.mxu0 0.0
        %603 = vmatmul.mubr.f32.gmra.mrb[0].mxu0 %v513
        %v604 = vpop.f32.mrb[0].mxu0
        %v605 = vadd.f32 0.0, %v604
        %v606 = vpop.f32.mrb[0].mxu0
        %607 = vmatprep.mubr.f32.mxu0 0.0
        %608 = vmatmul.mubr.f32.gmra.mrb[0].mxu0 %v516
        %v609 = vpop.f32.mrb[0].mxu0
        %v610 = vadd.f32 0.0, %v609
        %v611 = vpop.f32.mrb[0].mxu0
        %612 = vmatprep.mubr.f32.mxu0 0.0
        %613 = vmatmul.mubr.f32.gmra.mrb[0].mxu0 %v519
        %v614 = vpop.f32.mrb[0].mxu0
        %v615 = vadd.f32 0.0, %v614
        %v616 = vpop.f32.mrb[0].mxu0
        %617 = vmatprep.mubr.f32.mxu0 0.0
        %618 = vmatmul.mubr.f32.gmra.mrb[0].mxu0 %v522
        %v619 = vpop.f32.mrb[0].mxu0
        %v620 = vadd.f32 0.0, %v619
        %v621 = vpop.f32.mrb[0].mxu0
        %622 = vmatprep.mubr.f32.mxu0 0.0
        %623 = vmatmul.mubr.f32.gmra.mrb[0].mxu0 %v525
        %v624 = vpop.f32.mrb[0].mxu0
        %v625 = vadd.f32 0.0, %v624
        %v626 = vpop.f32.mrb[0].mxu0
        %627 = vmatprep.mubr.f32.mxu0 0.0
        %628 = vmatmul.mubr.f32.gmra.mrb[0].mxu0 %v528
        %v629 = vpop.f32.mrb[0].mxu0
        %v630 = vadd.f32 0.0, %v629
        %v631 = vpop.f32.mrb[0].mxu0
        %632 = vmatprep.mubr.f32.mxu0 0.0
        %633 = vmatmul.mubr.f32.gmra.mrb[0].mxu0 %v531
        %v634 = vpop.f32.mrb[0].mxu0
        %v635 = vadd.f32 0.0, %v634
        %v636 = vpop.f32.mrb[0].mxu0
        %637 = vdwg.mxu0
        %v638 = vmul.f32 %v600, 0.055555556
        %v639 = vmul.f32 %v605, 0.055555556
        %v640 = vmul.f32 %v610, 0.055555556
        %v641 = vmul.f32 %v615, 0.055555556
        %v642 = vmul.f32 %v620, 0.055555556
        %v643 = vmul.f32 %v625, 0.055555556
        %v644 = vmul.f32 %v630, 0.055555556
        %v645 = vmul.f32 %v635, 0.055555556
        %v646 = vld [vmem:[%s5] sm:$0xff]
        %v647 = vld [vmem:[%s5 + $0x8] sm:$0xff]
        %v648 = vld [vmem:[%s5 + $0x10] sm:$0xff]
        %v649 = vld [vmem:[%s5 + $0x18] sm:$0xff]
        %v650 = vld [vmem:[%s5 + $0x20] sm:$0xff]
        %v651 = vld [vmem:[%s5 + $0x28] sm:$0xff]
        %v652 = vld [vmem:[%s5 + $0x30] sm:$0xff]
        %v653 = vld [vmem:[%s5 + $0x38] sm:$0xff]
        %655 = vset.pattern.permute.xlu0 0
        %656 = vperm.xlu0 %655, %v638
        %v657 = vpop.permute.xlu0 %656
        %660 = vset.pattern.permute.xlu0 0
        %661 = vperm.xlu0 %660, %v639
        %v662 = vpop.permute.xlu0 %661
        %665 = vset.pattern.permute.xlu0 0
        %666 = vperm.xlu0 %665, %v640
        %v667 = vpop.permute.xlu0 %666
        %670 = vset.pattern.permute.xlu0 0
        %671 = vperm.xlu0 %670, %v641
        %v672 = vpop.permute.xlu0 %671
        %675 = vset.pattern.permute.xlu0 0
        %676 = vperm.xlu0 %675, %v642
        %v677 = vpop.permute.xlu0 %676
        %680 = vset.pattern.permute.xlu0 0
        %681 = vperm.xlu0 %680, %v643
        %v682 = vpop.permute.xlu0 %681
        %685 = vset.pattern.permute.xlu0 0
        %686 = vperm.xlu0 %685, %v644
        %v687 = vpop.permute.xlu0 %686
        %690 = vset.pattern.permute.xlu0 0
        %691 = vperm.xlu0 %690, %v645
        %v692 = vpop.permute.xlu0 %691
        %v694 = vsub.f32 %v646, %v657
        %v695 = vsub.f32 %v647, %v662
        %v696 = vsub.f32 %v648, %v667
        %v697 = vsub.f32 %v649, %v672
        %v698 = vsub.f32 %v650, %v677
        %v699 = vsub.f32 %v651, %v682
        %v700 = vsub.f32 %v652, %v687
        %v701 = vsub.f32 %v653, %v692
        %v702 = vmul.f32 %v694, %v694
        %v703 = vmul.f32 %v695, %v695
        %v704 = vmul.f32 %v696, %v696
        %v705 = vmul.f32 %v697, %v697
        %v706 = vmul.f32 %v698, %v698
        %v707 = vmul.f32 %v699, %v699
        %v708 = vmul.f32 %v700, %v700
        %v709 = vmul.f32 %v701, %v701
        %v710 = vsel %vm432, %v702, 0.0
        %711 = vadd.xlane.f32.xlu0 %v710
        %v712 = vpop.xlane.xlu0 %711
        %v713 = vsel %vm432, %v703, 0.0
        %714 = vadd.xlane.f32.xlu0 %v713
        %v715 = vpop.xlane.xlu0 %714
        %v716 = vsel %vm432, %v704, 0.0
        %717 = vadd.xlane.f32.xlu0 %v716
        %v718 = vpop.xlane.xlu0 %717
        %v719 = vsel %vm432, %v705, 0.0
        %720 = vadd.xlane.f32.xlu0 %v719
        %v721 = vpop.xlane.xlu0 %720
        %v722 = vsel %vm432, %v706, 0.0
        %723 = vadd.xlane.f32.xlu0 %v722
        %v724 = vpop.xlane.xlu0 %723
        %v725 = vsel %vm432, %v707, 0.0
        %726 = vadd.xlane.f32.xlu0 %v725
        %v727 = vpop.xlane.xlu0 %726
        %v728 = vsel %vm432, %v708, 0.0
        %729 = vadd.xlane.f32.xlu0 %v728
        %v730 = vpop.xlane.xlu0 %729
        %v731 = vsel %vm432, %v709, 0.0
        %732 = vadd.xlane.f32.xlu0 %v731
        %v733 = vpop.xlane.xlu0 %732
        %v734 = vadd.f32 %v712, 0.0
        %v735 = vadd.f32 %v715, 0.0
        %v736 = vadd.f32 %v718, 0.0
        %v737 = vadd.f32 %v721, 0.0
        %v738 = vadd.f32 %v724, 0.0
        %v739 = vadd.f32 %v727, 0.0
        %v740 = vadd.f32 %v730, 0.0
        %v741 = vadd.f32 %v733, 0.0
        %s742 = scalar_lea.vmem %s5, 64
        %v743 = vld [vmem:[%s742] sm:$0xff]
        %v744 = vld [vmem:[%s742 + $0x8] sm:$0xff]
        %v745 = vld [vmem:[%s742 + $0x10] sm:$0xff]
        %v746 = vld [vmem:[%s742 + $0x18] sm:$0xff]
        %v747 = vld [vmem:[%s742 + $0x20] sm:$0xff]
        %v748 = vld [vmem:[%s742 + $0x28] sm:$0xff]
        %v749 = vld [vmem:[%s742 + $0x30] sm:$0xff]
        %v750 = vld [vmem:[%s742 + $0x38] sm:$0xff]
        %v751 = vsub.f32 %v743, %v657
        %v752 = vsub.f32 %v744, %v662
        %v753 = vsub.f32 %v745, %v667
        %v754 = vsub.f32 %v746, %v672
        %v755 = vsub.f32 %v747, %v677
        %v756 = vsub.f32 %v748, %v682
        %v757 = vsub.f32 %v749, %v687
        %v758 = vsub.f32 %v750, %v692
        %v759 = vmul.f32 %v751, %v751
        %v760 = vmul.f32 %v752, %v752
        %v761 = vmul.f32 %v753, %v753
        %v762 = vmul.f32 %v754, %v754
        %v763 = vmul.f32 %v755, %v755
        %v764 = vmul.f32 %v756, %v756
        %v765 = vmul.f32 %v757, %v757
        %v766 = vmul.f32 %v758, %v758
        %v767 = vsel %vm432, %v759, 0.0
        %768 = vadd.xlane.f32.xlu0 %v767
        %v769 = vpop.xlane.xlu0 %768
        %v770 = vsel %vm432, %v760, 0.0
        %771 = vadd.xlane.f32.xlu0 %v770
        %v772 = vpop.xlane.xlu0 %771
        %v773 = vsel %vm432, %v761, 0.0
        %774 = vadd.xlane.f32.xlu0 %v773
        %v775 = vpop.xlane.xlu0 %774
        %v776 = vsel %vm432, %v762, 0.0
        %777 = vadd.xlane.f32.xlu0 %v776
        %v778 = vpop.xlane.xlu0 %777
        %v779 = vsel %vm432, %v763, 0.0
        %780 = vadd.xlane.f32.xlu0 %v779
        %v781 = vpop.xlane.xlu0 %780
        %v782 = vsel %vm432, %v764, 0.0
        %783 = vadd.xlane.f32.xlu0 %v782
        %v784 = vpop.xlane.xlu0 %783
        %v785 = vsel %vm432, %v765, 0.0
        %786 = vadd.xlane.f32.xlu0 %v785
        %v787 = vpop.xlane.xlu0 %786
        %v788 = vsel %vm432, %v766, 0.0
        %789 = vadd.xlane.f32.xlu0 %v788
        %v790 = vpop.xlane.xlu0 %789
        %v791 = vadd.f32 %v734, %v769
        %v792 = vadd.f32 %v735, %v772
        %v793 = vadd.f32 %v736, %v775
        %v794 = vadd.f32 %v737, %v778
        %v795 = vadd.f32 %v738, %v781
        %v796 = vadd.f32 %v739, %v784
        %v797 = vadd.f32 %v740, %v787
        %v798 = vadd.f32 %v741, %v790
        %799 = vmatprep.subr.mxu0 0.0
        %800 = vmatpush1.msra.mxu0 %v791
        %801 = vmatprep.subr.mxu0 0.0
        %802 = vmatpush1.msra.mxu0 %v792
        %803 = vmatprep.subr.mxu0 0.0
        %804 = vmatpush1.msra.mxu0 %v793
        %805 = vmatprep.subr.mxu0 0.0
        %806 = vmatpush1.msra.mxu0 %v794
        %807 = vmatprep.subr.mxu0 0.0
        %808 = vmatpush1.msra.mxu0 %v795
        %809 = vmatprep.subr.mxu0 0.0
        %810 = vmatpush1.msra.mxu0 %v796
        %811 = vmatprep.subr.mxu0 0.0
        %812 = vmatpush1.msra.mxu0 %v797
        %813 = vmatprep.subr.mxu0 0.0
        %814 = vmatpush1.msra.mxu0 %v798
        %815 = vmatprep.subr.mxu0 0.0
        %816 = vmatpush1.msra.mxu0 0.0
        %817 = vmatprep.subr.mxu0 0.0
        %818 = vmatpush1.msra.mxu0 0.0
        %819 = vmatprep.subr.mxu0 0.0
        %820 = vmatpush1.msra.mxu0 0.0
        %821 = vmatprep.subr.mxu0 0.0
        %822 = vmatpush1.msra.mxu0 0.0
        %823 = vmatprep.subr.mxu0 0.0
        %824 = vmatpush1.msra.mxu0 0.0
        %825 = vmatprep.subr.mxu0 0.0
        %826 = vmatpush1.msra.mxu0 0.0
        %827 = vmatprep.subr.mxu0 0.0
        %828 = vmatpush1.msra.mxu0 0.0
        %829 = vmatprep.subr.mxu0 0.0
        %830 = vmatpush1.msra.mxu0 0.0
        %831 = vmatprep.subr.mxu0 0.0
        %832 = vmatpush1.msra.mxu0 0.0
        %833 = vmatprep.subr.mxu0 0.0
        %834 = vmatpush1.msra.mxu0 0.0
        %835 = vmatprep.subr.mxu0 0.0
        %836 = vmatpush1.msra.mxu0 0.0
        %837 = vmatprep.subr.mxu0 0.0
        %838 = vmatpush1.msra.mxu0 0.0
        %839 = vmatprep.subr.mxu0 0.0
        %840 = vmatpush1.msra.mxu0 0.0
        %841 = vmatprep.subr.mxu0 0.0
        %842 = vmatpush1.msra.mxu0 0.0
        %843 = vmatprep.subr.mxu0 0.0
        %844 = vmatpush1.msra.mxu0 0.0
        %845 = vmatprep.subr.mxu0 0.0
        %846 = vmatpush1.msra.mxu0 0.0
        %847 = vmatprep.subr.mxu0 0.0
        %848 = vmatpush1.msra.mxu0 0.0
        %849 = vmatprep.subr.mxu0 0.0
        %850 = vmatpush1.msra.mxu0 0.0
        %851 = vmatprep.subr.mxu0 0.0
        %852 = vmatpush1.msra.mxu0 0.0
        %853 = vmatprep.subr.mxu0 0.0
        %854 = vmatpush1.msra.mxu0 0.0
        %855 = vmatprep.subr.mxu0 0.0
        %856 = vmatpush1.msra.mxu0 0.0
        %857 = vmatprep.subr.mxu0 0.0
        %858 = vmatpush1.msra.mxu0 0.0
        %859 = vmatprep.subr.mxu0 0.0
        %860 = vmatpush1.msra.mxu0 0.0
        %861 = vmatprep.subr.mxu0 0.0
        %862 = vmatpush1.msra.mxu0 0.0
        %863 = vmatprep.mubr.f32.mxu0 0.0
        %864 = vmatmul.mubr.f32.gmra.mrb[0].mxu0 %v510
        %v865 = vpop.f32.mrb[0].mxu0
        %v866 = vadd.f32 0.0, %v865
        %v867 = vpop.f32.mrb[0].mxu0
        %868 = vmatprep.mubr.f32.mxu0 0.0
        %869 = vmatmul.mubr.f32.gmra.mrb[0].mxu0 %v513
        %v870 = vpop.f32.mrb[0].mxu0
        %v871 = vadd.f32 0.0, %v870
        %v872 = vpop.f32.mrb[0].mxu0
        %873 = vmatprep.mubr.f32.mxu0 0.0
        %874 = vmatmul.mubr.f32.gmra.mrb[0].mxu0 %v516
        %v875 = vpop.f32.mrb[0].mxu0
        %v876 = vadd.f32 0.0, %v875
        %v877 = vpop.f32.mrb[0].mxu0
        %878 = vmatprep.mubr.f32.mxu0 0.0
        %879 = vmatmul.mubr.f32.gmra.mrb[0].mxu0 %v519
        %v880 = vpop.f32.mrb[0].mxu0
        %v881 = vadd.f32 0.0, %v880
        %v882 = vpop.f32.mrb[0].mxu0
        %883 = vmatprep.mubr.f32.mxu0 0.0
        %884 = vmatmul.mubr.f32.gmra.mrb[0].mxu0 %v522
        %v885 = vpop.f32.mrb[0].mxu0
        %v886 = vadd.f32 0.0, %v885
        %v887 = vpop.f32.mrb[0].mxu0
        %888 = vmatprep.mubr.f32.mxu0 0.0
        %889 = vmatmul.mubr.f32.gmra.mrb[0].mxu0 %v525
        %v890 = vpop.f32.mrb[0].mxu0
        %v891 = vadd.f32 0.0, %v890
        %v892 = vpop.f32.mrb[0].mxu0
        %893 = vmatprep.mubr.f32.mxu0 0.0
        %894 = vmatmul.mubr.f32.gmra.mrb[0].mxu0 %v528
        %v895 = vpop.f32.mrb[0].mxu0
        %v896 = vadd.f32 0.0, %v895
        %v897 = vpop.f32.mrb[0].mxu0
        %898 = vmatprep.mubr.f32.mxu0 0.0
        %899 = vmatmul.mubr.f32.gmra.mrb[0].mxu0 %v531
        %v900 = vpop.f32.mrb[0].mxu0
        %v901 = vadd.f32 0.0, %v900
        %v902 = vpop.f32.mrb[0].mxu0
        %903 = vdwg.mxu0
        %v904 = vmul.f32 %v866, 0.055555556
        %v905 = vmul.f32 %v871, 0.055555556
        %v906 = vmul.f32 %v876, 0.055555556
        %v907 = vmul.f32 %v881, 0.055555556
        %v908 = vmul.f32 %v886, 0.055555556
        %v909 = vmul.f32 %v891, 0.055555556
        %v910 = vmul.f32 %v896, 0.055555556
        %v911 = vmul.f32 %v901, 0.055555556
        %v912 = vld [vmem:[%s2] sm:$0xff]
        %v913 = vld [vmem:[%s2 + $0x8] sm:$0xff]
        %v914 = vld [vmem:[%s2 + $0x10] sm:$0xff]
        %v915 = vld [vmem:[%s2 + $0x18] sm:$0xff]
        %v916 = vld [vmem:[%s2 + $0x20] sm:$0xff]
        %v917 = vld [vmem:[%s2 + $0x28] sm:$0xff]
        %v918 = vld [vmem:[%s2 + $0x30] sm:$0xff]
        %v919 = vld [vmem:[%s2 + $0x38] sm:$0xff]
        %v920 = vadd.f32 %v904, 1e-05
        %v921 = vadd.f32 %v905, 1e-05
        %v922 = vadd.f32 %v906, 1e-05
        %v923 = vadd.f32 %v907, 1e-05
        %v924 = vadd.f32 %v908, 1e-05
        %v925 = vadd.f32 %v909, 1e-05
        %v926 = vadd.f32 %v910, 1e-05
        %v927 = vadd.f32 %v911, 1e-05
        %v928 = vrsqrt.pop %v920
        %v929 = vrsqrt.pop %v921
        %v930 = vrsqrt.pop %v922
        %v931 = vrsqrt.pop %v923
        %v932 = vrsqrt.pop %v924
        %v933 = vrsqrt.pop %v925
        %v934 = vrsqrt.pop %v926
        %v935 = vrsqrt.pop %v927
        %v936 = vmul.f32 %v912, %v928
        %v937 = vmul.f32 %v913, %v929
        %v938 = vmul.f32 %v914, %v930
        %v939 = vmul.f32 %v915, %v931
        %v940 = vmul.f32 %v916, %v932
        %v941 = vmul.f32 %v917, %v933
        %v942 = vmul.f32 %v918, %v934
        %v943 = vmul.f32 %v919, %v935
        %v944 = vld [vmem:[%s3] sm:$0xff]
        %v945 = vld [vmem:[%s3 + $0x8] sm:$0xff]
        %v946 = vld [vmem:[%s3 + $0x10] sm:$0xff]
        %v947 = vld [vmem:[%s3 + $0x18] sm:$0xff]
        %v948 = vld [vmem:[%s3 + $0x20] sm:$0xff]
        %v949 = vld [vmem:[%s3 + $0x28] sm:$0xff]
        %v950 = vld [vmem:[%s3 + $0x30] sm:$0xff]
        %v951 = vld [vmem:[%s3 + $0x38] sm:$0xff]
        %v952 = vmul.f32 %v638, %v936
        %v953 = vmul.f32 %v639, %v937
        %v954 = vmul.f32 %v640, %v938
        %v955 = vmul.f32 %v641, %v939
        %v956 = vmul.f32 %v642, %v940
        %v957 = vmul.f32 %v643, %v941
        %v958 = vmul.f32 %v644, %v942
        %v959 = vmul.f32 %v645, %v943
        %v960 = vsub.f32 %v944, %v952
        %v961 = vsub.f32 %v945, %v953
        %v962 = vsub.f32 %v946, %v954
        %v963 = vsub.f32 %v947, %v955
        %v964 = vsub.f32 %v948, %v956
        %v965 = vsub.f32 %v949, %v957
        %v966 = vsub.f32 %v950, %v958
        %v967 = vsub.f32 %v951, %v959
        %969 = vset.pattern.permute.xlu0 0
        %970 = vperm.xlu0 %969, %v936
        %v971 = vpop.permute.xlu0 %970
        %974 = vset.pattern.permute.xlu0 0
        %975 = vperm.xlu0 %974, %v937
        %v976 = vpop.permute.xlu0 %975
        %979 = vset.pattern.permute.xlu0 0
        %980 = vperm.xlu0 %979, %v938
        %v981 = vpop.permute.xlu0 %980
        %984 = vset.pattern.permute.xlu0 0
        %985 = vperm.xlu0 %984, %v939
        %v986 = vpop.permute.xlu0 %985
        %989 = vset.pattern.permute.xlu0 0
        %990 = vperm.xlu0 %989, %v940
        %v991 = vpop.permute.xlu0 %990
        %994 = vset.pattern.permute.xlu0 0
        %995 = vperm.xlu0 %994, %v941
        %v996 = vpop.permute.xlu0 %995
        %999 = vset.pattern.permute.xlu0 0
        %1000 = vperm.xlu0 %999, %v942
        %v1001 = vpop.permute.xlu0 %1000
        %1004 = vset.pattern.permute.xlu0 0
        %1005 = vperm.xlu0 %1004, %v943
        %v1006 = vpop.permute.xlu0 %1005
        %v1008 = vmul.f32 %v646, %v971
        %v1009 = vmul.f32 %v647, %v976
        %v1010 = vmul.f32 %v648, %v981
        %v1011 = vmul.f32 %v649, %v986
        %v1012 = vmul.f32 %v650, %v991
        %v1013 = vmul.f32 %v651, %v996
        %v1014 = vmul.f32 %v652, %v1001
        %v1015 = vmul.f32 %v653, %v1006
        %1017 = vset.pattern.permute.xlu0 0
        %1018 = vperm.xlu0 %1017, %v960
        %v1019 = vpop.permute.xlu0 %1018
        %1022 = vset.pattern.permute.xlu0 0
        %1023 = vperm.xlu0 %1022, %v961
        %v1024 = vpop.permute.xlu0 %1023
        %1027 = vset.pattern.permute.xlu0 0
        %1028 = vperm.xlu0 %1027, %v962
        %v1029 = vpop.permute.xlu0 %1028
        %1032 = vset.pattern.permute.xlu0 0
        %1033 = vperm.xlu0 %1032, %v963
        %v1034 = vpop.permute.xlu0 %1033
        %1037 = vset.pattern.permute.xlu0 0
        %1038 = vperm.xlu0 %1037, %v964
        %v1039 = vpop.permute.xlu0 %1038
        %1042 = vset.pattern.permute.xlu0 0
        %1043 = vperm.xlu0 %1042, %v965
        %v1044 = vpop.permute.xlu0 %1043
        %1047 = vset.pattern.permute.xlu0 0
        %1048 = vperm.xlu0 %1047, %v966
        %v1049 = vpop.permute.xlu0 %1048
        %1052 = vset.pattern.permute.xlu0 0
        %1053 = vperm.xlu0 %1052, %v967
        %v1054 = vpop.permute.xlu0 %1053
        %v1056 = vadd.f32 %v1008, %v1019
        %v1057 = vadd.f32 %v1009, %v1024
        %v1058 = vadd.f32 %v1010, %v1029
        %v1059 = vadd.f32 %v1011, %v1034
        %v1060 = vadd.f32 %v1012, %v1039
        %v1061 = vadd.f32 %v1013, %v1044
        %v1062 = vadd.f32 %v1014, %v1049
        %v1063 = vadd.f32 %v1015, %v1054
        %v1064 = vmax.f32 %v1056, 0.0
        %v1065 = vmax.f32 %v1057, 0.0
        %v1066 = vmax.f32 %v1058, 0.0
        %v1067 = vmax.f32 %v1059, 0.0
        %v1068 = vmax.f32 %v1060, 0.0
        %v1069 = vmax.f32 %v1061, 0.0
        %v1070 = vmax.f32 %v1062, 0.0
        %v1071 = vmax.f32 %v1063, 0.0
        %1072 = vst.msk [vmem:[%s5] sm:$0xff] %vm432, %v1064
        %1073 = vst.msk [vmem:[%s5 + $0x8] sm:$0xff] %vm432, %v1065
        %1074 = vst.msk [vmem:[%s5 + $0x10] sm:$0xff] %vm432, %v1066
        %1075 = vst.msk [vmem:[%s5 + $0x18] sm:$0xff] %vm432, %v1067
        %1076 = vst.msk [vmem:[%s5 + $0x20] sm:$0xff] %vm432, %v1068
        %1077 = vst.msk [vmem:[%s5 + $0x28] sm:$0xff] %vm432, %v1069
        %1078 = vst.msk [vmem:[%s5 + $0x30] sm:$0xff] %vm432, %v1070
        %1079 = vst.msk [vmem:[%s5 + $0x38] sm:$0xff] %vm432, %v1071
        %v1080 = vld [vmem:[%s742] sm:$0xff]
        %v1081 = vld [vmem:[%s742 + $0x8] sm:$0xff]
        %v1082 = vld [vmem:[%s742 + $0x10] sm:$0xff]
        %v1083 = vld [vmem:[%s742 + $0x18] sm:$0xff]
        %v1084 = vld [vmem:[%s742 + $0x20] sm:$0xff]
        %v1085 = vld [vmem:[%s742 + $0x28] sm:$0xff]
        %v1086 = vld [vmem:[%s742 + $0x30] sm:$0xff]
        %v1087 = vld [vmem:[%s742 + $0x38] sm:$0xff]
        %v1088 = vmul.f32 %v1080, %v971
        %v1089 = vmul.f32 %v1081, %v976
        %v1090 = vmul.f32 %v1082, %v981
        %v1091 = vmul.f32 %v1083, %v986
        %v1092 = vmul.f32 %v1084, %v991
        %v1093 = vmul.f32 %v1085, %v996
        %v1094 = vmul.f32 %v1086, %v1001
        %v1095 = vmul.f32 %v1087, %v1006
        %v1096 = vadd.f32 %v1088, %v1019
        %v1097 = vadd.f32 %v1089, %v1024
        %v1098 = vadd.f32 %v1090, %v1029
        %v1099 = vadd.f32 %v1091, %v1034
        %v1100 = vadd.f32 %v1092, %v1039
        %v1101 = vadd.f32 %v1093, %v1044
        %v1102 = vadd.f32 %v1094, %v1049
        %v1103 = vadd.f32 %v1095, %v1054
        %v1104 = vmax.f32 %v1096, 0.0
        %v1105 = vmax.f32 %v1097, 0.0
        %v1106 = vmax.f32 %v1098, 0.0
        %v1107 = vmax.f32 %v1099, 0.0
        %v1108 = vmax.f32 %v1100, 0.0
        %v1109 = vmax.f32 %v1101, 0.0
        %v1110 = vmax.f32 %v1102, 0.0
        %v1111 = vmax.f32 %v1103, 0.0
        %1112 = vst.msk [vmem:[%s742] sm:$0xff] %vm432, %v1104
        %1113 = vst.msk [vmem:[%s742 + $0x8] sm:$0xff] %vm432, %v1105
        %1114 = vst.msk [vmem:[%s742 + $0x10] sm:$0xff] %vm432, %v1106
        %1115 = vst.msk [vmem:[%s742 + $0x18] sm:$0xff] %vm432, %v1107
        %1116 = vst.msk [vmem:[%s742 + $0x20] sm:$0xff] %vm432, %v1108
        %1117 = vst.msk [vmem:[%s742 + $0x28] sm:$0xff] %vm432, %v1109
        %1118 = vst.msk [vmem:[%s742 + $0x30] sm:$0xff] %vm432, %v1110
        %1119 = vst.msk [vmem:[%s742 + $0x38] sm:$0xff] %vm432, %v1111
      $region48: #{decoder_forward.7} parent=39 // pred_fallthru
        _
      // Predicated region
      $region49: #{decoder_forward.7} parent=39 // pred_check
        %p1120 = pneg %p153
      $region50: #{decoder_forward.7} parent=39 // pred_check_branch
        %1122 = sbr.rel (%p1120) target = $region52
      $region51: #{decoder_forward.7} parent=39 // pred_region
        _
      $region52: #{decoder_forward.7} parent=39 // pred_fallthru
        _
      // Predicated region
      $region53: #{decoder_forward.7} parent=39 // pred_check
        %p1123 = pneg %p153
      $region54: #{decoder_forward.7} parent=39 // pred_check_branch
        %1125 = sbr.rel (%p1123) target = $region56
      $region55: #{decoder_forward.7} parent=39 // pred_region
        _
      $region56: #{decoder_forward.7} parent=39 // pred_fallthru
        _
    $region40: #{decoder_forward.7} parent=5 // pred_fallthru
      _
    %p1126 = scmp.le.s32.totalorder 2, %s11
    // Predicated region
    $region57: #{decoder_forward.7} parent=5 // pred_check
      %p1127 = pneg %p1126
    $region58: #{decoder_forward.7} parent=5 // pred_check_branch
      %1129 = sbr.rel (%p1127) target = $region60
    $region59: #{decoder_forward.7} parent=5 // pred_region
      %s1130 = ssub.s32 %s11, 2
    $region60: #{decoder_forward.7} parent=5 // pred_fallthru
      _
  $region6: #{decoder_forward.7} parent=0 // loop_footer
    %s15 = sadd.s32 1, %s11
  $region7: #{decoder_forward.7} parent=0 // loop_footer_branch
    %10 = sbr.rel target = $region3
  $region8: #{decoder_forward.7} parent=0 // loop_exit
    _

// kernel: decoder_forward.8
$region0: #{decoder_forward.8}
  #allocation0 [shape = 'u32[]', space=smem, size = 0x4, offset = 0x4, fixed_abs, tag = 'smem constant byte address 0x4 - core index']
  #allocation1 [shape = 'u32[144,128]{1,0:T(1,128)}', space=vmem, size = 0x12000, scoped, tag = 'internal scratch']
  #allocation2 [shape = 'f32[32,1]{1,0:T(8,128)}', space=vmem, size = 0x4000, scoped, tag = 'scratch operand']
  %s0 = inlined_call_operand.vmem [shape: bf16[2,1,1024,49], index: 0, kind: input, shape index: {}]
  %s1 = inlined_call_operand.vmem [shape: bf16[32,1024], index: 1, kind: input, shape index: {}]
  %s2 = inlined_call_operand.vmem [shape: f32[32,1], index: 2, kind: input, shape index: {}]
  %s3 = inlined_call_operand.vmem [shape: f32[32,1], index: 3, kind: input, shape index: {}]
  %s4 = inlined_call_operand.vmem [shape: f32[32,32], index: 4, kind: input, shape index: {}]
  %s5 = inlined_call_operand.vmem [shape: f32[2,1,32,49], index: 5, kind: output, shape index: {}]
  %s6 = sld [smem:[#allocation0]]
  $region61: #{decoder_forward.8} parent=0
    _
  %s8 = ssub.s32 1, %s6
  %s9 = scalar_select 0, %s8, %s6
  loop: start=0, step=1, limit=4
  $region2: #{decoder_forward.8} parent=0 // loop_pre_header
    _
  $region3: #{decoder_forward.8} parent=0 // loop_header
    %s11 = sphi 0, %s15
    %p12 = scmp.ge.s32.totalorder %s11, 4
    %s18 = sphi 0, %s30
    %s19 = sphi 0, %s26
    %s20 = sphi 0, %s18
    %s21 = sphi 0, %s19
    %s22 = sphi 0, %s20
    %s23 = sphi 0, %s21
    %s35 = sphi 0, %s37
    %s38 = sphi 0, %s35
    %s39 = sphi 0, %s38
    %s55 = sphi 0, %s39
    %s59 = sphi 0, %s59
    %s61 = sphi 0, %s59
    %s62 = sphi 0, %s61
    %s76 = sphi 0, %s62
    %s80 = sphi 0, %s80
    %s82 = sphi 0, %s80
    %s83 = sphi 0, %s82
    %s97 = sphi 0, %s83
    %s101 = sphi 0, %s101
    %s103 = sphi 0, %s101
    %s104 = sphi 0, %s103
    %s118 = sphi 0, %s104
    %s122 = sphi 0, %s122
    %s124 = sphi 0, %s122
    %s125 = sphi 0, %s124
    %s139 = sphi 0, %s125
    %s143 = sphi 0, %s143
    %s145 = sphi 0, %s143
    %s146 = sphi 0, %s145
    %s160 = sphi 0, %s146
  $region4: #{decoder_forward.8} parent=0 // loop_header_branch
    %14 = sbr.rel (%p12) target = $region8
  $region5: #{decoder_forward.8} parent=0 // loop_body
    %s16 = ssub.s32 %s11, 1
    %s17 = ssub.s32 %s11, 2
    %s24 = sadd.s32 1, %s19
    %p25 = scmp.ge.s32.totalorder %s24, 1
    %s26 = scalar_select %p25, 0, %s24
    %s27 = sadd.s32 1, %s18
    %s28 = scalar_select %p25, %s27, %s18
    %p29 = scmp.ge.s32.totalorder %s28, 2
    %s30 = scalar_select %p29, 0, %s28
    %s31 = ssub.s32 %s18, %s30
    %s32 = ssub.s32 %s19, %s26
    %s33 = sor.u32 %s31, %s32
    %p34 = scmp.eq.s32.totalorder %s33, 0
    %s36 = sadd.s32 %s35, 1
    %s37 = scalar_select %p34, %s35, %s36
    %p40 = pneg %p34
    %p41 = scmp.eq.s32.totalorder %s11, 1
    %p42 = por %p40, %p41
    %p43 = scmp.ne.s32.totalorder %s35, %s38
    %p44 = scmp.eq.s32.totalorder %s11, 0
    %p45 = por %p43, %p44
    %p46 = scmp.ne.s32.totalorder %s35, %s38
    %p47 = scmp.eq.s32.totalorder %s16, 1
    %p48 = por %p46, %p47
    %p49 = scmp.ne.s32.totalorder %s38, %s39
    %p50 = scmp.eq.s32.totalorder %s16, 0
    %p51 = por %p49, %p50
    %p52 = scmp.ne.s32.totalorder %s38, %s39
    %p53 = scmp.eq.s32.totalorder %s17, 1
    %p54 = por %p52, %p53
    %p56 = scmp.ne.s32.totalorder %s39, %s55
    %p57 = scmp.eq.s32.totalorder %s17, 0
    %p58 = por %p56, %p57
    %s60 = sadd.s32 %s59, 1
    %p63 = scmp.eq.s32.totalorder %s11, 1
    %p64 = scmp.ne.s32.totalorder %s59, %s61
    %p65 = scmp.eq.s32.totalorder %s11, 0
    %p66 = por %p64, %p65
    %p67 = scmp.ne.s32.totalorder %s59, %s61
    %p68 = scmp.eq.s32.totalorder %s16, 1
    %p69 = por %p67, %p68
    %p70 = scmp.ne.s32.totalorder %s61, %s62
    %p71 = scmp.eq.s32.totalorder %s16, 0
    %p72 = por %p70, %p71
    %p73 = scmp.ne.s32.totalorder %s61, %s62
    %p74 = scmp.eq.s32.totalorder %s17, 1
    %p75 = por %p73, %p74
    %p77 = scmp.ne.s32.totalorder %s62, %s76
    %p78 = scmp.eq.s32.totalorder %s17, 0
    %p79 = por %p77, %p78
    %s81 = sadd.s32 %s80, 1
    %p84 = scmp.eq.s32.totalorder %s11, 1
    %p85 = scmp.ne.s32.totalorder %s80, %s82
    %p86 = scmp.eq.s32.totalorder %s11, 0
    %p87 = por %p85, %p86
    %p88 = scmp.ne.s32.totalorder %s80, %s82
    %p89 = scmp.eq.s32.totalorder %s16, 1
    %p90 = por %p88, %p89
    %p91 = scmp.ne.s32.totalorder %s82, %s83
    %p92 = scmp.eq.s32.totalorder %s16, 0
    %p93 = por %p91, %p92
    %p94 = scmp.ne.s32.totalorder %s82, %s83
    %p95 = scmp.eq.s32.totalorder %s17, 1
    %p96 = por %p94, %p95
    %p98 = scmp.ne.s32.totalorder %s83, %s97
    %p99 = scmp.eq.s32.totalorder %s17, 0
    %p100 = por %p98, %p99
    %s102 = sadd.s32 %s101, 1
    %p105 = scmp.eq.s32.totalorder %s11, 1
    %p106 = scmp.ne.s32.totalorder %s101, %s103
    %p107 = scmp.eq.s32.totalorder %s11, 0
    %p108 = por %p106, %p107
    %p109 = scmp.ne.s32.totalorder %s101, %s103
    %p110 = scmp.eq.s32.totalorder %s16, 1
    %p111 = por %p109, %p110
    %p112 = scmp.ne.s32.totalorder %s103, %s104
    %p113 = scmp.eq.s32.totalorder %s16, 0
    %p114 = por %p112, %p113
    %p115 = scmp.ne.s32.totalorder %s103, %s104
    %p116 = scmp.eq.s32.totalorder %s17, 1
    %p117 = por %p115, %p116
    %p119 = scmp.ne.s32.totalorder %s104, %s118
    %p120 = scmp.eq.s32.totalorder %s17, 0
    %p121 = por %p119, %p120
    %s123 = sadd.s32 %s122, 1
    %p126 = scmp.eq.s32.totalorder %s11, 1
    %p127 = scmp.ne.s32.totalorder %s122, %s124
    %p128 = scmp.eq.s32.totalorder %s11, 0
    %p129 = por %p127, %p128
    %p130 = scmp.ne.s32.totalorder %s122, %s124
    %p131 = scmp.eq.s32.totalorder %s16, 1
    %p132 = por %p130, %p131
    %p133 = scmp.ne.s32.totalorder %s124, %s125
    %p134 = scmp.eq.s32.totalorder %s16, 0
    %p135 = por %p133, %p134
    %p136 = scmp.ne.s32.totalorder %s124, %s125
    %p137 = scmp.eq.s32.totalorder %s17, 1
    %p138 = por %p136, %p137
    %p140 = scmp.ne.s32.totalorder %s125, %s139
    %p141 = scmp.eq.s32.totalorder %s17, 0
    %p142 = por %p140, %p141
    %s144 = sadd.s32 %s143, 1
    %p147 = scmp.eq.s32.totalorder %s11, 1
    %p148 = scmp.ne.s32.totalorder %s143, %s145
    %p149 = scmp.eq.s32.totalorder %s11, 0
    %p150 = por %p148, %p149
    %p151 = scmp.ne.s32.totalorder %s143, %s145
    %p152 = scmp.eq.s32.totalorder %s16, 1
    %p153 = por %p151, %p152
    %p154 = scmp.ne.s32.totalorder %s145, %s146
    %p155 = scmp.eq.s32.totalorder %s16, 0
    %p156 = por %p154, %p155
    %p157 = scmp.ne.s32.totalorder %s145, %s146
    %p158 = scmp.eq.s32.totalorder %s17, 1
    %p159 = por %p157, %p158
    %p161 = scmp.ne.s32.totalorder %s146, %s160
    %p162 = scmp.eq.s32.totalorder %s17, 0
    %p163 = por %p161, %p162
    %p164 = scmp.le.s32.totalorder 1, %s11
    %p165 = scmp.lt.s32.totalorder %s11, 3
    %p166 = pnand %p164, %p165
    %p167 = pneg %p166
    // Predicated region
    $region9: #{decoder_forward.8} parent=5 // pred_check
      _
    $region10: #{decoder_forward.8} parent=5 // pred_check_branch
      %169 = sbr.rel (%p166) target = $region12
    $region11: #{decoder_forward.8} parent=5 // pred_region
      %s170 = ssub.s32 %s11, 1
      // Predicated region
      $region13: #{decoder_forward.8} parent=11 // pred_check
        %p171 = pneg %p72
      $region14: #{decoder_forward.8} parent=11 // pred_check_branch
        %173 = sbr.rel (%p171) target = $region16
      $region15: #{decoder_forward.8} parent=11 // pred_region
        _
      $region16: #{decoder_forward.8} parent=11 // pred_fallthru
        _
      // Predicated region
      $region17: #{decoder_forward.8} parent=11 // pred_check
        %p174 = pneg %p93
      $region18: #{decoder_forward.8} parent=11 // pred_check_branch
        %176 = sbr.rel (%p174) target = $region20
      $region19: #{decoder_forward.8} parent=11 // pred_region
        _
      $region20: #{decoder_forward.8} parent=11 // pred_fallthru
        _
      // Predicated region
      $region21: #{decoder_forward.8} parent=11 // pred_check
        %p177 = pneg %p114
      $region22: #{decoder_forward.8} parent=11 // pred_check_branch
        %179 = sbr.rel (%p177) target = $region24
      $region23: #{decoder_forward.8} parent=11 // pred_region
        _
      $region24: #{decoder_forward.8} parent=11 // pred_fallthru
        _
      // Predicated region
      $region25: #{decoder_forward.8} parent=11 // pred_check
        %p180 = pneg %p135
      $region26: #{decoder_forward.8} parent=11 // pred_check_branch
        %182 = sbr.rel (%p180) target = $region28
      $region27: #{decoder_forward.8} parent=11 // pred_region
        _
      $region28: #{decoder_forward.8} parent=11 // pred_fallthru
        _
    $region12: #{decoder_forward.8} parent=5 // pred_fallthru
      _
    %p183 = scmp.lt.s32.totalorder %s11, 2
    // Predicated region
    $region29: #{decoder_forward.8} parent=5 // pred_check
      %p184 = pneg %p183
    $region30: #{decoder_forward.8} parent=5 // pred_check_branch
      %186 = sbr.rel (%p184) target = $region32
    $region31: #{decoder_forward.8} parent=5 // pred_region
      // Predicated region
      $region33: #{decoder_forward.8} parent=31 // pred_check
        %p187 = pneg %p45
      $region34: #{decoder_forward.8} parent=31 // pred_check_branch
        %189 = sbr.rel (%p187) target = $region36
      $region35: #{decoder_forward.8} parent=31 // pred_region
        %p190 = scmp.lt.s32.totalorder %s18, 1
        %s191 = scalar_select %p190, %s18, 1
        %p192 = scmp.lt.s32.totalorder %s19, 0
        %s193 = scalar_select %p192, %s19, 0
        %s194 = smul.addr %s193, 128
        %s195 = smul.addr %s191, 128
        %s196 = sadd.s32 %s194, %s195
        %s197 = smul.addr %s196, 4
        %s198 = scalar_lea.vmem %s0, %s197
      $region36: #{decoder_forward.8} parent=31 // pred_fallthru
        _
    $region32: #{decoder_forward.8} parent=5 // pred_fallthru
      _
    %p199 = scmp.le.s32.totalorder 1, %s11
    %p200 = scmp.lt.s32.totalorder %s11, 3
    %p201 = pnand %p199, %p200
    %p202 = pneg %p201
    // Predicated region
    $region37: #{decoder_forward.8} parent=5 // pred_check
      _
    $region38: #{decoder_forward.8} parent=5 // pred_check_branch
      %204 = sbr.rel (%p201) target = $region40
    $region39: #{decoder_forward.8} parent=5 // pred_region
      %s205 = ssub.s32 %s11, 1
      %p206 = scmp.lt.s32.totalorder %s20, 1
      %s207 = scalar_select %p206, %s20, 1
      %p208 = scmp.lt.s32.totalorder %s21, 0
      %s209 = scalar_select %p208, %s21, 0
      %s210 = smul.addr %s209, 128
      %s211 = smul.addr %s207, 128
      %s212 = sadd.s32 %s210, %s211
      %s213 = smul.addr %s212, 4
      %s214 = scalar_lea.vmem %s0, %s213
      %p215 = pneg %p51
      %p216 = pneg %p48
      %p217 = pneg %p72
      %p218 = pneg %p69
      %p219 = pneg %p93
      %p220 = pneg %p90
      %p221 = pneg %p114
      %p222 = pneg %p111
      %p223 = pneg %p135
      %p224 = pneg %p132
      %p225 = pneg %p156
      %p226 = pneg %p153
      %p227 = scmp.lt.s32.totalorder %s20, 1
      %s228 = scalar_select %p227, %s20, 1
      %p229 = scmp.lt.s32.totalorder %s21, 0
      %s230 = scalar_select %p229, %s21, 0
      %s231 = smul.addr %s230, 128
      %s232 = smul.addr %s228, 128
      %s233 = sadd.s32 %s231, %s232
      %s234 = smul.addr %s233, 4
      %s235 = scalar_lea.vmem %s0, %s234
      %p237 = scmp.eq.s32.totalorder %s20, 0
      %p238 = scmp.eq.s32.totalorder %s21, 0
      %p239 = pnand %p237, %p238
      %p240 = pneg %p239
      %p241 = scmp.eq.s32.totalorder %s20, 1
      %p242 = pnand %p241, %p238
      %p243 = pneg %p242
      // Predicated region
      $region41: #{decoder_forward.8} parent=39 // pred_check
        _
      $region42: #{decoder_forward.8} parent=39 // pred_check_branch
        %245 = sbr.rel (%p239) target = $region44
      $region43: #{decoder_forward.8} parent=39 // pred_region
        %vm246 = vcmask 7168
        %247 = vst.msk [vmem:[#allocation2] sm:$0xff] %vm246, 0.0
        %248 = vst.msk [vmem:[#allocation2 + $0x8] sm:$0xff] %vm246, 0.0
        %249 = vst.msk [vmem:[#allocation2 + $0x10] sm:$0xff] %vm246, 0.0
        %250 = vst.msk [vmem:[#allocation2 + $0x18] sm:$0xff] %vm246, 0.0
      $region44: #{decoder_forward.8} parent=39 // pred_fallthru
        _
      %v251 = vld [vmem:[%s1] sm:$0xff]
      %v252 = vld [vmem:[%s1 + $0x8] sm:$0xff]
      %v253 = vld [vmem:[%s1 + $0x10] sm:$0xff]
      %v254 = vld [vmem:[%s1 + $0x18] sm:$0xff]
      %v255 = vld [vmem:[%s1 + $0x20] sm:$0xff]
      %v256 = vld [vmem:[%s1 + $0x28] sm:$0xff]
      %v257 = vld [vmem:[%s1 + $0x30] sm:$0xff]
      %v258 = vld [vmem:[%s1 + $0x38] sm:$0xff]
      %v259 = vld [vmem:[%s1 + $0x40] sm:$0xff]
      %v260 = vld [vmem:[%s1 + $0x48] sm:$0xff]
      %v261 = vld [vmem:[%s1 + $0x50] sm:$0xff]
      %v262 = vld [vmem:[%s1 + $0x58] sm:$0xff]
      %v263 = vld [vmem:[%s1 + $0x60] sm:$0xff]
      %v264 = vld [vmem:[%s1 + $0x68] sm:$0xff]
      %v265 = vld [vmem:[%s1 + $0x70] sm:$0xff]
      %v266 = vld [vmem:[%s1 + $0x78] sm:$0xff]
      %v267 = vld [vmem:[%s235] sm:$0xf]
      %v268 = vld [vmem:[%s235 + $0x4] sm:$0xf]
      %v269 = vld [vmem:[%s235 + $0x8] sm:$0xf]
      %v270 = vld [vmem:[%s235 + $0xc] sm:$0xf]
      %v271 = vld [vmem:[%s235 + $0x10] sm:$0xf]
      %v272 = vld [vmem:[%s235 + $0x14] sm:$0xf]
      %v273 = vld [vmem:[%s235 + $0x18] sm:$0xf]
      %v274 = vld [vmem:[%s235 + $0x1c] sm:$0xf]
      %v275 = vld [vmem:[%s235 + $0x20] sm:$0xf]
      %v276 = vld [vmem:[%s235 + $0x24] sm:$0xf]
      %v277 = vld [vmem:[%s235 + $0x28] sm:$0xf]
      %v278 = vld [vmem:[%s235 + $0x2c] sm:$0xf]
      %v279 = vld [vmem:[%s235 + $0x30] sm:$0xf]
      %v280 = vld [vmem:[%s235 + $0x34] sm:$0xf]
      %v281 = vld [vmem:[%s235 + $0x38] sm:$0xf]
      %v282 = vld [vmem:[%s235 + $0x3c] sm:$0xf]
      %v283 = vld [vmem:[%s235 + $0x40] sm:$0xf]
      %v284 = vld [vmem:[%s235 + $0x44] sm:$0xf]
      %v285 = vld [vmem:[%s235 + $0x48] sm:$0xf]
      %v286 = vld [vmem:[%s235 + $0x4c] sm:$0xf]
      %v287 = vld [vmem:[%s235 + $0x50] sm:$0xf]
      %v288 = vld [vmem:[%s235 + $0x54] sm:$0xf]
      %v289 = vld [vmem:[%s235 + $0x58] sm:$0xf]
      %v290 = vld [vmem:[%s235 + $0x5c] sm:$0xf]
      %v291 = vld [vmem:[%s235 + $0x60] sm:$0xf]
      %v292 = vld [vmem:[%s235 + $0x64] sm:$0xf]
      %v293 = vld [vmem:[%s235 + $0x68] sm:$0xf]
      %v294 = vld [vmem:[%s235 + $0x6c] sm:$0xf]
      %v295 = vld [vmem:[%s235 + $0x70] sm:$0xf]
      %v296 = vld [vmem:[%s235 + $0x74] sm:$0xf]
      %v297 = vld [vmem:[%s235 + $0x78] sm:$0xf]
      %v298 = vld [vmem:[%s235 + $0x7c] sm:$0xf]
      %v299 = vld [vmem:[%s235 + $0x80] sm:$0xf]
      %v300 = vld [vmem:[%s235 + $0x84] sm:$0xf]
      %v301 = vld [vmem:[%s235 + $0x88] sm:$0xf]
      %v302 = vld [vmem:[%s235 + $0x8c] sm:$0xf]
      %v303 = vld [vmem:[%s235 + $0x90] sm:$0xf]
      %v304 = vld [vmem:[%s235 + $0x94] sm:$0xf]
      %v305 = vld [vmem:[%s235 + $0x98] sm:$0xf]
      %v306 = vld [vmem:[%s235 + $0x9c] sm:$0xf]
      %v307 = vld [vmem:[%s235 + $0xa0] sm:$0xf]
      %v308 = vld [vmem:[%s235 + $0xa4] sm:$0xf]
      %v309 = vld [vmem:[%s235 + $0xa8] sm:$0xf]
      %v310 = vld [vmem:[%s235 + $0xac] sm:$0xf]
      %v311 = vld [vmem:[%s235 + $0xb0] sm:$0xf]
      %v312 = vld [vmem:[%s235 + $0xb4] sm:$0xf]
      %v313 = vld [vmem:[%s235 + $0xb8] sm:$0xf]
      %v314 = vld [vmem:[%s235 + $0xbc] sm:$0xf]
      %v315 = vld [vmem:[%s235 + $0xc0] sm:$0xf]
      %v316 = vld [vmem:[%s235 + $0xc4] sm:$0xf]
      %v317 = vld [vmem:[%s235 + $0xc8] sm:$0xf]
      %v318 = vld [vmem:[%s235 + $0xcc] sm:$0xf]
      %v319 = vld [vmem:[%s235 + $0xd0] sm:$0xf]
      %v320 = vld [vmem:[%s235 + $0xd4] sm:$0xf]
      %v321 = vld [vmem:[%s235 + $0xd8] sm:$0xf]
      %v322 = vld [vmem:[%s235 + $0xdc] sm:$0xf]
      %v323 = vld [vmem:[%s235 + $0xe0] sm:$0xf]
      %v324 = vld [vmem:[%s235 + $0xe4] sm:$0xf]
      %v325 = vld [vmem:[%s235 + $0xe8] sm:$0xf]
      %v326 = vld [vmem:[%s235 + $0xec] sm:$0xf]
      %v327 = vld [vmem:[%s235 + $0xf0] sm:$0xf]
      %v328 = vld [vmem:[%s235 + $0xf4] sm:$0xf]
      %v329 = vld [vmem:[%s235 + $0xf8] sm:$0xf]
      %v330 = vld [vmem:[%s235 + $0xfc] sm:$0xf]
      %v331 = vld [vmem:[%s235 + $0x100] sm:$0xf]
      %v332 = vld [vmem:[%s235 + $0x104] sm:$0xf]
      %v333 = vld [vmem:[%s235 + $0x108] sm:$0xf]
      %v334 = vld [vmem:[%s235 + $0x10c] sm:$0xf]
      %v335 = vld [vmem:[%s235 + $0x110] sm:$0xf]
      %v336 = vld [vmem:[%s235 + $0x114] sm:$0xf]
      %v337 = vld [vmem:[%s235 + $0x118] sm:$0xf]
      %v338 = vld [vmem:[%s235 + $0x11c] sm:$0xf]
      %v339 = vld [vmem:[%s235 + $0x120] sm:$0xf]
      %v340 = vld [vmem:[%s235 + $0x124] sm:$0xf]
      %v341 = vld [vmem:[%s235 + $0x128] sm:$0xf]
      %v342 = vld [vmem:[%s235 + $0x12c] sm:$0xf]
      %v343 = vld [vmem:[%s235 + $0x130] sm:$0xf]
      %v344 = vld [vmem:[%s235 + $0x134] sm:$0xf]
      %v345 = vld [vmem:[%s235 + $0x138] sm:$0xf]
      %v346 = vld [vmem:[%s235 + $0x13c] sm:$0xf]
      %v347 = vld [vmem:[%s235 + $0x140] sm:$0xf]
      %v348 = vld [vmem:[%s235 + $0x144] sm:$0xf]
      %v349 = vld [vmem:[%s235 + $0x148] sm:$0xf]
      %v350 = vld [vmem:[%s235 + $0x14c] sm:$0xf]
      %v351 = vld [vmem:[%s235 + $0x150] sm:$0xf]
      %v352 = vld [vmem:[%s235 + $0x154] sm:$0xf]
      %v353 = vld [vmem:[%s235 + $0x158] sm:$0xf]
      %v354 = vld [vmem:[%s235 + $0x15c] sm:$0xf]
      %v355 = vld [vmem:[%s235 + $0x160] sm:$0xf]
      %v356 = vld [vmem:[%s235 + $0x164] sm:$0xf]
      %v357 = vld [vmem:[%s235 + $0x168] sm:$0xf]
      %v358 = vld [vmem:[%s235 + $0x16c] sm:$0xf]
      %v359 = vld [vmem:[%s235 + $0x170] sm:$0xf]
      %v360 = vld [vmem:[%s235 + $0x174] sm:$0xf]
      %v361 = vld [vmem:[%s235 + $0x178] sm:$0xf]
      %v362 = vld [vmem:[%s235 + $0x17c] sm:$0xf]
      %v363 = vld [vmem:[%s235 + $0x180] sm:$0xf]
      %v364 = vld [vmem:[%s235 + $0x184] sm:$0xf]
      %v365 = vld [vmem:[%s235 + $0x188] sm:$0xf]
      %v366 = vld [vmem:[%s235 + $0x18c] sm:$0xf]
      %v367 = vld [vmem:[%s235 + $0x190] sm:$0xf]
      %v368 = vld [vmem:[%s235 + $0x194] sm:$0xf]
      %v369 = vld [vmem:[%s235 + $0x198] sm:$0xf]
      %v370 = vld [vmem:[%s235 + $0x19c] sm:$0xf]
      %v371 = vld [vmem:[%s235 + $0x1a0] sm:$0xf]
      %v372 = vld [vmem:[%s235 + $0x1a4] sm:$0xf]
      %v373 = vld [vmem:[%s235 + $0x1a8] sm:$0xf]
      %v374 = vld [vmem:[%s235 + $0x1ac] sm:$0xf]
      %v375 = vld [vmem:[%s235 + $0x1b0] sm:$0xf]
      %v376 = vld [vmem:[%s235 + $0x1b4] sm:$0xf]
      %v377 = vld [vmem:[%s235 + $0x1b8] sm:$0xf]
      %v378 = vld [vmem:[%s235 + $0x1bc] sm:$0xf]
      %v379 = vld [vmem:[%s235 + $0x1c0] sm:$0xf]
      %v380 = vld [vmem:[%s235 + $0x1c4] sm:$0xf]
      %v381 = vld [vmem:[%s235 + $0x1c8] sm:$0xf]
      %v382 = vld [vmem:[%s235 + $0x1cc] sm:$0xf]
      %v383 = vld [vmem:[%s235 + $0x1d0] sm:$0xf]
      %v384 = vld [vmem:[%s235 + $0x1d4] sm:$0xf]
      %v385 = vld [vmem:[%s235 + $0x1d8] sm:$0xf]
      %v386 = vld [vmem:[%s235 + $0x1dc] sm:$0xf]
      %v387 = vld [vmem:[%s235 + $0x1e0] sm:$0xf]
      %v388 = vld [vmem:[%s235 + $0x1e4] sm:$0xf]
      %v389 = vld [vmem:[%s235 + $0x1e8] sm:$0xf]
      %v390 = vld [vmem:[%s235 + $0x1ec] sm:$0xf]
      %v391 = vld [vmem:[%s235 + $0x1f0] sm:$0xf]
      %v392 = vld [vmem:[%s235 + $0x1f4] sm:$0xf]
      %v393 = vld [vmem:[%s235 + $0x1f8] sm:$0xf]
      %v394 = vld [vmem:[%s235 + $0x1fc] sm:$0xf]
      %v411 = vunpack.c.l.b16 %v251
      %v412 = vunpack.c.h.b16 %v251
      %v413 = vunpack.c.l.b16 %v252
      %v414 = vunpack.c.h.b16 %v252
      %v415 = vunpack.c.l.b16 %v253
      %v416 = vunpack.c.h.b16 %v253
      %v417 = vunpack.c.l.b16 %v254
      %v418 = vunpack.c.h.b16 %v254
      %v419 = vunpack.c.l.b16 %v255
      %v420 = vunpack.c.h.b16 %v255
      %v421 = vunpack.c.l.b16 %v256
      %v422 = vunpack.c.h.b16 %v256
      %v423 = vunpack.c.l.b16 %v257
      %v424 = vunpack.c.h.b16 %v257
      %v425 = vunpack.c.l.b16 %v258
      %v426 = vunpack.c.h.b16 %v258
      %v427 = vunpack.c.l.b16 %v259
      %v428 = vunpack.c.h.b16 %v259
      %v429 = vunpack.c.l.b16 %v260
      %v430 = vunpack.c.h.b16 %v260
      %v431 = vunpack.c.l.b16 %v261
      %v432 = vunpack.c.h.b16 %v261
      %v433 = vunpack.c.l.b16 %v262
      %v434 = vunpack.c.h.b16 %v262
      %v435 = vunpack.c.l.b16 %v263
      %v436 = vunpack.c.h.b16 %v263
      %v437 = vunpack.c.l.b16 %v264
      %v438 = vunpack.c.h.b16 %v264
      %v439 = vunpack.c.l.b16 %v265
      %v440 = vunpack.c.h.b16 %v265
      %v441 = vunpack.c.l.b16 %v266
      %v442 = vunpack.c.h.b16 %v266
      %v443 = vpack.c.b16 %v419, %v411
      %v444 = vpack.c.b16 %v420, %v412
      %v445 = vpack.c.b16 %v421, %v413
      %v446 = vpack.c.b16 %v422, %v414
      %v447 = vpack.c.b16 %v423, %v415
      %v448 = vpack.c.b16 %v424, %v416
      %v449 = vpack.c.b16 %v425, %v417
      %v450 = vpack.c.b16 %v426, %v418
      %v451 = vpack.c.b16 %v435, %v427
      %v452 = vpack.c.b16 %v436, %v428
      %v453 = vpack.c.b16 %v437, %v429
      %v454 = vpack.c.b16 %v438, %v430
      %v455 = vpack.c.b16 %v439, %v431
      %v456 = vpack.c.b16 %v440, %v432
      %v457 = vpack.c.b16 %v441, %v433
      %v458 = vpack.c.b16 %v442, %v434
      %v603 = vunpack.c.l.b16 %v267
      %v604 = vunpack.c.l.b16 %v268
      %v605 = vunpack.c.l.b16 %v269
      %v606 = vunpack.c.l.b16 %v270
      %v607 = vunpack.c.l.b16 %v271
      %v608 = vunpack.c.l.b16 %v272
      %v609 = vunpack.c.l.b16 %v273
      %v610 = vunpack.c.l.b16 %v274
      %v611 = vunpack.c.l.b16 %v275
      %v612 = vunpack.c.l.b16 %v276
      %v613 = vunpack.c.l.b16 %v277
      %v614 = vunpack.c.l.b16 %v278
      %v615 = vunpack.c.l.b16 %v279
      %v616 = vunpack.c.l.b16 %v280
      %v617 = vunpack.c.l.b16 %v281
      %v618 = vunpack.c.l.b16 %v282
      %v619 = vunpack.c.l.b16 %v283
      %v620 = vunpack.c.l.b16 %v284
      %v621 = vunpack.c.l.b16 %v285
      %v622 = vunpack.c.l.b16 %v286
      %v623 = vunpack.c.l.b16 %v287
      %v624 = vunpack.c.l.b16 %v288
      %v625 = vunpack.c.l.b16 %v289
      %v626 = vunpack.c.l.b16 %v290
      %v627 = vunpack.c.l.b16 %v291
      %v628 = vunpack.c.l.b16 %v292
      %v629 = vunpack.c.l.b16 %v293
      %v630 = vunpack.c.l.b16 %v294
      %v631 = vunpack.c.l.b16 %v295
      %v632 = vunpack.c.l.b16 %v296
      %v633 = vunpack.c.l.b16 %v297
      %v634 = vunpack.c.l.b16 %v298
      %v635 = vunpack.c.l.b16 %v299
      %v636 = vunpack.c.l.b16 %v300
      %v637 = vunpack.c.l.b16 %v301
      %v638 = vunpack.c.l.b16 %v302
      %v639 = vunpack.c.l.b16 %v303
      %v640 = vunpack.c.l.b16 %v304
      %v641 = vunpack.c.l.b16 %v305
      %v642 = vunpack.c.l.b16 %v306
      %v643 = vunpack.c.l.b16 %v307
      %v644 = vunpack.c.l.b16 %v308
      %v645 = vunpack.c.l.b16 %v309
      %v646 = vunpack.c.l.b16 %v310
      %v647 = vunpack.c.l.b16 %v311
      %v648 = vunpack.c.l.b16 %v312
      %v649 = vunpack.c.l.b16 %v313
      %v650 = vunpack.c.l.b16 %v314
      %v651 = vunpack.c.l.b16 %v315
      %v652 = vunpack.c.l.b16 %v316
      %v653 = vunpack.c.l.b16 %v317
      %v654 = vunpack.c.l.b16 %v318
      %v655 = vunpack.c.l.b16 %v319
      %v656 = vunpack.c.l.b16 %v320
      %v657 = vunpack.c.l.b16 %v321
      %v658 = vunpack.c.l.b16 %v322
      %v659 = vunpack.c.l.b16 %v323
      %v660 = vunpack.c.l.b16 %v324
      %v661 = vunpack.c.l.b16 %v325
      %v662 = vunpack.c.l.b16 %v326
      %v663 = vunpack.c.l.b16 %v327
      %v664 = vunpack.c.l.b16 %v328
      %v665 = vunpack.c.l.b16 %v329
      %v666 = vunpack.c.l.b16 %v330
      %v667 = vunpack.c.l.b16 %v331
      %v668 = vunpack.c.l.b16 %v332
      %v669 = vunpack.c.l.b16 %v333
      %v670 = vunpack.c.l.b16 %v334
      %v671 = vunpack.c.l.b16 %v335
      %v672 = vunpack.c.l.b16 %v336
      %v673 = vunpack.c.l.b16 %v337
      %v674 = vunpack.c.l.b16 %v338
      %v675 = vunpack.c.l.b16 %v339
      %v676 = vunpack.c.l.b16 %v340
      %v677 = vunpack.c.l.b16 %v341
      %v678 = vunpack.c.l.b16 %v342
      %v679 = vunpack.c.l.b16 %v343
      %v680 = vunpack.c.l.b16 %v344
      %v681 = vunpack.c.l.b16 %v345
      %v682 = vunpack.c.l.b16 %v346
      %v683 = vunpack.c.l.b16 %v347
      %v684 = vunpack.c.l.b16 %v348
      %v685 = vunpack.c.l.b16 %v349
      %v686 = vunpack.c.l.b16 %v350
      %v687 = vunpack.c.l.b16 %v351
      %v688 = vunpack.c.l.b16 %v352
      %v689 = vunpack.c.l.b16 %v353
      %v690 = vunpack.c.l.b16 %v354
      %v691 = vunpack.c.l.b16 %v355
      %v692 = vunpack.c.l.b16 %v356
      %v693 = vunpack.c.l.b16 %v357
      %v694 = vunpack.c.l.b16 %v358
      %v695 = vunpack.c.l.b16 %v359
      %v696 = vunpack.c.l.b16 %v360
      %v697 = vunpack.c.l.b16 %v361
      %v698 = vunpack.c.l.b16 %v362
      %v699 = vunpack.c.l.b16 %v363
      %v700 = vunpack.c.l.b16 %v364
      %v701 = vunpack.c.l.b16 %v365
      %v702 = vunpack.c.l.b16 %v366
      %v703 = vunpack.c.l.b16 %v367
      %v704 = vunpack.c.l.b16 %v368
      %v705 = vunpack.c.l.b16 %v369
      %v706 = vunpack.c.l.b16 %v370
      %v707 = vunpack.c.l.b16 %v371
      %v708 = vunpack.c.l.b16 %v372
      %v709 = vunpack.c.l.b16 %v373
      %v710 = vunpack.c.l.b16 %v374
      %v711 = vunpack.c.l.b16 %v375
      %v712 = vunpack.c.l.b16 %v376
      %v713 = vunpack.c.l.b16 %v377
      %v714 = vunpack.c.l.b16 %v378
      %v715 = vunpack.c.l.b16 %v379
      %v716 = vunpack.c.l.b16 %v380
      %v717 = vunpack.c.l.b16 %v381
      %v718 = vunpack.c.l.b16 %v382
      %v719 = vunpack.c.l.b16 %v383
      %v720 = vunpack.c.l.b16 %v384
      %v721 = vunpack.c.l.b16 %v385
      %v722 = vunpack.c.l.b16 %v386
      %v723 = vunpack.c.l.b16 %v387
      %v724 = vunpack.c.l.b16 %v388
      %v725 = vunpack.c.l.b16 %v389
      %v726 = vunpack.c.l.b16 %v390
      %v727 = vunpack.c.l.b16 %v391
      %v728 = vunpack.c.l.b16 %v392
      %v729 = vunpack.c.l.b16 %v393
      %v730 = vunpack.c.l.b16 %v394
      %v731 = vpack.c.b16 %v604, %v603
      %v732 = vpack.c.b16 %v606, %v605
      %v733 = vpack.c.b16 %v608, %v607
      %v734 = vpack.c.b16 %v610, %v609
      %v735 = vpack.c.b16 %v612, %v611
      %v736 = vpack.c.b16 %v614, %v613
      %v737 = vpack.c.b16 %v616, %v615
      %v738 = vpack.c.b16 %v618, %v617
      %v739 = vpack.c.b16 %v620, %v619
      %v740 = vpack.c.b16 %v622, %v621
      %v741 = vpack.c.b16 %v624, %v623
      %v742 = vpack.c.b16 %v626, %v625
      %v743 = vpack.c.b16 %v628, %v627
      %v744 = vpack.c.b16 %v630, %v629
      %v745 = vpack.c.b16 %v632, %v631
      %v746 = vpack.c.b16 %v634, %v633
      %v747 = vpack.c.b16 %v636, %v635
      %v748 = vpack.c.b16 %v638, %v637
      %v749 = vpack.c.b16 %v640, %v639
      %v750 = vpack.c.b16 %v642, %v641
      %v751 = vpack.c.b16 %v644, %v643
      %v752 = vpack.c.b16 %v646, %v645
      %v753 = vpack.c.b16 %v648, %v647
      %v754 = vpack.c.b16 %v650, %v649
      %v755 = vpack.c.b16 %v652, %v651
      %v756 = vpack.c.b16 %v654, %v653
      %v757 = vpack.c.b16 %v656, %v655
      %v758 = vpack.c.b16 %v658, %v657
      %v759 = vpack.c.b16 %v660, %v659
      %v760 = vpack.c.b16 %v662, %v661
      %v761 = vpack.c.b16 %v664, %v663
      %v762 = vpack.c.b16 %v666, %v665
      %v763 = vpack.c.b16 %v668, %v667
      %v764 = vpack.c.b16 %v670, %v669
      %v765 = vpack.c.b16 %v672, %v671
      %v766 = vpack.c.b16 %v674, %v673
      %v767 = vpack.c.b16 %v676, %v675
      %v768 = vpack.c.b16 %v678, %v677
      %v769 = vpack.c.b16 %v680, %v679
      %v770 = vpack.c.b16 %v682, %v681
      %v771 = vpack.c.b16 %v684, %v683
      %v772 = vpack.c.b16 %v686, %v685
      %v773 = vpack.c.b16 %v688, %v687
      %v774 = vpack.c.b16 %v690, %v689
      %v775 = vpack.c.b16 %v692, %v691
      %v776 = vpack.c.b16 %v694, %v693
      %v777 = vpack.c.b16 %v696, %v695
      %v778 = vpack.c.b16 %v698, %v697
      %v779 = vpack.c.b16 %v700, %v699
      %v780 = vpack.c.b16 %v702, %v701
      %v781 = vpack.c.b16 %v704, %v703
      %v782 = vpack.c.b16 %v706, %v705
      %v783 = vpack.c.b16 %v708, %v707
      %v784 = vpack.c.b16 %v710, %v709
      %v785 = vpack.c.b16 %v712, %v711
      %v786 = vpack.c.b16 %v714, %v713
      %v787 = vpack.c.b16 %v716, %v715
      %v788 = vpack.c.b16 %v718, %v717
      %v789 = vpack.c.b16 %v720, %v719
      %v790 = vpack.c.b16 %v722, %v721
      %v791 = vpack.c.b16 %v724, %v723
      %v792 = vpack.c.b16 %v726, %v725
      %v793 = vpack.c.b16 %v728, %v727
      %v794 = vpack.c.b16 %v730, %v729
      %859 = vmatprep.subr.bf16.mxu0 0
      %860 = vmatpush1.bf16.msra.mxu0 %v731
      %861 = vmatprep.subr.bf16.mxu0 0
      %862 = vmatpush1.bf16.msra.mxu0 %v732
      %863 = vmatprep.subr.bf16.mxu0 0
      %864 = vmatpush1.bf16.msra.mxu0 %v733
      %865 = vmatprep.subr.bf16.mxu0 0
      %866 = vmatpush1.bf16.msra.mxu0 %v734
      %867 = vmatprep.subr.bf16.mxu0 0
      %868 = vmatpush1.bf16.msra.mxu0 %v735
      %869 = vmatprep.subr.bf16.mxu0 0
      %870 = vmatpush1.bf16.msra.mxu0 %v736
      %871 = vmatprep.subr.bf16.mxu0 0
      %872 = vmatpush1.bf16.msra.mxu0 %v737
      %873 = vmatprep.subr.bf16.mxu0 0
      %874 = vmatpush1.bf16.msra.mxu0 %v738
      %875 = vmatprep.subr.bf16.mxu0 0
      %876 = vmatpush1.bf16.msra.mxu0 %v739
      %877 = vmatprep.subr.bf16.mxu0 0
      %878 = vmatpush1.bf16.msra.mxu0 %v740
      %879 = vmatprep.subr.bf16.mxu0 0
      %880 = vmatpush1.bf16.msra.mxu0 %v741
      %881 = vmatprep.subr.bf16.mxu0 0
      %882 = vmatpush1.bf16.msra.mxu0 %v742
      %883 = vmatprep.subr.bf16.mxu0 0
      %884 = vmatpush1.bf16.msra.mxu0 %v743
      %885 = vmatprep.subr.bf16.mxu0 0
      %886 = vmatpush1.bf16.msra.mxu0 %v744
      %887 = vmatprep.subr.bf16.mxu0 0
      %888 = vmatpush1.bf16.msra.mxu0 %v745
      %889 = vmatprep.subr.bf16.mxu0 0
      %890 = vmatpush1.bf16.msra.mxu0 %v746
      %891 = vmatprep.mubr.bf16.mxu0 %v444
      %892 = vmatmul.mubr.bf16.gmra.mrb[0].mxu0 %v443
      %v893 = vpop.f32.mrb[0].mxu0
      %v894 = vadd.f32 0.0, %v893
      %v895 = vpop.f32.mrb[0].mxu0
      %v896 = vpop.f32.mrb[0].mxu0
      %v897 = vadd.f32 0.0, %v896
      %v898 = vpop.f32.mrb[0].mxu0
      %899 = vmatprep.mubr.bf16.mxu0 %v452
      %900 = vmatmul.mubr.bf16.gmra.mrb[0].mxu0 %v451
      %v901 = vpop.f32.mrb[0].mxu0
      %v902 = vadd.f32 0.0, %v901
      %v903 = vpop.f32.mrb[0].mxu0
      %v904 = vpop.f32.mrb[0].mxu0
      %v905 = vadd.f32 0.0, %v904
      %v906 = vpop.f32.mrb[0].mxu0
      %907 = vdwg.mxu0
      %908 = vmatprep.subr.bf16.mxu0 0
      %909 = vmatpush1.bf16.msra.mxu0 %v747
      %910 = vmatprep.subr.bf16.mxu0 0
      %911 = vmatpush1.bf16.msra.mxu0 %v748
      %912 = vmatprep.subr.bf16.mxu0 0
      %913 = vmatpush1.bf16.msra.mxu0 %v749
      %914 = vmatprep.subr.bf16.mxu0 0
      %915 = vmatpush1.bf16.msra.mxu0 %v750
      %916 = vmatprep.subr.bf16.mxu0 0
      %917 = vmatpush1.bf16.msra.mxu0 %v751
      %918 = vmatprep.subr.bf16.mxu0 0
      %919 = vmatpush1.bf16.msra.mxu0 %v752
      %920 = vmatprep.subr.bf16.mxu0 0
      %921 = vmatpush1.bf16.msra.mxu0 %v753
      %922 = vmatprep.subr.bf16.mxu0 0
      %923 = vmatpush1.bf16.msra.mxu0 %v754
      %924 = vmatprep.subr.bf16.mxu0 0
      %925 = vmatpush1.bf16.msra.mxu0 %v755
      %926 = vmatprep.subr.bf16.mxu0 0
      %927 = vmatpush1.bf16.msra.mxu0 %v756
      %928 = vmatprep.subr.bf16.mxu0 0
      %929 = vmatpush1.bf16.msra.mxu0 %v757
      %930 = vmatprep.subr.bf16.mxu0 0
      %931 = vmatpush1.bf16.msra.mxu0 %v758
      %932 = vmatprep.subr.bf16.mxu0 0
      %933 = vmatpush1.bf16.msra.mxu0 %v759
      %934 = vmatprep.subr.bf16.mxu0 0
      %935 = vmatpush1.bf16.msra.mxu0 %v760
      %936 = vmatprep.subr.bf16.mxu0 0
      %937 = vmatpush1.bf16.msra.mxu0 %v761
      %938 = vmatprep.subr.bf16.mxu0 0
      %939 = vmatpush1.bf16.msra.mxu0 %v762
      %940 = vmatprep.mubr.bf16.mxu0 %v446
      %941 = vmatmul.mubr.bf16.gmra.mrb[0].mxu0 %v445
      %v942 = vpop.f32.mrb[0].mxu0
      %v943 = vadd.f32 %v894, %v942
      %v944 = vpop.f32.mrb[0].mxu0
      %v945 = vpop.f32.mrb[0].mxu0
      %v946 = vadd.f32 %v897, %v945
      %v947 = vpop.f32.mrb[0].mxu0
      %948 = vmatprep.mubr.bf16.mxu0 %v454
      %949 = vmatmul.mubr.bf16.gmra.mrb[0].mxu0 %v453
      %v950 = vpop.f32.mrb[0].mxu0
      %v951 = vadd.f32 %v902, %v950
      %v952 = vpop.f32.mrb[0].mxu0
      %v953 = vpop.f32.mrb[0].mxu0
      %v954 = vadd.f32 %v905, %v953
      %v955 = vpop.f32.mrb[0].mxu0
      %956 = vdwg.mxu0
      %957 = vmatprep.subr.bf16.mxu0 0
      %958 = vmatpush1.bf16.msra.mxu0 %v763
      %959 = vmatprep.subr.bf16.mxu0 0
      %960 = vmatpush1.bf16.msra.mxu0 %v764
      %961 = vmatprep.subr.bf16.mxu0 0
      %962 = vmatpush1.bf16.msra.mxu0 %v765
      %963 = vmatprep.subr.bf16.mxu0 0
      %964 = vmatpush1.bf16.msra.mxu0 %v766
      %965 = vmatprep.subr.bf16.mxu0 0
      %966 = vmatpush1.bf16.msra.mxu0 %v767
      %967 = vmatprep.subr.bf16.mxu0 0
      %968 = vmatpush1.bf16.msra.mxu0 %v768
      %969 = vmatprep.subr.bf16.mxu0 0
      %970 = vmatpush1.bf16.msra.mxu0 %v769
      %971 = vmatprep.subr.bf16.mxu0 0
      %972 = vmatpush1.bf16.msra.mxu0 %v770
      %973 = vmatprep.subr.bf16.mxu0 0
      %974 = vmatpush1.bf16.msra.mxu0 %v771
      %975 = vmatprep.subr.bf16.mxu0 0
      %976 = vmatpush1.bf16.msra.mxu0 %v772
      %977 = vmatprep.subr.bf16.mxu0 0
      %978 = vmatpush1.bf16.msra.mxu0 %v773
      %979 = vmatprep.subr.bf16.mxu0 0
      %980 = vmatpush1.bf16.msra.mxu0 %v774
      %981 = vmatprep.subr.bf16.mxu0 0
      %982 = vmatpush1.bf16.msra.mxu0 %v775
      %983 = vmatprep.subr.bf16.mxu0 0
      %984 = vmatpush1.bf16.msra.mxu0 %v776
      %985 = vmatprep.subr.bf16.mxu0 0
      %986 = vmatpush1.bf16.msra.mxu0 %v777
      %987 = vmatprep.subr.bf16.mxu0 0
      %988 = vmatpush1.bf16.msra.mxu0 %v778
      %989 = vmatprep.mubr.bf16.mxu0 %v448
      %990 = vmatmul.mubr.bf16.gmra.mrb[0].mxu0 %v447
      %v991 = vpop.f32.mrb[0].mxu0
      %v992 = vadd.f32 %v943, %v991
      %v993 = vpop.f32.mrb[0].mxu0
      %v994 = vpop.f32.mrb[0].mxu0
      %v995 = vadd.f32 %v946, %v994
      %v996 = vpop.f32.mrb[0].mxu0
      %997 = vmatprep.mubr.bf16.mxu0 %v456
      %998 = vmatmul.mubr.bf16.gmra.mrb[0].mxu0 %v455
      %v999 = vpop.f32.mrb[0].mxu0
      %v1000 = vadd.f32 %v951, %v999
      %v1001 = vpop.f32.mrb[0].mxu0
      %v1002 = vpop.f32.mrb[0].mxu0
      %v1003 = vadd.f32 %v954, %v1002
      %v1004 = vpop.f32.mrb[0].mxu0
      %1005 = vdwg.mxu0
      %1006 = vmatprep.subr.bf16.mxu0 0
      %1007 = vmatpush1.bf16.msra.mxu0 %v779
      %1008 = vmatprep.subr.bf16.mxu0 0
      %1009 = vmatpush1.bf16.msra.mxu0 %v780
      %1010 = vmatprep.subr.bf16.mxu0 0
      %1011 = vmatpush1.bf16.msra.mxu0 %v781
      %1012 = vmatprep.subr.bf16.mxu0 0
      %1013 = vmatpush1.bf16.msra.mxu0 %v782
      %1014 = vmatprep.subr.bf16.mxu0 0
      %1015 = vmatpush1.bf16.msra.mxu0 %v783
      %1016 = vmatprep.subr.bf16.mxu0 0
      %1017 = vmatpush1.bf16.msra.mxu0 %v784
      %1018 = vmatprep.subr.bf16.mxu0 0
      %1019 = vmatpush1.bf16.msra.mxu0 %v785
      %1020 = vmatprep.subr.bf16.mxu0 0
      %1021 = vmatpush1.bf16.msra.mxu0 %v786
      %1022 = vmatprep.subr.bf16.mxu0 0
      %1023 = vmatpush1.bf16.msra.mxu0 %v787
      %1024 = vmatprep.subr.bf16.mxu0 0
      %1025 = vmatpush1.bf16.msra.mxu0 %v788
      %1026 = vmatprep.subr.bf16.mxu0 0
      %1027 = vmatpush1.bf16.msra.mxu0 %v789
      %1028 = vmatprep.subr.bf16.mxu0 0
      %1029 = vmatpush1.bf16.msra.mxu0 %v790
      %1030 = vmatprep.subr.bf16.mxu0 0
      %1031 = vmatpush1.bf16.msra.mxu0 %v791
      %1032 = vmatprep.subr.bf16.mxu0 0
      %1033 = vmatpush1.bf16.msra.mxu0 %v792
      %1034 = vmatprep.subr.bf16.mxu0 0
      %1035 = vmatpush1.bf16.msra.mxu0 %v793
      %1036 = vmatprep.subr.bf16.mxu0 0
      %1037 = vmatpush1.bf16.msra.mxu0 %v794
      %1038 = vmatprep.mubr.bf16.mxu0 %v450
      %1039 = vmatmul.mubr.bf16.gmra.mrb[0].mxu0 %v449
      %v1040 = vpop.f32.mrb[0].mxu0
      %v1041 = vadd.f32 %v992, %v1040
      %v1042 = vpop.f32.mrb[0].mxu0
      %v1043 = vpop.f32.mrb[0].mxu0
      %v1044 = vadd.f32 %v995, %v1043
      %v1045 = vpop.f32.mrb[0].mxu0
      %1046 = vmatprep.mubr.bf16.mxu0 %v458
      %1047 = vmatmul.mubr.bf16.gmra.mrb[0].mxu0 %v457
      %v1048 = vpop.f32.mrb[0].mxu0
      %v1049 = vadd.f32 %v1000, %v1048
      %v1050 = vpop.f32.mrb[0].mxu0
      %v1051 = vpop.f32.mrb[0].mxu0
      %v1052 = vadd.f32 %v1003, %v1051
      %v1053 = vpop.f32.mrb[0].mxu0
      %1054 = vdwg.mxu0
      %s1055 = smul.u32 %s21, 32
      %s1056 = smul.u32 %s20, 32
      %s1057 = sadd.s32 %s1055, %s1056
      %s1058 = scalar_lea.vmem %s5, %s1057
      %vm1059 = vcmask 400384
      %1060 = vst.msk [vmem:[%s1058] sm:$0xff] %vm1059, %v1041
      %1061 = vst.msk [vmem:[%s1058 + $0x8] sm:$0xff] %vm1059, %v1044
      %1062 = vst.msk [vmem:[%s1058 + $0x10] sm:$0xff] %vm1059, %v1049
      %1063 = vst.msk [vmem:[%s1058 + $0x18] sm:$0xff] %vm1059, %v1052
      %v1064 = vld [vmem:[#allocation2] sm:$0xff]
      %v1065 = vld [vmem:[#allocation2 + $0x8] sm:$0xff]
      %v1066 = vld [vmem:[#allocation2 + $0x10] sm:$0xff]
      %v1067 = vld [vmem:[#allocation2 + $0x18] sm:$0xff]
      %v1068 = vsel %vm1059, %v1041, 0.0
      %1069 = vadd.xlane.f32.xlu0 %v1068
      %v1070 = vpop.xlane.xlu0 %1069
      %v1071 = vsel %vm1059, %v1044, 0.0
      %1072 = vadd.xlane.f32.xlu0 %v1071
      %v1073 = vpop.xlane.xlu0 %1072
      %v1074 = vsel %vm1059, %v1049, 0.0
      %1075 = vadd.xlane.f32.xlu0 %v1074
      %v1076 = vpop.xlane.xlu0 %1075
      %v1077 = vsel %vm1059, %v1052, 0.0
      %1078 = vadd.xlane.f32.xlu0 %v1077
      %v1079 = vpop.xlane.xlu0 %1078
      %v1080 = vadd.f32 %v1064, %v1070
      %v1081 = vadd.f32 %v1065, %v1073
      %v1082 = vadd.f32 %v1066, %v1076
      %v1083 = vadd.f32 %v1067, %v1079
      %vm1084 = vcmask 7168
      %1085 = vst.msk [vmem:[#allocation2] sm:$0xff] %vm1084, %v1080
      %1086 = vst.msk [vmem:[#allocation2 + $0x8] sm:$0xff] %vm1084, %v1081
      %1087 = vst.msk [vmem:[#allocation2 + $0x10] sm:$0xff] %vm1084, %v1082
      %1088 = vst.msk [vmem:[#allocation2 + $0x18] sm:$0xff] %vm1084, %v1083
      // Predicated region
      $region45: #{decoder_forward.8} parent=39 // pred_check
        _
      $region46: #{decoder_forward.8} parent=39 // pred_check_branch
        %1090 = sbr.rel (%p242) target = $region48
      $region47: #{decoder_forward.8} parent=39 // pred_region
        %v1091 = vld [vmem:[%s4] sm:$0xff]
        %v1092 = vld [vmem:[%s4 + $0x8] sm:$0xff]
        %v1093 = vld [vmem:[%s4 + $0x10] sm:$0xff]
        %v1094 = vld [vmem:[%s4 + $0x18] sm:$0xff]
        %v1095 = vld [vmem:[#allocation2] sm:$0xff]
        %v1096 = vld [vmem:[#allocation2 + $0x8] sm:$0xff]
        %v1097 = vld [vmem:[#allocation2 + $0x10] sm:$0xff]
        %v1098 = vld [vmem:[#allocation2 + $0x18] sm:$0xff]
        %vm1099 = vcmask 261120
        %v1101 = vsel %vm1099, %v1091, 0
        %v1104 = vsel %vm1099, %v1092, 0
        %v1107 = vsel %vm1099, %v1093, 0
        %v1110 = vsel %vm1099, %v1094, 0
        %1112 = vmatprep.subr.mxu0 0.0
        %1113 = vmatpush1.msra.mxu0 %v1095
        %1114 = vmatprep.subr.mxu0 0.0
        %1115 = vmatpush1.msra.mxu0 %v1096
        %1116 = vmatprep.subr.mxu0 0.0
        %1117 = vmatpush1.msra.mxu0 %v1097
        %1118 = vmatprep.subr.mxu0 0.0
        %1119 = vmatpush1.msra.mxu0 %v1098
        %1120 = vmatprep.subr.mxu0 0.0
        %1121 = vmatpush1.msra.mxu0 0.0
        %1122 = vmatprep.subr.mxu0 0.0
        %1123 = vmatpush1.msra.mxu0 0.0
        %1124 = vmatprep.subr.mxu0 0.0
        %1125 = vmatpush1.msra.mxu0 0.0
        %1126 = vmatprep.subr.mxu0 0.0
        %1127 = vmatpush1.msra.mxu0 0.0
        %1128 = vmatprep.subr.mxu0 0.0
        %1129 = vmatpush1.msra.mxu0 0.0
        %1130 = vmatprep.subr.mxu0 0.0
        %1131 = vmatpush1.msra.mxu0 0.0
        %1132 = vmatprep.subr.mxu0 0.0
        %1133 = vmatpush1.msra.mxu0 0.0
        %1134 = vmatprep.subr.mxu0 0.0
        %1135 = vmatpush1.msra.mxu0 0.0
        %1136 = vmatprep.subr.mxu0 0.0
        %1137 = vmatpush1.msra.mxu0 0.0
        %1138 = vmatprep.subr.mxu0 0.0
        %1139 = vmatpush1.msra.mxu0 0.0
        %1140 = vmatprep.subr.mxu0 0.0
        %1141 = vmatpush1.msra.mxu0 0.0
        %1142 = vmatprep.subr.mxu0 0.0
        %1143 = vmatpush1.msra.mxu0 0.0
        %1144 = vmatprep.subr.mxu0 0.0
        %1145 = vmatpush1.msra.mxu0 0.0
        %1146 = vmatprep.subr.mxu0 0.0
        %1147 = vmatpush1.msra.mxu0 0.0
        %1148 = vmatprep.subr.mxu0 0.0
        %1149 = vmatpush1.msra.mxu0 0.0
        %1150 = vmatprep.subr.mxu0 0.0
        %1151 = vmatpush1.msra.mxu0 0.0
        %1152 = vmatprep.subr.mxu0 0.0
        %1153 = vmatpush1.msra.mxu0 0.0
        %1154 = vmatprep.subr.mxu0 0.0
        %1155 = vmatpush1.msra.mxu0 0.0
        %1156 = vmatprep.subr.mxu0 0.0
        %1157 = vmatpush1.msra.mxu0 0.0
        %1158 = vmatprep.subr.mxu0 0.0
        %1159 = vmatpush1.msra.mxu0 0.0
        %1160 = vmatprep.subr.mxu0 0.0
        %1161 = vmatpush1.msra.mxu0 0.0
        %1162 = vmatprep.subr.mxu0 0.0
        %1163 = vmatpush1.msra.mxu0 0.0
        %1164 = vmatprep.subr.mxu0 0.0
        %1165 = vmatpush1.msra.mxu0 0.0
        %1166 = vmatprep.subr.mxu0 0.0
        %1167 = vmatpush1.msra.mxu0 0.0
        %1168 = vmatprep.subr.mxu0 0.0
        %1169 = vmatpush1.msra.mxu0 0.0
        %1170 = vmatprep.subr.mxu0 0.0
        %1171 = vmatpush1.msra.mxu0 0.0
        %1172 = vmatprep.subr.mxu0 0.0
        %1173 = vmatpush1.msra.mxu0 0.0
        %1174 = vmatprep.subr.mxu0 0.0
        %1175 = vmatpush1.msra.mxu0 0.0
        %1176 = vmatprep.mubr.f32.mxu0 0.0
        %1177 = vmatmul.mubr.f32.gmra.mrb[0].mxu0 %v1101
        %v1178 = vpop.f32.mrb[0].mxu0
        %v1179 = vadd.f32 0.0, %v1178
        %v1180 = vpop.f32.mrb[0].mxu0
        %1181 = vmatprep.mubr.f32.mxu0 0.0
        %1182 = vmatmul.mubr.f32.gmra.mrb[0].mxu0 %v1104
        %v1183 = vpop.f32.mrb[0].mxu0
        %v1184 = vadd.f32 0.0, %v1183
        %v1185 = vpop.f32.mrb[0].mxu0
        %1186 = vmatprep.mubr.f32.mxu0 0.0
        %1187 = vmatmul.mubr.f32.gmra.mrb[0].mxu0 %v1107
        %v1188 = vpop.f32.mrb[0].mxu0
        %v1189 = vadd.f32 0.0, %v1188
        %v1190 = vpop.f32.mrb[0].mxu0
        %1191 = vmatprep.mubr.f32.mxu0 0.0
        %1192 = vmatmul.mubr.f32.gmra.mrb[0].mxu0 %v1110
        %v1193 = vpop.f32.mrb[0].mxu0
        %v1194 = vadd.f32 0.0, %v1193
        %v1195 = vpop.f32.mrb[0].mxu0
        %1196 = vdwg.mxu0
        %v1197 = vmul.f32 %v1179, 0.010204081
        %v1198 = vmul.f32 %v1184, 0.010204081
        %v1199 = vmul.f32 %v1189, 0.010204081
        %v1200 = vmul.f32 %v1194, 0.010204081
        %v1201 = vld [vmem:[%s5] sm:$0xff]
        %v1202 = vld [vmem:[%s5 + $0x8] sm:$0xff]
        %v1203 = vld [vmem:[%s5 + $0x10] sm:$0xff]
        %v1204 = vld [vmem:[%s5 + $0x18] sm:$0xff]
        %1206 = vset.pattern.permute.xlu0 0
        %1207 = vperm.xlu0 %1206, %v1197
        %v1208 = vpop.permute.xlu0 %1207
        %1211 = vset.pattern.permute.xlu0 0
        %1212 = vperm.xlu0 %1211, %v1198
        %v1213 = vpop.permute.xlu0 %1212
        %1216 = vset.pattern.permute.xlu0 0
        %1217 = vperm.xlu0 %1216, %v1199
        %v1218 = vpop.permute.xlu0 %1217
        %1221 = vset.pattern.permute.xlu0 0
        %1222 = vperm.xlu0 %1221, %v1200
        %v1223 = vpop.permute.xlu0 %1222
        %v1225 = vsub.f32 %v1201, %v1208
        %v1226 = vsub.f32 %v1202, %v1213
        %v1227 = vsub.f32 %v1203, %v1218
        %v1228 = vsub.f32 %v1204, %v1223
        %v1229 = vmul.f32 %v1225, %v1225
        %v1230 = vmul.f32 %v1226, %v1226
        %v1231 = vmul.f32 %v1227, %v1227
        %v1232 = vmul.f32 %v1228, %v1228
        %v1233 = vsel %vm1059, %v1229, 0.0
        %1234 = vadd.xlane.f32.xlu0 %v1233
        %v1235 = vpop.xlane.xlu0 %1234
        %v1236 = vsel %vm1059, %v1230, 0.0
        %1237 = vadd.xlane.f32.xlu0 %v1236
        %v1238 = vpop.xlane.xlu0 %1237
        %v1239 = vsel %vm1059, %v1231, 0.0
        %1240 = vadd.xlane.f32.xlu0 %v1239
        %v1241 = vpop.xlane.xlu0 %1240
        %v1242 = vsel %vm1059, %v1232, 0.0
        %1243 = vadd.xlane.f32.xlu0 %v1242
        %v1244 = vpop.xlane.xlu0 %1243
        %v1245 = vadd.f32 %v1235, 0.0
        %v1246 = vadd.f32 %v1238, 0.0
        %v1247 = vadd.f32 %v1241, 0.0
        %v1248 = vadd.f32 %v1244, 0.0
        %s1249 = scalar_lea.vmem %s5, 32
        %v1250 = vld [vmem:[%s1249] sm:$0xff]
        %v1251 = vld [vmem:[%s1249 + $0x8] sm:$0xff]
        %v1252 = vld [vmem:[%s1249 + $0x10] sm:$0xff]
        %v1253 = vld [vmem:[%s1249 + $0x18] sm:$0xff]
        %v1254 = vsub.f32 %v1250, %v1208
        %v1255 = vsub.f32 %v1251, %v1213
        %v1256 = vsub.f32 %v1252, %v1218
        %v1257 = vsub.f32 %v1253, %v1223
        %v1258 = vmul.f32 %v1254, %v1254
        %v1259 = vmul.f32 %v1255, %v1255
        %v1260 = vmul.f32 %v1256, %v1256
        %v1261 = vmul.f32 %v1257, %v1257
        %v1262 = vsel %vm1059, %v1258, 0.0
        %1263 = vadd.xlane.f32.xlu0 %v1262
        %v1264 = vpop.xlane.xlu0 %1263
        %v1265 = vsel %vm1059, %v1259, 0.0
        %1266 = vadd.xlane.f32.xlu0 %v1265
        %v1267 = vpop.xlane.xlu0 %1266
        %v1268 = vsel %vm1059, %v1260, 0.0
        %1269 = vadd.xlane.f32.xlu0 %v1268
        %v1270 = vpop.xlane.xlu0 %1269
        %v1271 = vsel %vm1059, %v1261, 0.0
        %1272 = vadd.xlane.f32.xlu0 %v1271
        %v1273 = vpop.xlane.xlu0 %1272
        %v1274 = vadd.f32 %v1245, %v1264
        %v1275 = vadd.f32 %v1246, %v1267
        %v1276 = vadd.f32 %v1247, %v1270
        %v1277 = vadd.f32 %v1248, %v1273
        %1278 = vmatprep.subr.mxu0 0.0
        %1279 = vmatpush1.msra.mxu0 %v1274
        %1280 = vmatprep.subr.mxu0 0.0
        %1281 = vmatpush1.msra.mxu0 %v1275
        %1282 = vmatprep.subr.mxu0 0.0
        %1283 = vmatpush1.msra.mxu0 %v1276
        %1284 = vmatprep.subr.mxu0 0.0
        %1285 = vmatpush1.msra.mxu0 %v1277
        %1286 = vmatprep.subr.mxu0 0.0
        %1287 = vmatpush1.msra.mxu0 0.0
        %1288 = vmatprep.subr.mxu0 0.0
        %1289 = vmatpush1.msra.mxu0 0.0
        %1290 = vmatprep.subr.mxu0 0.0
        %1291 = vmatpush1.msra.mxu0 0.0
        %1292 = vmatprep.subr.mxu0 0.0
        %1293 = vmatpush1.msra.mxu0 0.0
        %1294 = vmatprep.subr.mxu0 0.0
        %1295 = vmatpush1.msra.mxu0 0.0
        %1296 = vmatprep.subr.mxu0 0.0
        %1297 = vmatpush1.msra.mxu0 0.0
        %1298 = vmatprep.subr.mxu0 0.0
        %1299 = vmatpush1.msra.mxu0 0.0
        %1300 = vmatprep.subr.mxu0 0.0
        %1301 = vmatpush1.msra.mxu0 0.0
        %1302 = vmatprep.subr.mxu0 0.0
        %1303 = vmatpush1.msra.mxu0 0.0
        %1304 = vmatprep.subr.mxu0 0.0
        %1305 = vmatpush1.msra.mxu0 0.0
        %1306 = vmatprep.subr.mxu0 0.0
        %1307 = vmatpush1.msra.mxu0 0.0
        %1308 = vmatprep.subr.mxu0 0.0
        %1309 = vmatpush1.msra.mxu0 0.0
        %1310 = vmatprep.subr.mxu0 0.0
        %1311 = vmatpush1.msra.mxu0 0.0
        %1312 = vmatprep.subr.mxu0 0.0
        %1313 = vmatpush1.msra.mxu0 0.0
        %1314 = vmatprep.subr.mxu0 0.0
        %1315 = vmatpush1.msra.mxu0 0.0
        %1316 = vmatprep.subr.mxu0 0.0
        %1317 = vmatpush1.msra.mxu0 0.0
        %1318 = vmatprep.subr.mxu0 0.0
        %1319 = vmatpush1.msra.mxu0 0.0
        %1320 = vmatprep.subr.mxu0 0.0
        %1321 = vmatpush1.msra.mxu0 0.0
        %1322 = vmatprep.subr.mxu0 0.0
        %1323 = vmatpush1.msra.mxu0 0.0
        %1324 = vmatprep.subr.mxu0 0.0
        %1325 = vmatpush1.msra.mxu0 0.0
        %1326 = vmatprep.subr.mxu0 0.0
        %1327 = vmatpush1.msra.mxu0 0.0
        %1328 = vmatprep.subr.mxu0 0.0
        %1329 = vmatpush1.msra.mxu0 0.0
        %1330 = vmatprep.subr.mxu0 0.0
        %1331 = vmatpush1.msra.mxu0 0.0
        %1332 = vmatprep.subr.mxu0 0.0
        %1333 = vmatpush1.msra.mxu0 0.0
        %1334 = vmatprep.subr.mxu0 0.0
        %1335 = vmatpush1.msra.mxu0 0.0
        %1336 = vmatprep.subr.mxu0 0.0
        %1337 = vmatpush1.msra.mxu0 0.0
        %1338 = vmatprep.subr.mxu0 0.0
        %1339 = vmatpush1.msra.mxu0 0.0
        %1340 = vmatprep.subr.mxu0 0.0
        %1341 = vmatpush1.msra.mxu0 0.0
        %1342 = vmatprep.mubr.f32.mxu0 0.0
        %1343 = vmatmul.mubr.f32.gmra.mrb[0].mxu0 %v1101
        %v1344 = vpop.f32.mrb[0].mxu0
        %v1345 = vadd.f32 0.0, %v1344
        %v1346 = vpop.f32.mrb[0].mxu0
        %1347 = vmatprep.mubr.f32.mxu0 0.0
        %1348 = vmatmul.mubr.f32.gmra.mrb[0].mxu0 %v1104
        %v1349 = vpop.f32.mrb[0].mxu0
        %v1350 = vadd.f32 0.0, %v1349
        %v1351 = vpop.f32.mrb[0].mxu0
        %1352 = vmatprep.mubr.f32.mxu0 0.0
        %1353 = vmatmul.mubr.f32.gmra.mrb[0].mxu0 %v1107
        %v1354 = vpop.f32.mrb[0].mxu0
        %v1355 = vadd.f32 0.0, %v1354
        %v1356 = vpop.f32.mrb[0].mxu0
        %1357 = vmatprep.mubr.f32.mxu0 0.0
        %1358 = vmatmul.mubr.f32.gmra.mrb[0].mxu0 %v1110
        %v1359 = vpop.f32.mrb[0].mxu0
        %v1360 = vadd.f32 0.0, %v1359
        %v1361 = vpop.f32.mrb[0].mxu0
        %1362 = vdwg.mxu0
        %v1363 = vmul.f32 %v1345, 0.010204081
        %v1364 = vmul.f32 %v1350, 0.010204081
        %v1365 = vmul.f32 %v1355, 0.010204081
        %v1366 = vmul.f32 %v1360, 0.010204081
        %v1367 = vld [vmem:[%s2] sm:$0xff]
        %v1368 = vld [vmem:[%s2 + $0x8] sm:$0xff]
        %v1369 = vld [vmem:[%s2 + $0x10] sm:$0xff]
        %v1370 = vld [vmem:[%s2 + $0x18] sm:$0xff]
        %v1371 = vadd.f32 %v1363, 1e-05
        %v1372 = vadd.f32 %v1364, 1e-05
        %v1373 = vadd.f32 %v1365, 1e-05
        %v1374 = vadd.f32 %v1366, 1e-05
        %v1375 = vrsqrt.pop %v1371
        %v1376 = vrsqrt.pop %v1372
        %v1377 = vrsqrt.pop %v1373
        %v1378 = vrsqrt.pop %v1374
        %v1379 = vmul.f32 %v1367, %v1375
        %v1380 = vmul.f32 %v1368, %v1376
        %v1381 = vmul.f32 %v1369, %v1377
        %v1382 = vmul.f32 %v1370, %v1378
        %v1383 = vld [vmem:[%s3] sm:$0xff]
        %v1384 = vld [vmem:[%s3 + $0x8] sm:$0xff]
        %v1385 = vld [vmem:[%s3 + $0x10] sm:$0xff]
        %v1386 = vld [vmem:[%s3 + $0x18] sm:$0xff]
        %v1387 = vmul.f32 %v1197, %v1379
        %v1388 = vmul.f32 %v1198, %v1380
        %v1389 = vmul.f32 %v1199, %v1381
        %v1390 = vmul.f32 %v1200, %v1382
        %v1391 = vsub.f32 %v1383, %v1387
        %v1392 = vsub.f32 %v1384, %v1388
        %v1393 = vsub.f32 %v1385, %v1389
        %v1394 = vsub.f32 %v1386, %v1390
        %1396 = vset.pattern.permute.xlu0 0
        %1397 = vperm.xlu0 %1396, %v1379
        %v1398 = vpop.permute.xlu0 %1397
        %1401 = vset.pattern.permute.xlu0 0
        %1402 = vperm.xlu0 %1401, %v1380
        %v1403 = vpop.permute.xlu0 %1402
        %1406 = vset.pattern.permute.xlu0 0
        %1407 = vperm.xlu0 %1406, %v1381
        %v1408 = vpop.permute.xlu0 %1407
        %1411 = vset.pattern.permute.xlu0 0
        %1412 = vperm.xlu0 %1411, %v1382
        %v1413 = vpop.permute.xlu0 %1412
        %v1415 = vmul.f32 %v1201, %v1398
        %v1416 = vmul.f32 %v1202, %v1403
        %v1417 = vmul.f32 %v1203, %v1408
        %v1418 = vmul.f32 %v1204, %v1413
        %1420 = vset.pattern.permute.xlu0 0
        %1421 = vperm.xlu0 %1420, %v1391
        %v1422 = vpop.permute.xlu0 %1421
        %1425 = vset.pattern.permute.xlu0 0
        %1426 = vperm.xlu0 %1425, %v1392
        %v1427 = vpop.permute.xlu0 %1426
        %1430 = vset.pattern.permute.xlu0 0
        %1431 = vperm.xlu0 %1430, %v1393
        %v1432 = vpop.permute.xlu0 %1431
        %1435 = vset.pattern.permute.xlu0 0
        %1436 = vperm.xlu0 %1435, %v1394
        %v1437 = vpop.permute.xlu0 %1436
        %v1439 = vadd.f32 %v1415, %v1422
        %v1440 = vadd.f32 %v1416, %v1427
        %v1441 = vadd.f32 %v1417, %v1432
        %v1442 = vadd.f32 %v1418, %v1437
        %v1443 = vmax.f32 %v1439, 0.0
        %v1444 = vmax.f32 %v1440, 0.0
        %v1445 = vmax.f32 %v1441, 0.0
        %v1446 = vmax.f32 %v1442, 0.0
        %1447 = vst.msk [vmem:[%s5] sm:$0xff] %vm1059, %v1443
        %1448 = vst.msk [vmem:[%s5 + $0x8] sm:$0xff] %vm1059, %v1444
        %1449 = vst.msk [vmem:[%s5 + $0x10] sm:$0xff] %vm1059, %v1445
        %1450 = vst.msk [vmem:[%s5 + $0x18] sm:$0xff] %vm1059, %v1446
        %v1451 = vld [vmem:[%s1249] sm:$0xff]
        %v1452 = vld [vmem:[%s1249 + $0x8] sm:$0xff]
        %v1453 = vld [vmem:[%s1249 + $0x10] sm:$0xff]
        %v1454 = vld [vmem:[%s1249 + $0x18] sm:$0xff]
        %v1455 = vmul.f32 %v1451, %v1398
        %v1456 = vmul.f32 %v1452, %v1403
        %v1457 = vmul.f32 %v1453, %v1408
        %v1458 = vmul.f32 %v1454, %v1413
        %v1459 = vadd.f32 %v1455, %v1422
        %v1460 = vadd.f32 %v1456, %v1427
        %v1461 = vadd.f32 %v1457, %v1432
        %v1462 = vadd.f32 %v1458, %v1437
        %v1463 = vmax.f32 %v1459, 0.0
        %v1464 = vmax.f32 %v1460, 0.0
        %v1465 = vmax.f32 %v1461, 0.0
        %v1466 = vmax.f32 %v1462, 0.0
        %1467 = vst.msk [vmem:[%s1249] sm:$0xff] %vm1059, %v1463
        %1468 = vst.msk [vmem:[%s1249 + $0x8] sm:$0xff] %vm1059, %v1464
        %1469 = vst.msk [vmem:[%s1249 + $0x10] sm:$0xff] %vm1059, %v1465
        %1470 = vst.msk [vmem:[%s1249 + $0x18] sm:$0xff] %vm1059, %v1466
      $region48: #{decoder_forward.8} parent=39 // pred_fallthru
        _
      // Predicated region
      $region49: #{decoder_forward.8} parent=39 // pred_check
        %p1471 = pneg %p153
      $region50: #{decoder_forward.8} parent=39 // pred_check_branch
        %1473 = sbr.rel (%p1471) target = $region52
      $region51: #{decoder_forward.8} parent=39 // pred_region
        _
      $region52: #{decoder_forward.8} parent=39 // pred_fallthru
        _
      // Predicated region
      $region53: #{decoder_forward.8} parent=39 // pred_check
        %p1474 = pneg %p153
      $region54: #{decoder_forward.8} parent=39 // pred_check_branch
        %1476 = sbr.rel (%p1474) target = $region56
      $region55: #{decoder_forward.8} parent=39 // pred_region
        _
      $region56: #{decoder_forward.8} parent=39 // pred_fallthru
        _
    $region40: #{decoder_forward.8} parent=5 // pred_fallthru
      _
    %p1477 = scmp.le.s32.totalorder 2, %s11
    // Predicated region
    $region57: #{decoder_forward.8} parent=5 // pred_check
      %p1478 = pneg %p1477
    $region58: #{decoder_forward.8} parent=5 // pred_check_branch
      %1480 = sbr.rel (%p1478) target = $region60
    $region59: #{decoder_forward.8} parent=5 // pred_region
      %s1481 = ssub.s32 %s11, 2
    $region60: #{decoder_forward.8} parent=5 // pred_fallthru
      _
  $region6: #{decoder_forward.8} parent=0 // loop_footer
    %s15 = sadd.s32 1, %s11
  $region7: #{decoder_forward.8} parent=0 // loop_footer_branch
    %10 = sbr.rel target = $region3
  $region8: #{decoder_forward.8} parent=0 // loop_exit
    _

// kernel: decoder_forward.9
$region0: #{decoder_forward.9}
  #allocation0 [shape = 'u32[]', space=smem, size = 0x4, offset = 0x4, fixed_abs, tag = 'smem constant byte address 0x4 - core index']
  #allocation1 [shape = 'u32[144,128]{1,0:T(1,128)}', space=vmem, size = 0x12000, scoped, tag = 'internal scratch']
  #allocation2 [shape = 'f32[64,1]{1,0:T(8,128)}', space=vmem, size = 0x8000, scoped, tag = 'scratch operand']
  %s0 = inlined_call_operand.vmem [shape: bf16[2,1,288,49], index: 0, kind: input, shape index: {}]
  %s1 = inlined_call_operand.vmem [shape: bf16[64,288], index: 1, kind: input, shape index: {}]
  %s2 = inlined_call_operand.vmem [shape: f32[64,1], index: 2, kind: input, shape index: {}]
  %s3 = inlined_call_operand.vmem [shape: f32[64,1], index: 3, kind: input, shape index: {}]
  %s4 = inlined_call_operand.vmem [shape: f32[64,64], index: 4, kind: input, shape index: {}]
  %s5 = inlined_call_operand.vmem [shape: f32[2,1,64,49], index: 5, kind: output, shape index: {}]
  %s6 = sld [smem:[#allocation0]]
  $region61: #{decoder_forward.9} parent=0
    _
  %s8 = ssub.s32 1, %s6
  %s9 = scalar_select 0, %s8, %s6
  loop: start=0, step=1, limit=4
  $region2: #{decoder_forward.9} parent=0 // loop_pre_header
    _
  $region3: #{decoder_forward.9} parent=0 // loop_header
    %s11 = sphi 0, %s15
    %p12 = scmp.ge.s32.totalorder %s11, 4
    %s18 = sphi 0, %s30
    %s19 = sphi 0, %s26
    %s20 = sphi 0, %s18
    %s21 = sphi 0, %s19
    %s22 = sphi 0, %s20
    %s23 = sphi 0, %s21
    %s35 = sphi 0, %s37
    %s38 = sphi 0, %s35
    %s39 = sphi 0, %s38
    %s55 = sphi 0, %s39
    %s59 = sphi 0, %s59
    %s61 = sphi 0, %s59
    %s62 = sphi 0, %s61
    %s76 = sphi 0, %s62
    %s80 = sphi 0, %s80
    %s82 = sphi 0, %s80
    %s83 = sphi 0, %s82
    %s97 = sphi 0, %s83
    %s101 = sphi 0, %s101
    %s103 = sphi 0, %s101
    %s104 = sphi 0, %s103
    %s118 = sphi 0, %s104
    %s122 = sphi 0, %s122
    %s124 = sphi 0, %s122
    %s125 = sphi 0, %s124
    %s139 = sphi 0, %s125
    %s143 = sphi 0, %s143
    %s145 = sphi 0, %s143
    %s146 = sphi 0, %s145
    %s160 = sphi 0, %s146
  $region4: #{decoder_forward.9} parent=0 // loop_header_branch
    %14 = sbr.rel (%p12) target = $region8
  $region5: #{decoder_forward.9} parent=0 // loop_body
    %s16 = ssub.s32 %s11, 1
    %s17 = ssub.s32 %s11, 2
    %s24 = sadd.s32 1, %s19
    %p25 = scmp.ge.s32.totalorder %s24, 1
    %s26 = scalar_select %p25, 0, %s24
    %s27 = sadd.s32 1, %s18
    %s28 = scalar_select %p25, %s27, %s18
    %p29 = scmp.ge.s32.totalorder %s28, 2
    %s30 = scalar_select %p29, 0, %s28
    %s31 = ssub.s32 %s18, %s30
    %s32 = ssub.s32 %s19, %s26
    %s33 = sor.u32 %s31, %s32
    %p34 = scmp.eq.s32.totalorder %s33, 0
    %s36 = sadd.s32 %s35, 1
    %s37 = scalar_select %p34, %s35, %s36
    %p40 = pneg %p34
    %p41 = scmp.eq.s32.totalorder %s11, 1
    %p42 = por %p40, %p41
    %p43 = scmp.ne.s32.totalorder %s35, %s38
    %p44 = scmp.eq.s32.totalorder %s11, 0
    %p45 = por %p43, %p44
    %p46 = scmp.ne.s32.totalorder %s35, %s38
    %p47 = scmp.eq.s32.totalorder %s16, 1
    %p48 = por %p46, %p47
    %p49 = scmp.ne.s32.totalorder %s38, %s39
    %p50 = scmp.eq.s32.totalorder %s16, 0
    %p51 = por %p49, %p50
    %p52 = scmp.ne.s32.totalorder %s38, %s39
    %p53 = scmp.eq.s32.totalorder %s17, 1
    %p54 = por %p52, %p53
    %p56 = scmp.ne.s32.totalorder %s39, %s55
    %p57 = scmp.eq.s32.totalorder %s17, 0
    %p58 = por %p56, %p57
    %s60 = sadd.s32 %s59, 1
    %p63 = scmp.eq.s32.totalorder %s11, 1
    %p64 = scmp.ne.s32.totalorder %s59, %s61
    %p65 = scmp.eq.s32.totalorder %s11, 0
    %p66 = por %p64, %p65
    %p67 = scmp.ne.s32.totalorder %s59, %s61
    %p68 = scmp.eq.s32.totalorder %s16, 1
    %p69 = por %p67, %p68
    %p70 = scmp.ne.s32.totalorder %s61, %s62
    %p71 = scmp.eq.s32.totalorder %s16, 0
    %p72 = por %p70, %p71
    %p73 = scmp.ne.s32.totalorder %s61, %s62
    %p74 = scmp.eq.s32.totalorder %s17, 1
    %p75 = por %p73, %p74
    %p77 = scmp.ne.s32.totalorder %s62, %s76
    %p78 = scmp.eq.s32.totalorder %s17, 0
    %p79 = por %p77, %p78
    %s81 = sadd.s32 %s80, 1
    %p84 = scmp.eq.s32.totalorder %s11, 1
    %p85 = scmp.ne.s32.totalorder %s80, %s82
    %p86 = scmp.eq.s32.totalorder %s11, 0
    %p87 = por %p85, %p86
    %p88 = scmp.ne.s32.totalorder %s80, %s82
    %p89 = scmp.eq.s32.totalorder %s16, 1
    %p90 = por %p88, %p89
    %p91 = scmp.ne.s32.totalorder %s82, %s83
    %p92 = scmp.eq.s32.totalorder %s16, 0
    %p93 = por %p91, %p92
    %p94 = scmp.ne.s32.totalorder %s82, %s83
    %p95 = scmp.eq.s32.totalorder %s17, 1
    %p96 = por %p94, %p95
    %p98 = scmp.ne.s32.totalorder %s83, %s97
    %p99 = scmp.eq.s32.totalorder %s17, 0
    %p100 = por %p98, %p99
    %s102 = sadd.s32 %s101, 1
    %p105 = scmp.eq.s32.totalorder %s11, 1
    %p106 = scmp.ne.s32.totalorder %s101, %s103
    %p107 = scmp.eq.s32.totalorder %s11, 0
    %p108 = por %p106, %p107
    %p109 = scmp.ne.s32.totalorder %s101, %s103
    %p110 = scmp.eq.s32.totalorder %s16, 1
    %p111 = por %p109, %p110
    %p112 = scmp.ne.s32.totalorder %s103, %s104
    %p113 = scmp.eq.s32.totalorder %s16, 0
    %p114 = por %p112, %p113
    %p115 = scmp.ne.s32.totalorder %s103, %s104
    %p116 = scmp.eq.s32.totalorder %s17, 1
    %p117 = por %p115, %p116
    %p119 = scmp.ne.s32.totalorder %s104, %s118
    %p120 = scmp.eq.s32.totalorder %s17, 0
    %p121 = por %p119, %p120
    %s123 = sadd.s32 %s122, 1
    %p126 = scmp.eq.s32.totalorder %s11, 1
    %p127 = scmp.ne.s32.totalorder %s122, %s124
    %p128 = scmp.eq.s32.totalorder %s11, 0
    %p129 = por %p127, %p128
    %p130 = scmp.ne.s32.totalorder %s122, %s124
    %p131 = scmp.eq.s32.totalorder %s16, 1
    %p132 = por %p130, %p131
    %p133 = scmp.ne.s32.totalorder %s124, %s125
    %p134 = scmp.eq.s32.totalorder %s16, 0
    %p135 = por %p133, %p134
    %p136 = scmp.ne.s32.totalorder %s124, %s125
    %p137 = scmp.eq.s32.totalorder %s17, 1
    %p138 = por %p136, %p137
    %p140 = scmp.ne.s32.totalorder %s125, %s139
    %p141 = scmp.eq.s32.totalorder %s17, 0
    %p142 = por %p140, %p141
    %s144 = sadd.s32 %s143, 1
    %p147 = scmp.eq.s32.totalorder %s11, 1
    %p148 = scmp.ne.s32.totalorder %s143, %s145
    %p149 = scmp.eq.s32.totalorder %s11, 0
    %p150 = por %p148, %p149
    %p151 = scmp.ne.s32.totalorder %s143, %s145
    %p152 = scmp.eq.s32.totalorder %s16, 1
    %p153 = por %p151, %p152
    %p154 = scmp.ne.s32.totalorder %s145, %s146
    %p155 = scmp.eq.s32.totalorder %s16, 0
    %p156 = por %p154, %p155
    %p157 = scmp.ne.s32.totalorder %s145, %s146
    %p158 = scmp.eq.s32.totalorder %s17, 1
    %p159 = por %p157, %p158
    %p161 = scmp.ne.s32.totalorder %s146, %s160
    %p162 = scmp.eq.s32.totalorder %s17, 0
    %p163 = por %p161, %p162
    %p164 = scmp.le.s32.totalorder 1, %s11
    %p165 = scmp.lt.s32.totalorder %s11, 3
    %p166 = pnand %p164, %p165
    %p167 = pneg %p166
    // Predicated region
    $region9: #{decoder_forward.9} parent=5 // pred_check
      _
    $region10: #{decoder_forward.9} parent=5 // pred_check_branch
      %169 = sbr.rel (%p166) target = $region12
    $region11: #{decoder_forward.9} parent=5 // pred_region
      %s170 = ssub.s32 %s11, 1
      // Predicated region
      $region13: #{decoder_forward.9} parent=11 // pred_check
        %p171 = pneg %p72
      $region14: #{decoder_forward.9} parent=11 // pred_check_branch
        %173 = sbr.rel (%p171) target = $region16
      $region15: #{decoder_forward.9} parent=11 // pred_region
        _
      $region16: #{decoder_forward.9} parent=11 // pred_fallthru
        _
      // Predicated region
      $region17: #{decoder_forward.9} parent=11 // pred_check
        %p174 = pneg %p93
      $region18: #{decoder_forward.9} parent=11 // pred_check_branch
        %176 = sbr.rel (%p174) target = $region20
      $region19: #{decoder_forward.9} parent=11 // pred_region
        _
      $region20: #{decoder_forward.9} parent=11 // pred_fallthru
        _
      // Predicated region
      $region21: #{decoder_forward.9} parent=11 // pred_check
        %p177 = pneg %p114
      $region22: #{decoder_forward.9} parent=11 // pred_check_branch
        %179 = sbr.rel (%p177) target = $region24
      $region23: #{decoder_forward.9} parent=11 // pred_region
        _
      $region24: #{decoder_forward.9} parent=11 // pred_fallthru
        _
      // Predicated region
      $region25: #{decoder_forward.9} parent=11 // pred_check
        %p180 = pneg %p135
      $region26: #{decoder_forward.9} parent=11 // pred_check_branch
        %182 = sbr.rel (%p180) target = $region28
      $region27: #{decoder_forward.9} parent=11 // pred_region
        _
      $region28: #{decoder_forward.9} parent=11 // pred_fallthru
        _
    $region12: #{decoder_forward.9} parent=5 // pred_fallthru
      _
    %p183 = scmp.lt.s32.totalorder %s11, 2
    // Predicated region
    $region29: #{decoder_forward.9} parent=5 // pred_check
      %p184 = pneg %p183
    $region30: #{decoder_forward.9} parent=5 // pred_check_branch
      %186 = sbr.rel (%p184) target = $region32
    $region31: #{decoder_forward.9} parent=5 // pred_region
      // Predicated region
      $region33: #{decoder_forward.9} parent=31 // pred_check
        %p187 = pneg %p45
      $region34: #{decoder_forward.9} parent=31 // pred_check_branch
        %189 = sbr.rel (%p187) target = $region36
      $region35: #{decoder_forward.9} parent=31 // pred_region
        %p190 = scmp.lt.s32.totalorder %s18, 1
        %s191 = scalar_select %p190, %s18, 1
        %p192 = scmp.lt.s32.totalorder %s19, 0
        %s193 = scalar_select %p192, %s19, 0
        %s194 = smul.addr %s193, 36
        %s195 = smul.addr %s191, 36
        %s196 = sadd.s32 %s194, %s195
        %s197 = smul.addr %s196, 4
        %s198 = scalar_lea.vmem %s0, %s197
      $region36: #{decoder_forward.9} parent=31 // pred_fallthru
        _
    $region32: #{decoder_forward.9} parent=5 // pred_fallthru
      _
    %p199 = scmp.le.s32.totalorder 1, %s11
    %p200 = scmp.lt.s32.totalorder %s11, 3
    %p201 = pnand %p199, %p200
    %p202 = pneg %p201
    // Predicated region
    $region37: #{decoder_forward.9} parent=5 // pred_check
      _
    $region38: #{decoder_forward.9} parent=5 // pred_check_branch
      %204 = sbr.rel (%p201) target = $region40
    $region39: #{decoder_forward.9} parent=5 // pred_region
      %s205 = ssub.s32 %s11, 1
      %p206 = scmp.lt.s32.totalorder %s20, 1
      %s207 = scalar_select %p206, %s20, 1
      %p208 = scmp.lt.s32.totalorder %s21, 0
      %s209 = scalar_select %p208, %s21, 0
      %s210 = smul.addr %s209, 36
      %s211 = smul.addr %s207, 36
      %s212 = sadd.s32 %s210, %s211
      %s213 = smul.addr %s212, 4
      %s214 = scalar_lea.vmem %s0, %s213
      %p215 = pneg %p51
      %p216 = pneg %p48
      %p217 = pneg %p72
      %p218 = pneg %p69
      %p219 = pneg %p93
      %p220 = pneg %p90
      %p221 = pneg %p114
      %p222 = pneg %p111
      %p223 = pneg %p135
      %p224 = pneg %p132
      %p225 = pneg %p156
      %p226 = pneg %p153
      %p227 = scmp.lt.s32.totalorder %s20, 1
      %s228 = scalar_select %p227, %s20, 1
      %p229 = scmp.lt.s32.totalorder %s21, 0
      %s230 = scalar_select %p229, %s21, 0
      %s231 = smul.addr %s230, 36
      %s232 = smul.addr %s228, 36
      %s233 = sadd.s32 %s231, %s232
      %s234 = smul.addr %s233, 4
      %s235 = scalar_lea.vmem %s0, %s234
      %p237 = scmp.eq.s32.totalorder %s20, 0
      %p238 = scmp.eq.s32.totalorder %s21, 0
      %p239 = pnand %p237, %p238
      %p240 = pneg %p239
      %p241 = scmp.eq.s32.totalorder %s20, 1
      %p242 = pnand %p241, %p238
      %p243 = pneg %p242
      // Predicated region
      $region41: #{decoder_forward.9} parent=39 // pred_check
        _
      $region42: #{decoder_forward.9} parent=39 // pred_check_branch
        %245 = sbr.rel (%p239) target = $region44
      $region43: #{decoder_forward.9} parent=39 // pred_region
        %vm246 = vcmask 7168
        %247 = vst.msk [vmem:[#allocation2] sm:$0xff] %vm246, 0.0
        %248 = vst.msk [vmem:[#allocation2 + $0x8] sm:$0xff] %vm246, 0.0
        %249 = vst.msk [vmem:[#allocation2 + $0x10] sm:$0xff] %vm246, 0.0
        %250 = vst.msk [vmem:[#allocation2 + $0x18] sm:$0xff] %vm246, 0.0
        %251 = vst.msk [vmem:[#allocation2 + $0x20] sm:$0xff] %vm246, 0.0
        %252 = vst.msk [vmem:[#allocation2 + $0x28] sm:$0xff] %vm246, 0.0
        %253 = vst.msk [vmem:[#allocation2 + $0x30] sm:$0xff] %vm246, 0.0
        %254 = vst.msk [vmem:[#allocation2 + $0x38] sm:$0xff] %vm246, 0.0
      $region44: #{decoder_forward.9} parent=39 // pred_fallthru
        _
      %v255 = vld [vmem:[%s1] sm:$0xff]
      %v256 = vld [vmem:[%s1 + $0x8] sm:$0xf]
      %v257 = vld [vmem:[%s1 + $0xc] sm:$0xff]
      %v258 = vld [vmem:[%s1 + $0x14] sm:$0xf]
      %v259 = vld [vmem:[%s1 + $0x18] sm:$0xff]
      %v260 = vld [vmem:[%s1 + $0x20] sm:$0xf]
      %v261 = vld [vmem:[%s1 + $0x24] sm:$0xff]
      %v262 = vld [vmem:[%s1 + $0x2c] sm:$0xf]
      %v263 = vld [vmem:[%s1 + $0x30] sm:$0xff]
      %v264 = vld [vmem:[%s1 + $0x38] sm:$0xf]
      %v265 = vld [vmem:[%s1 + $0x3c] sm:$0xff]
      %v266 = vld [vmem:[%s1 + $0x44] sm:$0xf]
      %v267 = vld [vmem:[%s1 + $0x48] sm:$0xff]
      %v268 = vld [vmem:[%s1 + $0x50] sm:$0xf]
      %v269 = vld [vmem:[%s1 + $0x54] sm:$0xff]
      %v270 = vld [vmem:[%s1 + $0x5c] sm:$0xf]
      %v271 = vld [vmem:[%s235] sm:$0xf]
      %v272 = vld [vmem:[%s235 + $0x4] sm:$0xf]
      %v273 = vld [vmem:[%s235 + $0x8] sm:$0xf]
      %v274 = vld [vmem:[%s235 + $0xc] sm:$0xf]
      %v275 = vld [vmem:[%s235 + $0x10] sm:$0xf]
      %v276 = vld [vmem:[%s235 + $0x14] sm:$0xf]
      %v277 = vld [vmem:[%s235 + $0x18] sm:$0xf]
      %v278 = vld [vmem:[%s235 + $0x1c] sm:$0xf]
      %v279 = vld [vmem:[%s235 + $0x20] sm:$0xf]
      %v280 = vld [vmem:[%s235 + $0x24] sm:$0xf]
      %v281 = vld [vmem:[%s235 + $0x28] sm:$0xf]
      %v282 = vld [vmem:[%s235 + $0x2c] sm:$0xf]
      %v283 = vld [vmem:[%s235 + $0x30] sm:$0xf]
      %v284 = vld [vmem:[%s235 + $0x34] sm:$0xf]
      %v285 = vld [vmem:[%s235 + $0x38] sm:$0xf]
      %v286 = vld [vmem:[%s235 + $0x3c] sm:$0xf]
      %v287 = vld [vmem:[%s235 + $0x40] sm:$0xf]
      %v288 = vld [vmem:[%s235 + $0x44] sm:$0xf]
      %v289 = vld [vmem:[%s235 + $0x48] sm:$0xf]
      %v290 = vld [vmem:[%s235 + $0x4c] sm:$0xf]
      %v291 = vld [vmem:[%s235 + $0x50] sm:$0xf]
      %v292 = vld [vmem:[%s235 + $0x54] sm:$0xf]
      %v293 = vld [vmem:[%s235 + $0x58] sm:$0xf]
      %v294 = vld [vmem:[%s235 + $0x5c] sm:$0xf]
      %v295 = vld [vmem:[%s235 + $0x60] sm:$0xf]
      %v296 = vld [vmem:[%s235 + $0x64] sm:$0xf]
      %v297 = vld [vmem:[%s235 + $0x68] sm:$0xf]
      %v298 = vld [vmem:[%s235 + $0x6c] sm:$0xf]
      %v299 = vld [vmem:[%s235 + $0x70] sm:$0xf]
      %v300 = vld [vmem:[%s235 + $0x74] sm:$0xf]
      %v301 = vld [vmem:[%s235 + $0x78] sm:$0xf]
      %v302 = vld [vmem:[%s235 + $0x7c] sm:$0xf]
      %v303 = vld [vmem:[%s235 + $0x80] sm:$0xf]
      %v304 = vld [vmem:[%s235 + $0x84] sm:$0xf]
      %v305 = vld [vmem:[%s235 + $0x88] sm:$0xf]
      %v306 = vld [vmem:[%s235 + $0x8c] sm:$0xf]
      %v323 = vunpack.c.l.b16 %v255
      %v324 = vunpack.c.h.b16 %v255
      %v325 = vunpack.c.l.b16 %v256
      %v326 = vunpack.c.l.b16 %v257
      %v327 = vunpack.c.h.b16 %v257
      %v328 = vunpack.c.l.b16 %v258
      %v329 = vunpack.c.l.b16 %v259
      %v330 = vunpack.c.h.b16 %v259
      %v331 = vunpack.c.l.b16 %v260
      %v332 = vunpack.c.l.b16 %v261
      %v333 = vunpack.c.h.b16 %v261
      %v334 = vunpack.c.l.b16 %v262
      %v335 = vunpack.c.l.b16 %v263
      %v336 = vunpack.c.h.b16 %v263
      %v337 = vunpack.c.l.b16 %v264
      %v338 = vunpack.c.l.b16 %v265
      %v339 = vunpack.c.h.b16 %v265
      %v340 = vunpack.c.l.b16 %v266
      %v341 = vunpack.c.l.b16 %v267
      %v342 = vunpack.c.h.b16 %v267
      %v343 = vunpack.c.l.b16 %v268
      %v344 = vunpack.c.l.b16 %v269
      %v345 = vunpack.c.h.b16 %v269
      %v346 = vunpack.c.l.b16 %v270
      %v347 = vpack.c.b16 %v326, %v323
      %v348 = vpack.c.b16 %v327, %v324
      %v349 = vpack.c.b16 %v328, %v325
      %v350 = vpack.c.b16 %v332, %v329
      %v351 = vpack.c.b16 %v333, %v330
      %v352 = vpack.c.b16 %v334, %v331
      %v353 = vpack.c.b16 %v338, %v335
      %v354 = vpack.c.b16 %v339, %v336
      %v355 = vpack.c.b16 %v340, %v337
      %v356 = vpack.c.b16 %v344, %v341
      %v357 = vpack.c.b16 %v345, %v342
      %v358 = vpack.c.b16 %v346, %v343
      %v403 = vunpack.c.l.b16 %v271
      %v404 = vunpack.c.l.b16 %v272
      %v405 = vunpack.c.l.b16 %v273
      %v406 = vunpack.c.l.b16 %v274
      %v407 = vunpack.c.l.b16 %v275
      %v408 = vunpack.c.l.b16 %v276
      %v409 = vunpack.c.l.b16 %v277
      %v410 = vunpack.c.l.b16 %v278
      %v411 = vunpack.c.l.b16 %v279
      %v412 = vunpack.c.l.b16 %v280
      %v413 = vunpack.c.l.b16 %v281
      %v414 = vunpack.c.l.b16 %v282
      %v415 = vunpack.c.l.b16 %v283
      %v416 = vunpack.c.l.b16 %v284
      %v417 = vunpack.c.l.b16 %v285
      %v418 = vunpack.c.l.b16 %v286
      %v419 = vunpack.c.l.b16 %v287
      %v420 = vunpack.c.l.b16 %v288
      %v421 = vunpack.c.l.b16 %v289
      %v422 = vunpack.c.l.b16 %v290
      %v423 = vunpack.c.l.b16 %v291
      %v424 = vunpack.c.l.b16 %v292
      %v425 = vunpack.c.l.b16 %v293
      %v426 = vunpack.c.l.b16 %v294
      %v427 = vunpack.c.l.b16 %v295
      %v428 = vunpack.c.l.b16 %v296
      %v429 = vunpack.c.l.b16 %v297
      %v430 = vunpack.c.l.b16 %v298
      %v431 = vunpack.c.l.b16 %v299
      %v432 = vunpack.c.l.b16 %v300
      %v433 = vunpack.c.l.b16 %v301
      %v434 = vunpack.c.l.b16 %v302
      %v435 = vunpack.c.l.b16 %v303
      %v436 = vunpack.c.l.b16 %v304
      %v437 = vunpack.c.l.b16 %v305
      %v438 = vunpack.c.l.b16 %v306
      %v439 = vpack.c.b16 %v404, %v403
      %v440 = vpack.c.b16 %v406, %v405
      %v441 = vpack.c.b16 %v408, %v407
      %v442 = vpack.c.b16 %v410, %v409
      %v443 = vpack.c.b16 %v412, %v411
      %v444 = vpack.c.b16 %v414, %v413
      %v445 = vpack.c.b16 %v416, %v415
      %v446 = vpack.c.b16 %v418, %v417
      %v447 = vpack.c.b16 %v420, %v419
      %v448 = vpack.c.b16 %v422, %v421
      %v449 = vpack.c.b16 %v424, %v423
      %v450 = vpack.c.b16 %v426, %v425
      %v451 = vpack.c.b16 %v428, %v427
      %v452 = vpack.c.b16 %v430, %v429
      %v453 = vpack.c.b16 %v432, %v431
      %v454 = vpack.c.b16 %v434, %v433
      %v455 = vpack.c.b16 %v436, %v435
      %v456 = vpack.c.b16 %v438, %v437
      %vm475 = vcmask 261120
      %v477 = vsel %vm475, %v349, 0
      %v480 = vsel %vm475, %v352, 0
      %v483 = vsel %vm475, %v355, 0
      %v486 = vsel %vm475, %v358, 0
      %488 = vmatprep.subr.bf16.mxu0 0
      %489 = vmatpush1.bf16.msra.mxu0 %v439
      %490 = vmatprep.subr.bf16.mxu0 0
      %491 = vmatpush1.bf16.msra.mxu0 %v440
      %492 = vmatprep.subr.bf16.mxu0 0
      %493 = vmatpush1.bf16.msra.mxu0 %v441
      %494 = vmatprep.subr.bf16.mxu0 0
      %495 = vmatpush1.bf16.msra.mxu0 %v442
      %496 = vmatprep.subr.bf16.mxu0 0
      %497 = vmatpush1.bf16.msra.mxu0 %v443
      %498 = vmatprep.subr.bf16.mxu0 0
      %499 = vmatpush1.bf16.msra.mxu0 %v444
      %500 = vmatprep.subr.bf16.mxu0 0
      %501 = vmatpush1.bf16.msra.mxu0 %v445
      %502 = vmatprep.subr.bf16.mxu0 0
      %503 = vmatpush1.bf16.msra.mxu0 %v446
      %504 = vmatprep.subr.bf16.mxu0 0
      %505 = vmatpush1.bf16.msra.mxu0 %v447
      %506 = vmatprep.subr.bf16.mxu0 0
      %507 = vmatpush1.bf16.msra.mxu0 %v448
      %508 = vmatprep.subr.bf16.mxu0 0
      %509 = vmatpush1.bf16.msra.mxu0 %v449
      %510 = vmatprep.subr.bf16.mxu0 0
      %511 = vmatpush1.bf16.msra.mxu0 %v450
      %512 = vmatprep.subr.bf16.mxu0 0
      %513 = vmatpush1.bf16.msra.mxu0 %v451
      %514 = vmatprep.subr.bf16.mxu0 0
      %515 = vmatpush1.bf16.msra.mxu0 %v452
      %516 = vmatprep.subr.bf16.mxu0 0
      %517 = vmatpush1.bf16.msra.mxu0 %v453
      %518 = vmatprep.subr.bf16.mxu0 0
      %519 = vmatpush1.bf16.msra.mxu0 %v454
      %520 = vmatprep.mubr.bf16.mxu0 %v348
      %521 = vmatmul.mubr.bf16.gmra.mrb[0].mxu0 %v347
      %v522 = vpop.f32.mrb[0].mxu0
      %v523 = vadd.f32 0.0, %v522
      %v524 = vpop.f32.mrb[0].mxu0
      %v525 = vpop.f32.mrb[0].mxu0
      %v526 = vadd.f32 0.0, %v525
      %v527 = vpop.f32.mrb[0].mxu0
      %528 = vmatprep.mubr.bf16.mxu0 %v351
      %529 = vmatmul.mubr.bf16.gmra.mrb[0].mxu0 %v350
      %v530 = vpop.f32.mrb[0].mxu0
      %v531 = vadd.f32 0.0, %v530
      %v532 = vpop.f32.mrb[0].mxu0
      %v533 = vpop.f32.mrb[0].mxu0
      %v534 = vadd.f32 0.0, %v533
      %v535 = vpop.f32.mrb[0].mxu0
      %536 = vmatprep.mubr.bf16.mxu0 %v354
      %537 = vmatmul.mubr.bf16.gmra.mrb[0].mxu0 %v353
      %v538 = vpop.f32.mrb[0].mxu0
      %v539 = vadd.f32 0.0, %v538
      %v540 = vpop.f32.mrb[0].mxu0
      %v541 = vpop.f32.mrb[0].mxu0
      %v542 = vadd.f32 0.0, %v541
      %v543 = vpop.f32.mrb[0].mxu0
      %544 = vmatprep.mubr.bf16.mxu0 %v357
      %545 = vmatmul.mubr.bf16.gmra.mrb[0].mxu0 %v356
      %v546 = vpop.f32.mrb[0].mxu0
      %v547 = vadd.f32 0.0, %v546
      %v548 = vpop.f32.mrb[0].mxu0
      %v549 = vpop.f32.mrb[0].mxu0
      %v550 = vadd.f32 0.0, %v549
      %v551 = vpop.f32.mrb[0].mxu0
      %552 = vdwg.mxu0
      %553 = vmatprep.subr.bf16.mxu0 0
      %554 = vmatpush1.bf16.msra.mxu0 %v455
      %555 = vmatprep.subr.bf16.mxu0 0
      %556 = vmatpush1.bf16.msra.mxu0 %v456
      %557 = vmatprep.subr.bf16.mxu0 0
      %558 = vmatpush1.bf16.msra.mxu0 0
      %559 = vmatprep.subr.bf16.mxu0 0
      %560 = vmatpush1.bf16.msra.mxu0 0
      %561 = vmatprep.subr.bf16.mxu0 0
      %562 = vmatpush1.bf16.msra.mxu0 0
      %563 = vmatprep.subr.bf16.mxu0 0
      %564 = vmatpush1.bf16.msra.mxu0 0
      %565 = vmatprep.subr.bf16.mxu0 0
      %566 = vmatpush1.bf16.msra.mxu0 0
      %567 = vmatprep.subr.bf16.mxu0 0
      %568 = vmatpush1.bf16.msra.mxu0 0
      %569 = vmatprep.subr.bf16.mxu0 0
      %570 = vmatpush1.bf16.msra.mxu0 0
      %571 = vmatprep.subr.bf16.mxu0 0
      %572 = vmatpush1.bf16.msra.mxu0 0
      %573 = vmatprep.subr.bf16.mxu0 0
      %574 = vmatpush1.bf16.msra.mxu0 0
      %575 = vmatprep.subr.bf16.mxu0 0
      %576 = vmatpush1.bf16.msra.mxu0 0
      %577 = vmatprep.subr.bf16.mxu0 0
      %578 = vmatpush1.bf16.msra.mxu0 0
      %579 = vmatprep.subr.bf16.mxu0 0
      %580 = vmatpush1.bf16.msra.mxu0 0
      %581 = vmatprep.subr.bf16.mxu0 0
      %582 = vmatpush1.bf16.msra.mxu0 0
      %583 = vmatprep.subr.bf16.mxu0 0
      %584 = vmatpush1.bf16.msra.mxu0 0
      %585 = vmatprep.mubr.bf16.mxu0 0
      %586 = vmatmul.mubr.bf16.gmra.mrb[0].mxu0 %v477
      %v587 = vpop.f32.mrb[0].mxu0
      %v588 = vadd.f32 %v523, %v587
      %v589 = vpop.f32.mrb[0].mxu0
      %v590 = vpop.f32.mrb[0].mxu0
      %v591 = vadd.f32 %v526, %v590
      %v592 = vpop.f32.mrb[0].mxu0
      %593 = vmatprep.mubr.bf16.mxu0 0
      %594 = vmatmul.mubr.bf16.gmra.mrb[0].mxu0 %v480
      %v595 = vpop.f32.mrb[0].mxu0
      %v596 = vadd.f32 %v531, %v595
      %v597 = vpop.f32.mrb[0].mxu0
      %v598 = vpop.f32.mrb[0].mxu0
      %v599 = vadd.f32 %v534, %v598
      %v600 = vpop.f32.mrb[0].mxu0
      %601 = vmatprep.mubr.bf16.mxu0 0
      %602 = vmatmul.mubr.bf16.gmra.mrb[0].mxu0 %v483
      %v603 = vpop.f32.mrb[0].mxu0
      %v604 = vadd.f32 %v539, %v603
      %v605 = vpop.f32.mrb[0].mxu0
      %v606 = vpop.f32.mrb[0].mxu0
      %v607 = vadd.f32 %v542, %v606
      %v608 = vpop.f32.mrb[0].mxu0
      %609 = vmatprep.mubr.bf16.mxu0 0
      %610 = vmatmul.mubr.bf16.gmra.mrb[0].mxu0 %v486
      %v611 = vpop.f32.mrb[0].mxu0
      %v612 = vadd.f32 %v547, %v611
      %v613 = vpop.f32.mrb[0].mxu0
      %v614 = vpop.f32.mrb[0].mxu0
      %v615 = vadd.f32 %v550, %v614
      %v616 = vpop.f32.mrb[0].mxu0
      %617 = vdwg.mxu0
      %s618 = smul.u32 %s21, 64
      %s619 = smul.u32 %s20, 64
      %s620 = sadd.s32 %s618, %s619
      %s621 = scalar_lea.vmem %s5, %s620
      %vm622 = vcmask 400384
      %623 = vst.msk [vmem:[%s621] sm:$0xff] %vm622, %v588
      %624 = vst.msk [vmem:[%s621 + $0x8] sm:$0xff] %vm622, %v591
      %625 = vst.msk [vmem:[%s621 + $0x10] sm:$0xff] %vm622, %v596
      %626 = vst.msk [vmem:[%s621 + $0x18] sm:$0xff] %vm622, %v599
      %627 = vst.msk [vmem:[%s621 + $0x20] sm:$0xff] %vm622, %v604
      %628 = vst.msk [vmem:[%s621 + $0x28] sm:$0xff] %vm622, %v607
      %629 = vst.msk [vmem:[%s621 + $0x30] sm:$0xff] %vm622, %v612
      %630 = vst.msk [vmem:[%s621 + $0x38] sm:$0xff] %vm622, %v615
      %v631 = vld [vmem:[#allocation2] sm:$0xff]
      %v632 = vld [vmem:[#allocation2 + $0x8] sm:$0xff]
      %v633 = vld [vmem:[#allocation2 + $0x10] sm:$0xff]
      %v634 = vld [vmem:[#allocation2 + $0x18] sm:$0xff]
      %v635 = vld [vmem:[#allocation2 + $0x20] sm:$0xff]
      %v636 = vld [vmem:[#allocation2 + $0x28] sm:$0xff]
      %v637 = vld [vmem:[#allocation2 + $0x30] sm:$0xff]
      %v638 = vld [vmem:[#allocation2 + $0x38] sm:$0xff]
      %v639 = vsel %vm622, %v588, 0.0
      %640 = vadd.xlane.f32.xlu0 %v639
      %v641 = vpop.xlane.xlu0 %640
      %v642 = vsel %vm622, %v591, 0.0
      %643 = vadd.xlane.f32.xlu0 %v642
      %v644 = vpop.xlane.xlu0 %643
      %v645 = vsel %vm622, %v596, 0.0
      %646 = vadd.xlane.f32.xlu0 %v645
      %v647 = vpop.xlane.xlu0 %646
      %v648 = vsel %vm622, %v599, 0.0
      %649 = vadd.xlane.f32.xlu0 %v648
      %v650 = vpop.xlane.xlu0 %649
      %v651 = vsel %vm622, %v604, 0.0
      %652 = vadd.xlane.f32.xlu0 %v651
      %v653 = vpop.xlane.xlu0 %652
      %v654 = vsel %vm622, %v607, 0.0
      %655 = vadd.xlane.f32.xlu0 %v654
      %v656 = vpop.xlane.xlu0 %655
      %v657 = vsel %vm622, %v612, 0.0
      %658 = vadd.xlane.f32.xlu0 %v657
      %v659 = vpop.xlane.xlu0 %658
      %v660 = vsel %vm622, %v615, 0.0
      %661 = vadd.xlane.f32.xlu0 %v660
      %v662 = vpop.xlane.xlu0 %661
      %v663 = vadd.f32 %v631, %v641
      %v664 = vadd.f32 %v632, %v644
      %v665 = vadd.f32 %v633, %v647
      %v666 = vadd.f32 %v634, %v650
      %v667 = vadd.f32 %v635, %v653
      %v668 = vadd.f32 %v636, %v656
      %v669 = vadd.f32 %v637, %v659
      %v670 = vadd.f32 %v638, %v662
      %vm671 = vcmask 7168
      %672 = vst.msk [vmem:[#allocation2] sm:$0xff] %vm671, %v663
      %673 = vst.msk [vmem:[#allocation2 + $0x8] sm:$0xff] %vm671, %v664
      %674 = vst.msk [vmem:[#allocation2 + $0x10] sm:$0xff] %vm671, %v665
      %675 = vst.msk [vmem:[#allocation2 + $0x18] sm:$0xff] %vm671, %v666
      %676 = vst.msk [vmem:[#allocation2 + $0x20] sm:$0xff] %vm671, %v667
      %677 = vst.msk [vmem:[#allocation2 + $0x28] sm:$0xff] %vm671, %v668
      %678 = vst.msk [vmem:[#allocation2 + $0x30] sm:$0xff] %vm671, %v669
      %679 = vst.msk [vmem:[#allocation2 + $0x38] sm:$0xff] %vm671, %v670
      // Predicated region
      $region45: #{decoder_forward.9} parent=39 // pred_check
        _
      $region46: #{decoder_forward.9} parent=39 // pred_check_branch
        %681 = sbr.rel (%p242) target = $region48
      $region47: #{decoder_forward.9} parent=39 // pred_region
        %v682 = vld [vmem:[%s4] sm:$0xff]
        %v683 = vld [vmem:[%s4 + $0x8] sm:$0xff]
        %v684 = vld [vmem:[%s4 + $0x10] sm:$0xff]
        %v685 = vld [vmem:[%s4 + $0x18] sm:$0xff]
        %v686 = vld [vmem:[%s4 + $0x20] sm:$0xff]
        %v687 = vld [vmem:[%s4 + $0x28] sm:$0xff]
        %v688 = vld [vmem:[%s4 + $0x30] sm:$0xff]
        %v689 = vld [vmem:[%s4 + $0x38] sm:$0xff]
        %v690 = vld [vmem:[#allocation2] sm:$0xff]
        %v691 = vld [vmem:[#allocation2 + $0x8] sm:$0xff]
        %v692 = vld [vmem:[#allocation2 + $0x10] sm:$0xff]
        %v693 = vld [vmem:[#allocation2 + $0x18] sm:$0xff]
        %v694 = vld [vmem:[#allocation2 + $0x20] sm:$0xff]
        %v695 = vld [vmem:[#allocation2 + $0x28] sm:$0xff]
        %v696 = vld [vmem:[#allocation2 + $0x30] sm:$0xff]
        %v697 = vld [vmem:[#allocation2 + $0x38] sm:$0xff]
        %vm698 = vcmask 523264
        %v700 = vsel %vm698, %v682, 0
        %v703 = vsel %vm698, %v683, 0
        %v706 = vsel %vm698, %v684, 0
        %v709 = vsel %vm698, %v685, 0
        %v712 = vsel %vm698, %v686, 0
        %v715 = vsel %vm698, %v687, 0
        %v718 = vsel %vm698, %v688, 0
        %v721 = vsel %vm698, %v689, 0
        %723 = vmatprep.subr.mxu0 0.0
        %724 = vmatpush1.msra.mxu0 %v690
        %725 = vmatprep.subr.mxu0 0.0
        %726 = vmatpush1.msra.mxu0 %v691
        %727 = vmatprep.subr.mxu0 0.0
        %728 = vmatpush1.msra.mxu0 %v692
        %729 = vmatprep.subr.mxu0 0.0
        %730 = vmatpush1.msra.mxu0 %v693
        %731 = vmatprep.subr.mxu0 0.0
        %732 = vmatpush1.msra.mxu0 %v694
        %733 = vmatprep.subr.mxu0 0.0
        %734 = vmatpush1.msra.mxu0 %v695
        %735 = vmatprep.subr.mxu0 0.0
        %736 = vmatpush1.msra.mxu0 %v696
        %737 = vmatprep.subr.mxu0 0.0
        %738 = vmatpush1.msra.mxu0 %v697
        %739 = vmatprep.subr.mxu0 0.0
        %740 = vmatpush1.msra.mxu0 0.0
        %741 = vmatprep.subr.mxu0 0.0
        %742 = vmatpush1.msra.mxu0 0.0
        %743 = vmatprep.subr.mxu0 0.0
        %744 = vmatpush1.msra.mxu0 0.0
        %745 = vmatprep.subr.mxu0 0.0
        %746 = vmatpush1.msra.mxu0 0.0
        %747 = vmatprep.subr.mxu0 0.0
        %748 = vmatpush1.msra.mxu0 0.0
        %749 = vmatprep.subr.mxu0 0.0
        %750 = vmatpush1.msra.mxu0 0.0
        %751 = vmatprep.subr.mxu0 0.0
        %752 = vmatpush1.msra.mxu0 0.0
        %753 = vmatprep.subr.mxu0 0.0
        %754 = vmatpush1.msra.mxu0 0.0
        %755 = vmatprep.subr.mxu0 0.0
        %756 = vmatpush1.msra.mxu0 0.0
        %757 = vmatprep.subr.mxu0 0.0
        %758 = vmatpush1.msra.mxu0 0.0
        %759 = vmatprep.subr.mxu0 0.0
        %760 = vmatpush1.msra.mxu0 0.0
        %761 = vmatprep.subr.mxu0 0.0
        %762 = vmatpush1.msra.mxu0 0.0
        %763 = vmatprep.subr.mxu0 0.0
        %764 = vmatpush1.msra.mxu0 0.0
        %765 = vmatprep.subr.mxu0 0.0
        %766 = vmatpush1.msra.mxu0 0.0
        %767 = vmatprep.subr.mxu0 0.0
        %768 = vmatpush1.msra.mxu0 0.0
        %769 = vmatprep.subr.mxu0 0.0
        %770 = vmatpush1.msra.mxu0 0.0
        %771 = vmatprep.subr.mxu0 0.0
        %772 = vmatpush1.msra.mxu0 0.0
        %773 = vmatprep.subr.mxu0 0.0
        %774 = vmatpush1.msra.mxu0 0.0
        %775 = vmatprep.subr.mxu0 0.0
        %776 = vmatpush1.msra.mxu0 0.0
        %777 = vmatprep.subr.mxu0 0.0
        %778 = vmatpush1.msra.mxu0 0.0
        %779 = vmatprep.subr.mxu0 0.0
        %780 = vmatpush1.msra.mxu0 0.0
        %781 = vmatprep.subr.mxu0 0.0
        %782 = vmatpush1.msra.mxu0 0.0
        %783 = vmatprep.subr.mxu0 0.0
        %784 = vmatpush1.msra.mxu0 0.0
        %785 = vmatprep.subr.mxu0 0.0
        %786 = vmatpush1.msra.mxu0 0.0
        %787 = vmatprep.mubr.f32.mxu0 0.0
        %788 = vmatmul.mubr.f32.gmra.mrb[0].mxu0 %v700
        %v789 = vpop.f32.mrb[0].mxu0
        %v790 = vadd.f32 0.0, %v789
        %v791 = vpop.f32.mrb[0].mxu0
        %792 = vmatprep.mubr.f32.mxu0 0.0
        %793 = vmatmul.mubr.f32.gmra.mrb[0].mxu0 %v703
        %v794 = vpop.f32.mrb[0].mxu0
        %v795 = vadd.f32 0.0, %v794
        %v796 = vpop.f32.mrb[0].mxu0
        %797 = vmatprep.mubr.f32.mxu0 0.0
        %798 = vmatmul.mubr.f32.gmra.mrb[0].mxu0 %v706
        %v799 = vpop.f32.mrb[0].mxu0
        %v800 = vadd.f32 0.0, %v799
        %v801 = vpop.f32.mrb[0].mxu0
        %802 = vmatprep.mubr.f32.mxu0 0.0
        %803 = vmatmul.mubr.f32.gmra.mrb[0].mxu0 %v709
        %v804 = vpop.f32.mrb[0].mxu0
        %v805 = vadd.f32 0.0, %v804
        %v806 = vpop.f32.mrb[0].mxu0
        %807 = vmatprep.mubr.f32.mxu0 0.0
        %808 = vmatmul.mubr.f32.gmra.mrb[0].mxu0 %v712
        %v809 = vpop.f32.mrb[0].mxu0
        %v810 = vadd.f32 0.0, %v809
        %v811 = vpop.f32.mrb[0].mxu0
        %812 = vmatprep.mubr.f32.mxu0 0.0
        %813 = vmatmul.mubr.f32.gmra.mrb[0].mxu0 %v715
        %v814 = vpop.f32.mrb[0].mxu0
        %v815 = vadd.f32 0.0, %v814
        %v816 = vpop.f32.mrb[0].mxu0
        %817 = vmatprep.mubr.f32.mxu0 0.0
        %818 = vmatmul.mubr.f32.gmra.mrb[0].mxu0 %v718
        %v819 = vpop.f32.mrb[0].mxu0
        %v820 = vadd.f32 0.0, %v819
        %v821 = vpop.f32.mrb[0].mxu0
        %822 = vmatprep.mubr.f32.mxu0 0.0
        %823 = vmatmul.mubr.f32.gmra.mrb[0].mxu0 %v721
        %v824 = vpop.f32.mrb[0].mxu0
        %v825 = vadd.f32 0.0, %v824
        %v826 = vpop.f32.mrb[0].mxu0
        %827 = vdwg.mxu0
        %v828 = vmul.f32 %v790, 0.0025510204
        %v829 = vmul.f32 %v795, 0.0025510204
        %v830 = vmul.f32 %v800, 0.0025510204
        %v831 = vmul.f32 %v805, 0.0025510204
        %v832 = vmul.f32 %v810, 0.0025510204
        %v833 = vmul.f32 %v815, 0.0025510204
        %v834 = vmul.f32 %v820, 0.0025510204
        %v835 = vmul.f32 %v825, 0.0025510204
        %v836 = vld [vmem:[%s5] sm:$0xff]
        %v837 = vld [vmem:[%s5 + $0x8] sm:$0xff]
        %v838 = vld [vmem:[%s5 + $0x10] sm:$0xff]
        %v839 = vld [vmem:[%s5 + $0x18] sm:$0xff]
        %v840 = vld [vmem:[%s5 + $0x20] sm:$0xff]
        %v841 = vld [vmem:[%s5 + $0x28] sm:$0xff]
        %v842 = vld [vmem:[%s5 + $0x30] sm:$0xff]
        %v843 = vld [vmem:[%s5 + $0x38] sm:$0xff]
        %845 = vset.pattern.permute.xlu0 0
        %846 = vperm.xlu0 %845, %v828
        %v847 = vpop.permute.xlu0 %846
        %850 = vset.pattern.permute.xlu0 0
        %851 = vperm.xlu0 %850, %v829
        %v852 = vpop.permute.xlu0 %851
        %855 = vset.pattern.permute.xlu0 0
        %856 = vperm.xlu0 %855, %v830
        %v857 = vpop.permute.xlu0 %856
        %860 = vset.pattern.permute.xlu0 0
        %861 = vperm.xlu0 %860, %v831
        %v862 = vpop.permute.xlu0 %861
        %865 = vset.pattern.permute.xlu0 0
        %866 = vperm.xlu0 %865, %v832
        %v867 = vpop.permute.xlu0 %866
        %870 = vset.pattern.permute.xlu0 0
        %871 = vperm.xlu0 %870, %v833
        %v872 = vpop.permute.xlu0 %871
        %875 = vset.pattern.permute.xlu0 0
        %876 = vperm.xlu0 %875, %v834
        %v877 = vpop.permute.xlu0 %876
        %880 = vset.pattern.permute.xlu0 0
        %881 = vperm.xlu0 %880, %v835
        %v882 = vpop.permute.xlu0 %881
        %v884 = vsub.f32 %v836, %v847
        %v885 = vsub.f32 %v837, %v852
        %v886 = vsub.f32 %v838, %v857
        %v887 = vsub.f32 %v839, %v862
        %v888 = vsub.f32 %v840, %v867
        %v889 = vsub.f32 %v841, %v872
        %v890 = vsub.f32 %v842, %v877
        %v891 = vsub.f32 %v843, %v882
        %v892 = vmul.f32 %v884, %v884
        %v893 = vmul.f32 %v885, %v885
        %v894 = vmul.f32 %v886, %v886
        %v895 = vmul.f32 %v887, %v887
        %v896 = vmul.f32 %v888, %v888
        %v897 = vmul.f32 %v889, %v889
        %v898 = vmul.f32 %v890, %v890
        %v899 = vmul.f32 %v891, %v891
        %v900 = vsel %vm622, %v892, 0.0
        %901 = vadd.xlane.f32.xlu0 %v900
        %v902 = vpop.xlane.xlu0 %901
        %v903 = vsel %vm622, %v893, 0.0
        %904 = vadd.xlane.f32.xlu0 %v903
        %v905 = vpop.xlane.xlu0 %904
        %v906 = vsel %vm622, %v894, 0.0
        %907 = vadd.xlane.f32.xlu0 %v906
        %v908 = vpop.xlane.xlu0 %907
        %v909 = vsel %vm622, %v895, 0.0
        %910 = vadd.xlane.f32.xlu0 %v909
        %v911 = vpop.xlane.xlu0 %910
        %v912 = vsel %vm622, %v896, 0.0
        %913 = vadd.xlane.f32.xlu0 %v912
        %v914 = vpop.xlane.xlu0 %913
        %v915 = vsel %vm622, %v897, 0.0
        %916 = vadd.xlane.f32.xlu0 %v915
        %v917 = vpop.xlane.xlu0 %916
        %v918 = vsel %vm622, %v898, 0.0
        %919 = vadd.xlane.f32.xlu0 %v918
        %v920 = vpop.xlane.xlu0 %919
        %v921 = vsel %vm622, %v899, 0.0
        %922 = vadd.xlane.f32.xlu0 %v921
        %v923 = vpop.xlane.xlu0 %922
        %v924 = vadd.f32 %v902, 0.0
        %v925 = vadd.f32 %v905, 0.0
        %v926 = vadd.f32 %v908, 0.0
        %v927 = vadd.f32 %v911, 0.0
        %v928 = vadd.f32 %v914, 0.0
        %v929 = vadd.f32 %v917, 0.0
        %v930 = vadd.f32 %v920, 0.0
        %v931 = vadd.f32 %v923, 0.0
        %s932 = scalar_lea.vmem %s5, 64
        %v933 = vld [vmem:[%s932] sm:$0xff]
        %v934 = vld [vmem:[%s932 + $0x8] sm:$0xff]
        %v935 = vld [vmem:[%s932 + $0x10] sm:$0xff]
        %v936 = vld [vmem:[%s932 + $0x18] sm:$0xff]
        %v937 = vld [vmem:[%s932 + $0x20] sm:$0xff]
        %v938 = vld [vmem:[%s932 + $0x28] sm:$0xff]
        %v939 = vld [vmem:[%s932 + $0x30] sm:$0xff]
        %v940 = vld [vmem:[%s932 + $0x38] sm:$0xff]
        %v941 = vsub.f32 %v933, %v847
        %v942 = vsub.f32 %v934, %v852
        %v943 = vsub.f32 %v935, %v857
        %v944 = vsub.f32 %v936, %v862
        %v945 = vsub.f32 %v937, %v867
        %v946 = vsub.f32 %v938, %v872
        %v947 = vsub.f32 %v939, %v877
        %v948 = vsub.f32 %v940, %v882
        %v949 = vmul.f32 %v941, %v941
        %v950 = vmul.f32 %v942, %v942
        %v951 = vmul.f32 %v943, %v943
        %v952 = vmul.f32 %v944, %v944
        %v953 = vmul.f32 %v945, %v945
        %v954 = vmul.f32 %v946, %v946
        %v955 = vmul.f32 %v947, %v947
        %v956 = vmul.f32 %v948, %v948
        %v957 = vsel %vm622, %v949, 0.0
        %958 = vadd.xlane.f32.xlu0 %v957
        %v959 = vpop.xlane.xlu0 %958
        %v960 = vsel %vm622, %v950, 0.0
        %961 = vadd.xlane.f32.xlu0 %v960
        %v962 = vpop.xlane.xlu0 %961
        %v963 = vsel %vm622, %v951, 0.0
        %964 = vadd.xlane.f32.xlu0 %v963
        %v965 = vpop.xlane.xlu0 %964
        %v966 = vsel %vm622, %v952, 0.0
        %967 = vadd.xlane.f32.xlu0 %v966
        %v968 = vpop.xlane.xlu0 %967
        %v969 = vsel %vm622, %v953, 0.0
        %970 = vadd.xlane.f32.xlu0 %v969
        %v971 = vpop.xlane.xlu0 %970
        %v972 = vsel %vm622, %v954, 0.0
        %973 = vadd.xlane.f32.xlu0 %v972
        %v974 = vpop.xlane.xlu0 %973
        %v975 = vsel %vm622, %v955, 0.0
        %976 = vadd.xlane.f32.xlu0 %v975
        %v977 = vpop.xlane.xlu0 %976
        %v978 = vsel %vm622, %v956, 0.0
        %979 = vadd.xlane.f32.xlu0 %v978
        %v980 = vpop.xlane.xlu0 %979
        %v981 = vadd.f32 %v924, %v959
        %v982 = vadd.f32 %v925, %v962
        %v983 = vadd.f32 %v926, %v965
        %v984 = vadd.f32 %v927, %v968
        %v985 = vadd.f32 %v928, %v971
        %v986 = vadd.f32 %v929, %v974
        %v987 = vadd.f32 %v930, %v977
        %v988 = vadd.f32 %v931, %v980
        %989 = vmatprep.subr.mxu0 0.0
        %990 = vmatpush1.msra.mxu0 %v981
        %991 = vmatprep.subr.mxu0 0.0
        %992 = vmatpush1.msra.mxu0 %v982
        %993 = vmatprep.subr.mxu0 0.0
        %994 = vmatpush1.msra.mxu0 %v983
        %995 = vmatprep.subr.mxu0 0.0
        %996 = vmatpush1.msra.mxu0 %v984
        %997 = vmatprep.subr.mxu0 0.0
        %998 = vmatpush1.msra.mxu0 %v985
        %999 = vmatprep.subr.mxu0 0.0
        %1000 = vmatpush1.msra.mxu0 %v986
        %1001 = vmatprep.subr.mxu0 0.0
        %1002 = vmatpush1.msra.mxu0 %v987
        %1003 = vmatprep.subr.mxu0 0.0
        %1004 = vmatpush1.msra.mxu0 %v988
        %1005 = vmatprep.subr.mxu0 0.0
        %1006 = vmatpush1.msra.mxu0 0.0
        %1007 = vmatprep.subr.mxu0 0.0
        %1008 = vmatpush1.msra.mxu0 0.0
        %1009 = vmatprep.subr.mxu0 0.0
        %1010 = vmatpush1.msra.mxu0 0.0
        %1011 = vmatprep.subr.mxu0 0.0
        %1012 = vmatpush1.msra.mxu0 0.0
        %1013 = vmatprep.subr.mxu0 0.0
        %1014 = vmatpush1.msra.mxu0 0.0
        %1015 = vmatprep.subr.mxu0 0.0
        %1016 = vmatpush1.msra.mxu0 0.0
        %1017 = vmatprep.subr.mxu0 0.0
        %1018 = vmatpush1.msra.mxu0 0.0
        %1019 = vmatprep.subr.mxu0 0.0
        %1020 = vmatpush1.msra.mxu0 0.0
        %1021 = vmatprep.subr.mxu0 0.0
        %1022 = vmatpush1.msra.mxu0 0.0
        %1023 = vmatprep.subr.mxu0 0.0
        %1024 = vmatpush1.msra.mxu0 0.0
        %1025 = vmatprep.subr.mxu0 0.0
        %1026 = vmatpush1.msra.mxu0 0.0
        %1027 = vmatprep.subr.mxu0 0.0
        %1028 = vmatpush1.msra.mxu0 0.0
        %1029 = vmatprep.subr.mxu0 0.0
        %1030 = vmatpush1.msra.mxu0 0.0
        %1031 = vmatprep.subr.mxu0 0.0
        %1032 = vmatpush1.msra.mxu0 0.0
        %1033 = vmatprep.subr.mxu0 0.0
        %1034 = vmatpush1.msra.mxu0 0.0
        %1035 = vmatprep.subr.mxu0 0.0
        %1036 = vmatpush1.msra.mxu0 0.0
        %1037 = vmatprep.subr.mxu0 0.0
        %1038 = vmatpush1.msra.mxu0 0.0
        %1039 = vmatprep.subr.mxu0 0.0
        %1040 = vmatpush1.msra.mxu0 0.0
        %1041 = vmatprep.subr.mxu0 0.0
        %1042 = vmatpush1.msra.mxu0 0.0
        %1043 = vmatprep.subr.mxu0 0.0
        %1044 = vmatpush1.msra.mxu0 0.0
        %1045 = vmatprep.subr.mxu0 0.0
        %1046 = vmatpush1.msra.mxu0 0.0
        %1047 = vmatprep.subr.mxu0 0.0
        %1048 = vmatpush1.msra.mxu0 0.0
        %1049 = vmatprep.subr.mxu0 0.0
        %1050 = vmatpush1.msra.mxu0 0.0
        %1051 = vmatprep.subr.mxu0 0.0
        %1052 = vmatpush1.msra.mxu0 0.0
        %1053 = vmatprep.mubr.f32.mxu0 0.0
        %1054 = vmatmul.mubr.f32.gmra.mrb[0].mxu0 %v700
        %v1055 = vpop.f32.mrb[0].mxu0
        %v1056 = vadd.f32 0.0, %v1055
        %v1057 = vpop.f32.mrb[0].mxu0
        %1058 = vmatprep.mubr.f32.mxu0 0.0
        %1059 = vmatmul.mubr.f32.gmra.mrb[0].mxu0 %v703
        %v1060 = vpop.f32.mrb[0].mxu0
        %v1061 = vadd.f32 0.0, %v1060
        %v1062 = vpop.f32.mrb[0].mxu0
        %1063 = vmatprep.mubr.f32.mxu0 0.0
        %1064 = vmatmul.mubr.f32.gmra.mrb[0].mxu0 %v706
        %v1065 = vpop.f32.mrb[0].mxu0
        %v1066 = vadd.f32 0.0, %v1065
        %v1067 = vpop.f32.mrb[0].mxu0
        %1068 = vmatprep.mubr.f32.mxu0 0.0
        %1069 = vmatmul.mubr.f32.gmra.mrb[0].mxu0 %v709
        %v1070 = vpop.f32.mrb[0].mxu0
        %v1071 = vadd.f32 0.0, %v1070
        %v1072 = vpop.f32.mrb[0].mxu0
        %1073 = vmatprep.mubr.f32.mxu0 0.0
        %1074 = vmatmul.mubr.f32.gmra.mrb[0].mxu0 %v712
        %v1075 = vpop.f32.mrb[0].mxu0
        %v1076 = vadd.f32 0.0, %v1075
        %v1077 = vpop.f32.mrb[0].mxu0
        %1078 = vmatprep.mubr.f32.mxu0 0.0
        %1079 = vmatmul.mubr.f32.gmra.mrb[0].mxu0 %v715
        %v1080 = vpop.f32.mrb[0].mxu0
        %v1081 = vadd.f32 0.0, %v1080
        %v1082 = vpop.f32.mrb[0].mxu0
        %1083 = vmatprep.mubr.f32.mxu0 0.0
        %1084 = vmatmul.mubr.f32.gmra.mrb[0].mxu0 %v718
        %v1085 = vpop.f32.mrb[0].mxu0
        %v1086 = vadd.f32 0.0, %v1085
        %v1087 = vpop.f32.mrb[0].mxu0
        %1088 = vmatprep.mubr.f32.mxu0 0.0
        %1089 = vmatmul.mubr.f32.gmra.mrb[0].mxu0 %v721
        %v1090 = vpop.f32.mrb[0].mxu0
        %v1091 = vadd.f32 0.0, %v1090
        %v1092 = vpop.f32.mrb[0].mxu0
        %1093 = vdwg.mxu0
        %v1094 = vmul.f32 %v1056, 0.0025510204
        %v1095 = vmul.f32 %v1061, 0.0025510204
        %v1096 = vmul.f32 %v1066, 0.0025510204
        %v1097 = vmul.f32 %v1071, 0.0025510204
        %v1098 = vmul.f32 %v1076, 0.0025510204
        %v1099 = vmul.f32 %v1081, 0.0025510204
        %v1100 = vmul.f32 %v1086, 0.0025510204
        %v1101 = vmul.f32 %v1091, 0.0025510204
        %v1102 = vld [vmem:[%s2] sm:$0xff]
        %v1103 = vld [vmem:[%s2 + $0x8] sm:$0xff]
        %v1104 = vld [vmem:[%s2 + $0x10] sm:$0xff]
        %v1105 = vld [vmem:[%s2 + $0x18] sm:$0xff]
        %v1106 = vld [vmem:[%s2 + $0x20] sm:$0xff]
        %v1107 = vld [vmem:[%s2 + $0x28] sm:$0xff]
        %v1108 = vld [vmem:[%s2 + $0x30] sm:$0xff]
        %v1109 = vld [vmem:[%s2 + $0x38] sm:$0xff]
        %v1110 = vadd.f32 %v1094, 1e-05
        %v1111 = vadd.f32 %v1095, 1e-05
        %v1112 = vadd.f32 %v1096, 1e-05
        %v1113 = vadd.f32 %v1097, 1e-05
        %v1114 = vadd.f32 %v1098, 1e-05
        %v1115 = vadd.f32 %v1099, 1e-05
        %v1116 = vadd.f32 %v1100, 1e-05
        %v1117 = vadd.f32 %v1101, 1e-05
        %v1118 = vrsqrt.pop %v1110
        %v1119 = vrsqrt.pop %v1111
        %v1120 = vrsqrt.pop %v1112
        %v1121 = vrsqrt.pop %v1113
        %v1122 = vrsqrt.pop %v1114
        %v1123 = vrsqrt.pop %v1115
        %v1124 = vrsqrt.pop %v1116
        %v1125 = vrsqrt.pop %v1117
        %v1126 = vmul.f32 %v1102, %v1118
        %v1127 = vmul.f32 %v1103, %v1119
        %v1128 = vmul.f32 %v1104, %v1120
        %v1129 = vmul.f32 %v1105, %v1121
        %v1130 = vmul.f32 %v1106, %v1122
        %v1131 = vmul.f32 %v1107, %v1123
        %v1132 = vmul.f32 %v1108, %v1124
        %v1133 = vmul.f32 %v1109, %v1125
        %v1134 = vld [vmem:[%s3] sm:$0xff]
        %v1135 = vld [vmem:[%s3 + $0x8] sm:$0xff]
        %v1136 = vld [vmem:[%s3 + $0x10] sm:$0xff]
        %v1137 = vld [vmem:[%s3 + $0x18] sm:$0xff]
        %v1138 = vld [vmem:[%s3 + $0x20] sm:$0xff]
        %v1139 = vld [vmem:[%s3 + $0x28] sm:$0xff]
        %v1140 = vld [vmem:[%s3 + $0x30] sm:$0xff]
        %v1141 = vld [vmem:[%s3 + $0x38] sm:$0xff]
        %v1142 = vmul.f32 %v828, %v1126
        %v1143 = vmul.f32 %v829, %v1127
        %v1144 = vmul.f32 %v830, %v1128
        %v1145 = vmul.f32 %v831, %v1129
        %v1146 = vmul.f32 %v832, %v1130
        %v1147 = vmul.f32 %v833, %v1131
        %v1148 = vmul.f32 %v834, %v1132
        %v1149 = vmul.f32 %v835, %v1133
        %v1150 = vsub.f32 %v1134, %v1142
        %v1151 = vsub.f32 %v1135, %v1143
        %v1152 = vsub.f32 %v1136, %v1144
        %v1153 = vsub.f32 %v1137, %v1145
        %v1154 = vsub.f32 %v1138, %v1146
        %v1155 = vsub.f32 %v1139, %v1147
        %v1156 = vsub.f32 %v1140, %v1148
        %v1157 = vsub.f32 %v1141, %v1149
        %1159 = vset.pattern.permute.xlu0 0
        %1160 = vperm.xlu0 %1159, %v1126
        %v1161 = vpop.permute.xlu0 %1160
        %1164 = vset.pattern.permute.xlu0 0
        %1165 = vperm.xlu0 %1164, %v1127
        %v1166 = vpop.permute.xlu0 %1165
        %1169 = vset.pattern.permute.xlu0 0
        %1170 = vperm.xlu0 %1169, %v1128
        %v1171 = vpop.permute.xlu0 %1170
        %1174 = vset.pattern.permute.xlu0 0
        %1175 = vperm.xlu0 %1174, %v1129
        %v1176 = vpop.permute.xlu0 %1175
        %1179 = vset.pattern.permute.xlu0 0
        %1180 = vperm.xlu0 %1179, %v1130
        %v1181 = vpop.permute.xlu0 %1180
        %1184 = vset.pattern.permute.xlu0 0
        %1185 = vperm.xlu0 %1184, %v1131
        %v1186 = vpop.permute.xlu0 %1185
        %1189 = vset.pattern.permute.xlu0 0
        %1190 = vperm.xlu0 %1189, %v1132
        %v1191 = vpop.permute.xlu0 %1190
        %1194 = vset.pattern.permute.xlu0 0
        %1195 = vperm.xlu0 %1194, %v1133
        %v1196 = vpop.permute.xlu0 %1195
        %v1198 = vmul.f32 %v836, %v1161
        %v1199 = vmul.f32 %v837, %v1166
        %v1200 = vmul.f32 %v838, %v1171
        %v1201 = vmul.f32 %v839, %v1176
        %v1202 = vmul.f32 %v840, %v1181
        %v1203 = vmul.f32 %v841, %v1186
        %v1204 = vmul.f32 %v842, %v1191
        %v1205 = vmul.f32 %v843, %v1196
        %1207 = vset.pattern.permute.xlu0 0
        %1208 = vperm.xlu0 %1207, %v1150
        %v1209 = vpop.permute.xlu0 %1208
        %1212 = vset.pattern.permute.xlu0 0
        %1213 = vperm.xlu0 %1212, %v1151
        %v1214 = vpop.permute.xlu0 %1213
        %1217 = vset.pattern.permute.xlu0 0
        %1218 = vperm.xlu0 %1217, %v1152
        %v1219 = vpop.permute.xlu0 %1218
        %1222 = vset.pattern.permute.xlu0 0
        %1223 = vperm.xlu0 %1222, %v1153
        %v1224 = vpop.permute.xlu0 %1223
        %1227 = vset.pattern.permute.xlu0 0
        %1228 = vperm.xlu0 %1227, %v1154
        %v1229 = vpop.permute.xlu0 %1228
        %1232 = vset.pattern.permute.xlu0 0
        %1233 = vperm.xlu0 %1232, %v1155
        %v1234 = vpop.permute.xlu0 %1233
        %1237 = vset.pattern.permute.xlu0 0
        %1238 = vperm.xlu0 %1237, %v1156
        %v1239 = vpop.permute.xlu0 %1238
        %1242 = vset.pattern.permute.xlu0 0
        %1243 = vperm.xlu0 %1242, %v1157
        %v1244 = vpop.permute.xlu0 %1243
        %v1246 = vadd.f32 %v1198, %v1209
        %v1247 = vadd.f32 %v1199, %v1214
        %v1248 = vadd.f32 %v1200, %v1219
        %v1249 = vadd.f32 %v1201, %v1224
        %v1250 = vadd.f32 %v1202, %v1229
        %v1251 = vadd.f32 %v1203, %v1234
        %v1252 = vadd.f32 %v1204, %v1239
        %v1253 = vadd.f32 %v1205, %v1244
        %v1254 = vmax.f32 %v1246, 0.0
        %v1255 = vmax.f32 %v1247, 0.0
        %v1256 = vmax.f32 %v1248, 0.0
        %v1257 = vmax.f32 %v1249, 0.0
        %v1258 = vmax.f32 %v1250, 0.0
        %v1259 = vmax.f32 %v1251, 0.0
        %v1260 = vmax.f32 %v1252, 0.0
        %v1261 = vmax.f32 %v1253, 0.0
        %1262 = vst.msk [vmem:[%s5] sm:$0xff] %vm622, %v1254
        %1263 = vst.msk [vmem:[%s5 + $0x8] sm:$0xff] %vm622, %v1255
        %1264 = vst.msk [vmem:[%s5 + $0x10] sm:$0xff] %vm622, %v1256
        %1265 = vst.msk [vmem:[%s5 + $0x18] sm:$0xff] %vm622, %v1257
        %1266 = vst.msk [vmem:[%s5 + $0x20] sm:$0xff] %vm622, %v1258
        %1267 = vst.msk [vmem:[%s5 + $0x28] sm:$0xff] %vm622, %v1259
        %1268 = vst.msk [vmem:[%s5 + $0x30] sm:$0xff] %vm622, %v1260
        %1269 = vst.msk [vmem:[%s5 + $0x38] sm:$0xff] %vm622, %v1261
        %v1270 = vld [vmem:[%s932] sm:$0xff]
        %v1271 = vld [vmem:[%s932 + $0x8] sm:$0xff]
        %v1272 = vld [vmem:[%s932 + $0x10] sm:$0xff]
        %v1273 = vld [vmem:[%s932 + $0x18] sm:$0xff]
        %v1274 = vld [vmem:[%s932 + $0x20] sm:$0xff]
        %v1275 = vld [vmem:[%s932 + $0x28] sm:$0xff]
        %v1276 = vld [vmem:[%s932 + $0x30] sm:$0xff]
        %v1277 = vld [vmem:[%s932 + $0x38] sm:$0xff]
        %v1278 = vmul.f32 %v1270, %v1161
        %v1279 = vmul.f32 %v1271, %v1166
        %v1280 = vmul.f32 %v1272, %v1171
        %v1281 = vmul.f32 %v1273, %v1176
        %v1282 = vmul.f32 %v1274, %v1181
        %v1283 = vmul.f32 %v1275, %v1186
        %v1284 = vmul.f32 %v1276, %v1191
        %v1285 = vmul.f32 %v1277, %v1196
        %v1286 = vadd.f32 %v1278, %v1209
        %v1287 = vadd.f32 %v1279, %v1214
        %v1288 = vadd.f32 %v1280, %v1219
        %v1289 = vadd.f32 %v1281, %v1224
        %v1290 = vadd.f32 %v1282, %v1229
        %v1291 = vadd.f32 %v1283, %v1234
        %v1292 = vadd.f32 %v1284, %v1239
        %v1293 = vadd.f32 %v1285, %v1244
        %v1294 = vmax.f32 %v1286, 0.0
        %v1295 = vmax.f32 %v1287, 0.0
        %v1296 = vmax.f32 %v1288, 0.0
        %v1297 = vmax.f32 %v1289, 0.0
        %v1298 = vmax.f32 %v1290, 0.0
        %v1299 = vmax.f32 %v1291, 0.0
        %v1300 = vmax.f32 %v1292, 0.0
        %v1301 = vmax.f32 %v1293, 0.0
        %1302 = vst.msk [vmem:[%s932] sm:$0xff] %vm622, %v1294
        %1303 = vst.msk [vmem:[%s932 + $0x8] sm:$0xff] %vm622, %v1295
        %1304 = vst.msk [vmem:[%s932 + $0x10] sm:$0xff] %vm622, %v1296
        %1305 = vst.msk [vmem:[%s932 + $0x18] sm:$0xff] %vm622, %v1297
        %1306 = vst.msk [vmem:[%s932 + $0x20] sm:$0xff] %vm622, %v1298
        %1307 = vst.msk [vmem:[%s932 + $0x28] sm:$0xff] %vm622, %v1299
        %1308 = vst.msk [vmem:[%s932 + $0x30] sm:$0xff] %vm622, %v1300
        %1309 = vst.msk [vmem:[%s932 + $0x38] sm:$0xff] %vm622, %v1301
      $region48: #{decoder_forward.9} parent=39 // pred_fallthru
        _
      // Predicated region
      $region49: #{decoder_forward.9} parent=39 // pred_check
        %p1310 = pneg %p153
      $region50: #{decoder_forward.9} parent=39 // pred_check_branch
        %1312 = sbr.rel (%p1310) target = $region52
      $region51: #{decoder_forward.9} parent=39 // pred_region
        _
      $region52: #{decoder_forward.9} parent=39 // pred_fallthru
        _
      // Predicated region
      $region53: #{decoder_forward.9} parent=39 // pred_check
        %p1313 = pneg %p153
      $region54: #{decoder_forward.9} parent=39 // pred_check_branch
        %1315 = sbr.rel (%p1313) target = $region56
      $region55: #{decoder_forward.9} parent=39 // pred_region
        _
      $region56: #{decoder_forward.9} parent=39 // pred_fallthru
        _
    $region40: #{decoder_forward.9} parent=5 // pred_fallthru
      _
    %p1316 = scmp.le.s32.totalorder 2, %s11
    // Predicated region
    $region57: #{decoder_forward.9} parent=5 // pred_check
      %p1317 = pneg %p1316
    $region58: #{decoder_forward.9} parent=5 // pred_check_branch
      %1319 = sbr.rel (%p1317) target = $region60
    $region59: #{decoder_forward.9} parent=5 // pred_region
      %s1320 = ssub.s32 %s11, 2
    $region60: #{decoder_forward.9} parent=5 // pred_fallthru
      _
  $region6: #{decoder_forward.9} parent=0 // loop_footer
    %s15 = sadd.s32 1, %s11
  $region7: #{decoder_forward.9} parent=0 // loop_footer_branch
    %10 = sbr.rel target = $region3
  $region8: #{decoder_forward.9} parent=0 // loop_exit
    _

// kernel: decoder_forward.10
$region0: #{decoder_forward.10}
  #allocation0 [shape = 'u32[]', space=smem, size = 0x4, offset = 0x4, fixed_abs, tag = 'smem constant byte address 0x4 - core index']
  #allocation1 [shape = 'u32[144,128]{1,0:T(1,128)}', space=vmem, size = 0x12000, scoped, tag = 'internal scratch']
  #allocation2 [shape = 'f32[32,1]{1,0:T(8,128)}', space=vmem, size = 0x4000, scoped, tag = 'scratch operand']
  %s0 = inlined_call_operand.vmem [shape: bf16[2,1,144,196], index: 0, kind: input, shape index: {}]
  %s1 = inlined_call_operand.vmem [shape: bf16[32,144], index: 1, kind: input, shape index: {}]
  %s2 = inlined_call_operand.vmem [shape: f32[32,1], index: 2, kind: input, shape index: {}]
  %s3 = inlined_call_operand.vmem [shape: f32[32,1], index: 3, kind: input, shape index: {}]
  %s4 = inlined_call_operand.vmem [shape: f32[32,32], index: 4, kind: input, shape index: {}]
  %s5 = inlined_call_operand.vmem [shape: f32[2,1,32,196], index: 5, kind: output, shape index: {}]
  %s6 = sld [smem:[#allocation0]]
  $region61: #{decoder_forward.10} parent=0
    _
  %s8 = ssub.s32 1, %s6
  %s9 = scalar_select 0, %s8, %s6
  loop: start=0, step=1, limit=4
  $region2: #{decoder_forward.10} parent=0 // loop_pre_header
    _
  $region3: #{decoder_forward.10} parent=0 // loop_header
    %s11 = sphi 0, %s15
    %p12 = scmp.ge.s32.totalorder %s11, 4
    %s18 = sphi 0, %s30
    %s19 = sphi 0, %s26
    %s20 = sphi 0, %s18
    %s21 = sphi 0, %s19
    %s22 = sphi 0, %s20
    %s23 = sphi 0, %s21
    %s35 = sphi 0, %s37
    %s38 = sphi 0, %s35
    %s39 = sphi 0, %s38
    %s55 = sphi 0, %s39
    %s59 = sphi 0, %s59
    %s61 = sphi 0, %s59
    %s62 = sphi 0, %s61
    %s76 = sphi 0, %s62
    %s80 = sphi 0, %s80
    %s82 = sphi 0, %s80
    %s83 = sphi 0, %s82
    %s97 = sphi 0, %s83
    %s101 = sphi 0, %s101
    %s103 = sphi 0, %s101
    %s104 = sphi 0, %s103
    %s118 = sphi 0, %s104
    %s122 = sphi 0, %s122
    %s124 = sphi 0, %s122
    %s125 = sphi 0, %s124
    %s139 = sphi 0, %s125
    %s143 = sphi 0, %s143
    %s145 = sphi 0, %s143
    %s146 = sphi 0, %s145
    %s160 = sphi 0, %s146
  $region4: #{decoder_forward.10} parent=0 // loop_header_branch
    %14 = sbr.rel (%p12) target = $region8
  $region5: #{decoder_forward.10} parent=0 // loop_body
    %s16 = ssub.s32 %s11, 1
    %s17 = ssub.s32 %s11, 2
    %s24 = sadd.s32 1, %s19
    %p25 = scmp.ge.s32.totalorder %s24, 1
    %s26 = scalar_select %p25, 0, %s24
    %s27 = sadd.s32 1, %s18
    %s28 = scalar_select %p25, %s27, %s18
    %p29 = scmp.ge.s32.totalorder %s28, 2
    %s30 = scalar_select %p29, 0, %s28
    %s31 = ssub.s32 %s18, %s30
    %s32 = ssub.s32 %s19, %s26
    %s33 = sor.u32 %s31, %s32
    %p34 = scmp.eq.s32.totalorder %s33, 0
    %s36 = sadd.s32 %s35, 1
    %s37 = scalar_select %p34, %s35, %s36
    %p40 = pneg %p34
    %p41 = scmp.eq.s32.totalorder %s11, 1
    %p42 = por %p40, %p41
    %p43 = scmp.ne.s32.totalorder %s35, %s38
    %p44 = scmp.eq.s32.totalorder %s11, 0
    %p45 = por %p43, %p44
    %p46 = scmp.ne.s32.totalorder %s35, %s38
    %p47 = scmp.eq.s32.totalorder %s16, 1
    %p48 = por %p46, %p47
    %p49 = scmp.ne.s32.totalorder %s38, %s39
    %p50 = scmp.eq.s32.totalorder %s16, 0
    %p51 = por %p49, %p50
    %p52 = scmp.ne.s32.totalorder %s38, %s39
    %p53 = scmp.eq.s32.totalorder %s17, 1
    %p54 = por %p52, %p53
    %p56 = scmp.ne.s32.totalorder %s39, %s55
    %p57 = scmp.eq.s32.totalorder %s17, 0
    %p58 = por %p56, %p57
    %s60 = sadd.s32 %s59, 1
    %p63 = scmp.eq.s32.totalorder %s11, 1
    %p64 = scmp.ne.s32.totalorder %s59, %s61
    %p65 = scmp.eq.s32.totalorder %s11, 0
    %p66 = por %p64, %p65
    %p67 = scmp.ne.s32.totalorder %s59, %s61
    %p68 = scmp.eq.s32.totalorder %s16, 1
    %p69 = por %p67, %p68
    %p70 = scmp.ne.s32.totalorder %s61, %s62
    %p71 = scmp.eq.s32.totalorder %s16, 0
    %p72 = por %p70, %p71
    %p73 = scmp.ne.s32.totalorder %s61, %s62
    %p74 = scmp.eq.s32.totalorder %s17, 1
    %p75 = por %p73, %p74
    %p77 = scmp.ne.s32.totalorder %s62, %s76
    %p78 = scmp.eq.s32.totalorder %s17, 0
    %p79 = por %p77, %p78
    %s81 = sadd.s32 %s80, 1
    %p84 = scmp.eq.s32.totalorder %s11, 1
    %p85 = scmp.ne.s32.totalorder %s80, %s82
    %p86 = scmp.eq.s32.totalorder %s11, 0
    %p87 = por %p85, %p86
    %p88 = scmp.ne.s32.totalorder %s80, %s82
    %p89 = scmp.eq.s32.totalorder %s16, 1
    %p90 = por %p88, %p89
    %p91 = scmp.ne.s32.totalorder %s82, %s83
    %p92 = scmp.eq.s32.totalorder %s16, 0
    %p93 = por %p91, %p92
    %p94 = scmp.ne.s32.totalorder %s82, %s83
    %p95 = scmp.eq.s32.totalorder %s17, 1
    %p96 = por %p94, %p95
    %p98 = scmp.ne.s32.totalorder %s83, %s97
    %p99 = scmp.eq.s32.totalorder %s17, 0
    %p100 = por %p98, %p99
    %s102 = sadd.s32 %s101, 1
    %p105 = scmp.eq.s32.totalorder %s11, 1
    %p106 = scmp.ne.s32.totalorder %s101, %s103
    %p107 = scmp.eq.s32.totalorder %s11, 0
    %p108 = por %p106, %p107
    %p109 = scmp.ne.s32.totalorder %s101, %s103
    %p110 = scmp.eq.s32.totalorder %s16, 1
    %p111 = por %p109, %p110
    %p112 = scmp.ne.s32.totalorder %s103, %s104
    %p113 = scmp.eq.s32.totalorder %s16, 0
    %p114 = por %p112, %p113
    %p115 = scmp.ne.s32.totalorder %s103, %s104
    %p116 = scmp.eq.s32.totalorder %s17, 1
    %p117 = por %p115, %p116
    %p119 = scmp.ne.s32.totalorder %s104, %s118
    %p120 = scmp.eq.s32.totalorder %s17, 0
    %p121 = por %p119, %p120
    %s123 = sadd.s32 %s122, 1
    %p126 = scmp.eq.s32.totalorder %s11, 1
    %p127 = scmp.ne.s32.totalorder %s122, %s124
    %p128 = scmp.eq.s32.totalorder %s11, 0
    %p129 = por %p127, %p128
    %p130 = scmp.ne.s32.totalorder %s122, %s124
    %p131 = scmp.eq.s32.totalorder %s16, 1
    %p132 = por %p130, %p131
    %p133 = scmp.ne.s32.totalorder %s124, %s125
    %p134 = scmp.eq.s32.totalorder %s16, 0
    %p135 = por %p133, %p134
    %p136 = scmp.ne.s32.totalorder %s124, %s125
    %p137 = scmp.eq.s32.totalorder %s17, 1
    %p138 = por %p136, %p137
    %p140 = scmp.ne.s32.totalorder %s125, %s139
    %p141 = scmp.eq.s32.totalorder %s17, 0
    %p142 = por %p140, %p141
    %s144 = sadd.s32 %s143, 1
    %p147 = scmp.eq.s32.totalorder %s11, 1
    %p148 = scmp.ne.s32.totalorder %s143, %s145
    %p149 = scmp.eq.s32.totalorder %s11, 0
    %p150 = por %p148, %p149
    %p151 = scmp.ne.s32.totalorder %s143, %s145
    %p152 = scmp.eq.s32.totalorder %s16, 1
    %p153 = por %p151, %p152
    %p154 = scmp.ne.s32.totalorder %s145, %s146
    %p155 = scmp.eq.s32.totalorder %s16, 0
    %p156 = por %p154, %p155
    %p157 = scmp.ne.s32.totalorder %s145, %s146
    %p158 = scmp.eq.s32.totalorder %s17, 1
    %p159 = por %p157, %p158
    %p161 = scmp.ne.s32.totalorder %s146, %s160
    %p162 = scmp.eq.s32.totalorder %s17, 0
    %p163 = por %p161, %p162
    %p164 = scmp.le.s32.totalorder 1, %s11
    %p165 = scmp.lt.s32.totalorder %s11, 3
    %p166 = pnand %p164, %p165
    %p167 = pneg %p166
    // Predicated region
    $region9: #{decoder_forward.10} parent=5 // pred_check
      _
    $region10: #{decoder_forward.10} parent=5 // pred_check_branch
      %169 = sbr.rel (%p166) target = $region12
    $region11: #{decoder_forward.10} parent=5 // pred_region
      %s170 = ssub.s32 %s11, 1
      // Predicated region
      $region13: #{decoder_forward.10} parent=11 // pred_check
        %p171 = pneg %p72
      $region14: #{decoder_forward.10} parent=11 // pred_check_branch
        %173 = sbr.rel (%p171) target = $region16
      $region15: #{decoder_forward.10} parent=11 // pred_region
        _
      $region16: #{decoder_forward.10} parent=11 // pred_fallthru
        _
      // Predicated region
      $region17: #{decoder_forward.10} parent=11 // pred_check
        %p174 = pneg %p93
      $region18: #{decoder_forward.10} parent=11 // pred_check_branch
        %176 = sbr.rel (%p174) target = $region20
      $region19: #{decoder_forward.10} parent=11 // pred_region
        _
      $region20: #{decoder_forward.10} parent=11 // pred_fallthru
        _
      // Predicated region
      $region21: #{decoder_forward.10} parent=11 // pred_check
        %p177 = pneg %p114
      $region22: #{decoder_forward.10} parent=11 // pred_check_branch
        %179 = sbr.rel (%p177) target = $region24
      $region23: #{decoder_forward.10} parent=11 // pred_region
        _
      $region24: #{decoder_forward.10} parent=11 // pred_fallthru
        _
      // Predicated region
      $region25: #{decoder_forward.10} parent=11 // pred_check
        %p180 = pneg %p135
      $region26: #{decoder_forward.10} parent=11 // pred_check_branch
        %182 = sbr.rel (%p180) target = $region28
      $region27: #{decoder_forward.10} parent=11 // pred_region
        _
      $region28: #{decoder_forward.10} parent=11 // pred_fallthru
        _
    $region12: #{decoder_forward.10} parent=5 // pred_fallthru
      _
    %p183 = scmp.lt.s32.totalorder %s11, 2
    // Predicated region
    $region29: #{decoder_forward.10} parent=5 // pred_check
      %p184 = pneg %p183
    $region30: #{decoder_forward.10} parent=5 // pred_check_branch
      %186 = sbr.rel (%p184) target = $region32
    $region31: #{decoder_forward.10} parent=5 // pred_region
      // Predicated region
      $region33: #{decoder_forward.10} parent=31 // pred_check
        %p187 = pneg %p45
      $region34: #{decoder_forward.10} parent=31 // pred_check_branch
        %189 = sbr.rel (%p187) target = $region36
      $region35: #{decoder_forward.10} parent=31 // pred_region
        %p190 = scmp.lt.s32.totalorder %s18, 1
        %s191 = scalar_select %p190, %s18, 1
        %p192 = scmp.lt.s32.totalorder %s19, 0
        %s193 = scalar_select %p192, %s19, 0
        %s194 = smul.addr %s193, 36
        %s195 = smul.addr %s191, 36
        %s196 = sadd.s32 %s194, %s195
        %s197 = smul.addr %s196, 4
        %s198 = scalar_lea.vmem %s0, %s197
      $region36: #{decoder_forward.10} parent=31 // pred_fallthru
        _
    $region32: #{decoder_forward.10} parent=5 // pred_fallthru
      _
    %p199 = scmp.le.s32.totalorder 1, %s11
    %p200 = scmp.lt.s32.totalorder %s11, 3
    %p201 = pnand %p199, %p200
    %p202 = pneg %p201
    // Predicated region
    $region37: #{decoder_forward.10} parent=5 // pred_check
      _
    $region38: #{decoder_forward.10} parent=5 // pred_check_branch
      %204 = sbr.rel (%p201) target = $region40
    $region39: #{decoder_forward.10} parent=5 // pred_region
      %s205 = ssub.s32 %s11, 1
      %p206 = scmp.lt.s32.totalorder %s20, 1
      %s207 = scalar_select %p206, %s20, 1
      %p208 = scmp.lt.s32.totalorder %s21, 0
      %s209 = scalar_select %p208, %s21, 0
      %s210 = smul.addr %s209, 36
      %s211 = smul.addr %s207, 36
      %s212 = sadd.s32 %s210, %s211
      %s213 = smul.addr %s212, 4
      %s214 = scalar_lea.vmem %s0, %s213
      %p215 = pneg %p51
      %p216 = pneg %p48
      %p217 = pneg %p72
      %p218 = pneg %p69
      %p219 = pneg %p93
      %p220 = pneg %p90
      %p221 = pneg %p114
      %p222 = pneg %p111
      %p223 = pneg %p135
      %p224 = pneg %p132
      %p225 = pneg %p156
      %p226 = pneg %p153
      %p227 = scmp.lt.s32.totalorder %s20, 1
      %s228 = scalar_select %p227, %s20, 1
      %p229 = scmp.lt.s32.totalorder %s21, 0
      %s230 = scalar_select %p229, %s21, 0
      %s231 = smul.addr %s230, 36
      %s232 = smul.addr %s228, 36
      %s233 = sadd.s32 %s231, %s232
      %s234 = smul.addr %s233, 4
      %s235 = scalar_lea.vmem %s0, %s234
      %p237 = scmp.eq.s32.totalorder %s20, 0
      %p238 = scmp.eq.s32.totalorder %s21, 0
      %p239 = pnand %p237, %p238
      %p240 = pneg %p239
      %p241 = scmp.eq.s32.totalorder %s20, 1
      %p242 = pnand %p241, %p238
      %p243 = pneg %p242
      // Predicated region
      $region41: #{decoder_forward.10} parent=39 // pred_check
        _
      $region42: #{decoder_forward.10} parent=39 // pred_check_branch
        %245 = sbr.rel (%p239) target = $region44
      $region43: #{decoder_forward.10} parent=39 // pred_region
        %vm246 = vcmask 7168
        %247 = vst.msk [vmem:[#allocation2] sm:$0xff] %vm246, 0.0
        %248 = vst.msk [vmem:[#allocation2 + $0x8] sm:$0xff] %vm246, 0.0
        %249 = vst.msk [vmem:[#allocation2 + $0x10] sm:$0xff] %vm246, 0.0
        %250 = vst.msk [vmem:[#allocation2 + $0x18] sm:$0xff] %vm246, 0.0
      $region44: #{decoder_forward.10} parent=39 // pred_fallthru
        _
      %v251 = vld [vmem:[%s1] sm:$0xff]
      %v252 = vld [vmem:[%s1 + $0x8] sm:$0xff]
      %v253 = vld [vmem:[%s1 + $0x10] sm:$0xff]
      %v254 = vld [vmem:[%s1 + $0x18] sm:$0xff]
      %v255 = vld [vmem:[%s235] sm:$0xff]
      %v256 = vld [vmem:[%s235 + $0x8] sm:$0xff]
      %v257 = vld [vmem:[%s235 + $0x10] sm:$0xff]
      %v258 = vld [vmem:[%s235 + $0x18] sm:$0xff]
      %v259 = vld [vmem:[%s235 + $0x20] sm:$0xff]
      %v260 = vld [vmem:[%s235 + $0x28] sm:$0xff]
      %v261 = vld [vmem:[%s235 + $0x30] sm:$0xff]
      %v262 = vld [vmem:[%s235 + $0x38] sm:$0xff]
      %v263 = vld [vmem:[%s235 + $0x40] sm:$0xff]
      %v264 = vld [vmem:[%s235 + $0x48] sm:$0xff]
      %v265 = vld [vmem:[%s235 + $0x50] sm:$0xff]
      %v266 = vld [vmem:[%s235 + $0x58] sm:$0xff]
      %v267 = vld [vmem:[%s235 + $0x60] sm:$0xff]
      %v268 = vld [vmem:[%s235 + $0x68] sm:$0xff]
      %v269 = vld [vmem:[%s235 + $0x70] sm:$0xff]
      %v270 = vld [vmem:[%s235 + $0x78] sm:$0xff]
      %v271 = vld [vmem:[%s235 + $0x80] sm:$0xff]
      %v272 = vld [vmem:[%s235 + $0x88] sm:$0xff]
      %v277 = vunpack.c.l.b16 %v251
      %v278 = vunpack.c.h.b16 %v251
      %v279 = vunpack.c.l.b16 %v252
      %v280 = vunpack.c.h.b16 %v252
      %v281 = vunpack.c.l.b16 %v253
      %v282 = vunpack.c.h.b16 %v253
      %v283 = vunpack.c.l.b16 %v254
      %v284 = vunpack.c.h.b16 %v254
      %v285 = vpack.c.b16 %v279, %v277
      %v286 = vpack.c.b16 %v280, %v278
      %v287 = vpack.c.b16 %v283, %v281
      %v288 = vpack.c.b16 %v284, %v282
      %v309 = vunpack.c.l.b16 %v255
      %v310 = vunpack.c.h.b16 %v255
      %v311 = vunpack.c.l.b16 %v256
      %v312 = vunpack.c.h.b16 %v256
      %v313 = vunpack.c.l.b16 %v257
      %v314 = vunpack.c.h.b16 %v257
      %v315 = vunpack.c.l.b16 %v258
      %v316 = vunpack.c.h.b16 %v258
      %v317 = vunpack.c.l.b16 %v259
      %v318 = vunpack.c.h.b16 %v259
      %v319 = vunpack.c.l.b16 %v260
      %v320 = vunpack.c.h.b16 %v260
      %v321 = vunpack.c.l.b16 %v261
      %v322 = vunpack.c.h.b16 %v261
      %v323 = vunpack.c.l.b16 %v262
      %v324 = vunpack.c.h.b16 %v262
      %v325 = vunpack.c.l.b16 %v263
      %v326 = vunpack.c.h.b16 %v263
      %v327 = vunpack.c.l.b16 %v264
      %v328 = vunpack.c.h.b16 %v264
      %v329 = vunpack.c.l.b16 %v265
      %v330 = vunpack.c.h.b16 %v265
      %v331 = vunpack.c.l.b16 %v266
      %v332 = vunpack.c.h.b16 %v266
      %v333 = vunpack.c.l.b16 %v267
      %v334 = vunpack.c.h.b16 %v267
      %v335 = vunpack.c.l.b16 %v268
      %v336 = vunpack.c.h.b16 %v268
      %v337 = vunpack.c.l.b16 %v269
      %v338 = vunpack.c.h.b16 %v269
      %v339 = vunpack.c.l.b16 %v270
      %v340 = vunpack.c.h.b16 %v270
      %v341 = vunpack.c.l.b16 %v271
      %v342 = vunpack.c.h.b16 %v271
      %v343 = vunpack.c.l.b16 %v272
      %v344 = vunpack.c.h.b16 %v272
      %v345 = vpack.c.b16 %v311, %v309
      %v346 = vpack.c.b16 %v312, %v310
      %v347 = vpack.c.b16 %v315, %v313
      %v348 = vpack.c.b16 %v316, %v314
      %v349 = vpack.c.b16 %v319, %v317
      %v350 = vpack.c.b16 %v320, %v318
      %v351 = vpack.c.b16 %v323, %v321
      %v352 = vpack.c.b16 %v324, %v322
      %v353 = vpack.c.b16 %v327, %v325
      %v354 = vpack.c.b16 %v328, %v326
      %v355 = vpack.c.b16 %v331, %v329
      %v356 = vpack.c.b16 %v332, %v330
      %v357 = vpack.c.b16 %v335, %v333
      %v358 = vpack.c.b16 %v336, %v334
      %v359 = vpack.c.b16 %v339, %v337
      %v360 = vpack.c.b16 %v340, %v338
      %v361 = vpack.c.b16 %v343, %v341
      %v362 = vpack.c.b16 %v344, %v342
      %vm381 = vcmask 130048
      %v383 = vsel %vm381, %v286, 0
      %v386 = vsel %vm381, %v288, 0
      %388 = vmatprep.subr.bf16.mxu0 %v346
      %389 = vmatpush1.bf16.msra.mxu0 %v345
      %390 = vmatprep.subr.bf16.mxu0 %v348
      %391 = vmatpush1.bf16.msra.mxu0 %v347
      %392 = vmatprep.subr.bf16.mxu0 %v350
      %393 = vmatpush1.bf16.msra.mxu0 %v349
      %394 = vmatprep.subr.bf16.mxu0 %v352
      %395 = vmatpush1.bf16.msra.mxu0 %v351
      %396 = vmatprep.subr.bf16.mxu0 %v354
      %397 = vmatpush1.bf16.msra.mxu0 %v353
      %398 = vmatprep.subr.bf16.mxu0 %v356
      %399 = vmatpush1.bf16.msra.mxu0 %v355
      %400 = vmatprep.subr.bf16.mxu0 %v358
      %401 = vmatpush1.bf16.msra.mxu0 %v357
      %402 = vmatprep.subr.bf16.mxu0 %v360
      %403 = vmatpush1.bf16.msra.mxu0 %v359
      %404 = vmatprep.subr.bf16.mxu0 %v362
      %405 = vmatpush1.bf16.msra.mxu0 %v361
      %406 = vmatprep.subr.bf16.mxu0 0
      %407 = vmatpush1.bf16.msra.mxu0 0
      %408 = vmatprep.subr.bf16.mxu0 0
      %409 = vmatpush1.bf16.msra.mxu0 0
      %410 = vmatprep.subr.bf16.mxu0 0
      %411 = vmatpush1.bf16.msra.mxu0 0
      %412 = vmatprep.subr.bf16.mxu0 0
      %413 = vmatpush1.bf16.msra.mxu0 0
      %414 = vmatprep.subr.bf16.mxu0 0
      %415 = vmatpush1.bf16.msra.mxu0 0
      %416 = vmatprep.subr.bf16.mxu0 0
      %417 = vmatpush1.bf16.msra.mxu0 0
      %418 = vmatprep.subr.bf16.mxu0 0
      %419 = vmatpush1.bf16.msra.mxu0 0
      %420 = vmatprep.mubr.bf16.mxu0 %v383
      %421 = vmatmul.mubr.bf16.gmra.mrb[0].mxu0 %v285
      %v422 = vpop.f32.mrb[0].mxu0
      %v423 = vadd.f32 0.0, %v422
      %v424 = vpop.f32.mrb[0].mxu0
      %v425 = vadd.f32 0.0, %v424
      %v426 = vpop.f32.mrb[0].mxu0
      %v427 = vadd.f32 0.0, %v426
      %v428 = vpop.f32.mrb[0].mxu0
      %v429 = vadd.f32 0.0, %v428
      %430 = vmatprep.mubr.bf16.mxu0 %v386
      %431 = vmatmul.mubr.bf16.gmra.mrb[0].mxu0 %v287
      %v432 = vpop.f32.mrb[0].mxu0
      %v433 = vadd.f32 0.0, %v432
      %v434 = vpop.f32.mrb[0].mxu0
      %v435 = vadd.f32 0.0, %v434
      %v436 = vpop.f32.mrb[0].mxu0
      %v437 = vadd.f32 0.0, %v436
      %v438 = vpop.f32.mrb[0].mxu0
      %v439 = vadd.f32 0.0, %v438
      %440 = vdwg.mxu0
      %s441 = smul.u32 %s21, 8
      %s442 = smul.u32 %s20, 8
      %s443 = sadd.s32 %s441, %s442
      %s444 = smul.addr %s443, 8
      %s445 = scalar_lea.vmem %s5, %s444
      %446 = vst [vmem:[%s445] sm:$0xff] %v423
      %vm447 = vcmask 556032
      %448 = vst.msk [vmem:[%s445 + $0x8] sm:$0xff] %vm447, %v425
      %449 = vst [vmem:[%s445 + $0x10] sm:$0xff] %v427
      %450 = vst.msk [vmem:[%s445 + $0x18] sm:$0xff] %vm447, %v429
      %451 = vst [vmem:[%s445 + $0x20] sm:$0xff] %v433
      %452 = vst.msk [vmem:[%s445 + $0x28] sm:$0xff] %vm447, %v435
      %453 = vst [vmem:[%s445 + $0x30] sm:$0xff] %v437
      %454 = vst.msk [vmem:[%s445 + $0x38] sm:$0xff] %vm447, %v439
      %v455 = vld [vmem:[#allocation2] sm:$0xff]
      %v456 = vld [vmem:[#allocation2 + $0x8] sm:$0xff]
      %v457 = vld [vmem:[#allocation2 + $0x10] sm:$0xff]
      %v458 = vld [vmem:[#allocation2 + $0x18] sm:$0xff]
      %v459 = vsel %vm447, %v425, 0.0
      %v460 = vadd.f32 %v423, %v459
      %461 = vadd.xlane.f32.xlu0 %v460
      %v462 = vpop.xlane.xlu0 %461
      %v463 = vsel %vm447, %v429, 0.0
      %v464 = vadd.f32 %v427, %v463
      %465 = vadd.xlane.f32.xlu0 %v464
      %v466 = vpop.xlane.xlu0 %465
      %v467 = vsel %vm447, %v435, 0.0
      %v468 = vadd.f32 %v433, %v467
      %469 = vadd.xlane.f32.xlu0 %v468
      %v470 = vpop.xlane.xlu0 %469
      %v471 = vsel %vm447, %v439, 0.0
      %v472 = vadd.f32 %v437, %v471
      %473 = vadd.xlane.f32.xlu0 %v472
      %v474 = vpop.xlane.xlu0 %473
      %v475 = vadd.f32 %v455, %v462
      %v476 = vadd.f32 %v456, %v466
      %v477 = vadd.f32 %v457, %v470
      %v478 = vadd.f32 %v458, %v474
      %vm479 = vcmask 7168
      %480 = vst.msk [vmem:[#allocation2] sm:$0xff] %vm479, %v475
      %481 = vst.msk [vmem:[#allocation2 + $0x8] sm:$0xff] %vm479, %v476
      %482 = vst.msk [vmem:[#allocation2 + $0x10] sm:$0xff] %vm479, %v477
      %483 = vst.msk [vmem:[#allocation2 + $0x18] sm:$0xff] %vm479, %v478
      // Predicated region
      $region45: #{decoder_forward.10} parent=39 // pred_check
        _
      $region46: #{decoder_forward.10} parent=39 // pred_check_branch
        %485 = sbr.rel (%p242) target = $region48
      $region47: #{decoder_forward.10} parent=39 // pred_region
        %v486 = vld [vmem:[%s4] sm:$0xff]
        %v487 = vld [vmem:[%s4 + $0x8] sm:$0xff]
        %v488 = vld [vmem:[%s4 + $0x10] sm:$0xff]
        %v489 = vld [vmem:[%s4 + $0x18] sm:$0xff]
        %v490 = vld [vmem:[#allocation2] sm:$0xff]
        %v491 = vld [vmem:[#allocation2 + $0x8] sm:$0xff]
        %v492 = vld [vmem:[#allocation2 + $0x10] sm:$0xff]
        %v493 = vld [vmem:[#allocation2 + $0x18] sm:$0xff]
        %vm494 = vcmask 261120
        %v496 = vsel %vm494, %v486, 0
        %v499 = vsel %vm494, %v487, 0
        %v502 = vsel %vm494, %v488, 0
        %v505 = vsel %vm494, %v489, 0
        %507 = vmatprep.subr.mxu0 0.0
        %508 = vmatpush1.msra.mxu0 %v490
        %509 = vmatprep.subr.mxu0 0.0
        %510 = vmatpush1.msra.mxu0 %v491
        %511 = vmatprep.subr.mxu0 0.0
        %512 = vmatpush1.msra.mxu0 %v492
        %513 = vmatprep.subr.mxu0 0.0
        %514 = vmatpush1.msra.mxu0 %v493
        %515 = vmatprep.subr.mxu0 0.0
        %516 = vmatpush1.msra.mxu0 0.0
        %517 = vmatprep.subr.mxu0 0.0
        %518 = vmatpush1.msra.mxu0 0.0
        %519 = vmatprep.subr.mxu0 0.0
        %520 = vmatpush1.msra.mxu0 0.0
        %521 = vmatprep.subr.mxu0 0.0
        %522 = vmatpush1.msra.mxu0 0.0
        %523 = vmatprep.subr.mxu0 0.0
        %524 = vmatpush1.msra.mxu0 0.0
        %525 = vmatprep.subr.mxu0 0.0
        %526 = vmatpush1.msra.mxu0 0.0
        %527 = vmatprep.subr.mxu0 0.0
        %528 = vmatpush1.msra.mxu0 0.0
        %529 = vmatprep.subr.mxu0 0.0
        %530 = vmatpush1.msra.mxu0 0.0
        %531 = vmatprep.subr.mxu0 0.0
        %532 = vmatpush1.msra.mxu0 0.0
        %533 = vmatprep.subr.mxu0 0.0
        %534 = vmatpush1.msra.mxu0 0.0
        %535 = vmatprep.subr.mxu0 0.0
        %536 = vmatpush1.msra.mxu0 0.0
        %537 = vmatprep.subr.mxu0 0.0
        %538 = vmatpush1.msra.mxu0 0.0
        %539 = vmatprep.subr.mxu0 0.0
        %540 = vmatpush1.msra.mxu0 0.0
        %541 = vmatprep.subr.mxu0 0.0
        %542 = vmatpush1.msra.mxu0 0.0
        %543 = vmatprep.subr.mxu0 0.0
        %544 = vmatpush1.msra.mxu0 0.0
        %545 = vmatprep.subr.mxu0 0.0
        %546 = vmatpush1.msra.mxu0 0.0
        %547 = vmatprep.subr.mxu0 0.0
        %548 = vmatpush1.msra.mxu0 0.0
        %549 = vmatprep.subr.mxu0 0.0
        %550 = vmatpush1.msra.mxu0 0.0
        %551 = vmatprep.subr.mxu0 0.0
        %552 = vmatpush1.msra.mxu0 0.0
        %553 = vmatprep.subr.mxu0 0.0
        %554 = vmatpush1.msra.mxu0 0.0
        %555 = vmatprep.subr.mxu0 0.0
        %556 = vmatpush1.msra.mxu0 0.0
        %557 = vmatprep.subr.mxu0 0.0
        %558 = vmatpush1.msra.mxu0 0.0
        %559 = vmatprep.subr.mxu0 0.0
        %560 = vmatpush1.msra.mxu0 0.0
        %561 = vmatprep.subr.mxu0 0.0
        %562 = vmatpush1.msra.mxu0 0.0
        %563 = vmatprep.subr.mxu0 0.0
        %564 = vmatpush1.msra.mxu0 0.0
        %565 = vmatprep.subr.mxu0 0.0
        %566 = vmatpush1.msra.mxu0 0.0
        %567 = vmatprep.subr.mxu0 0.0
        %568 = vmatpush1.msra.mxu0 0.0
        %569 = vmatprep.subr.mxu0 0.0
        %570 = vmatpush1.msra.mxu0 0.0
        %571 = vmatprep.mubr.f32.mxu0 0.0
        %572 = vmatmul.mubr.f32.gmra.mrb[0].mxu0 %v496
        %v573 = vpop.f32.mrb[0].mxu0
        %v574 = vadd.f32 0.0, %v573
        %v575 = vpop.f32.mrb[0].mxu0
        %576 = vmatprep.mubr.f32.mxu0 0.0
        %577 = vmatmul.mubr.f32.gmra.mrb[0].mxu0 %v499
        %v578 = vpop.f32.mrb[0].mxu0
        %v579 = vadd.f32 0.0, %v578
        %v580 = vpop.f32.mrb[0].mxu0
        %581 = vmatprep.mubr.f32.mxu0 0.0
        %582 = vmatmul.mubr.f32.gmra.mrb[0].mxu0 %v502
        %v583 = vpop.f32.mrb[0].mxu0
        %v584 = vadd.f32 0.0, %v583
        %v585 = vpop.f32.mrb[0].mxu0
        %586 = vmatprep.mubr.f32.mxu0 0.0
        %587 = vmatmul.mubr.f32.gmra.mrb[0].mxu0 %v505
        %v588 = vpop.f32.mrb[0].mxu0
        %v589 = vadd.f32 0.0, %v588
        %v590 = vpop.f32.mrb[0].mxu0
        %591 = vdwg.mxu0
        %v592 = vmul.f32 %v574, 0.0006377551
        %v593 = vmul.f32 %v579, 0.0006377551
        %v594 = vmul.f32 %v584, 0.0006377551
        %v595 = vmul.f32 %v589, 0.0006377551
        %v596 = vld [vmem:[%s5] sm:$0xff]
        %v597 = vld [vmem:[%s5 + $0x8] sm:$0xff]
        %v598 = vld [vmem:[%s5 + $0x10] sm:$0xff]
        %v599 = vld [vmem:[%s5 + $0x18] sm:$0xff]
        %v600 = vld [vmem:[%s5 + $0x20] sm:$0xff]
        %v601 = vld [vmem:[%s5 + $0x28] sm:$0xff]
        %v602 = vld [vmem:[%s5 + $0x30] sm:$0xff]
        %v603 = vld [vmem:[%s5 + $0x38] sm:$0xff]
        %605 = vset.pattern.permute.xlu0 0
        %606 = vperm.xlu0 %605, %v592
        %v607 = vpop.permute.xlu0 %606
        %610 = vset.pattern.permute.xlu0 0
        %611 = vperm.xlu0 %610, %v593
        %v612 = vpop.permute.xlu0 %611
        %615 = vset.pattern.permute.xlu0 0
        %616 = vperm.xlu0 %615, %v594
        %v617 = vpop.permute.xlu0 %616
        %620 = vset.pattern.permute.xlu0 0
        %621 = vperm.xlu0 %620, %v595
        %v622 = vpop.permute.xlu0 %621
        %v624 = vsub.f32 %v596, %v607
        %v625 = vsub.f32 %v597, %v607
        %v626 = vsub.f32 %v598, %v612
        %v627 = vsub.f32 %v599, %v612
        %v628 = vsub.f32 %v600, %v617
        %v629 = vsub.f32 %v601, %v617
        %v630 = vsub.f32 %v602, %v622
        %v631 = vsub.f32 %v603, %v622
        %v632 = vmul.f32 %v624, %v624
        %v633 = vmul.f32 %v625, %v625
        %v634 = vmul.f32 %v626, %v626
        %v635 = vmul.f32 %v627, %v627
        %v636 = vmul.f32 %v628, %v628
        %v637 = vmul.f32 %v629, %v629
        %v638 = vmul.f32 %v630, %v630
        %v639 = vmul.f32 %v631, %v631
        %v640 = vsel %vm447, %v633, 0.0
        %v641 = vadd.f32 %v632, %v640
        %642 = vadd.xlane.f32.xlu0 %v641
        %v643 = vpop.xlane.xlu0 %642
        %v644 = vsel %vm447, %v635, 0.0
        %v645 = vadd.f32 %v634, %v644
        %646 = vadd.xlane.f32.xlu0 %v645
        %v647 = vpop.xlane.xlu0 %646
        %v648 = vsel %vm447, %v637, 0.0
        %v649 = vadd.f32 %v636, %v648
        %650 = vadd.xlane.f32.xlu0 %v649
        %v651 = vpop.xlane.xlu0 %650
        %v652 = vsel %vm447, %v639, 0.0
        %v653 = vadd.f32 %v638, %v652
        %654 = vadd.xlane.f32.xlu0 %v653
        %v655 = vpop.xlane.xlu0 %654
        %v656 = vadd.f32 %v643, 0.0
        %v657 = vadd.f32 %v647, 0.0
        %v658 = vadd.f32 %v651, 0.0
        %v659 = vadd.f32 %v655, 0.0
        %s660 = scalar_lea.vmem %s5, 64
        %v661 = vld [vmem:[%s660] sm:$0xff]
        %v662 = vld [vmem:[%s660 + $0x8] sm:$0xff]
        %v663 = vld [vmem:[%s660 + $0x10] sm:$0xff]
        %v664 = vld [vmem:[%s660 + $0x18] sm:$0xff]
        %v665 = vld [vmem:[%s660 + $0x20] sm:$0xff]
        %v666 = vld [vmem:[%s660 + $0x28] sm:$0xff]
        %v667 = vld [vmem:[%s660 + $0x30] sm:$0xff]
        %v668 = vld [vmem:[%s660 + $0x38] sm:$0xff]
        %v669 = vsub.f32 %v661, %v607
        %v670 = vsub.f32 %v662, %v607
        %v671 = vsub.f32 %v663, %v612
        %v672 = vsub.f32 %v664, %v612
        %v673 = vsub.f32 %v665, %v617
        %v674 = vsub.f32 %v666, %v617
        %v675 = vsub.f32 %v667, %v622
        %v676 = vsub.f32 %v668, %v622
        %v677 = vmul.f32 %v669, %v669
        %v678 = vmul.f32 %v670, %v670
        %v679 = vmul.f32 %v671, %v671
        %v680 = vmul.f32 %v672, %v672
        %v681 = vmul.f32 %v673, %v673
        %v682 = vmul.f32 %v674, %v674
        %v683 = vmul.f32 %v675, %v675
        %v684 = vmul.f32 %v676, %v676
        %v685 = vsel %vm447, %v678, 0.0
        %v686 = vadd.f32 %v677, %v685
        %687 = vadd.xlane.f32.xlu0 %v686
        %v688 = vpop.xlane.xlu0 %687
        %v689 = vsel %vm447, %v680, 0.0
        %v690 = vadd.f32 %v679, %v689
        %691 = vadd.xlane.f32.xlu0 %v690
        %v692 = vpop.xlane.xlu0 %691
        %v693 = vsel %vm447, %v682, 0.0
        %v694 = vadd.f32 %v681, %v693
        %695 = vadd.xlane.f32.xlu0 %v694
        %v696 = vpop.xlane.xlu0 %695
        %v697 = vsel %vm447, %v684, 0.0
        %v698 = vadd.f32 %v683, %v697
        %699 = vadd.xlane.f32.xlu0 %v698
        %v700 = vpop.xlane.xlu0 %699
        %v701 = vadd.f32 %v656, %v688
        %v702 = vadd.f32 %v657, %v692
        %v703 = vadd.f32 %v658, %v696
        %v704 = vadd.f32 %v659, %v700
        %705 = vmatprep.subr.mxu0 0.0
        %706 = vmatpush1.msra.mxu0 %v701
        %707 = vmatprep.subr.mxu0 0.0
        %708 = vmatpush1.msra.mxu0 %v702
        %709 = vmatprep.subr.mxu0 0.0
        %710 = vmatpush1.msra.mxu0 %v703
        %711 = vmatprep.subr.mxu0 0.0
        %712 = vmatpush1.msra.mxu0 %v704
        %713 = vmatprep.subr.mxu0 0.0
        %714 = vmatpush1.msra.mxu0 0.0
        %715 = vmatprep.subr.mxu0 0.0
        %716 = vmatpush1.msra.mxu0 0.0
        %717 = vmatprep.subr.mxu0 0.0
        %718 = vmatpush1.msra.mxu0 0.0
        %719 = vmatprep.subr.mxu0 0.0
        %720 = vmatpush1.msra.mxu0 0.0
        %721 = vmatprep.subr.mxu0 0.0
        %722 = vmatpush1.msra.mxu0 0.0
        %723 = vmatprep.subr.mxu0 0.0
        %724 = vmatpush1.msra.mxu0 0.0
        %725 = vmatprep.subr.mxu0 0.0
        %726 = vmatpush1.msra.mxu0 0.0
        %727 = vmatprep.subr.mxu0 0.0
        %728 = vmatpush1.msra.mxu0 0.0
        %729 = vmatprep.subr.mxu0 0.0
        %730 = vmatpush1.msra.mxu0 0.0
        %731 = vmatprep.subr.mxu0 0.0
        %732 = vmatpush1.msra.mxu0 0.0
        %733 = vmatprep.subr.mxu0 0.0
        %734 = vmatpush1.msra.mxu0 0.0
        %735 = vmatprep.subr.mxu0 0.0
        %736 = vmatpush1.msra.mxu0 0.0
        %737 = vmatprep.subr.mxu0 0.0
        %738 = vmatpush1.msra.mxu0 0.0
        %739 = vmatprep.subr.mxu0 0.0
        %740 = vmatpush1.msra.mxu0 0.0
        %741 = vmatprep.subr.mxu0 0.0
        %742 = vmatpush1.msra.mxu0 0.0
        %743 = vmatprep.subr.mxu0 0.0
        %744 = vmatpush1.msra.mxu0 0.0
        %745 = vmatprep.subr.mxu0 0.0
        %746 = vmatpush1.msra.mxu0 0.0
        %747 = vmatprep.subr.mxu0 0.0
        %748 = vmatpush1.msra.mxu0 0.0
        %749 = vmatprep.subr.mxu0 0.0
        %750 = vmatpush1.msra.mxu0 0.0
        %751 = vmatprep.subr.mxu0 0.0
        %752 = vmatpush1.msra.mxu0 0.0
        %753 = vmatprep.subr.mxu0 0.0
        %754 = vmatpush1.msra.mxu0 0.0
        %755 = vmatprep.subr.mxu0 0.0
        %756 = vmatpush1.msra.mxu0 0.0
        %757 = vmatprep.subr.mxu0 0.0
        %758 = vmatpush1.msra.mxu0 0.0
        %759 = vmatprep.subr.mxu0 0.0
        %760 = vmatpush1.msra.mxu0 0.0
        %761 = vmatprep.subr.mxu0 0.0
        %762 = vmatpush1.msra.mxu0 0.0
        %763 = vmatprep.subr.mxu0 0.0
        %764 = vmatpush1.msra.mxu0 0.0
        %765 = vmatprep.subr.mxu0 0.0
        %766 = vmatpush1.msra.mxu0 0.0
        %767 = vmatprep.subr.mxu0 0.0
        %768 = vmatpush1.msra.mxu0 0.0
        %769 = vmatprep.mubr.f32.mxu0 0.0
        %770 = vmatmul.mubr.f32.gmra.mrb[0].mxu0 %v496
        %v771 = vpop.f32.mrb[0].mxu0
        %v772 = vadd.f32 0.0, %v771
        %v773 = vpop.f32.mrb[0].mxu0
        %774 = vmatprep.mubr.f32.mxu0 0.0
        %775 = vmatmul.mubr.f32.gmra.mrb[0].mxu0 %v499
        %v776 = vpop.f32.mrb[0].mxu0
        %v777 = vadd.f32 0.0, %v776
        %v778 = vpop.f32.mrb[0].mxu0
        %779 = vmatprep.mubr.f32.mxu0 0.0
        %780 = vmatmul.mubr.f32.gmra.mrb[0].mxu0 %v502
        %v781 = vpop.f32.mrb[0].mxu0
        %v782 = vadd.f32 0.0, %v781
        %v783 = vpop.f32.mrb[0].mxu0
        %784 = vmatprep.mubr.f32.mxu0 0.0
        %785 = vmatmul.mubr.f32.gmra.mrb[0].mxu0 %v505
        %v786 = vpop.f32.mrb[0].mxu0
        %v787 = vadd.f32 0.0, %v786
        %v788 = vpop.f32.mrb[0].mxu0
        %789 = vdwg.mxu0
        %v790 = vmul.f32 %v772, 0.0006377551
        %v791 = vmul.f32 %v777, 0.0006377551
        %v792 = vmul.f32 %v782, 0.0006377551
        %v793 = vmul.f32 %v787, 0.0006377551
        %v794 = vld [vmem:[%s2] sm:$0xff]
        %v795 = vld [vmem:[%s2 + $0x8] sm:$0xff]
        %v796 = vld [vmem:[%s2 + $0x10] sm:$0xff]
        %v797 = vld [vmem:[%s2 + $0x18] sm:$0xff]
        %v798 = vadd.f32 %v790, 1e-05
        %v799 = vadd.f32 %v791, 1e-05
        %v800 = vadd.f32 %v792, 1e-05
        %v801 = vadd.f32 %v793, 1e-05
        %v802 = vrsqrt.pop %v798
        %v803 = vrsqrt.pop %v799
        %v804 = vrsqrt.pop %v800
        %v805 = vrsqrt.pop %v801
        %v806 = vmul.f32 %v794, %v802
        %v807 = vmul.f32 %v795, %v803
        %v808 = vmul.f32 %v796, %v804
        %v809 = vmul.f32 %v797, %v805
        %v810 = vld [vmem:[%s3] sm:$0xff]
        %v811 = vld [vmem:[%s3 + $0x8] sm:$0xff]
        %v812 = vld [vmem:[%s3 + $0x10] sm:$0xff]
        %v813 = vld [vmem:[%s3 + $0x18] sm:$0xff]
        %v814 = vmul.f32 %v592, %v806
        %v815 = vmul.f32 %v593, %v807
        %v816 = vmul.f32 %v594, %v808
        %v817 = vmul.f32 %v595, %v809
        %v818 = vsub.f32 %v810, %v814
        %v819 = vsub.f32 %v811, %v815
        %v820 = vsub.f32 %v812, %v816
        %v821 = vsub.f32 %v813, %v817
        %823 = vset.pattern.permute.xlu0 0
        %824 = vperm.xlu0 %823, %v806
        %v825 = vpop.permute.xlu0 %824
        %828 = vset.pattern.permute.xlu0 0
        %829 = vperm.xlu0 %828, %v807
        %v830 = vpop.permute.xlu0 %829
        %833 = vset.pattern.permute.xlu0 0
        %834 = vperm.xlu0 %833, %v808
        %v835 = vpop.permute.xlu0 %834
        %838 = vset.pattern.permute.xlu0 0
        %839 = vperm.xlu0 %838, %v809
        %v840 = vpop.permute.xlu0 %839
        %v842 = vmul.f32 %v596, %v825
        %v843 = vmul.f32 %v597, %v825
        %v844 = vmul.f32 %v598, %v830
        %v845 = vmul.f32 %v599, %v830
        %v846 = vmul.f32 %v600, %v835
        %v847 = vmul.f32 %v601, %v835
        %v848 = vmul.f32 %v602, %v840
        %v849 = vmul.f32 %v603, %v840
        %851 = vset.pattern.permute.xlu0 0
        %852 = vperm.xlu0 %851, %v818
        %v853 = vpop.permute.xlu0 %852
        %856 = vset.pattern.permute.xlu0 0
        %857 = vperm.xlu0 %856, %v819
        %v858 = vpop.permute.xlu0 %857
        %861 = vset.pattern.permute.xlu0 0
        %862 = vperm.xlu0 %861, %v820
        %v863 = vpop.permute.xlu0 %862
        %866 = vset.pattern.permute.xlu0 0
        %867 = vperm.xlu0 %866, %v821
        %v868 = vpop.permute.xlu0 %867
        %v870 = vadd.f32 %v842, %v853
        %v871 = vadd.f32 %v843, %v853
        %v872 = vadd.f32 %v844, %v858
        %v873 = vadd.f32 %v845, %v858
        %v874 = vadd.f32 %v846, %v863
        %v875 = vadd.f32 %v847, %v863
        %v876 = vadd.f32 %v848, %v868
        %v877 = vadd.f32 %v849, %v868
        %v878 = vmax.f32 %v870, 0.0
        %v879 = vmax.f32 %v871, 0.0
        %v880 = vmax.f32 %v872, 0.0
        %v881 = vmax.f32 %v873, 0.0
        %v882 = vmax.f32 %v874, 0.0
        %v883 = vmax.f32 %v875, 0.0
        %v884 = vmax.f32 %v876, 0.0
        %v885 = vmax.f32 %v877, 0.0
        %886 = vst [vmem:[%s5] sm:$0xff] %v878
        %887 = vst.msk [vmem:[%s5 + $0x8] sm:$0xff] %vm447, %v879
        %888 = vst [vmem:[%s5 + $0x10] sm:$0xff] %v880
        %889 = vst.msk [vmem:[%s5 + $0x18] sm:$0xff] %vm447, %v881
        %890 = vst [vmem:[%s5 + $0x20] sm:$0xff] %v882
        %891 = vst.msk [vmem:[%s5 + $0x28] sm:$0xff] %vm447, %v883
        %892 = vst [vmem:[%s5 + $0x30] sm:$0xff] %v884
        %893 = vst.msk [vmem:[%s5 + $0x38] sm:$0xff] %vm447, %v885
        %v894 = vld [vmem:[%s660] sm:$0xff]
        %v895 = vld [vmem:[%s660 + $0x8] sm:$0xff]
        %v896 = vld [vmem:[%s660 + $0x10] sm:$0xff]
        %v897 = vld [vmem:[%s660 + $0x18] sm:$0xff]
        %v898 = vld [vmem:[%s660 + $0x20] sm:$0xff]
        %v899 = vld [vmem:[%s660 + $0x28] sm:$0xff]
        %v900 = vld [vmem:[%s660 + $0x30] sm:$0xff]
        %v901 = vld [vmem:[%s660 + $0x38] sm:$0xff]
        %v902 = vmul.f32 %v894, %v825
        %v903 = vmul.f32 %v895, %v825
        %v904 = vmul.f32 %v896, %v830
        %v905 = vmul.f32 %v897, %v830
        %v906 = vmul.f32 %v898, %v835
        %v907 = vmul.f32 %v899, %v835
        %v908 = vmul.f32 %v900, %v840
        %v909 = vmul.f32 %v901, %v840
        %v910 = vadd.f32 %v902, %v853
        %v911 = vadd.f32 %v903, %v853
        %v912 = vadd.f32 %v904, %v858
        %v913 = vadd.f32 %v905, %v858
        %v914 = vadd.f32 %v906, %v863
        %v915 = vadd.f32 %v907, %v863
        %v916 = vadd.f32 %v908, %v868
        %v917 = vadd.f32 %v909, %v868
        %v918 = vmax.f32 %v910, 0.0
        %v919 = vmax.f32 %v911, 0.0
        %v920 = vmax.f32 %v912, 0.0
        %v921 = vmax.f32 %v913, 0.0
        %v922 = vmax.f32 %v914, 0.0
        %v923 = vmax.f32 %v915, 0.0
        %v924 = vmax.f32 %v916, 0.0
        %v925 = vmax.f32 %v917, 0.0
        %926 = vst [vmem:[%s660] sm:$0xff] %v918
        %927 = vst.msk [vmem:[%s660 + $0x8] sm:$0xff] %vm447, %v919
        %928 = vst [vmem:[%s660 + $0x10] sm:$0xff] %v920
        %929 = vst.msk [vmem:[%s660 + $0x18] sm:$0xff] %vm447, %v921
        %930 = vst [vmem:[%s660 + $0x20] sm:$0xff] %v922
        %931 = vst.msk [vmem:[%s660 + $0x28] sm:$0xff] %vm447, %v923
        %932 = vst [vmem:[%s660 + $0x30] sm:$0xff] %v924
        %933 = vst.msk [vmem:[%s660 + $0x38] sm:$0xff] %vm447, %v925
      $region48: #{decoder_forward.10} parent=39 // pred_fallthru
        _
      // Predicated region
      $region49: #{decoder_forward.10} parent=39 // pred_check
        %p934 = pneg %p153
      $region50: #{decoder_forward.10} parent=39 // pred_check_branch
        %936 = sbr.rel (%p934) target = $region52
      $region51: #{decoder_forward.10} parent=39 // pred_region
        _
      $region52: #{decoder_forward.10} parent=39 // pred_fallthru
        _
      // Predicated region
      $region53: #{decoder_forward.10} parent=39 // pred_check
        %p937 = pneg %p153
      $region54: #{decoder_forward.10} parent=39 // pred_check_branch
        %939 = sbr.rel (%p937) target = $region56
      $region55: #{decoder_forward.10} parent=39 // pred_region
        _
      $region56: #{decoder_forward.10} parent=39 // pred_fallthru
        _
    $region40: #{decoder_forward.10} parent=5 // pred_fallthru
      _
    %p940 = scmp.le.s32.totalorder 2, %s11
    // Predicated region
    $region57: #{decoder_forward.10} parent=5 // pred_check
      %p941 = pneg %p940
    $region58: #{decoder_forward.10} parent=5 // pred_check_branch
      %943 = sbr.rel (%p941) target = $region60
    $region59: #{decoder_forward.10} parent=5 // pred_region
      %s944 = ssub.s32 %s11, 2
    $region60: #{decoder_forward.10} parent=5 // pred_fallthru
      _
  $region6: #{decoder_forward.10} parent=0 // loop_footer
    %s15 = sadd.s32 1, %s11
  $region7: #{decoder_forward.10} parent=0 // loop_footer_branch
    %10 = sbr.rel target = $region3
  $region8: #{decoder_forward.10} parent=0 // loop_exit
    _

// kernel: decoder_forward.11
$region0: #{decoder_forward.11}
  #allocation0 [shape = 'u32[]', space=smem, size = 0x4, offset = 0x4, fixed_abs, tag = 'smem constant byte address 0x4 - core index']
  #allocation1 [shape = 'u32[144,128]{1,0:T(1,128)}', space=vmem, size = 0x12000, scoped, tag = 'internal scratch']
  #allocation2 [shape = 'f32[16,1]{1,0:T(8,128)}', space=vmem, size = 0x2000, scoped, tag = 'scratch operand']
  %s0 = inlined_call_operand.vmem [shape: bf16[2,1,72,784], index: 0, kind: input, shape index: {}]
  %s1 = inlined_call_operand.vmem [shape: bf16[16,72], index: 1, kind: input, shape index: {}]
  %s2 = inlined_call_operand.vmem [shape: f32[16,1], index: 2, kind: input, shape index: {}]
  %s3 = inlined_call_operand.vmem [shape: f32[16,1], index: 3, kind: input, shape index: {}]
  %s4 = inlined_call_operand.vmem [shape: f32[16,16], index: 4, kind: input, shape index: {}]
  %s5 = inlined_call_operand.vmem [shape: f32[2,1,16,784], index: 5, kind: output, shape index: {}]
  %s6 = sld [smem:[#allocation0]]
  $region61: #{decoder_forward.11} parent=0
    _
  %s8 = ssub.s32 1, %s6
  %s9 = scalar_select 0, %s8, %s6
  loop: start=0, step=1, limit=4
  $region2: #{decoder_forward.11} parent=0 // loop_pre_header
    _
  $region3: #{decoder_forward.11} parent=0 // loop_header
    %s11 = sphi 0, %s15
    %p12 = scmp.ge.s32.totalorder %s11, 4
    %s18 = sphi 0, %s30
    %s19 = sphi 0, %s26
    %s20 = sphi 0, %s18
    %s21 = sphi 0, %s19
    %s22 = sphi 0, %s20
    %s23 = sphi 0, %s21
    %s35 = sphi 0, %s37
    %s38 = sphi 0, %s35
    %s39 = sphi 0, %s38
    %s55 = sphi 0, %s39
    %s59 = sphi 0, %s59
    %s61 = sphi 0, %s59
    %s62 = sphi 0, %s61
    %s76 = sphi 0, %s62
    %s80 = sphi 0, %s80
    %s82 = sphi 0, %s80
    %s83 = sphi 0, %s82
    %s97 = sphi 0, %s83
    %s101 = sphi 0, %s101
    %s103 = sphi 0, %s101
    %s104 = sphi 0, %s103
    %s118 = sphi 0, %s104
    %s122 = sphi 0, %s122
    %s124 = sphi 0, %s122
    %s125 = sphi 0, %s124
    %s139 = sphi 0, %s125
    %s143 = sphi 0, %s143
    %s145 = sphi 0, %s143
    %s146 = sphi 0, %s145
    %s160 = sphi 0, %s146
  $region4: #{decoder_forward.11} parent=0 // loop_header_branch
    %14 = sbr.rel (%p12) target = $region8
  $region5: #{decoder_forward.11} parent=0 // loop_body
    %s16 = ssub.s32 %s11, 1
    %s17 = ssub.s32 %s11, 2
    %s24 = sadd.s32 1, %s19
    %p25 = scmp.ge.s32.totalorder %s24, 1
    %s26 = scalar_select %p25, 0, %s24
    %s27 = sadd.s32 1, %s18
    %s28 = scalar_select %p25, %s27, %s18
    %p29 = scmp.ge.s32.totalorder %s28, 2
    %s30 = scalar_select %p29, 0, %s28
    %s31 = ssub.s32 %s18, %s30
    %s32 = ssub.s32 %s19, %s26
    %s33 = sor.u32 %s31, %s32
    %p34 = scmp.eq.s32.totalorder %s33, 0
    %s36 = sadd.s32 %s35, 1
    %s37 = scalar_select %p34, %s35, %s36
    %p40 = pneg %p34
    %p41 = scmp.eq.s32.totalorder %s11, 1
    %p42 = por %p40, %p41
    %p43 = scmp.ne.s32.totalorder %s35, %s38
    %p44 = scmp.eq.s32.totalorder %s11, 0
    %p45 = por %p43, %p44
    %p46 = scmp.ne.s32.totalorder %s35, %s38
    %p47 = scmp.eq.s32.totalorder %s16, 1
    %p48 = por %p46, %p47
    %p49 = scmp.ne.s32.totalorder %s38, %s39
    %p50 = scmp.eq.s32.totalorder %s16, 0
    %p51 = por %p49, %p50
    %p52 = scmp.ne.s32.totalorder %s38, %s39
    %p53 = scmp.eq.s32.totalorder %s17, 1
    %p54 = por %p52, %p53
    %p56 = scmp.ne.s32.totalorder %s39, %s55
    %p57 = scmp.eq.s32.totalorder %s17, 0
    %p58 = por %p56, %p57
    %s60 = sadd.s32 %s59, 1
    %p63 = scmp.eq.s32.totalorder %s11, 1
    %p64 = scmp.ne.s32.totalorder %s59, %s61
    %p65 = scmp.eq.s32.totalorder %s11, 0
    %p66 = por %p64, %p65
    %p67 = scmp.ne.s32.totalorder %s59, %s61
    %p68 = scmp.eq.s32.totalorder %s16, 1
    %p69 = por %p67, %p68
    %p70 = scmp.ne.s32.totalorder %s61, %s62
    %p71 = scmp.eq.s32.totalorder %s16, 0
    %p72 = por %p70, %p71
    %p73 = scmp.ne.s32.totalorder %s61, %s62
    %p74 = scmp.eq.s32.totalorder %s17, 1
    %p75 = por %p73, %p74
    %p77 = scmp.ne.s32.totalorder %s62, %s76
    %p78 = scmp.eq.s32.totalorder %s17, 0
    %p79 = por %p77, %p78
    %s81 = sadd.s32 %s80, 1
    %p84 = scmp.eq.s32.totalorder %s11, 1
    %p85 = scmp.ne.s32.totalorder %s80, %s82
    %p86 = scmp.eq.s32.totalorder %s11, 0
    %p87 = por %p85, %p86
    %p88 = scmp.ne.s32.totalorder %s80, %s82
    %p89 = scmp.eq.s32.totalorder %s16, 1
    %p90 = por %p88, %p89
    %p91 = scmp.ne.s32.totalorder %s82, %s83
    %p92 = scmp.eq.s32.totalorder %s16, 0
    %p93 = por %p91, %p92
    %p94 = scmp.ne.s32.totalorder %s82, %s83
    %p95 = scmp.eq.s32.totalorder %s17, 1
    %p96 = por %p94, %p95
    %p98 = scmp.ne.s32.totalorder %s83, %s97
    %p99 = scmp.eq.s32.totalorder %s17, 0
    %p100 = por %p98, %p99
    %s102 = sadd.s32 %s101, 1
    %p105 = scmp.eq.s32.totalorder %s11, 1
    %p106 = scmp.ne.s32.totalorder %s101, %s103
    %p107 = scmp.eq.s32.totalorder %s11, 0
    %p108 = por %p106, %p107
    %p109 = scmp.ne.s32.totalorder %s101, %s103
    %p110 = scmp.eq.s32.totalorder %s16, 1
    %p111 = por %p109, %p110
    %p112 = scmp.ne.s32.totalorder %s103, %s104
    %p113 = scmp.eq.s32.totalorder %s16, 0
    %p114 = por %p112, %p113
    %p115 = scmp.ne.s32.totalorder %s103, %s104
    %p116 = scmp.eq.s32.totalorder %s17, 1
    %p117 = por %p115, %p116
    %p119 = scmp.ne.s32.totalorder %s104, %s118
    %p120 = scmp.eq.s32.totalorder %s17, 0
    %p121 = por %p119, %p120
    %s123 = sadd.s32 %s122, 1
    %p126 = scmp.eq.s32.totalorder %s11, 1
    %p127 = scmp.ne.s32.totalorder %s122, %s124
    %p128 = scmp.eq.s32.totalorder %s11, 0
    %p129 = por %p127, %p128
    %p130 = scmp.ne.s32.totalorder %s122, %s124
    %p131 = scmp.eq.s32.totalorder %s16, 1
    %p132 = por %p130, %p131
    %p133 = scmp.ne.s32.totalorder %s124, %s125
    %p134 = scmp.eq.s32.totalorder %s16, 0
    %p135 = por %p133, %p134
    %p136 = scmp.ne.s32.totalorder %s124, %s125
    %p137 = scmp.eq.s32.totalorder %s17, 1
    %p138 = por %p136, %p137
    %p140 = scmp.ne.s32.totalorder %s125, %s139
    %p141 = scmp.eq.s32.totalorder %s17, 0
    %p142 = por %p140, %p141
    %s144 = sadd.s32 %s143, 1
    %p147 = scmp.eq.s32.totalorder %s11, 1
    %p148 = scmp.ne.s32.totalorder %s143, %s145
    %p149 = scmp.eq.s32.totalorder %s11, 0
    %p150 = por %p148, %p149
    %p151 = scmp.ne.s32.totalorder %s143, %s145
    %p152 = scmp.eq.s32.totalorder %s16, 1
    %p153 = por %p151, %p152
    %p154 = scmp.ne.s32.totalorder %s145, %s146
    %p155 = scmp.eq.s32.totalorder %s16, 0
    %p156 = por %p154, %p155
    %p157 = scmp.ne.s32.totalorder %s145, %s146
    %p158 = scmp.eq.s32.totalorder %s17, 1
    %p159 = por %p157, %p158
    %p161 = scmp.ne.s32.totalorder %s146, %s160
    %p162 = scmp.eq.s32.totalorder %s17, 0
    %p163 = por %p161, %p162
    %p164 = scmp.le.s32.totalorder 1, %s11
    %p165 = scmp.lt.s32.totalorder %s11, 3
    %p166 = pnand %p164, %p165
    %p167 = pneg %p166
    // Predicated region
    $region9: #{decoder_forward.11} parent=5 // pred_check
      _
    $region10: #{decoder_forward.11} parent=5 // pred_check_branch
      %169 = sbr.rel (%p166) target = $region12
    $region11: #{decoder_forward.11} parent=5 // pred_region
      %s170 = ssub.s32 %s11, 1
      // Predicated region
      $region13: #{decoder_forward.11} parent=11 // pred_check
        %p171 = pneg %p72
      $region14: #{decoder_forward.11} parent=11 // pred_check_branch
        %173 = sbr.rel (%p171) target = $region16
      $region15: #{decoder_forward.11} parent=11 // pred_region
        _
      $region16: #{decoder_forward.11} parent=11 // pred_fallthru
        _
      // Predicated region
      $region17: #{decoder_forward.11} parent=11 // pred_check
        %p174 = pneg %p93
      $region18: #{decoder_forward.11} parent=11 // pred_check_branch
        %176 = sbr.rel (%p174) target = $region20
      $region19: #{decoder_forward.11} parent=11 // pred_region
        _
      $region20: #{decoder_forward.11} parent=11 // pred_fallthru
        _
      // Predicated region
      $region21: #{decoder_forward.11} parent=11 // pred_check
        %p177 = pneg %p114
      $region22: #{decoder_forward.11} parent=11 // pred_check_branch
        %179 = sbr.rel (%p177) target = $region24
      $region23: #{decoder_forward.11} parent=11 // pred_region
        _
      $region24: #{decoder_forward.11} parent=11 // pred_fallthru
        _
      // Predicated region
      $region25: #{decoder_forward.11} parent=11 // pred_check
        %p180 = pneg %p135
      $region26: #{decoder_forward.11} parent=11 // pred_check_branch
        %182 = sbr.rel (%p180) target = $region28
      $region27: #{decoder_forward.11} parent=11 // pred_region
        _
      $region28: #{decoder_forward.11} parent=11 // pred_fallthru
        _
    $region12: #{decoder_forward.11} parent=5 // pred_fallthru
      _
    %p183 = scmp.lt.s32.totalorder %s11, 2
    // Predicated region
    $region29: #{decoder_forward.11} parent=5 // pred_check
      %p184 = pneg %p183
    $region30: #{decoder_forward.11} parent=5 // pred_check_branch
      %186 = sbr.rel (%p184) target = $region32
    $region31: #{decoder_forward.11} parent=5 // pred_region
      // Predicated region
      $region33: #{decoder_forward.11} parent=31 // pred_check
        %p187 = pneg %p45
      $region34: #{decoder_forward.11} parent=31 // pred_check_branch
        %189 = sbr.rel (%p187) target = $region36
      $region35: #{decoder_forward.11} parent=31 // pred_region
        %p190 = scmp.lt.s32.totalorder %s18, 1
        %s191 = scalar_select %p190, %s18, 1
        %p192 = scmp.lt.s32.totalorder %s19, 0
        %s193 = scalar_select %p192, %s19, 0
        %s194 = smul.addr %s193, 63
        %s195 = smul.addr %s191, 63
        %s196 = sadd.s32 %s194, %s195
        %s197 = smul.addr %s196, 4
        %s198 = scalar_lea.vmem %s0, %s197
      $region36: #{decoder_forward.11} parent=31 // pred_fallthru
        _
    $region32: #{decoder_forward.11} parent=5 // pred_fallthru
      _
    %p199 = scmp.le.s32.totalorder 1, %s11
    %p200 = scmp.lt.s32.totalorder %s11, 3
    %p201 = pnand %p199, %p200
    %p202 = pneg %p201
    // Predicated region
    $region37: #{decoder_forward.11} parent=5 // pred_check
      _
    $region38: #{decoder_forward.11} parent=5 // pred_check_branch
      %204 = sbr.rel (%p201) target = $region40
    $region39: #{decoder_forward.11} parent=5 // pred_region
      %s205 = ssub.s32 %s11, 1
      %p206 = scmp.lt.s32.totalorder %s20, 1
      %s207 = scalar_select %p206, %s20, 1
      %p208 = scmp.lt.s32.totalorder %s21, 0
      %s209 = scalar_select %p208, %s21, 0
      %s210 = smul.addr %s209, 63
      %s211 = smul.addr %s207, 63
      %s212 = sadd.s32 %s210, %s211
      %s213 = smul.addr %s212, 4
      %s214 = scalar_lea.vmem %s0, %s213
      %p215 = pneg %p51
      %p216 = pneg %p48
      %p217 = pneg %p72
      %p218 = pneg %p69
      %p219 = pneg %p93
      %p220 = pneg %p90
      %p221 = pneg %p114
      %p222 = pneg %p111
      %p223 = pneg %p135
      %p224 = pneg %p132
      %p225 = pneg %p156
      %p226 = pneg %p153
      %p227 = scmp.lt.s32.totalorder %s20, 1
      %s228 = scalar_select %p227, %s20, 1
      %p229 = scmp.lt.s32.totalorder %s21, 0
      %s230 = scalar_select %p229, %s21, 0
      %s231 = smul.addr %s230, 63
      %s232 = smul.addr %s228, 63
      %s233 = sadd.s32 %s231, %s232
      %s234 = smul.addr %s233, 4
      %s235 = scalar_lea.vmem %s0, %s234
      %p237 = scmp.eq.s32.totalorder %s20, 0
      %p238 = scmp.eq.s32.totalorder %s21, 0
      %p239 = pnand %p237, %p238
      %p240 = pneg %p239
      %p241 = scmp.eq.s32.totalorder %s20, 1
      %p242 = pnand %p241, %p238
      %p243 = pneg %p242
      // Predicated region
      $region41: #{decoder_forward.11} parent=39 // pred_check
        _
      $region42: #{decoder_forward.11} parent=39 // pred_check_branch
        %245 = sbr.rel (%p239) target = $region44
      $region43: #{decoder_forward.11} parent=39 // pred_region
        %vm246 = vcmask 7168
        %247 = vst.msk [vmem:[#allocation2] sm:$0xff] %vm246, 0.0
        %248 = vst.msk [vmem:[#allocation2 + $0x8] sm:$0xff] %vm246, 0.0
      $region44: #{decoder_forward.11} parent=39 // pred_fallthru
        _
      %v249 = vld [vmem:[%s1] sm:$0xf]
      %v250 = vld [vmem:[%s1 + $0x4] sm:$0xf]
      %v251 = vld [vmem:[%s235] sm:$0xff]
      %v252 = vld [vmem:[%s235 + $0x8] sm:$0xff]
      %v253 = vld [vmem:[%s235 + $0x10] sm:$0xff]
      %v254 = vld [vmem:[%s235 + $0x18] sm:$0xf]
      %v255 = vld [vmem:[%s235 + $0x1c] sm:$0xff]
      %v256 = vld [vmem:[%s235 + $0x24] sm:$0xff]
      %v257 = vld [vmem:[%s235 + $0x2c] sm:$0xff]
      %v258 = vld [vmem:[%s235 + $0x34] sm:$0xf]
      %v259 = vld [vmem:[%s235 + $0x38] sm:$0xff]
      %v260 = vld [vmem:[%s235 + $0x40] sm:$0xff]
      %v261 = vld [vmem:[%s235 + $0x48] sm:$0xff]
      %v262 = vld [vmem:[%s235 + $0x50] sm:$0xf]
      %v263 = vld [vmem:[%s235 + $0x54] sm:$0xff]
      %v264 = vld [vmem:[%s235 + $0x5c] sm:$0xff]
      %v265 = vld [vmem:[%s235 + $0x64] sm:$0xff]
      %v266 = vld [vmem:[%s235 + $0x6c] sm:$0xf]
      %v267 = vld [vmem:[%s235 + $0x70] sm:$0xff]
      %v268 = vld [vmem:[%s235 + $0x78] sm:$0xff]
      %v269 = vld [vmem:[%s235 + $0x80] sm:$0xff]
      %v270 = vld [vmem:[%s235 + $0x88] sm:$0xf]
      %v271 = vld [vmem:[%s235 + $0x8c] sm:$0xff]
      %v272 = vld [vmem:[%s235 + $0x94] sm:$0xff]
      %v273 = vld [vmem:[%s235 + $0x9c] sm:$0xff]
      %v274 = vld [vmem:[%s235 + $0xa4] sm:$0xf]
      %v275 = vld [vmem:[%s235 + $0xa8] sm:$0xff]
      %v276 = vld [vmem:[%s235 + $0xb0] sm:$0xff]
      %v277 = vld [vmem:[%s235 + $0xb8] sm:$0xff]
      %v278 = vld [vmem:[%s235 + $0xc0] sm:$0xf]
      %v279 = vld [vmem:[%s235 + $0xc4] sm:$0xff]
      %v280 = vld [vmem:[%s235 + $0xcc] sm:$0xff]
      %v281 = vld [vmem:[%s235 + $0xd4] sm:$0xff]
      %v282 = vld [vmem:[%s235 + $0xdc] sm:$0xf]
      %v283 = vld [vmem:[%s235 + $0xe0] sm:$0xff]
      %v284 = vld [vmem:[%s235 + $0xe8] sm:$0xff]
      %v285 = vld [vmem:[%s235 + $0xf0] sm:$0xff]
      %v286 = vld [vmem:[%s235 + $0xf8] sm:$0xf]
      %v289 = vunpack.c.l.b16 %v249
      %v290 = vunpack.c.l.b16 %v250
      %v291 = vpack.c.b16 %v290, %v289
      %v328 = vunpack.c.l.b16 %v251
      %v329 = vunpack.c.h.b16 %v251
      %v330 = vunpack.c.l.b16 %v252
      %v331 = vunpack.c.h.b16 %v252
      %v332 = vunpack.c.l.b16 %v253
      %v333 = vunpack.c.h.b16 %v253
      %v334 = vunpack.c.l.b16 %v254
      %v335 = vunpack.c.l.b16 %v255
      %v336 = vunpack.c.h.b16 %v255
      %v337 = vunpack.c.l.b16 %v256
      %v338 = vunpack.c.h.b16 %v256
      %v339 = vunpack.c.l.b16 %v257
      %v340 = vunpack.c.h.b16 %v257
      %v341 = vunpack.c.l.b16 %v258
      %v342 = vunpack.c.l.b16 %v259
      %v343 = vunpack.c.h.b16 %v259
      %v344 = vunpack.c.l.b16 %v260
      %v345 = vunpack.c.h.b16 %v260
      %v346 = vunpack.c.l.b16 %v261
      %v347 = vunpack.c.h.b16 %v261
      %v348 = vunpack.c.l.b16 %v262
      %v349 = vunpack.c.l.b16 %v263
      %v350 = vunpack.c.h.b16 %v263
      %v351 = vunpack.c.l.b16 %v264
      %v352 = vunpack.c.h.b16 %v264
      %v353 = vunpack.c.l.b16 %v265
      %v354 = vunpack.c.h.b16 %v265
      %v355 = vunpack.c.l.b16 %v266
      %v356 = vunpack.c.l.b16 %v267
      %v357 = vunpack.c.h.b16 %v267
      %v358 = vunpack.c.l.b16 %v268
      %v359 = vunpack.c.h.b16 %v268
      %v360 = vunpack.c.l.b16 %v269
      %v361 = vunpack.c.h.b16 %v269
      %v362 = vunpack.c.l.b16 %v270
      %v363 = vunpack.c.l.b16 %v271
      %v364 = vunpack.c.h.b16 %v271
      %v365 = vunpack.c.l.b16 %v272
      %v366 = vunpack.c.h.b16 %v272
      %v367 = vunpack.c.l.b16 %v273
      %v368 = vunpack.c.h.b16 %v273
      %v369 = vunpack.c.l.b16 %v274
      %v370 = vunpack.c.l.b16 %v275
      %v371 = vunpack.c.h.b16 %v275
      %v372 = vunpack.c.l.b16 %v276
      %v373 = vunpack.c.h.b16 %v276
      %v374 = vunpack.c.l.b16 %v277
      %v375 = vunpack.c.h.b16 %v277
      %v376 = vunpack.c.l.b16 %v278
      %v377 = vunpack.c.l.b16 %v279
      %v378 = vunpack.c.h.b16 %v279
      %v379 = vunpack.c.l.b16 %v280
      %v380 = vunpack.c.h.b16 %v280
      %v381 = vunpack.c.l.b16 %v281
      %v382 = vunpack.c.h.b16 %v281
      %v383 = vunpack.c.l.b16 %v282
      %v384 = vunpack.c.l.b16 %v283
      %v385 = vunpack.c.h.b16 %v283
      %v386 = vunpack.c.l.b16 %v284
      %v387 = vunpack.c.h.b16 %v284
      %v388 = vunpack.c.l.b16 %v285
      %v389 = vunpack.c.h.b16 %v285
      %v390 = vunpack.c.l.b16 %v286
      %v391 = vpack.c.b16 %v335, %v328
      %v392 = vpack.c.b16 %v336, %v329
      %v393 = vpack.c.b16 %v337, %v330
      %v394 = vpack.c.b16 %v338, %v331
      %v395 = vpack.c.b16 %v339, %v332
      %v396 = vpack.c.b16 %v340, %v333
      %v397 = vpack.c.b16 %v341, %v334
      %v398 = vpack.c.b16 %v349, %v342
      %v399 = vpack.c.b16 %v350, %v343
      %v400 = vpack.c.b16 %v351, %v344
      %v401 = vpack.c.b16 %v352, %v345
      %v402 = vpack.c.b16 %v353, %v346
      %v403 = vpack.c.b16 %v354, %v347
      %v404 = vpack.c.b16 %v355, %v348
      %v405 = vpack.c.b16 %v363, %v356
      %v406 = vpack.c.b16 %v364, %v357
      %v407 = vpack.c.b16 %v365, %v358
      %v408 = vpack.c.b16 %v366, %v359
      %v409 = vpack.c.b16 %v367, %v360
      %v410 = vpack.c.b16 %v368, %v361
      %v411 = vpack.c.b16 %v369, %v362
      %v412 = vpack.c.b16 %v377, %v370
      %v413 = vpack.c.b16 %v378, %v371
      %v414 = vpack.c.b16 %v379, %v372
      %v415 = vpack.c.b16 %v380, %v373
      %v416 = vpack.c.b16 %v381, %v374
      %v417 = vpack.c.b16 %v382, %v375
      %v418 = vpack.c.b16 %v383, %v376
      %v419 = vpack.c.b16 %v384, %v384
      %v420 = vpack.c.b16 %v385, %v385
      %v421 = vpack.c.b16 %v386, %v386
      %v422 = vpack.c.b16 %v387, %v387
      %v423 = vpack.c.b16 %v388, %v388
      %v424 = vpack.c.b16 %v389, %v389
      %v425 = vpack.c.b16 %v390, %v390
      %vm454 = vcmask 588800
      %v456 = vsel %vm454, %v291, 0
      %vm458 = vcmask 1043456
      %v460 = vsel %vm458, %v419, 0
      %v463 = vsel %vm458, %v420, 0
      %v466 = vsel %vm458, %v421, 0
      %v469 = vsel %vm458, %v422, 0
      %v472 = vsel %vm458, %v423, 0
      %v475 = vsel %vm458, %v424, 0
      %v478 = vsel %vm458, %v425, 0
      %480 = vmatprep.subr.bf16.mxu0 %v392
      %481 = vmatpush1.bf16.msra.mxu0 %v391
      %482 = vmatprep.subr.bf16.mxu0 %v399
      %483 = vmatpush1.bf16.msra.mxu0 %v398
      %484 = vmatprep.subr.bf16.mxu0 %v406
      %485 = vmatpush1.bf16.msra.mxu0 %v405
      %486 = vmatprep.subr.bf16.mxu0 %v413
      %487 = vmatpush1.bf16.msra.mxu0 %v412
      %488 = vmatprep.subr.bf16.mxu0 %v463
      %489 = vmatpush1.bf16.msra.mxu0 %v460
      %490 = vmatprep.subr.bf16.mxu0 0
      %491 = vmatpush1.bf16.msra.mxu0 0
      %492 = vmatprep.subr.bf16.mxu0 0
      %493 = vmatpush1.bf16.msra.mxu0 0
      %494 = vmatprep.subr.bf16.mxu0 0
      %495 = vmatpush1.bf16.msra.mxu0 0
      %496 = vmatprep.subr.bf16.mxu0 0
      %497 = vmatpush1.bf16.msra.mxu0 0
      %498 = vmatprep.subr.bf16.mxu0 0
      %499 = vmatpush1.bf16.msra.mxu0 0
      %500 = vmatprep.subr.bf16.mxu0 0
      %501 = vmatpush1.bf16.msra.mxu0 0
      %502 = vmatprep.subr.bf16.mxu0 0
      %503 = vmatpush1.bf16.msra.mxu0 0
      %504 = vmatprep.subr.bf16.mxu0 0
      %505 = vmatpush1.bf16.msra.mxu0 0
      %506 = vmatprep.subr.bf16.mxu0 0
      %507 = vmatpush1.bf16.msra.mxu0 0
      %508 = vmatprep.subr.bf16.mxu0 0
      %509 = vmatpush1.bf16.msra.mxu0 0
      %510 = vmatprep.subr.bf16.mxu0 0
      %511 = vmatpush1.bf16.msra.mxu0 0
      %512 = vmatprep.mubr.bf16.mxu0 0
      %513 = vmatmul.mubr.bf16.gmra.mrb[0].mxu0 %v456
      %v514 = vpop.f32.mrb[0].mxu0
      %v515 = vadd.f32 0.0, %v514
      %v516 = vpop.f32.mrb[0].mxu0
      %v517 = vadd.f32 0.0, %v516
      %v518 = vpop.f32.mrb[0].mxu0
      %v519 = vadd.f32 0.0, %v518
      %v520 = vpop.f32.mrb[0].mxu0
      %v521 = vadd.f32 0.0, %v520
      %522 = vdwg.mxu0
      %523 = vmatprep.subr.bf16.mxu0 %v394
      %524 = vmatpush1.bf16.msra.mxu0 %v393
      %525 = vmatprep.subr.bf16.mxu0 %v401
      %526 = vmatpush1.bf16.msra.mxu0 %v400
      %527 = vmatprep.subr.bf16.mxu0 %v408
      %528 = vmatpush1.bf16.msra.mxu0 %v407
      %529 = vmatprep.subr.bf16.mxu0 %v415
      %530 = vmatpush1.bf16.msra.mxu0 %v414
      %531 = vmatprep.subr.bf16.mxu0 %v469
      %532 = vmatpush1.bf16.msra.mxu0 %v466
      %533 = vmatprep.subr.bf16.mxu0 0
      %534 = vmatpush1.bf16.msra.mxu0 0
      %535 = vmatprep.subr.bf16.mxu0 0
      %536 = vmatpush1.bf16.msra.mxu0 0
      %537 = vmatprep.subr.bf16.mxu0 0
      %538 = vmatpush1.bf16.msra.mxu0 0
      %539 = vmatprep.subr.bf16.mxu0 0
      %540 = vmatpush1.bf16.msra.mxu0 0
      %541 = vmatprep.subr.bf16.mxu0 0
      %542 = vmatpush1.bf16.msra.mxu0 0
      %543 = vmatprep.subr.bf16.mxu0 0
      %544 = vmatpush1.bf16.msra.mxu0 0
      %545 = vmatprep.subr.bf16.mxu0 0
      %546 = vmatpush1.bf16.msra.mxu0 0
      %547 = vmatprep.subr.bf16.mxu0 0
      %548 = vmatpush1.bf16.msra.mxu0 0
      %549 = vmatprep.subr.bf16.mxu0 0
      %550 = vmatpush1.bf16.msra.mxu0 0
      %551 = vmatprep.subr.bf16.mxu0 0
      %552 = vmatpush1.bf16.msra.mxu0 0
      %553 = vmatprep.subr.bf16.mxu0 0
      %554 = vmatpush1.bf16.msra.mxu0 0
      %555 = vmatprep.mubr.bf16.mxu0 0
      %556 = vmatmul.mubr.bf16.gmra.mrb[0].mxu0 %v456
      %v557 = vpop.f32.mrb[0].mxu0
      %v558 = vadd.f32 0.0, %v557
      %v559 = vpop.f32.mrb[0].mxu0
      %v560 = vadd.f32 0.0, %v559
      %v561 = vpop.f32.mrb[0].mxu0
      %v562 = vadd.f32 0.0, %v561
      %v563 = vpop.f32.mrb[0].mxu0
      %v564 = vadd.f32 0.0, %v563
      %565 = vdwg.mxu0
      %566 = vmatprep.subr.bf16.mxu0 %v396
      %567 = vmatpush1.bf16.msra.mxu0 %v395
      %568 = vmatprep.subr.bf16.mxu0 %v403
      %569 = vmatpush1.bf16.msra.mxu0 %v402
      %570 = vmatprep.subr.bf16.mxu0 %v410
      %571 = vmatpush1.bf16.msra.mxu0 %v409
      %572 = vmatprep.subr.bf16.mxu0 %v417
      %573 = vmatpush1.bf16.msra.mxu0 %v416
      %574 = vmatprep.subr.bf16.mxu0 %v475
      %575 = vmatpush1.bf16.msra.mxu0 %v472
      %576 = vmatprep.subr.bf16.mxu0 0
      %577 = vmatpush1.bf16.msra.mxu0 0
      %578 = vmatprep.subr.bf16.mxu0 0
      %579 = vmatpush1.bf16.msra.mxu0 0
      %580 = vmatprep.subr.bf16.mxu0 0
      %581 = vmatpush1.bf16.msra.mxu0 0
      %582 = vmatprep.subr.bf16.mxu0 0
      %583 = vmatpush1.bf16.msra.mxu0 0
      %584 = vmatprep.subr.bf16.mxu0 0
      %585 = vmatpush1.bf16.msra.mxu0 0
      %586 = vmatprep.subr.bf16.mxu0 0
      %587 = vmatpush1.bf16.msra.mxu0 0
      %588 = vmatprep.subr.bf16.mxu0 0
      %589 = vmatpush1.bf16.msra.mxu0 0
      %590 = vmatprep.subr.bf16.mxu0 0
      %591 = vmatpush1.bf16.msra.mxu0 0
      %592 = vmatprep.subr.bf16.mxu0 0
      %593 = vmatpush1.bf16.msra.mxu0 0
      %594 = vmatprep.subr.bf16.mxu0 0
      %595 = vmatpush1.bf16.msra.mxu0 0
      %596 = vmatprep.subr.bf16.mxu0 0
      %597 = vmatpush1.bf16.msra.mxu0 0
      %598 = vmatprep.mubr.bf16.mxu0 0
      %599 = vmatmul.mubr.bf16.gmra.mrb[0].mxu0 %v456
      %v600 = vpop.f32.mrb[0].mxu0
      %v601 = vadd.f32 0.0, %v600
      %v602 = vpop.f32.mrb[0].mxu0
      %v603 = vadd.f32 0.0, %v602
      %v604 = vpop.f32.mrb[0].mxu0
      %v605 = vadd.f32 0.0, %v604
      %v606 = vpop.f32.mrb[0].mxu0
      %v607 = vadd.f32 0.0, %v606
      %608 = vdwg.mxu0
      %609 = vmatprep.subr.bf16.mxu0 0
      %610 = vmatpush1.bf16.msra.mxu0 %v397
      %611 = vmatprep.subr.bf16.mxu0 0
      %612 = vmatpush1.bf16.msra.mxu0 %v404
      %613 = vmatprep.subr.bf16.mxu0 0
      %614 = vmatpush1.bf16.msra.mxu0 %v411
      %615 = vmatprep.subr.bf16.mxu0 0
      %616 = vmatpush1.bf16.msra.mxu0 %v418
      %617 = vmatprep.subr.bf16.mxu0 0
      %618 = vmatpush1.bf16.msra.mxu0 %v478
      %619 = vmatprep.subr.bf16.mxu0 0
      %620 = vmatpush1.bf16.msra.mxu0 0
      %621 = vmatprep.subr.bf16.mxu0 0
      %622 = vmatpush1.bf16.msra.mxu0 0
      %623 = vmatprep.subr.bf16.mxu0 0
      %624 = vmatpush1.bf16.msra.mxu0 0
      %625 = vmatprep.subr.bf16.mxu0 0
      %626 = vmatpush1.bf16.msra.mxu0 0
      %627 = vmatprep.subr.bf16.mxu0 0
      %628 = vmatpush1.bf16.msra.mxu0 0
      %629 = vmatprep.subr.bf16.mxu0 0
      %630 = vmatpush1.bf16.msra.mxu0 0
      %631 = vmatprep.subr.bf16.mxu0 0
      %632 = vmatpush1.bf16.msra.mxu0 0
      %633 = vmatprep.subr.bf16.mxu0 0
      %634 = vmatpush1.bf16.msra.mxu0 0
      %635 = vmatprep.subr.bf16.mxu0 0
      %636 = vmatpush1.bf16.msra.mxu0 0
      %637 = vmatprep.subr.bf16.mxu0 0
      %638 = vmatpush1.bf16.msra.mxu0 0
      %639 = vmatprep.subr.bf16.mxu0 0
      %640 = vmatpush1.bf16.msra.mxu0 0
      %641 = vmatprep.mubr.bf16.mxu0 0
      %642 = vmatmul.mubr.bf16.gmra.mrb[0].mxu0 %v456
      %v643 = vpop.f32.mrb[0].mxu0
      %v644 = vadd.f32 0.0, %v643
      %v645 = vpop.f32.mrb[0].mxu0
      %v646 = vpop.f32.mrb[0].mxu0
      %v647 = vadd.f32 0.0, %v646
      %v648 = vpop.f32.mrb[0].mxu0
      %649 = vdwg.mxu0
      %s650 = smul.u32 %s21, 14
      %s651 = smul.u32 %s20, 14
      %s652 = sadd.s32 %s650, %s651
      %s653 = smul.addr %s652, 8
      %s654 = scalar_lea.vmem %s5, %s653
      %655 = vst [vmem:[%s654] sm:$0xff] %v515
      %656 = vst [vmem:[%s654 + $0x8] sm:$0xff] %v517
      %657 = vst [vmem:[%s654 + $0x10] sm:$0xff] %v558
      %658 = vst [vmem:[%s654 + $0x18] sm:$0xff] %v560
      %659 = vst [vmem:[%s654 + $0x20] sm:$0xff] %v601
      %660 = vst [vmem:[%s654 + $0x28] sm:$0xff] %v603
      %vm661 = vcmask 130048
      %662 = vst.msk [vmem:[%s654 + $0x30] sm:$0xff] %vm661, %v644
      %663 = vst [vmem:[%s654 + $0x38] sm:$0xff] %v519
      %664 = vst [vmem:[%s654 + $0x40] sm:$0xff] %v521
      %665 = vst [vmem:[%s654 + $0x48] sm:$0xff] %v562
      %666 = vst [vmem:[%s654 + $0x50] sm:$0xff] %v564
      %667 = vst [vmem:[%s654 + $0x58] sm:$0xff] %v605
      %668 = vst [vmem:[%s654 + $0x60] sm:$0xff] %v607
      %669 = vst.msk [vmem:[%s654 + $0x68] sm:$0xff] %vm661, %v647
      %v670 = vld [vmem:[#allocation2] sm:$0xff]
      %v671 = vld [vmem:[#allocation2 + $0x8] sm:$0xff]
      %v672 = vadd.f32 %v515, %v517
      %v673 = vadd.f32 %v672, %v558
      %v674 = vadd.f32 %v673, %v560
      %v675 = vadd.f32 %v674, %v601
      %v676 = vadd.f32 %v675, %v603
      %v677 = vsel %vm661, %v644, 0.0
      %v678 = vadd.f32 %v676, %v677
      %679 = vadd.xlane.f32.xlu0 %v678
      %v680 = vpop.xlane.xlu0 %679
      %v681 = vadd.f32 %v519, %v521
      %v682 = vadd.f32 %v681, %v562
      %v683 = vadd.f32 %v682, %v564
      %v684 = vadd.f32 %v683, %v605
      %v685 = vadd.f32 %v684, %v607
      %v686 = vsel %vm661, %v647, 0.0
      %v687 = vadd.f32 %v685, %v686
      %688 = vadd.xlane.f32.xlu0 %v687
      %v689 = vpop.xlane.xlu0 %688
      %v690 = vadd.f32 %v670, %v680
      %v691 = vadd.f32 %v671, %v689
      %vm692 = vcmask 7168
      %693 = vst.msk [vmem:[#allocation2] sm:$0xff] %vm692, %v690
      %694 = vst.msk [vmem:[#allocation2 + $0x8] sm:$0xff] %vm692, %v691
      // Predicated region
      $region45: #{decoder_forward.11} parent=39 // pred_check
        _
      $region46: #{decoder_forward.11} parent=39 // pred_check_branch
        %696 = sbr.rel (%p242) target = $region48
      $region47: #{decoder_forward.11} parent=39 // pred_region
        %v697 = vld [vmem:[%s4] sm:$0xff]
        %v698 = vld [vmem:[%s4 + $0x8] sm:$0xff]
        %v699 = vld [vmem:[#allocation2] sm:$0xff]
        %v700 = vld [vmem:[#allocation2 + $0x8] sm:$0xff]
        %v702 = vsel %vm661, %v697, 0
        %v705 = vsel %vm661, %v698, 0
        %707 = vmatprep.subr.mxu0 0.0
        %708 = vmatpush1.msra.mxu0 %v699
        %709 = vmatprep.subr.mxu0 0.0
        %710 = vmatpush1.msra.mxu0 %v700
        %711 = vmatprep.subr.mxu0 0.0
        %712 = vmatpush1.msra.mxu0 0.0
        %713 = vmatprep.subr.mxu0 0.0
        %714 = vmatpush1.msra.mxu0 0.0
        %715 = vmatprep.subr.mxu0 0.0
        %716 = vmatpush1.msra.mxu0 0.0
        %717 = vmatprep.subr.mxu0 0.0
        %718 = vmatpush1.msra.mxu0 0.0
        %719 = vmatprep.subr.mxu0 0.0
        %720 = vmatpush1.msra.mxu0 0.0
        %721 = vmatprep.subr.mxu0 0.0
        %722 = vmatpush1.msra.mxu0 0.0
        %723 = vmatprep.subr.mxu0 0.0
        %724 = vmatpush1.msra.mxu0 0.0
        %725 = vmatprep.subr.mxu0 0.0
        %726 = vmatpush1.msra.mxu0 0.0
        %727 = vmatprep.subr.mxu0 0.0
        %728 = vmatpush1.msra.mxu0 0.0
        %729 = vmatprep.subr.mxu0 0.0
        %730 = vmatpush1.msra.mxu0 0.0
        %731 = vmatprep.subr.mxu0 0.0
        %732 = vmatpush1.msra.mxu0 0.0
        %733 = vmatprep.subr.mxu0 0.0
        %734 = vmatpush1.msra.mxu0 0.0
        %735 = vmatprep.subr.mxu0 0.0
        %736 = vmatpush1.msra.mxu0 0.0
        %737 = vmatprep.subr.mxu0 0.0
        %738 = vmatpush1.msra.mxu0 0.0
        %739 = vmatprep.subr.mxu0 0.0
        %740 = vmatpush1.msra.mxu0 0.0
        %741 = vmatprep.subr.mxu0 0.0
        %742 = vmatpush1.msra.mxu0 0.0
        %743 = vmatprep.subr.mxu0 0.0
        %744 = vmatpush1.msra.mxu0 0.0
        %745 = vmatprep.subr.mxu0 0.0
        %746 = vmatpush1.msra.mxu0 0.0
        %747 = vmatprep.subr.mxu0 0.0
        %748 = vmatpush1.msra.mxu0 0.0
        %749 = vmatprep.subr.mxu0 0.0
        %750 = vmatpush1.msra.mxu0 0.0
        %751 = vmatprep.subr.mxu0 0.0
        %752 = vmatpush1.msra.mxu0 0.0
        %753 = vmatprep.subr.mxu0 0.0
        %754 = vmatpush1.msra.mxu0 0.0
        %755 = vmatprep.subr.mxu0 0.0
        %756 = vmatpush1.msra.mxu0 0.0
        %757 = vmatprep.subr.mxu0 0.0
        %758 = vmatpush1.msra.mxu0 0.0
        %759 = vmatprep.subr.mxu0 0.0
        %760 = vmatpush1.msra.mxu0 0.0
        %761 = vmatprep.subr.mxu0 0.0
        %762 = vmatpush1.msra.mxu0 0.0
        %763 = vmatprep.subr.mxu0 0.0
        %764 = vmatpush1.msra.mxu0 0.0
        %765 = vmatprep.subr.mxu0 0.0
        %766 = vmatpush1.msra.mxu0 0.0
        %767 = vmatprep.subr.mxu0 0.0
        %768 = vmatpush1.msra.mxu0 0.0
        %769 = vmatprep.subr.mxu0 0.0
        %770 = vmatpush1.msra.mxu0 0.0
        %771 = vmatprep.mubr.f32.mxu0 0.0
        %772 = vmatmul.mubr.f32.gmra.mrb[0].mxu0 %v702
        %v773 = vpop.f32.mrb[0].mxu0
        %v774 = vadd.f32 0.0, %v773
        %v775 = vpop.f32.mrb[0].mxu0
        %776 = vmatprep.mubr.f32.mxu0 0.0
        %777 = vmatmul.mubr.f32.gmra.mrb[0].mxu0 %v705
        %v778 = vpop.f32.mrb[0].mxu0
        %v779 = vadd.f32 0.0, %v778
        %v780 = vpop.f32.mrb[0].mxu0
        %781 = vdwg.mxu0
        %v782 = vmul.f32 %v774, 0.00015943877
        %v783 = vmul.f32 %v779, 0.00015943877
        %v784 = vld [vmem:[%s5] sm:$0xff]
        %v785 = vld [vmem:[%s5 + $0x8] sm:$0xff]
        %v786 = vld [vmem:[%s5 + $0x10] sm:$0xff]
        %v787 = vld [vmem:[%s5 + $0x18] sm:$0xff]
        %v788 = vld [vmem:[%s5 + $0x20] sm:$0xff]
        %v789 = vld [vmem:[%s5 + $0x28] sm:$0xff]
        %v790 = vld [vmem:[%s5 + $0x30] sm:$0xff]
        %v791 = vld [vmem:[%s5 + $0x38] sm:$0xff]
        %v792 = vld [vmem:[%s5 + $0x40] sm:$0xff]
        %v793 = vld [vmem:[%s5 + $0x48] sm:$0xff]
        %v794 = vld [vmem:[%s5 + $0x50] sm:$0xff]
        %v795 = vld [vmem:[%s5 + $0x58] sm:$0xff]
        %v796 = vld [vmem:[%s5 + $0x60] sm:$0xff]
        %v797 = vld [vmem:[%s5 + $0x68] sm:$0xff]
        %799 = vset.pattern.permute.xlu0 0
        %800 = vperm.xlu0 %799, %v782
        %v801 = vpop.permute.xlu0 %800
        %804 = vset.pattern.permute.xlu0 0
        %805 = vperm.xlu0 %804, %v783
        %v806 = vpop.permute.xlu0 %805
        %v808 = vsub.f32 %v784, %v801
        %v809 = vsub.f32 %v785, %v801
        %v810 = vsub.f32 %v786, %v801
        %v811 = vsub.f32 %v787, %v801
        %v812 = vsub.f32 %v788, %v801
        %v813 = vsub.f32 %v789, %v801
        %v814 = vsub.f32 %v790, %v801
        %v815 = vsub.f32 %v791, %v806
        %v816 = vsub.f32 %v792, %v806
        %v817 = vsub.f32 %v793, %v806
        %v818 = vsub.f32 %v794, %v806
        %v819 = vsub.f32 %v795, %v806
        %v820 = vsub.f32 %v796, %v806
        %v821 = vsub.f32 %v797, %v806
        %v822 = vmul.f32 %v808, %v808
        %v823 = vmul.f32 %v809, %v809
        %v824 = vmul.f32 %v810, %v810
        %v825 = vmul.f32 %v811, %v811
        %v826 = vmul.f32 %v812, %v812
        %v827 = vmul.f32 %v813, %v813
        %v828 = vmul.f32 %v814, %v814
        %v829 = vmul.f32 %v815, %v815
        %v830 = vmul.f32 %v816, %v816
        %v831 = vmul.f32 %v817, %v817
        %v832 = vmul.f32 %v818, %v818
        %v833 = vmul.f32 %v819, %v819
        %v834 = vmul.f32 %v820, %v820
        %v835 = vmul.f32 %v821, %v821
        %v836 = vadd.f32 %v822, %v823
        %v837 = vadd.f32 %v836, %v824
        %v838 = vadd.f32 %v837, %v825
        %v839 = vadd.f32 %v838, %v826
        %v840 = vadd.f32 %v839, %v827
        %v841 = vsel %vm661, %v828, 0.0
        %v842 = vadd.f32 %v840, %v841
        %843 = vadd.xlane.f32.xlu0 %v842
        %v844 = vpop.xlane.xlu0 %843
        %v845 = vadd.f32 %v829, %v830
        %v846 = vadd.f32 %v845, %v831
        %v847 = vadd.f32 %v846, %v832
        %v848 = vadd.f32 %v847, %v833
        %v849 = vadd.f32 %v848, %v834
        %v850 = vsel %vm661, %v835, 0.0
        %v851 = vadd.f32 %v849, %v850
        %852 = vadd.xlane.f32.xlu0 %v851
        %v853 = vpop.xlane.xlu0 %852
        %v854 = vadd.f32 %v844, 0.0
        %v855 = vadd.f32 %v853, 0.0
        %s856 = scalar_lea.vmem %s5, 112
        %v857 = vld [vmem:[%s856] sm:$0xff]
        %v858 = vld [vmem:[%s856 + $0x8] sm:$0xff]
        %v859 = vld [vmem:[%s856 + $0x10] sm:$0xff]
        %v860 = vld [vmem:[%s856 + $0x18] sm:$0xff]
        %v861 = vld [vmem:[%s856 + $0x20] sm:$0xff]
        %v862 = vld [vmem:[%s856 + $0x28] sm:$0xff]
        %v863 = vld [vmem:[%s856 + $0x30] sm:$0xff]
        %v864 = vld [vmem:[%s856 + $0x38] sm:$0xff]
        %v865 = vld [vmem:[%s856 + $0x40] sm:$0xff]
        %v866 = vld [vmem:[%s856 + $0x48] sm:$0xff]
        %v867 = vld [vmem:[%s856 + $0x50] sm:$0xff]
        %v868 = vld [vmem:[%s856 + $0x58] sm:$0xff]
        %v869 = vld [vmem:[%s856 + $0x60] sm:$0xff]
        %v870 = vld [vmem:[%s856 + $0x68] sm:$0xff]
        %v871 = vsub.f32 %v857, %v801
        %v872 = vsub.f32 %v858, %v801
        %v873 = vsub.f32 %v859, %v801
        %v874 = vsub.f32 %v860, %v801
        %v875 = vsub.f32 %v861, %v801
        %v876 = vsub.f32 %v862, %v801
        %v877 = vsub.f32 %v863, %v801
        %v878 = vsub.f32 %v864, %v806
        %v879 = vsub.f32 %v865, %v806
        %v880 = vsub.f32 %v866, %v806
        %v881 = vsub.f32 %v867, %v806
        %v882 = vsub.f32 %v868, %v806
        %v883 = vsub.f32 %v869, %v806
        %v884 = vsub.f32 %v870, %v806
        %v885 = vmul.f32 %v871, %v871
        %v886 = vmul.f32 %v872, %v872
        %v887 = vmul.f32 %v873, %v873
        %v888 = vmul.f32 %v874, %v874
        %v889 = vmul.f32 %v875, %v875
        %v890 = vmul.f32 %v876, %v876
        %v891 = vmul.f32 %v877, %v877
        %v892 = vmul.f32 %v878, %v878
        %v893 = vmul.f32 %v879, %v879
        %v894 = vmul.f32 %v880, %v880
        %v895 = vmul.f32 %v881, %v881
        %v896 = vmul.f32 %v882, %v882
        %v897 = vmul.f32 %v883, %v883
        %v898 = vmul.f32 %v884, %v884
        %v899 = vadd.f32 %v885, %v886
        %v900 = vadd.f32 %v899, %v887
        %v901 = vadd.f32 %v900, %v888
        %v902 = vadd.f32 %v901, %v889
        %v903 = vadd.f32 %v902, %v890
        %v904 = vsel %vm661, %v891, 0.0
        %v905 = vadd.f32 %v903, %v904
        %906 = vadd.xlane.f32.xlu0 %v905
        %v907 = vpop.xlane.xlu0 %906
        %v908 = vadd.f32 %v892, %v893
        %v909 = vadd.f32 %v908, %v894
        %v910 = vadd.f32 %v909, %v895
        %v911 = vadd.f32 %v910, %v896
        %v912 = vadd.f32 %v911, %v897
        %v913 = vsel %vm661, %v898, 0.0
        %v914 = vadd.f32 %v912, %v913
        %915 = vadd.xlane.f32.xlu0 %v914
        %v916 = vpop.xlane.xlu0 %915
        %v917 = vadd.f32 %v854, %v907
        %v918 = vadd.f32 %v855, %v916
        %919 = vmatprep.subr.mxu0 0.0
        %920 = vmatpush1.msra.mxu0 %v917
        %921 = vmatprep.subr.mxu0 0.0
        %922 = vmatpush1.msra.mxu0 %v918
        %923 = vmatprep.subr.mxu0 0.0
        %924 = vmatpush1.msra.mxu0 0.0
        %925 = vmatprep.subr.mxu0 0.0
        %926 = vmatpush1.msra.mxu0 0.0
        %927 = vmatprep.subr.mxu0 0.0
        %928 = vmatpush1.msra.mxu0 0.0
        %929 = vmatprep.subr.mxu0 0.0
        %930 = vmatpush1.msra.mxu0 0.0
        %931 = vmatprep.subr.mxu0 0.0
        %932 = vmatpush1.msra.mxu0 0.0
        %933 = vmatprep.subr.mxu0 0.0
        %934 = vmatpush1.msra.mxu0 0.0
        %935 = vmatprep.subr.mxu0 0.0
        %936 = vmatpush1.msra.mxu0 0.0
        %937 = vmatprep.subr.mxu0 0.0
        %938 = vmatpush1.msra.mxu0 0.0
        %939 = vmatprep.subr.mxu0 0.0
        %940 = vmatpush1.msra.mxu0 0.0
        %941 = vmatprep.subr.mxu0 0.0
        %942 = vmatpush1.msra.mxu0 0.0
        %943 = vmatprep.subr.mxu0 0.0
        %944 = vmatpush1.msra.mxu0 0.0
        %945 = vmatprep.subr.mxu0 0.0
        %946 = vmatpush1.msra.mxu0 0.0
        %947 = vmatprep.subr.mxu0 0.0
        %948 = vmatpush1.msra.mxu0 0.0
        %949 = vmatprep.subr.mxu0 0.0
        %950 = vmatpush1.msra.mxu0 0.0
        %951 = vmatprep.subr.mxu0 0.0
        %952 = vmatpush1.msra.mxu0 0.0
        %953 = vmatprep.subr.mxu0 0.0
        %954 = vmatpush1.msra.mxu0 0.0
        %955 = vmatprep.subr.mxu0 0.0
        %956 = vmatpush1.msra.mxu0 0.0
        %957 = vmatprep.subr.mxu0 0.0
        %958 = vmatpush1.msra.mxu0 0.0
        %959 = vmatprep.subr.mxu0 0.0
        %960 = vmatpush1.msra.mxu0 0.0
        %961 = vmatprep.subr.mxu0 0.0
        %962 = vmatpush1.msra.mxu0 0.0
        %963 = vmatprep.subr.mxu0 0.0
        %964 = vmatpush1.msra.mxu0 0.0
        %965 = vmatprep.subr.mxu0 0.0
        %966 = vmatpush1.msra.mxu0 0.0
        %967 = vmatprep.subr.mxu0 0.0
        %968 = vmatpush1.msra.mxu0 0.0
        %969 = vmatprep.subr.mxu0 0.0
        %970 = vmatpush1.msra.mxu0 0.0
        %971 = vmatprep.subr.mxu0 0.0
        %972 = vmatpush1.msra.mxu0 0.0
        %973 = vmatprep.subr.mxu0 0.0
        %974 = vmatpush1.msra.mxu0 0.0
        %975 = vmatprep.subr.mxu0 0.0
        %976 = vmatpush1.msra.mxu0 0.0
        %977 = vmatprep.subr.mxu0 0.0
        %978 = vmatpush1.msra.mxu0 0.0
        %979 = vmatprep.subr.mxu0 0.0
        %980 = vmatpush1.msra.mxu0 0.0
        %981 = vmatprep.subr.mxu0 0.0
        %982 = vmatpush1.msra.mxu0 0.0
        %983 = vmatprep.mubr.f32.mxu0 0.0
        %984 = vmatmul.mubr.f32.gmra.mrb[0].mxu0 %v702
        %v985 = vpop.f32.mrb[0].mxu0
        %v986 = vadd.f32 0.0, %v985
        %v987 = vpop.f32.mrb[0].mxu0
        %988 = vmatprep.mubr.f32.mxu0 0.0
        %989 = vmatmul.mubr.f32.gmra.mrb[0].mxu0 %v705
        %v990 = vpop.f32.mrb[0].mxu0
        %v991 = vadd.f32 0.0, %v990
        %v992 = vpop.f32.mrb[0].mxu0
        %993 = vdwg.mxu0
        %v994 = vmul.f32 %v986, 0.00015943877
        %v995 = vmul.f32 %v991, 0.00015943877
        %v996 = vld [vmem:[%s2] sm:$0xff]
        %v997 = vld [vmem:[%s2 + $0x8] sm:$0xff]
        %v998 = vadd.f32 %v994, 1e-05
        %v999 = vadd.f32 %v995, 1e-05
        %v1000 = vrsqrt.pop %v998
        %v1001 = vrsqrt.pop %v999
        %v1002 = vmul.f32 %v996, %v1000
        %v1003 = vmul.f32 %v997, %v1001
        %v1004 = vld [vmem:[%s3] sm:$0xff]
        %v1005 = vld [vmem:[%s3 + $0x8] sm:$0xff]
        %v1006 = vmul.f32 %v782, %v1002
        %v1007 = vmul.f32 %v783, %v1003
        %v1008 = vsub.f32 %v1004, %v1006
        %v1009 = vsub.f32 %v1005, %v1007
        %1011 = vset.pattern.permute.xlu0 0
        %1012 = vperm.xlu0 %1011, %v1002
        %v1013 = vpop.permute.xlu0 %1012
        %1016 = vset.pattern.permute.xlu0 0
        %1017 = vperm.xlu0 %1016, %v1003
        %v1018 = vpop.permute.xlu0 %1017
        %v1020 = vmul.f32 %v784, %v1013
        %v1021 = vmul.f32 %v785, %v1013
        %v1022 = vmul.f32 %v786, %v1013
        %v1023 = vmul.f32 %v787, %v1013
        %v1024 = vmul.f32 %v788, %v1013
        %v1025 = vmul.f32 %v789, %v1013
        %v1026 = vmul.f32 %v790, %v1013
        %v1027 = vmul.f32 %v791, %v1018
        %v1028 = vmul.f32 %v792, %v1018
        %v1029 = vmul.f32 %v793, %v1018
        %v1030 = vmul.f32 %v794, %v1018
        %v1031 = vmul.f32 %v795, %v1018
        %v1032 = vmul.f32 %v796, %v1018
        %v1033 = vmul.f32 %v797, %v1018
        %1035 = vset.pattern.permute.xlu0 0
        %1036 = vperm.xlu0 %1035, %v1008
        %v1037 = vpop.permute.xlu0 %1036
        %1040 = vset.pattern.permute.xlu0 0
        %1041 = vperm.xlu0 %1040, %v1009
        %v1042 = vpop.permute.xlu0 %1041
        %v1044 = vadd.f32 %v1020, %v1037
        %v1045 = vadd.f32 %v1021, %v1037
        %v1046 = vadd.f32 %v1022, %v1037
        %v1047 = vadd.f32 %v1023, %v1037
        %v1048 = vadd.f32 %v1024, %v1037
        %v1049 = vadd.f32 %v1025, %v1037
        %v1050 = vadd.f32 %v1026, %v1037
        %v1051 = vadd.f32 %v1027, %v1042
        %v1052 = vadd.f32 %v1028, %v1042
        %v1053 = vadd.f32 %v1029, %v1042
        %v1054 = vadd.f32 %v1030, %v1042
        %v1055 = vadd.f32 %v1031, %v1042
        %v1056 = vadd.f32 %v1032, %v1042
        %v1057 = vadd.f32 %v1033, %v1042
        %v1058 = vmax.f32 %v1044, 0.0
        %v1059 = vmax.f32 %v1045, 0.0
        %v1060 = vmax.f32 %v1046, 0.0
        %v1061 = vmax.f32 %v1047, 0.0
        %v1062 = vmax.f32 %v1048, 0.0
        %v1063 = vmax.f32 %v1049, 0.0
        %v1064 = vmax.f32 %v1050, 0.0
        %v1065 = vmax.f32 %v1051, 0.0
        %v1066 = vmax.f32 %v1052, 0.0
        %v1067 = vmax.f32 %v1053, 0.0
        %v1068 = vmax.f32 %v1054, 0.0
        %v1069 = vmax.f32 %v1055, 0.0
        %v1070 = vmax.f32 %v1056, 0.0
        %v1071 = vmax.f32 %v1057, 0.0
        %1072 = vst [vmem:[%s5] sm:$0xff] %v1058
        %1073 = vst [vmem:[%s5 + $0x8] sm:$0xff] %v1059
        %1074 = vst [vmem:[%s5 + $0x10] sm:$0xff] %v1060
        %1075 = vst [vmem:[%s5 + $0x18] sm:$0xff] %v1061
        %1076 = vst [vmem:[%s5 + $0x20] sm:$0xff] %v1062
        %1077 = vst [vmem:[%s5 + $0x28] sm:$0xff] %v1063
        %1078 = vst.msk [vmem:[%s5 + $0x30] sm:$0xff] %vm661, %v1064
        %1079 = vst [vmem:[%s5 + $0x38] sm:$0xff] %v1065
        %1080 = vst [vmem:[%s5 + $0x40] sm:$0xff] %v1066
        %1081 = vst [vmem:[%s5 + $0x48] sm:$0xff] %v1067
        %1082 = vst [vmem:[%s5 + $0x50] sm:$0xff] %v1068
        %1083 = vst [vmem:[%s5 + $0x58] sm:$0xff] %v1069
        %1084 = vst [vmem:[%s5 + $0x60] sm:$0xff] %v1070
        %1085 = vst.msk [vmem:[%s5 + $0x68] sm:$0xff] %vm661, %v1071
        %v1086 = vld [vmem:[%s856] sm:$0xff]
        %v1087 = vld [vmem:[%s856 + $0x8] sm:$0xff]
        %v1088 = vld [vmem:[%s856 + $0x10] sm:$0xff]
        %v1089 = vld [vmem:[%s856 + $0x18] sm:$0xff]
        %v1090 = vld [vmem:[%s856 + $0x20] sm:$0xff]
        %v1091 = vld [vmem:[%s856 + $0x28] sm:$0xff]
        %v1092 = vld [vmem:[%s856 + $0x30] sm:$0xff]
        %v1093 = vld [vmem:[%s856 + $0x38] sm:$0xff]
        %v1094 = vld [vmem:[%s856 + $0x40] sm:$0xff]
        %v1095 = vld [vmem:[%s856 + $0x48] sm:$0xff]
        %v1096 = vld [vmem:[%s856 + $0x50] sm:$0xff]
        %v1097 = vld [vmem:[%s856 + $0x58] sm:$0xff]
        %v1098 = vld [vmem:[%s856 + $0x60] sm:$0xff]
        %v1099 = vld [vmem:[%s856 + $0x68] sm:$0xff]
        %v1100 = vmul.f32 %v1086, %v1013
        %v1101 = vmul.f32 %v1087, %v1013
        %v1102 = vmul.f32 %v1088, %v1013
        %v1103 = vmul.f32 %v1089, %v1013
        %v1104 = vmul.f32 %v1090, %v1013
        %v1105 = vmul.f32 %v1091, %v1013
        %v1106 = vmul.f32 %v1092, %v1013
        %v1107 = vmul.f32 %v1093, %v1018
        %v1108 = vmul.f32 %v1094, %v1018
        %v1109 = vmul.f32 %v1095, %v1018
        %v1110 = vmul.f32 %v1096, %v1018
        %v1111 = vmul.f32 %v1097, %v1018
        %v1112 = vmul.f32 %v1098, %v1018
        %v1113 = vmul.f32 %v1099, %v1018
        %v1114 = vadd.f32 %v1100, %v1037
        %v1115 = vadd.f32 %v1101, %v1037
        %v1116 = vadd.f32 %v1102, %v1037
        %v1117 = vadd.f32 %v1103, %v1037
        %v1118 = vadd.f32 %v1104, %v1037
        %v1119 = vadd.f32 %v1105, %v1037
        %v1120 = vadd.f32 %v1106, %v1037
        %v1121 = vadd.f32 %v1107, %v1042
        %v1122 = vadd.f32 %v1108, %v1042
        %v1123 = vadd.f32 %v1109, %v1042
        %v1124 = vadd.f32 %v1110, %v1042
        %v1125 = vadd.f32 %v1111, %v1042
        %v1126 = vadd.f32 %v1112, %v1042
        %v1127 = vadd.f32 %v1113, %v1042
        %v1128 = vmax.f32 %v1114, 0.0
        %v1129 = vmax.f32 %v1115, 0.0
        %v1130 = vmax.f32 %v1116, 0.0
        %v1131 = vmax.f32 %v1117, 0.0
        %v1132 = vmax.f32 %v1118, 0.0
        %v1133 = vmax.f32 %v1119, 0.0
        %v1134 = vmax.f32 %v1120, 0.0
        %v1135 = vmax.f32 %v1121, 0.0
        %v1136 = vmax.f32 %v1122, 0.0
        %v1137 = vmax.f32 %v1123, 0.0
        %v1138 = vmax.f32 %v1124, 0.0
        %v1139 = vmax.f32 %v1125, 0.0
        %v1140 = vmax.f32 %v1126, 0.0
        %v1141 = vmax.f32 %v1127, 0.0
        %1142 = vst [vmem:[%s856] sm:$0xff] %v1128
        %1143 = vst [vmem:[%s856 + $0x8] sm:$0xff] %v1129
        %1144 = vst [vmem:[%s856 + $0x10] sm:$0xff] %v1130
        %1145 = vst [vmem:[%s856 + $0x18] sm:$0xff] %v1131
        %1146 = vst [vmem:[%s856 + $0x20] sm:$0xff] %v1132
        %1147 = vst [vmem:[%s856 + $0x28] sm:$0xff] %v1133
        %1148 = vst.msk [vmem:[%s856 + $0x30] sm:$0xff] %vm661, %v1134
        %1149 = vst [vmem:[%s856 + $0x38] sm:$0xff] %v1135
        %1150 = vst [vmem:[%s856 + $0x40] sm:$0xff] %v1136
        %1151 = vst [vmem:[%s856 + $0x48] sm:$0xff] %v1137
        %1152 = vst [vmem:[%s856 + $0x50] sm:$0xff] %v1138
        %1153 = vst [vmem:[%s856 + $0x58] sm:$0xff] %v1139
        %1154 = vst [vmem:[%s856 + $0x60] sm:$0xff] %v1140
        %1155 = vst.msk [vmem:[%s856 + $0x68] sm:$0xff] %vm661, %v1141
      $region48: #{decoder_forward.11} parent=39 // pred_fallthru
        _
      // Predicated region
      $region49: #{decoder_forward.11} parent=39 // pred_check
        %p1156 = pneg %p153
      $region50: #{decoder_forward.11} parent=39 // pred_check_branch
        %1158 = sbr.rel (%p1156) target = $region52
      $region51: #{decoder_forward.11} parent=39 // pred_region
        _
      $region52: #{decoder_forward.11} parent=39 // pred_fallthru
        _
      // Predicated region
      $region53: #{decoder_forward.11} parent=39 // pred_check
        %p1159 = pneg %p153
      $region54: #{decoder_forward.11} parent=39 // pred_check_branch
        %1161 = sbr.rel (%p1159) target = $region56
      $region55: #{decoder_forward.11} parent=39 // pred_region
        _
      $region56: #{decoder_forward.11} parent=39 // pred_fallthru
        _
    $region40: #{decoder_forward.11} parent=5 // pred_fallthru
      _
    %p1162 = scmp.le.s32.totalorder 2, %s11
    // Predicated region
    $region57: #{decoder_forward.11} parent=5 // pred_check
      %p1163 = pneg %p1162
    $region58: #{decoder_forward.11} parent=5 // pred_check_branch
      %1165 = sbr.rel (%p1163) target = $region60
    $region59: #{decoder_forward.11} parent=5 // pred_region
      %s1166 = ssub.s32 %s11, 2
    $region60: #{decoder_forward.11} parent=5 // pred_fallthru
      _
  $region6: #{decoder_forward.11} parent=0 // loop_footer
    %s15 = sadd.s32 1, %s11
  $region7: #{decoder_forward.11} parent=0 // loop_footer_branch
    %10 = sbr.rel target = $region3
  $region8: #{decoder_forward.11} parent=0 // loop_exit
    _

// kernel: decoder_forward.12
$region0: #{decoder_forward.12}
  #allocation0 [shape = 'u32[]', space=smem, size = 0x4, offset = 0x4, fixed_abs, tag = 'smem constant byte address 0x4 - core index']
  #allocation1 [shape = 'u32[144,128]{1,0:T(1,128)}', space=vmem, size = 0x12000, scoped, tag = 'internal scratch']
  #allocation2 [shape = 'f32[8,1]{1,0:T(8,128)}', space=vmem, size = 0x1000, scoped, tag = 'scratch operand']
  %s0 = inlined_call_operand.vmem [shape: bf16[2,4,36,784], index: 0, kind: input, shape index: {}]
  %s1 = inlined_call_operand.vmem [shape: bf16[8,36], index: 1, kind: input, shape index: {}]
  %s2 = inlined_call_operand.vmem [shape: f32[8,1], index: 2, kind: input, shape index: {}]
  %s3 = inlined_call_operand.vmem [shape: f32[8,1], index: 3, kind: input, shape index: {}]
  %s4 = inlined_call_operand.vmem [shape: f32[8,8], index: 4, kind: input, shape index: {}]
  %s5 = inlined_call_operand.vmem [shape: f32[2,4,8,784], index: 5, kind: output, shape index: {}]
  %s6 = sld [smem:[#allocation0]]
  $region61: #{decoder_forward.12} parent=0
    _
  %s8 = ssub.s32 1, %s6
  %s9 = scalar_select 0, %s8, %s6
  loop: start=0, step=1, limit=10
  $region2: #{decoder_forward.12} parent=0 // loop_pre_header
    _
  $region3: #{decoder_forward.12} parent=0 // loop_header
    %s11 = sphi 0, %s15
    %p12 = scmp.ge.s32.totalorder %s11, 10
    %s18 = sphi 0, %s30
    %s19 = sphi 0, %s26
    %s20 = sphi 0, %s18
    %s21 = sphi 0, %s19
    %s22 = sphi 0, %s20
    %s23 = sphi 0, %s21
    %s35 = sphi 0, %s37
    %s38 = sphi 0, %s35
    %s39 = sphi 0, %s38
    %s55 = sphi 0, %s39
    %s59 = sphi 0, %s59
    %s61 = sphi 0, %s59
    %s62 = sphi 0, %s61
    %s76 = sphi 0, %s62
    %s80 = sphi 0, %s80
    %s82 = sphi 0, %s80
    %s83 = sphi 0, %s82
    %s97 = sphi 0, %s83
    %s101 = sphi 0, %s101
    %s103 = sphi 0, %s101
    %s104 = sphi 0, %s103
    %s118 = sphi 0, %s104
    %s122 = sphi 0, %s122
    %s124 = sphi 0, %s122
    %s125 = sphi 0, %s124
    %s139 = sphi 0, %s125
    %s143 = sphi 0, %s143
    %s145 = sphi 0, %s143
    %s146 = sphi 0, %s145
    %s160 = sphi 0, %s146
  $region4: #{decoder_forward.12} parent=0 // loop_header_branch
    %14 = sbr.rel (%p12) target = $region8
  $region5: #{decoder_forward.12} parent=0 // loop_body
    %s16 = ssub.s32 %s11, 1
    %s17 = ssub.s32 %s11, 2
    %s24 = sadd.s32 1, %s19
    %p25 = scmp.ge.s32.totalorder %s24, 4
    %s26 = scalar_select %p25, 0, %s24
    %s27 = sadd.s32 1, %s18
    %s28 = scalar_select %p25, %s27, %s18
    %p29 = scmp.ge.s32.totalorder %s28, 2
    %s30 = scalar_select %p29, 0, %s28
    %s31 = ssub.s32 %s18, %s30
    %s32 = ssub.s32 %s19, %s26
    %s33 = sor.u32 %s31, %s32
    %p34 = scmp.eq.s32.totalorder %s33, 0
    %s36 = sadd.s32 %s35, 1
    %s37 = scalar_select %p34, %s35, %s36
    %p40 = pneg %p34
    %p41 = scmp.eq.s32.totalorder %s11, 7
    %p42 = por %p40, %p41
    %p43 = scmp.ne.s32.totalorder %s35, %s38
    %p44 = scmp.eq.s32.totalorder %s11, 0
    %p45 = por %p43, %p44
    %p46 = scmp.ne.s32.totalorder %s35, %s38
    %p47 = scmp.eq.s32.totalorder %s16, 7
    %p48 = por %p46, %p47
    %p49 = scmp.ne.s32.totalorder %s38, %s39
    %p50 = scmp.eq.s32.totalorder %s16, 0
    %p51 = por %p49, %p50
    %p52 = scmp.ne.s32.totalorder %s38, %s39
    %p53 = scmp.eq.s32.totalorder %s17, 7
    %p54 = por %p52, %p53
    %p56 = scmp.ne.s32.totalorder %s39, %s55
    %p57 = scmp.eq.s32.totalorder %s17, 0
    %p58 = por %p56, %p57
    %s60 = sadd.s32 %s59, 1
    %p63 = scmp.eq.s32.totalorder %s11, 7
    %p64 = scmp.ne.s32.totalorder %s59, %s61
    %p65 = scmp.eq.s32.totalorder %s11, 0
    %p66 = por %p64, %p65
    %p67 = scmp.ne.s32.totalorder %s59, %s61
    %p68 = scmp.eq.s32.totalorder %s16, 7
    %p69 = por %p67, %p68
    %p70 = scmp.ne.s32.totalorder %s61, %s62
    %p71 = scmp.eq.s32.totalorder %s16, 0
    %p72 = por %p70, %p71
    %p73 = scmp.ne.s32.totalorder %s61, %s62
    %p74 = scmp.eq.s32.totalorder %s17, 7
    %p75 = por %p73, %p74
    %p77 = scmp.ne.s32.totalorder %s62, %s76
    %p78 = scmp.eq.s32.totalorder %s17, 0
    %p79 = por %p77, %p78
    %s81 = sadd.s32 %s80, 1
    %p84 = scmp.eq.s32.totalorder %s11, 7
    %p85 = scmp.ne.s32.totalorder %s80, %s82
    %p86 = scmp.eq.s32.totalorder %s11, 0
    %p87 = por %p85, %p86
    %p88 = scmp.ne.s32.totalorder %s80, %s82
    %p89 = scmp.eq.s32.totalorder %s16, 7
    %p90 = por %p88, %p89
    %p91 = scmp.ne.s32.totalorder %s82, %s83
    %p92 = scmp.eq.s32.totalorder %s16, 0
    %p93 = por %p91, %p92
    %p94 = scmp.ne.s32.totalorder %s82, %s83
    %p95 = scmp.eq.s32.totalorder %s17, 7
    %p96 = por %p94, %p95
    %p98 = scmp.ne.s32.totalorder %s83, %s97
    %p99 = scmp.eq.s32.totalorder %s17, 0
    %p100 = por %p98, %p99
    %s102 = sadd.s32 %s101, 1
    %p105 = scmp.eq.s32.totalorder %s11, 7
    %p106 = scmp.ne.s32.totalorder %s101, %s103
    %p107 = scmp.eq.s32.totalorder %s11, 0
    %p108 = por %p106, %p107
    %p109 = scmp.ne.s32.totalorder %s101, %s103
    %p110 = scmp.eq.s32.totalorder %s16, 7
    %p111 = por %p109, %p110
    %p112 = scmp.ne.s32.totalorder %s103, %s104
    %p113 = scmp.eq.s32.totalorder %s16, 0
    %p114 = por %p112, %p113
    %p115 = scmp.ne.s32.totalorder %s103, %s104
    %p116 = scmp.eq.s32.totalorder %s17, 7
    %p117 = por %p115, %p116
    %p119 = scmp.ne.s32.totalorder %s104, %s118
    %p120 = scmp.eq.s32.totalorder %s17, 0
    %p121 = por %p119, %p120
    %s123 = sadd.s32 %s122, 1
    %p126 = scmp.eq.s32.totalorder %s11, 7
    %p127 = scmp.ne.s32.totalorder %s122, %s124
    %p128 = scmp.eq.s32.totalorder %s11, 0
    %p129 = por %p127, %p128
    %p130 = scmp.ne.s32.totalorder %s122, %s124
    %p131 = scmp.eq.s32.totalorder %s16, 7
    %p132 = por %p130, %p131
    %p133 = scmp.ne.s32.totalorder %s124, %s125
    %p134 = scmp.eq.s32.totalorder %s16, 0
    %p135 = por %p133, %p134
    %p136 = scmp.ne.s32.totalorder %s124, %s125
    %p137 = scmp.eq.s32.totalorder %s17, 7
    %p138 = por %p136, %p137
    %p140 = scmp.ne.s32.totalorder %s125, %s139
    %p141 = scmp.eq.s32.totalorder %s17, 0
    %p142 = por %p140, %p141
    %s144 = sadd.s32 %s143, 1
    %p147 = scmp.eq.s32.totalorder %s11, 7
    %p148 = scmp.ne.s32.totalorder %s143, %s145
    %p149 = scmp.eq.s32.totalorder %s11, 0
    %p150 = por %p148, %p149
    %p151 = scmp.ne.s32.totalorder %s143, %s145
    %p152 = scmp.eq.s32.totalorder %s16, 7
    %p153 = por %p151, %p152
    %p154 = scmp.ne.s32.totalorder %s145, %s146
    %p155 = scmp.eq.s32.totalorder %s16, 0
    %p156 = por %p154, %p155
    %p157 = scmp.ne.s32.totalorder %s145, %s146
    %p158 = scmp.eq.s32.totalorder %s17, 7
    %p159 = por %p157, %p158
    %p161 = scmp.ne.s32.totalorder %s146, %s160
    %p162 = scmp.eq.s32.totalorder %s17, 0
    %p163 = por %p161, %p162
    %p164 = scmp.le.s32.totalorder 1, %s11
    %p165 = scmp.lt.s32.totalorder %s11, 9
    %p166 = pnand %p164, %p165
    %p167 = pneg %p166
    // Predicated region
    $region9: #{decoder_forward.12} parent=5 // pred_check
      _
    $region10: #{decoder_forward.12} parent=5 // pred_check_branch
      %169 = sbr.rel (%p166) target = $region12
    $region11: #{decoder_forward.12} parent=5 // pred_region
      %s170 = ssub.s32 %s11, 1
      // Predicated region
      $region13: #{decoder_forward.12} parent=11 // pred_check
        %p171 = pneg %p72
      $region14: #{decoder_forward.12} parent=11 // pred_check_branch
        %173 = sbr.rel (%p171) target = $region16
      $region15: #{decoder_forward.12} parent=11 // pred_region
        _
      $region16: #{decoder_forward.12} parent=11 // pred_fallthru
        _
      // Predicated region
      $region17: #{decoder_forward.12} parent=11 // pred_check
        %p174 = pneg %p93
      $region18: #{decoder_forward.12} parent=11 // pred_check_branch
        %176 = sbr.rel (%p174) target = $region20
      $region19: #{decoder_forward.12} parent=11 // pred_region
        _
      $region20: #{decoder_forward.12} parent=11 // pred_fallthru
        _
      // Predicated region
      $region21: #{decoder_forward.12} parent=11 // pred_check
        %p177 = pneg %p114
      $region22: #{decoder_forward.12} parent=11 // pred_check_branch
        %179 = sbr.rel (%p177) target = $region24
      $region23: #{decoder_forward.12} parent=11 // pred_region
        _
      $region24: #{decoder_forward.12} parent=11 // pred_fallthru
        _
      // Predicated region
      $region25: #{decoder_forward.12} parent=11 // pred_check
        %p180 = pneg %p135
      $region26: #{decoder_forward.12} parent=11 // pred_check_branch
        %182 = sbr.rel (%p180) target = $region28
      $region27: #{decoder_forward.12} parent=11 // pred_region
        _
      $region28: #{decoder_forward.12} parent=11 // pred_fallthru
        _
    $region12: #{decoder_forward.12} parent=5 // pred_fallthru
      _
    %p183 = scmp.lt.s32.totalorder %s11, 8
    // Predicated region
    $region29: #{decoder_forward.12} parent=5 // pred_check
      %p184 = pneg %p183
    $region30: #{decoder_forward.12} parent=5 // pred_check_branch
      %186 = sbr.rel (%p184) target = $region32
    $region31: #{decoder_forward.12} parent=5 // pred_region
      // Predicated region
      $region33: #{decoder_forward.12} parent=31 // pred_check
        %p187 = pneg %p45
      $region34: #{decoder_forward.12} parent=31 // pred_check_branch
        %189 = sbr.rel (%p187) target = $region36
      $region35: #{decoder_forward.12} parent=31 // pred_region
        %p190 = scmp.lt.s32.totalorder %s18, 1
        %s191 = scalar_select %p190, %s18, 1
        %p192 = scmp.lt.s32.totalorder %s19, 3
        %s193 = scalar_select %p192, %s19, 3
        %s194 = smul.addr %s193, 35
        %s195 = smul.addr %s191, 140
        %s196 = sadd.s32 %s194, %s195
        %s197 = smul.addr %s196, 4
        %s198 = scalar_lea.vmem %s0, %s197
      $region36: #{decoder_forward.12} parent=31 // pred_fallthru
        _
    $region32: #{decoder_forward.12} parent=5 // pred_fallthru
      _
    %p199 = scmp.le.s32.totalorder 1, %s11
    %p200 = scmp.lt.s32.totalorder %s11, 9
    %p201 = pnand %p199, %p200
    %p202 = pneg %p201
    // Predicated region
    $region37: #{decoder_forward.12} parent=5 // pred_check
      _
    $region38: #{decoder_forward.12} parent=5 // pred_check_branch
      %204 = sbr.rel (%p201) target = $region40
    $region39: #{decoder_forward.12} parent=5 // pred_region
      %s205 = ssub.s32 %s11, 1
      %p206 = scmp.lt.s32.totalorder %s20, 1
      %s207 = scalar_select %p206, %s20, 1
      %p208 = scmp.lt.s32.totalorder %s21, 3
      %s209 = scalar_select %p208, %s21, 3
      %s210 = smul.addr %s209, 35
      %s211 = smul.addr %s207, 140
      %s212 = sadd.s32 %s210, %s211
      %s213 = smul.addr %s212, 4
      %s214 = scalar_lea.vmem %s0, %s213
      %p215 = pneg %p51
      %p216 = pneg %p48
      %p217 = pneg %p72
      %p218 = pneg %p69
      %p219 = pneg %p93
      %p220 = pneg %p90
      %p221 = pneg %p114
      %p222 = pneg %p111
      %p223 = pneg %p135
      %p224 = pneg %p132
      %p225 = pneg %p156
      %p226 = pneg %p153
      %p227 = scmp.lt.s32.totalorder %s20, 1
      %s228 = scalar_select %p227, %s20, 1
      %p229 = scmp.lt.s32.totalorder %s21, 3
      %s230 = scalar_select %p229, %s21, 3
      %s231 = smul.addr %s230, 35
      %s232 = smul.addr %s228, 140
      %s233 = sadd.s32 %s231, %s232
      %s234 = smul.addr %s233, 4
      %s235 = scalar_lea.vmem %s0, %s234
      %p237 = scmp.eq.s32.totalorder %s20, 0
      %p238 = scmp.eq.s32.totalorder %s21, 0
      %p239 = pnand %p237, %p238
      %p240 = pneg %p239
      %p241 = scmp.eq.s32.totalorder %s20, 1
      %p242 = scmp.eq.s32.totalorder %s21, 3
      %p243 = pnand %p241, %p242
      %p244 = pneg %p243
      // Predicated region
      $region41: #{decoder_forward.12} parent=39 // pred_check
        _
      $region42: #{decoder_forward.12} parent=39 // pred_check_branch
        %246 = sbr.rel (%p239) target = $region44
      $region43: #{decoder_forward.12} parent=39 // pred_region
        %vm247 = vcmask 7168
        %248 = vst.msk [vmem:[#allocation2] sm:$0xff] %vm247, 0.0
      $region44: #{decoder_forward.12} parent=39 // pred_fallthru
        _
      %v249 = vld [vmem:[%s1] sm:$0xf]
      %v250 = vld [vmem:[%s235] sm:$0xff]
      %v251 = vld [vmem:[%s235 + $0x8] sm:$0xff]
      %v252 = vld [vmem:[%s235 + $0x10] sm:$0xff]
      %v253 = vld [vmem:[%s235 + $0x18] sm:$0xf]
      %v254 = vld [vmem:[%s235 + $0x1c] sm:$0xff]
      %v255 = vld [vmem:[%s235 + $0x24] sm:$0xff]
      %v256 = vld [vmem:[%s235 + $0x2c] sm:$0xff]
      %v257 = vld [vmem:[%s235 + $0x34] sm:$0xf]
      %v258 = vld [vmem:[%s235 + $0x38] sm:$0xff]
      %v259 = vld [vmem:[%s235 + $0x40] sm:$0xff]
      %v260 = vld [vmem:[%s235 + $0x48] sm:$0xff]
      %v261 = vld [vmem:[%s235 + $0x50] sm:$0xf]
      %v262 = vld [vmem:[%s235 + $0x54] sm:$0xff]
      %v263 = vld [vmem:[%s235 + $0x5c] sm:$0xff]
      %v264 = vld [vmem:[%s235 + $0x64] sm:$0xff]
      %v265 = vld [vmem:[%s235 + $0x6c] sm:$0xf]
      %v266 = vld [vmem:[%s235 + $0x70] sm:$0x33]
      %v267 = vld [vmem:[%s235 + $0x78] sm:$0x33]
      %v268 = vld [vmem:[%s235 + $0x80] sm:$0x33]
      %v269 = vld [vmem:[%s235 + $0x88] sm:$0x3]
      %v290 = vunpack.c.l.b16 %v250
      %v291 = vunpack.c.h.b16 %v250
      %v292 = vunpack.c.l.b16 %v251
      %v293 = vunpack.c.h.b16 %v251
      %v294 = vunpack.c.l.b16 %v252
      %v295 = vunpack.c.h.b16 %v252
      %v296 = vunpack.c.l.b16 %v253
      %v297 = vunpack.c.l.b16 %v254
      %v298 = vunpack.c.h.b16 %v254
      %v299 = vunpack.c.l.b16 %v255
      %v300 = vunpack.c.h.b16 %v255
      %v301 = vunpack.c.l.b16 %v256
      %v302 = vunpack.c.h.b16 %v256
      %v303 = vunpack.c.l.b16 %v257
      %v304 = vunpack.c.l.b16 %v258
      %v305 = vunpack.c.h.b16 %v258
      %v306 = vunpack.c.l.b16 %v259
      %v307 = vunpack.c.h.b16 %v259
      %v308 = vunpack.c.l.b16 %v260
      %v309 = vunpack.c.h.b16 %v260
      %v310 = vunpack.c.l.b16 %v261
      %v311 = vunpack.c.l.b16 %v262
      %v312 = vunpack.c.h.b16 %v262
      %v313 = vunpack.c.l.b16 %v263
      %v314 = vunpack.c.h.b16 %v263
      %v315 = vunpack.c.l.b16 %v264
      %v316 = vunpack.c.h.b16 %v264
      %v317 = vunpack.c.l.b16 %v265
      %v318 = vunpack.c.l.b16 %v266
      %v319 = vunpack.c.h.b16 %v266
      %v320 = vunpack.c.l.b16 %v267
      %v321 = vunpack.c.h.b16 %v267
      %v322 = vunpack.c.l.b16 %v268
      %v323 = vunpack.c.h.b16 %v268
      %v324 = vunpack.c.l.b16 %v269
      %v325 = vpack.c.b16 %v297, %v290
      %v326 = vpack.c.b16 %v298, %v291
      %v327 = vpack.c.b16 %v299, %v292
      %v328 = vpack.c.b16 %v300, %v293
      %v329 = vpack.c.b16 %v301, %v294
      %v330 = vpack.c.b16 %v302, %v295
      %v331 = vpack.c.b16 %v303, %v296
      %v332 = vpack.c.b16 %v311, %v304
      %v333 = vpack.c.b16 %v312, %v305
      %v334 = vpack.c.b16 %v313, %v306
      %v335 = vpack.c.b16 %v314, %v307
      %v336 = vpack.c.b16 %v315, %v308
      %v337 = vpack.c.b16 %v316, %v309
      %v338 = vpack.c.b16 %v317, %v310
      %v339 = vpack.c.b16 %v318, %v318
      %v340 = vpack.c.b16 %v319, %v319
      %v341 = vpack.c.b16 %v320, %v320
      %v342 = vpack.c.b16 %v321, %v321
      %v343 = vpack.c.b16 %v322, %v322
      %v344 = vpack.c.b16 %v323, %v323
      %v345 = vpack.c.b16 %v324, %v324
      %vm360 = vcmask 293888
      %v362 = vsel %vm360, %v249, 0
      %vm364 = vcmask 1041408
      %v366 = vsel %vm364, %v339, 0
      %v369 = vsel %vm364, %v340, 0
      %v372 = vsel %vm364, %v341, 0
      %v375 = vsel %vm364, %v342, 0
      %v378 = vsel %vm364, %v343, 0
      %v381 = vsel %vm364, %v344, 0
      %v384 = vsel %vm364, %v345, 0
      %386 = vmatprep.subr.bf16.mxu0 %v326
      %387 = vmatpush1.bf16.msra.mxu0 %v325
      %388 = vmatprep.subr.bf16.mxu0 %v333
      %389 = vmatpush1.bf16.msra.mxu0 %v332
      %390 = vmatprep.subr.bf16.mxu0 %v369
      %391 = vmatpush1.bf16.msra.mxu0 %v366
      %392 = vmatprep.subr.bf16.mxu0 0
      %393 = vmatpush1.bf16.msra.mxu0 0
      %394 = vmatprep.subr.bf16.mxu0 0
      %395 = vmatpush1.bf16.msra.mxu0 0
      %396 = vmatprep.subr.bf16.mxu0 0
      %397 = vmatpush1.bf16.msra.mxu0 0
      %398 = vmatprep.subr.bf16.mxu0 0
      %399 = vmatpush1.bf16.msra.mxu0 0
      %400 = vmatprep.subr.bf16.mxu0 0
      %401 = vmatpush1.bf16.msra.mxu0 0
      %402 = vmatprep.subr.bf16.mxu0 0
      %403 = vmatpush1.bf16.msra.mxu0 0
      %404 = vmatprep.subr.bf16.mxu0 0
      %405 = vmatpush1.bf16.msra.mxu0 0
      %406 = vmatprep.subr.bf16.mxu0 0
      %407 = vmatpush1.bf16.msra.mxu0 0
      %408 = vmatprep.subr.bf16.mxu0 0
      %409 = vmatpush1.bf16.msra.mxu0 0
      %410 = vmatprep.subr.bf16.mxu0 0
      %411 = vmatpush1.bf16.msra.mxu0 0
      %412 = vmatprep.subr.bf16.mxu0 0
      %413 = vmatpush1.bf16.msra.mxu0 0
      %414 = vmatprep.subr.bf16.mxu0 0
      %415 = vmatpush1.bf16.msra.mxu0 0
      %416 = vmatprep.subr.bf16.mxu0 0
      %417 = vmatpush1.bf16.msra.mxu0 0
      %418 = vmatprep.mubr.bf16.mxu0 0
      %419 = vmatmul.mubr.bf16.gmra.mrb[0].mxu0 %v362
      %v420 = vpop.f32.mrb[0].mxu0
      %v421 = vadd.f32 0.0, %v420
      %v422 = vpop.f32.mrb[0].mxu0
      %v423 = vadd.f32 0.0, %v422
      %v424 = vpop.f32.mrb[0].mxu0
      %v425 = vpop.f32.mrb[0].mxu0
      %426 = vdwg.mxu0
      %427 = vmatprep.subr.bf16.mxu0 %v328
      %428 = vmatpush1.bf16.msra.mxu0 %v327
      %429 = vmatprep.subr.bf16.mxu0 %v335
      %430 = vmatpush1.bf16.msra.mxu0 %v334
      %431 = vmatprep.subr.bf16.mxu0 %v375
      %432 = vmatpush1.bf16.msra.mxu0 %v372
      %433 = vmatprep.subr.bf16.mxu0 0
      %434 = vmatpush1.bf16.msra.mxu0 0
      %435 = vmatprep.subr.bf16.mxu0 0
      %436 = vmatpush1.bf16.msra.mxu0 0
      %437 = vmatprep.subr.bf16.mxu0 0
      %438 = vmatpush1.bf16.msra.mxu0 0
      %439 = vmatprep.subr.bf16.mxu0 0
      %440 = vmatpush1.bf16.msra.mxu0 0
      %441 = vmatprep.subr.bf16.mxu0 0
      %442 = vmatpush1.bf16.msra.mxu0 0
      %443 = vmatprep.subr.bf16.mxu0 0
      %444 = vmatpush1.bf16.msra.mxu0 0
      %445 = vmatprep.subr.bf16.mxu0 0
      %446 = vmatpush1.bf16.msra.mxu0 0
      %447 = vmatprep.subr.bf16.mxu0 0
      %448 = vmatpush1.bf16.msra.mxu0 0
      %449 = vmatprep.subr.bf16.mxu0 0
      %450 = vmatpush1.bf16.msra.mxu0 0
      %451 = vmatprep.subr.bf16.mxu0 0
      %452 = vmatpush1.bf16.msra.mxu0 0
      %453 = vmatprep.subr.bf16.mxu0 0
      %454 = vmatpush1.bf16.msra.mxu0 0
      %455 = vmatprep.subr.bf16.mxu0 0
      %456 = vmatpush1.bf16.msra.mxu0 0
      %457 = vmatprep.subr.bf16.mxu0 0
      %458 = vmatpush1.bf16.msra.mxu0 0
      %459 = vmatprep.mubr.bf16.mxu0 0
      %460 = vmatmul.mubr.bf16.gmra.mrb[0].mxu0 %v362
      %v461 = vpop.f32.mrb[0].mxu0
      %v462 = vadd.f32 0.0, %v461
      %v463 = vpop.f32.mrb[0].mxu0
      %v464 = vadd.f32 0.0, %v463
      %v465 = vpop.f32.mrb[0].mxu0
      %v466 = vpop.f32.mrb[0].mxu0
      %467 = vdwg.mxu0
      %468 = vmatprep.subr.bf16.mxu0 %v330
      %469 = vmatpush1.bf16.msra.mxu0 %v329
      %470 = vmatprep.subr.bf16.mxu0 %v337
      %471 = vmatpush1.bf16.msra.mxu0 %v336
      %472 = vmatprep.subr.bf16.mxu0 %v381
      %473 = vmatpush1.bf16.msra.mxu0 %v378
      %474 = vmatprep.subr.bf16.mxu0 0
      %475 = vmatpush1.bf16.msra.mxu0 0
      %476 = vmatprep.subr.bf16.mxu0 0
      %477 = vmatpush1.bf16.msra.mxu0 0
      %478 = vmatprep.subr.bf16.mxu0 0
      %479 = vmatpush1.bf16.msra.mxu0 0
      %480 = vmatprep.subr.bf16.mxu0 0
      %481 = vmatpush1.bf16.msra.mxu0 0
      %482 = vmatprep.subr.bf16.mxu0 0
      %483 = vmatpush1.bf16.msra.mxu0 0
      %484 = vmatprep.subr.bf16.mxu0 0
      %485 = vmatpush1.bf16.msra.mxu0 0
      %486 = vmatprep.subr.bf16.mxu0 0
      %487 = vmatpush1.bf16.msra.mxu0 0
      %488 = vmatprep.subr.bf16.mxu0 0
      %489 = vmatpush1.bf16.msra.mxu0 0
      %490 = vmatprep.subr.bf16.mxu0 0
      %491 = vmatpush1.bf16.msra.mxu0 0
      %492 = vmatprep.subr.bf16.mxu0 0
      %493 = vmatpush1.bf16.msra.mxu0 0
      %494 = vmatprep.subr.bf16.mxu0 0
      %495 = vmatpush1.bf16.msra.mxu0 0
      %496 = vmatprep.subr.bf16.mxu0 0
      %497 = vmatpush1.bf16.msra.mxu0 0
      %498 = vmatprep.subr.bf16.mxu0 0
      %499 = vmatpush1.bf16.msra.mxu0 0
      %500 = vmatprep.mubr.bf16.mxu0 0
      %501 = vmatmul.mubr.bf16.gmra.mrb[0].mxu0 %v362
      %v502 = vpop.f32.mrb[0].mxu0
      %v503 = vadd.f32 0.0, %v502
      %v504 = vpop.f32.mrb[0].mxu0
      %v505 = vadd.f32 0.0, %v504
      %v506 = vpop.f32.mrb[0].mxu0
      %v507 = vpop.f32.mrb[0].mxu0
      %508 = vdwg.mxu0
      %509 = vmatprep.subr.bf16.mxu0 0
      %510 = vmatpush1.bf16.msra.mxu0 %v331
      %511 = vmatprep.subr.bf16.mxu0 0
      %512 = vmatpush1.bf16.msra.mxu0 %v338
      %513 = vmatprep.subr.bf16.mxu0 0
      %514 = vmatpush1.bf16.msra.mxu0 %v384
      %515 = vmatprep.subr.bf16.mxu0 0
      %516 = vmatpush1.bf16.msra.mxu0 0
      %517 = vmatprep.subr.bf16.mxu0 0
      %518 = vmatpush1.bf16.msra.mxu0 0
      %519 = vmatprep.subr.bf16.mxu0 0
      %520 = vmatpush1.bf16.msra.mxu0 0
      %521 = vmatprep.subr.bf16.mxu0 0
      %522 = vmatpush1.bf16.msra.mxu0 0
      %523 = vmatprep.subr.bf16.mxu0 0
      %524 = vmatpush1.bf16.msra.mxu0 0
      %525 = vmatprep.subr.bf16.mxu0 0
      %526 = vmatpush1.bf16.msra.mxu0 0
      %527 = vmatprep.subr.bf16.mxu0 0
      %528 = vmatpush1.bf16.msra.mxu0 0
      %529 = vmatprep.subr.bf16.mxu0 0
      %530 = vmatpush1.bf16.msra.mxu0 0
      %531 = vmatprep.subr.bf16.mxu0 0
      %532 = vmatpush1.bf16.msra.mxu0 0
      %533 = vmatprep.subr.bf16.mxu0 0
      %534 = vmatpush1.bf16.msra.mxu0 0
      %535 = vmatprep.subr.bf16.mxu0 0
      %536 = vmatpush1.bf16.msra.mxu0 0
      %537 = vmatprep.subr.bf16.mxu0 0
      %538 = vmatpush1.bf16.msra.mxu0 0
      %539 = vmatprep.subr.bf16.mxu0 0
      %540 = vmatpush1.bf16.msra.mxu0 0
      %541 = vmatprep.mubr.bf16.mxu0 0
      %542 = vmatmul.mubr.bf16.gmra.mrb[0].mxu0 %v362
      %v543 = vpop.f32.mrb[0].mxu0
      %v544 = vadd.f32 0.0, %v543
      %v545 = vpop.f32.mrb[0].mxu0
      %v546 = vpop.f32.mrb[0].mxu0
      %v547 = vpop.f32.mrb[0].mxu0
      %548 = vdwg.mxu0
      %s549 = smul.u32 %s21, 7
      %s550 = smul.u32 %s20, 28
      %s551 = sadd.s32 %s549, %s550
      %s552 = smul.addr %s551, 8
      %s553 = scalar_lea.vmem %s5, %s552
      %554 = vst [vmem:[%s553] sm:$0xff] %v421
      %555 = vst [vmem:[%s553 + $0x8] sm:$0xff] %v423
      %556 = vst [vmem:[%s553 + $0x10] sm:$0xff] %v462
      %557 = vst [vmem:[%s553 + $0x18] sm:$0xff] %v464
      %558 = vst [vmem:[%s553 + $0x20] sm:$0xff] %v503
      %559 = vst [vmem:[%s553 + $0x28] sm:$0xff] %v505
      %vm560 = vcmask 130048
      %561 = vst.msk [vmem:[%s553 + $0x30] sm:$0xff] %vm560, %v544
      %v562 = vld [vmem:[#allocation2] sm:$0xff]
      %v563 = vadd.f32 %v421, %v423
      %v564 = vadd.f32 %v563, %v462
      %v565 = vadd.f32 %v564, %v464
      %v566 = vadd.f32 %v565, %v503
      %v567 = vadd.f32 %v566, %v505
      %v568 = vsel %vm560, %v544, 0.0
      %v569 = vadd.f32 %v567, %v568
      %570 = vadd.xlane.f32.xlu0 %v569
      %v571 = vpop.xlane.xlu0 %570
      %v572 = vadd.f32 %v562, %v571
      %vm573 = vcmask 7168
      %574 = vst.msk [vmem:[#allocation2] sm:$0xff] %vm573, %v572
      // Predicated region
      $region45: #{decoder_forward.12} parent=39 // pred_check
        _
      $region46: #{decoder_forward.12} parent=39 // pred_check_branch
        %576 = sbr.rel (%p243) target = $region48
      $region47: #{decoder_forward.12} parent=39 // pred_region
        %v577 = vld [vmem:[%s4] sm:$0xff]
        %v578 = vld [vmem:[#allocation2] sm:$0xff]
        %vm579 = vcmask 64512
        %v581 = vsel %vm579, %v577, 0
        %583 = vmatprep.subr.mxu0 0.0
        %584 = vmatpush1.msra.mxu0 %v578
        %585 = vmatprep.subr.mxu0 0.0
        %586 = vmatpush1.msra.mxu0 0.0
        %587 = vmatprep.subr.mxu0 0.0
        %588 = vmatpush1.msra.mxu0 0.0
        %589 = vmatprep.subr.mxu0 0.0
        %590 = vmatpush1.msra.mxu0 0.0
        %591 = vmatprep.subr.mxu0 0.0
        %592 = vmatpush1.msra.mxu0 0.0
        %593 = vmatprep.subr.mxu0 0.0
        %594 = vmatpush1.msra.mxu0 0.0
        %595 = vmatprep.subr.mxu0 0.0
        %596 = vmatpush1.msra.mxu0 0.0
        %597 = vmatprep.subr.mxu0 0.0
        %598 = vmatpush1.msra.mxu0 0.0
        %599 = vmatprep.subr.mxu0 0.0
        %600 = vmatpush1.msra.mxu0 0.0
        %601 = vmatprep.subr.mxu0 0.0
        %602 = vmatpush1.msra.mxu0 0.0
        %603 = vmatprep.subr.mxu0 0.0
        %604 = vmatpush1.msra.mxu0 0.0
        %605 = vmatprep.subr.mxu0 0.0
        %606 = vmatpush1.msra.mxu0 0.0
        %607 = vmatprep.subr.mxu0 0.0
        %608 = vmatpush1.msra.mxu0 0.0
        %609 = vmatprep.subr.mxu0 0.0
        %610 = vmatpush1.msra.mxu0 0.0
        %611 = vmatprep.subr.mxu0 0.0
        %612 = vmatpush1.msra.mxu0 0.0
        %613 = vmatprep.subr.mxu0 0.0
        %614 = vmatpush1.msra.mxu0 0.0
        %615 = vmatprep.subr.mxu0 0.0
        %616 = vmatpush1.msra.mxu0 0.0
        %617 = vmatprep.subr.mxu0 0.0
        %618 = vmatpush1.msra.mxu0 0.0
        %619 = vmatprep.subr.mxu0 0.0
        %620 = vmatpush1.msra.mxu0 0.0
        %621 = vmatprep.subr.mxu0 0.0
        %622 = vmatpush1.msra.mxu0 0.0
        %623 = vmatprep.subr.mxu0 0.0
        %624 = vmatpush1.msra.mxu0 0.0
        %625 = vmatprep.subr.mxu0 0.0
        %626 = vmatpush1.msra.mxu0 0.0
        %627 = vmatprep.subr.mxu0 0.0
        %628 = vmatpush1.msra.mxu0 0.0
        %629 = vmatprep.subr.mxu0 0.0
        %630 = vmatpush1.msra.mxu0 0.0
        %631 = vmatprep.subr.mxu0 0.0
        %632 = vmatpush1.msra.mxu0 0.0
        %633 = vmatprep.subr.mxu0 0.0
        %634 = vmatpush1.msra.mxu0 0.0
        %635 = vmatprep.subr.mxu0 0.0
        %636 = vmatpush1.msra.mxu0 0.0
        %637 = vmatprep.subr.mxu0 0.0
        %638 = vmatpush1.msra.mxu0 0.0
        %639 = vmatprep.subr.mxu0 0.0
        %640 = vmatpush1.msra.mxu0 0.0
        %641 = vmatprep.subr.mxu0 0.0
        %642 = vmatpush1.msra.mxu0 0.0
        %643 = vmatprep.subr.mxu0 0.0
        %644 = vmatpush1.msra.mxu0 0.0
        %645 = vmatprep.subr.mxu0 0.0
        %646 = vmatpush1.msra.mxu0 0.0
        %647 = vmatprep.mubr.f32.mxu0 0.0
        %648 = vmatmul.mubr.f32.gmra.mrb[0].mxu0 %v581
        %v649 = vpop.f32.mrb[0].mxu0
        %v650 = vadd.f32 0.0, %v649
        %v651 = vpop.f32.mrb[0].mxu0
        %652 = vdwg.mxu0
        %v653 = vmul.f32 %v650, 3.9859693e-05
        %v654 = vld [vmem:[%s5] sm:$0xff]
        %v655 = vld [vmem:[%s5 + $0x8] sm:$0xff]
        %v656 = vld [vmem:[%s5 + $0x10] sm:$0xff]
        %v657 = vld [vmem:[%s5 + $0x18] sm:$0xff]
        %v658 = vld [vmem:[%s5 + $0x20] sm:$0xff]
        %v659 = vld [vmem:[%s5 + $0x28] sm:$0xff]
        %v660 = vld [vmem:[%s5 + $0x30] sm:$0xff]
        %662 = vset.pattern.permute.xlu0 0
        %663 = vperm.xlu0 %662, %v653
        %v664 = vpop.permute.xlu0 %663
        %v666 = vsub.f32 %v654, %v664
        %v667 = vsub.f32 %v655, %v664
        %v668 = vsub.f32 %v656, %v664
        %v669 = vsub.f32 %v657, %v664
        %v670 = vsub.f32 %v658, %v664
        %v671 = vsub.f32 %v659, %v664
        %v672 = vsub.f32 %v660, %v664
        %v673 = vmul.f32 %v666, %v666
        %v674 = vmul.f32 %v667, %v667
        %v675 = vmul.f32 %v668, %v668
        %v676 = vmul.f32 %v669, %v669
        %v677 = vmul.f32 %v670, %v670
        %v678 = vmul.f32 %v671, %v671
        %v679 = vmul.f32 %v672, %v672
        %v680 = vadd.f32 %v673, %v674
        %v681 = vadd.f32 %v680, %v675
        %v682 = vadd.f32 %v681, %v676
        %v683 = vadd.f32 %v682, %v677
        %v684 = vadd.f32 %v683, %v678
        %v685 = vsel %vm560, %v679, 0.0
        %v686 = vadd.f32 %v684, %v685
        %687 = vadd.xlane.f32.xlu0 %v686
        %v688 = vpop.xlane.xlu0 %687
        %v689 = vadd.f32 %v688, 0.0
        %s690 = scalar_lea.vmem %s5, 56
        %v691 = vld [vmem:[%s690] sm:$0xff]
        %v692 = vld [vmem:[%s690 + $0x8] sm:$0xff]
        %v693 = vld [vmem:[%s690 + $0x10] sm:$0xff]
        %v694 = vld [vmem:[%s690 + $0x18] sm:$0xff]
        %v695 = vld [vmem:[%s690 + $0x20] sm:$0xff]
        %v696 = vld [vmem:[%s690 + $0x28] sm:$0xff]
        %v697 = vld [vmem:[%s690 + $0x30] sm:$0xff]
        %v698 = vsub.f32 %v691, %v664
        %v699 = vsub.f32 %v692, %v664
        %v700 = vsub.f32 %v693, %v664
        %v701 = vsub.f32 %v694, %v664
        %v702 = vsub.f32 %v695, %v664
        %v703 = vsub.f32 %v696, %v664
        %v704 = vsub.f32 %v697, %v664
        %v705 = vmul.f32 %v698, %v698
        %v706 = vmul.f32 %v699, %v699
        %v707 = vmul.f32 %v700, %v700
        %v708 = vmul.f32 %v701, %v701
        %v709 = vmul.f32 %v702, %v702
        %v710 = vmul.f32 %v703, %v703
        %v711 = vmul.f32 %v704, %v704
        %v712 = vadd.f32 %v705, %v706
        %v713 = vadd.f32 %v712, %v707
        %v714 = vadd.f32 %v713, %v708
        %v715 = vadd.f32 %v714, %v709
        %v716 = vadd.f32 %v715, %v710
        %v717 = vsel %vm560, %v711, 0.0
        %v718 = vadd.f32 %v716, %v717
        %719 = vadd.xlane.f32.xlu0 %v718
        %v720 = vpop.xlane.xlu0 %719
        %v721 = vadd.f32 %v689, %v720
        %s722 = scalar_lea.vmem %s5, 112
        %v723 = vld [vmem:[%s722] sm:$0xff]
        %v724 = vld [vmem:[%s722 + $0x8] sm:$0xff]
        %v725 = vld [vmem:[%s722 + $0x10] sm:$0xff]
        %v726 = vld [vmem:[%s722 + $0x18] sm:$0xff]
        %v727 = vld [vmem:[%s722 + $0x20] sm:$0xff]
        %v728 = vld [vmem:[%s722 + $0x28] sm:$0xff]
        %v729 = vld [vmem:[%s722 + $0x30] sm:$0xff]
        %v730 = vsub.f32 %v723, %v664
        %v731 = vsub.f32 %v724, %v664
        %v732 = vsub.f32 %v725, %v664
        %v733 = vsub.f32 %v726, %v664
        %v734 = vsub.f32 %v727, %v664
        %v735 = vsub.f32 %v728, %v664
        %v736 = vsub.f32 %v729, %v664
        %v737 = vmul.f32 %v730, %v730
        %v738 = vmul.f32 %v731, %v731
        %v739 = vmul.f32 %v732, %v732
        %v740 = vmul.f32 %v733, %v733
        %v741 = vmul.f32 %v734, %v734
        %v742 = vmul.f32 %v735, %v735
        %v743 = vmul.f32 %v736, %v736
        %v744 = vadd.f32 %v737, %v738
        %v745 = vadd.f32 %v744, %v739
        %v746 = vadd.f32 %v745, %v740
        %v747 = vadd.f32 %v746, %v741
        %v748 = vadd.f32 %v747, %v742
        %v749 = vsel %vm560, %v743, 0.0
        %v750 = vadd.f32 %v748, %v749
        %751 = vadd.xlane.f32.xlu0 %v750
        %v752 = vpop.xlane.xlu0 %751
        %v753 = vadd.f32 %v721, %v752
        %s754 = scalar_lea.vmem %s5, 168
        %v755 = vld [vmem:[%s754] sm:$0xff]
        %v756 = vld [vmem:[%s754 + $0x8] sm:$0xff]
        %v757 = vld [vmem:[%s754 + $0x10] sm:$0xff]
        %v758 = vld [vmem:[%s754 + $0x18] sm:$0xff]
        %v759 = vld [vmem:[%s754 + $0x20] sm:$0xff]
        %v760 = vld [vmem:[%s754 + $0x28] sm:$0xff]
        %v761 = vld [vmem:[%s754 + $0x30] sm:$0xff]
        %v762 = vsub.f32 %v755, %v664
        %v763 = vsub.f32 %v756, %v664
        %v764 = vsub.f32 %v757, %v664
        %v765 = vsub.f32 %v758, %v664
        %v766 = vsub.f32 %v759, %v664
        %v767 = vsub.f32 %v760, %v664
        %v768 = vsub.f32 %v761, %v664
        %v769 = vmul.f32 %v762, %v762
        %v770 = vmul.f32 %v763, %v763
        %v771 = vmul.f32 %v764, %v764
        %v772 = vmul.f32 %v765, %v765
        %v773 = vmul.f32 %v766, %v766
        %v774 = vmul.f32 %v767, %v767
        %v775 = vmul.f32 %v768, %v768
        %v776 = vadd.f32 %v769, %v770
        %v777 = vadd.f32 %v776, %v771
        %v778 = vadd.f32 %v777, %v772
        %v779 = vadd.f32 %v778, %v773
        %v780 = vadd.f32 %v779, %v774
        %v781 = vsel %vm560, %v775, 0.0
        %v782 = vadd.f32 %v780, %v781
        %783 = vadd.xlane.f32.xlu0 %v782
        %v784 = vpop.xlane.xlu0 %783
        %v785 = vadd.f32 %v753, %v784
        %s786 = scalar_lea.vmem %s5, 224
        %v787 = vld [vmem:[%s786] sm:$0xff]
        %v788 = vld [vmem:[%s786 + $0x8] sm:$0xff]
        %v789 = vld [vmem:[%s786 + $0x10] sm:$0xff]
        %v790 = vld [vmem:[%s786 + $0x18] sm:$0xff]
        %v791 = vld [vmem:[%s786 + $0x20] sm:$0xff]
        %v792 = vld [vmem:[%s786 + $0x28] sm:$0xff]
        %v793 = vld [vmem:[%s786 + $0x30] sm:$0xff]
        %v794 = vsub.f32 %v787, %v664
        %v795 = vsub.f32 %v788, %v664
        %v796 = vsub.f32 %v789, %v664
        %v797 = vsub.f32 %v790, %v664
        %v798 = vsub.f32 %v791, %v664
        %v799 = vsub.f32 %v792, %v664
        %v800 = vsub.f32 %v793, %v664
        %v801 = vmul.f32 %v794, %v794
        %v802 = vmul.f32 %v795, %v795
        %v803 = vmul.f32 %v796, %v796
        %v804 = vmul.f32 %v797, %v797
        %v805 = vmul.f32 %v798, %v798
        %v806 = vmul.f32 %v799, %v799
        %v807 = vmul.f32 %v800, %v800
        %v808 = vadd.f32 %v801, %v802
        %v809 = vadd.f32 %v808, %v803
        %v810 = vadd.f32 %v809, %v804
        %v811 = vadd.f32 %v810, %v805
        %v812 = vadd.f32 %v811, %v806
        %v813 = vsel %vm560, %v807, 0.0
        %v814 = vadd.f32 %v812, %v813
        %815 = vadd.xlane.f32.xlu0 %v814
        %v816 = vpop.xlane.xlu0 %815
        %v817 = vadd.f32 %v785, %v816
        %s818 = scalar_lea.vmem %s5, 280
        %v819 = vld [vmem:[%s818] sm:$0xff]
        %v820 = vld [vmem:[%s818 + $0x8] sm:$0xff]
        %v821 = vld [vmem:[%s818 + $0x10] sm:$0xff]
        %v822 = vld [vmem:[%s818 + $0x18] sm:$0xff]
        %v823 = vld [vmem:[%s818 + $0x20] sm:$0xff]
        %v824 = vld [vmem:[%s818 + $0x28] sm:$0xff]
        %v825 = vld [vmem:[%s818 + $0x30] sm:$0xff]
        %v826 = vsub.f32 %v819, %v664
        %v827 = vsub.f32 %v820, %v664
        %v828 = vsub.f32 %v821, %v664
        %v829 = vsub.f32 %v822, %v664
        %v830 = vsub.f32 %v823, %v664
        %v831 = vsub.f32 %v824, %v664
        %v832 = vsub.f32 %v825, %v664
        %v833 = vmul.f32 %v826, %v826
        %v834 = vmul.f32 %v827, %v827
        %v835 = vmul.f32 %v828, %v828
        %v836 = vmul.f32 %v829, %v829
        %v837 = vmul.f32 %v830, %v830
        %v838 = vmul.f32 %v831, %v831
        %v839 = vmul.f32 %v832, %v832
        %v840 = vadd.f32 %v833, %v834
        %v841 = vadd.f32 %v840, %v835
        %v842 = vadd.f32 %v841, %v836
        %v843 = vadd.f32 %v842, %v837
        %v844 = vadd.f32 %v843, %v838
        %v845 = vsel %vm560, %v839, 0.0
        %v846 = vadd.f32 %v844, %v845
        %847 = vadd.xlane.f32.xlu0 %v846
        %v848 = vpop.xlane.xlu0 %847
        %v849 = vadd.f32 %v817, %v848
        %s850 = scalar_lea.vmem %s5, 336
        %v851 = vld [vmem:[%s850] sm:$0xff]
        %v852 = vld [vmem:[%s850 + $0x8] sm:$0xff]
        %v853 = vld [vmem:[%s850 + $0x10] sm:$0xff]
        %v854 = vld [vmem:[%s850 + $0x18] sm:$0xff]
        %v855 = vld [vmem:[%s850 + $0x20] sm:$0xff]
        %v856 = vld [vmem:[%s850 + $0x28] sm:$0xff]
        %v857 = vld [vmem:[%s850 + $0x30] sm:$0xff]
        %v858 = vsub.f32 %v851, %v664
        %v859 = vsub.f32 %v852, %v664
        %v860 = vsub.f32 %v853, %v664
        %v861 = vsub.f32 %v854, %v664
        %v862 = vsub.f32 %v855, %v664
        %v863 = vsub.f32 %v856, %v664
        %v864 = vsub.f32 %v857, %v664
        %v865 = vmul.f32 %v858, %v858
        %v866 = vmul.f32 %v859, %v859
        %v867 = vmul.f32 %v860, %v860
        %v868 = vmul.f32 %v861, %v861
        %v869 = vmul.f32 %v862, %v862
        %v870 = vmul.f32 %v863, %v863
        %v871 = vmul.f32 %v864, %v864
        %v872 = vadd.f32 %v865, %v866
        %v873 = vadd.f32 %v872, %v867
        %v874 = vadd.f32 %v873, %v868
        %v875 = vadd.f32 %v874, %v869
        %v876 = vadd.f32 %v875, %v870
        %v877 = vsel %vm560, %v871, 0.0
        %v878 = vadd.f32 %v876, %v877
        %879 = vadd.xlane.f32.xlu0 %v878
        %v880 = vpop.xlane.xlu0 %879
        %v881 = vadd.f32 %v849, %v880
        %s882 = scalar_lea.vmem %s5, 392
        %v883 = vld [vmem:[%s882] sm:$0xff]
        %v884 = vld [vmem:[%s882 + $0x8] sm:$0xff]
        %v885 = vld [vmem:[%s882 + $0x10] sm:$0xff]
        %v886 = vld [vmem:[%s882 + $0x18] sm:$0xff]
        %v887 = vld [vmem:[%s882 + $0x20] sm:$0xff]
        %v888 = vld [vmem:[%s882 + $0x28] sm:$0xff]
        %v889 = vld [vmem:[%s882 + $0x30] sm:$0xff]
        %v890 = vsub.f32 %v883, %v664
        %v891 = vsub.f32 %v884, %v664
        %v892 = vsub.f32 %v885, %v664
        %v893 = vsub.f32 %v886, %v664
        %v894 = vsub.f32 %v887, %v664
        %v895 = vsub.f32 %v888, %v664
        %v896 = vsub.f32 %v889, %v664
        %v897 = vmul.f32 %v890, %v890
        %v898 = vmul.f32 %v891, %v891
        %v899 = vmul.f32 %v892, %v892
        %v900 = vmul.f32 %v893, %v893
        %v901 = vmul.f32 %v894, %v894
        %v902 = vmul.f32 %v895, %v895
        %v903 = vmul.f32 %v896, %v896
        %v904 = vadd.f32 %v897, %v898
        %v905 = vadd.f32 %v904, %v899
        %v906 = vadd.f32 %v905, %v900
        %v907 = vadd.f32 %v906, %v901
        %v908 = vadd.f32 %v907, %v902
        %v909 = vsel %vm560, %v903, 0.0
        %v910 = vadd.f32 %v908, %v909
        %911 = vadd.xlane.f32.xlu0 %v910
        %v912 = vpop.xlane.xlu0 %911
        %v913 = vadd.f32 %v881, %v912
        %914 = vmatprep.subr.mxu0 0.0
        %915 = vmatpush1.msra.mxu0 %v913
        %916 = vmatprep.subr.mxu0 0.0
        %917 = vmatpush1.msra.mxu0 0.0
        %918 = vmatprep.subr.mxu0 0.0
        %919 = vmatpush1.msra.mxu0 0.0
        %920 = vmatprep.subr.mxu0 0.0
        %921 = vmatpush1.msra.mxu0 0.0
        %922 = vmatprep.subr.mxu0 0.0
        %923 = vmatpush1.msra.mxu0 0.0
        %924 = vmatprep.subr.mxu0 0.0
        %925 = vmatpush1.msra.mxu0 0.0
        %926 = vmatprep.subr.mxu0 0.0
        %927 = vmatpush1.msra.mxu0 0.0
        %928 = vmatprep.subr.mxu0 0.0
        %929 = vmatpush1.msra.mxu0 0.0
        %930 = vmatprep.subr.mxu0 0.0
        %931 = vmatpush1.msra.mxu0 0.0
        %932 = vmatprep.subr.mxu0 0.0
        %933 = vmatpush1.msra.mxu0 0.0
        %934 = vmatprep.subr.mxu0 0.0
        %935 = vmatpush1.msra.mxu0 0.0
        %936 = vmatprep.subr.mxu0 0.0
        %937 = vmatpush1.msra.mxu0 0.0
        %938 = vmatprep.subr.mxu0 0.0
        %939 = vmatpush1.msra.mxu0 0.0
        %940 = vmatprep.subr.mxu0 0.0
        %941 = vmatpush1.msra.mxu0 0.0
        %942 = vmatprep.subr.mxu0 0.0
        %943 = vmatpush1.msra.mxu0 0.0
        %944 = vmatprep.subr.mxu0 0.0
        %945 = vmatpush1.msra.mxu0 0.0
        %946 = vmatprep.subr.mxu0 0.0
        %947 = vmatpush1.msra.mxu0 0.0
        %948 = vmatprep.subr.mxu0 0.0
        %949 = vmatpush1.msra.mxu0 0.0
        %950 = vmatprep.subr.mxu0 0.0
        %951 = vmatpush1.msra.mxu0 0.0
        %952 = vmatprep.subr.mxu0 0.0
        %953 = vmatpush1.msra.mxu0 0.0
        %954 = vmatprep.subr.mxu0 0.0
        %955 = vmatpush1.msra.mxu0 0.0
        %956 = vmatprep.subr.mxu0 0.0
        %957 = vmatpush1.msra.mxu0 0.0
        %958 = vmatprep.subr.mxu0 0.0
        %959 = vmatpush1.msra.mxu0 0.0
        %960 = vmatprep.subr.mxu0 0.0
        %961 = vmatpush1.msra.mxu0 0.0
        %962 = vmatprep.subr.mxu0 0.0
        %963 = vmatpush1.msra.mxu0 0.0
        %964 = vmatprep.subr.mxu0 0.0
        %965 = vmatpush1.msra.mxu0 0.0
        %966 = vmatprep.subr.mxu0 0.0
        %967 = vmatpush1.msra.mxu0 0.0
        %968 = vmatprep.subr.mxu0 0.0
        %969 = vmatpush1.msra.mxu0 0.0
        %970 = vmatprep.subr.mxu0 0.0
        %971 = vmatpush1.msra.mxu0 0.0
        %972 = vmatprep.subr.mxu0 0.0
        %973 = vmatpush1.msra.mxu0 0.0
        %974 = vmatprep.subr.mxu0 0.0
        %975 = vmatpush1.msra.mxu0 0.0
        %976 = vmatprep.subr.mxu0 0.0
        %977 = vmatpush1.msra.mxu0 0.0
        %978 = vmatprep.mubr.f32.mxu0 0.0
        %979 = vmatmul.mubr.f32.gmra.mrb[0].mxu0 %v581
        %v980 = vpop.f32.mrb[0].mxu0
        %v981 = vadd.f32 0.0, %v980
        %v982 = vpop.f32.mrb[0].mxu0
        %983 = vdwg.mxu0
        %v984 = vmul.f32 %v981, 3.9859693e-05
        %v985 = vld [vmem:[%s2] sm:$0xff]
        %v986 = vadd.f32 %v984, 1e-05
        %v987 = vrsqrt.pop %v986
        %v988 = vmul.f32 %v985, %v987
        %v989 = vld [vmem:[%s3] sm:$0xff]
        %v990 = vmul.f32 %v653, %v988
        %v991 = vsub.f32 %v989, %v990
        %993 = vset.pattern.permute.xlu0 0
        %994 = vperm.xlu0 %993, %v988
        %v995 = vpop.permute.xlu0 %994
        %v997 = vmul.f32 %v654, %v995
        %v998 = vmul.f32 %v655, %v995
        %v999 = vmul.f32 %v656, %v995
        %v1000 = vmul.f32 %v657, %v995
        %v1001 = vmul.f32 %v658, %v995
        %v1002 = vmul.f32 %v659, %v995
        %v1003 = vmul.f32 %v660, %v995
        %1005 = vset.pattern.permute.xlu0 0
        %1006 = vperm.xlu0 %1005, %v991
        %v1007 = vpop.permute.xlu0 %1006
        %v1009 = vadd.f32 %v997, %v1007
        %v1010 = vadd.f32 %v998, %v1007
        %v1011 = vadd.f32 %v999, %v1007
        %v1012 = vadd.f32 %v1000, %v1007
        %v1013 = vadd.f32 %v1001, %v1007
        %v1014 = vadd.f32 %v1002, %v1007
        %v1015 = vadd.f32 %v1003, %v1007
        %v1016 = vmax.f32 %v1009, 0.0
        %v1017 = vmax.f32 %v1010, 0.0
        %v1018 = vmax.f32 %v1011, 0.0
        %v1019 = vmax.f32 %v1012, 0.0
        %v1020 = vmax.f32 %v1013, 0.0
        %v1021 = vmax.f32 %v1014, 0.0
        %v1022 = vmax.f32 %v1015, 0.0
        %1023 = vst [vmem:[%s5] sm:$0xff] %v1016
        %1024 = vst [vmem:[%s5 + $0x8] sm:$0xff] %v1017
        %1025 = vst [vmem:[%s5 + $0x10] sm:$0xff] %v1018
        %1026 = vst [vmem:[%s5 + $0x18] sm:$0xff] %v1019
        %1027 = vst [vmem:[%s5 + $0x20] sm:$0xff] %v1020
        %1028 = vst [vmem:[%s5 + $0x28] sm:$0xff] %v1021
        %1029 = vst.msk [vmem:[%s5 + $0x30] sm:$0xff] %vm560, %v1022
        %v1030 = vld [vmem:[%s690] sm:$0xff]
        %v1031 = vld [vmem:[%s690 + $0x8] sm:$0xff]
        %v1032 = vld [vmem:[%s690 + $0x10] sm:$0xff]
        %v1033 = vld [vmem:[%s690 + $0x18] sm:$0xff]
        %v1034 = vld [vmem:[%s690 + $0x20] sm:$0xff]
        %v1035 = vld [vmem:[%s690 + $0x28] sm:$0xff]
        %v1036 = vld [vmem:[%s690 + $0x30] sm:$0xff]
        %v1037 = vmul.f32 %v1030, %v995
        %v1038 = vmul.f32 %v1031, %v995
        %v1039 = vmul.f32 %v1032, %v995
        %v1040 = vmul.f32 %v1033, %v995
        %v1041 = vmul.f32 %v1034, %v995
        %v1042 = vmul.f32 %v1035, %v995
        %v1043 = vmul.f32 %v1036, %v995
        %v1044 = vadd.f32 %v1037, %v1007
        %v1045 = vadd.f32 %v1038, %v1007
        %v1046 = vadd.f32 %v1039, %v1007
        %v1047 = vadd.f32 %v1040, %v1007
        %v1048 = vadd.f32 %v1041, %v1007
        %v1049 = vadd.f32 %v1042, %v1007
        %v1050 = vadd.f32 %v1043, %v1007
        %v1051 = vmax.f32 %v1044, 0.0
        %v1052 = vmax.f32 %v1045, 0.0
        %v1053 = vmax.f32 %v1046, 0.0
        %v1054 = vmax.f32 %v1047, 0.0
        %v1055 = vmax.f32 %v1048, 0.0
        %v1056 = vmax.f32 %v1049, 0.0
        %v1057 = vmax.f32 %v1050, 0.0
        %1058 = vst [vmem:[%s690] sm:$0xff] %v1051
        %1059 = vst [vmem:[%s690 + $0x8] sm:$0xff] %v1052
        %1060 = vst [vmem:[%s690 + $0x10] sm:$0xff] %v1053
        %1061 = vst [vmem:[%s690 + $0x18] sm:$0xff] %v1054
        %1062 = vst [vmem:[%s690 + $0x20] sm:$0xff] %v1055
        %1063 = vst [vmem:[%s690 + $0x28] sm:$0xff] %v1056
        %1064 = vst.msk [vmem:[%s690 + $0x30] sm:$0xff] %vm560, %v1057
        %v1065 = vld [vmem:[%s722] sm:$0xff]
        %v1066 = vld [vmem:[%s722 + $0x8] sm:$0xff]
        %v1067 = vld [vmem:[%s722 + $0x10] sm:$0xff]
        %v1068 = vld [vmem:[%s722 + $0x18] sm:$0xff]
        %v1069 = vld [vmem:[%s722 + $0x20] sm:$0xff]
        %v1070 = vld [vmem:[%s722 + $0x28] sm:$0xff]
        %v1071 = vld [vmem:[%s722 + $0x30] sm:$0xff]
        %v1072 = vmul.f32 %v1065, %v995
        %v1073 = vmul.f32 %v1066, %v995
        %v1074 = vmul.f32 %v1067, %v995
        %v1075 = vmul.f32 %v1068, %v995
        %v1076 = vmul.f32 %v1069, %v995
        %v1077 = vmul.f32 %v1070, %v995
        %v1078 = vmul.f32 %v1071, %v995
        %v1079 = vadd.f32 %v1072, %v1007
        %v1080 = vadd.f32 %v1073, %v1007
        %v1081 = vadd.f32 %v1074, %v1007
        %v1082 = vadd.f32 %v1075, %v1007
        %v1083 = vadd.f32 %v1076, %v1007
        %v1084 = vadd.f32 %v1077, %v1007
        %v1085 = vadd.f32 %v1078, %v1007
        %v1086 = vmax.f32 %v1079, 0.0
        %v1087 = vmax.f32 %v1080, 0.0
        %v1088 = vmax.f32 %v1081, 0.0
        %v1089 = vmax.f32 %v1082, 0.0
        %v1090 = vmax.f32 %v1083, 0.0
        %v1091 = vmax.f32 %v1084, 0.0
        %v1092 = vmax.f32 %v1085, 0.0
        %1093 = vst [vmem:[%s722] sm:$0xff] %v1086
        %1094 = vst [vmem:[%s722 + $0x8] sm:$0xff] %v1087
        %1095 = vst [vmem:[%s722 + $0x10] sm:$0xff] %v1088
        %1096 = vst [vmem:[%s722 + $0x18] sm:$0xff] %v1089
        %1097 = vst [vmem:[%s722 + $0x20] sm:$0xff] %v1090
        %1098 = vst [vmem:[%s722 + $0x28] sm:$0xff] %v1091
        %1099 = vst.msk [vmem:[%s722 + $0x30] sm:$0xff] %vm560, %v1092
        %v1100 = vld [vmem:[%s754] sm:$0xff]
        %v1101 = vld [vmem:[%s754 + $0x8] sm:$0xff]
        %v1102 = vld [vmem:[%s754 + $0x10] sm:$0xff]
        %v1103 = vld [vmem:[%s754 + $0x18] sm:$0xff]
        %v1104 = vld [vmem:[%s754 + $0x20] sm:$0xff]
        %v1105 = vld [vmem:[%s754 + $0x28] sm:$0xff]
        %v1106 = vld [vmem:[%s754 + $0x30] sm:$0xff]
        %v1107 = vmul.f32 %v1100, %v995
        %v1108 = vmul.f32 %v1101, %v995
        %v1109 = vmul.f32 %v1102, %v995
        %v1110 = vmul.f32 %v1103, %v995
        %v1111 = vmul.f32 %v1104, %v995
        %v1112 = vmul.f32 %v1105, %v995
        %v1113 = vmul.f32 %v1106, %v995
        %v1114 = vadd.f32 %v1107, %v1007
        %v1115 = vadd.f32 %v1108, %v1007
        %v1116 = vadd.f32 %v1109, %v1007
        %v1117 = vadd.f32 %v1110, %v1007
        %v1118 = vadd.f32 %v1111, %v1007
        %v1119 = vadd.f32 %v1112, %v1007
        %v1120 = vadd.f32 %v1113, %v1007
        %v1121 = vmax.f32 %v1114, 0.0
        %v1122 = vmax.f32 %v1115, 0.0
        %v1123 = vmax.f32 %v1116, 0.0
        %v1124 = vmax.f32 %v1117, 0.0
        %v1125 = vmax.f32 %v1118, 0.0
        %v1126 = vmax.f32 %v1119, 0.0
        %v1127 = vmax.f32 %v1120, 0.0
        %1128 = vst [vmem:[%s754] sm:$0xff] %v1121
        %1129 = vst [vmem:[%s754 + $0x8] sm:$0xff] %v1122
        %1130 = vst [vmem:[%s754 + $0x10] sm:$0xff] %v1123
        %1131 = vst [vmem:[%s754 + $0x18] sm:$0xff] %v1124
        %1132 = vst [vmem:[%s754 + $0x20] sm:$0xff] %v1125
        %1133 = vst [vmem:[%s754 + $0x28] sm:$0xff] %v1126
        %1134 = vst.msk [vmem:[%s754 + $0x30] sm:$0xff] %vm560, %v1127
        %v1135 = vld [vmem:[%s786] sm:$0xff]
        %v1136 = vld [vmem:[%s786 + $0x8] sm:$0xff]
        %v1137 = vld [vmem:[%s786 + $0x10] sm:$0xff]
        %v1138 = vld [vmem:[%s786 + $0x18] sm:$0xff]
        %v1139 = vld [vmem:[%s786 + $0x20] sm:$0xff]
        %v1140 = vld [vmem:[%s786 + $0x28] sm:$0xff]
        %v1141 = vld [vmem:[%s786 + $0x30] sm:$0xff]
        %v1142 = vmul.f32 %v1135, %v995
        %v1143 = vmul.f32 %v1136, %v995
        %v1144 = vmul.f32 %v1137, %v995
        %v1145 = vmul.f32 %v1138, %v995
        %v1146 = vmul.f32 %v1139, %v995
        %v1147 = vmul.f32 %v1140, %v995
        %v1148 = vmul.f32 %v1141, %v995
        %v1149 = vadd.f32 %v1142, %v1007
        %v1150 = vadd.f32 %v1143, %v1007
        %v1151 = vadd.f32 %v1144, %v1007
        %v1152 = vadd.f32 %v1145, %v1007
        %v1153 = vadd.f32 %v1146, %v1007
        %v1154 = vadd.f32 %v1147, %v1007
        %v1155 = vadd.f32 %v1148, %v1007
        %v1156 = vmax.f32 %v1149, 0.0
        %v1157 = vmax.f32 %v1150, 0.0
        %v1158 = vmax.f32 %v1151, 0.0
        %v1159 = vmax.f32 %v1152, 0.0
        %v1160 = vmax.f32 %v1153, 0.0
        %v1161 = vmax.f32 %v1154, 0.0
        %v1162 = vmax.f32 %v1155, 0.0
        %1163 = vst [vmem:[%s786] sm:$0xff] %v1156
        %1164 = vst [vmem:[%s786 + $0x8] sm:$0xff] %v1157
        %1165 = vst [vmem:[%s786 + $0x10] sm:$0xff] %v1158
        %1166 = vst [vmem:[%s786 + $0x18] sm:$0xff] %v1159
        %1167 = vst [vmem:[%s786 + $0x20] sm:$0xff] %v1160
        %1168 = vst [vmem:[%s786 + $0x28] sm:$0xff] %v1161
        %1169 = vst.msk [vmem:[%s786 + $0x30] sm:$0xff] %vm560, %v1162
        %v1170 = vld [vmem:[%s818] sm:$0xff]
        %v1171 = vld [vmem:[%s818 + $0x8] sm:$0xff]
        %v1172 = vld [vmem:[%s818 + $0x10] sm:$0xff]
        %v1173 = vld [vmem:[%s818 + $0x18] sm:$0xff]
        %v1174 = vld [vmem:[%s818 + $0x20] sm:$0xff]
        %v1175 = vld [vmem:[%s818 + $0x28] sm:$0xff]
        %v1176 = vld [vmem:[%s818 + $0x30] sm:$0xff]
        %v1177 = vmul.f32 %v1170, %v995
        %v1178 = vmul.f32 %v1171, %v995
        %v1179 = vmul.f32 %v1172, %v995
        %v1180 = vmul.f32 %v1173, %v995
        %v1181 = vmul.f32 %v1174, %v995
        %v1182 = vmul.f32 %v1175, %v995
        %v1183 = vmul.f32 %v1176, %v995
        %v1184 = vadd.f32 %v1177, %v1007
        %v1185 = vadd.f32 %v1178, %v1007
        %v1186 = vadd.f32 %v1179, %v1007
        %v1187 = vadd.f32 %v1180, %v1007
        %v1188 = vadd.f32 %v1181, %v1007
        %v1189 = vadd.f32 %v1182, %v1007
        %v1190 = vadd.f32 %v1183, %v1007
        %v1191 = vmax.f32 %v1184, 0.0
        %v1192 = vmax.f32 %v1185, 0.0
        %v1193 = vmax.f32 %v1186, 0.0
        %v1194 = vmax.f32 %v1187, 0.0
        %v1195 = vmax.f32 %v1188, 0.0
        %v1196 = vmax.f32 %v1189, 0.0
        %v1197 = vmax.f32 %v1190, 0.0
        %1198 = vst [vmem:[%s818] sm:$0xff] %v1191
        %1199 = vst [vmem:[%s818 + $0x8] sm:$0xff] %v1192
        %1200 = vst [vmem:[%s818 + $0x10] sm:$0xff] %v1193
        %1201 = vst [vmem:[%s818 + $0x18] sm:$0xff] %v1194
        %1202 = vst [vmem:[%s818 + $0x20] sm:$0xff] %v1195
        %1203 = vst [vmem:[%s818 + $0x28] sm:$0xff] %v1196
        %1204 = vst.msk [vmem:[%s818 + $0x30] sm:$0xff] %vm560, %v1197
        %v1205 = vld [vmem:[%s850] sm:$0xff]
        %v1206 = vld [vmem:[%s850 + $0x8] sm:$0xff]
        %v1207 = vld [vmem:[%s850 + $0x10] sm:$0xff]
        %v1208 = vld [vmem:[%s850 + $0x18] sm:$0xff]
        %v1209 = vld [vmem:[%s850 + $0x20] sm:$0xff]
        %v1210 = vld [vmem:[%s850 + $0x28] sm:$0xff]
        %v1211 = vld [vmem:[%s850 + $0x30] sm:$0xff]
        %v1212 = vmul.f32 %v1205, %v995
        %v1213 = vmul.f32 %v1206, %v995
        %v1214 = vmul.f32 %v1207, %v995
        %v1215 = vmul.f32 %v1208, %v995
        %v1216 = vmul.f32 %v1209, %v995
        %v1217 = vmul.f32 %v1210, %v995
        %v1218 = vmul.f32 %v1211, %v995
        %v1219 = vadd.f32 %v1212, %v1007
        %v1220 = vadd.f32 %v1213, %v1007
        %v1221 = vadd.f32 %v1214, %v1007
        %v1222 = vadd.f32 %v1215, %v1007
        %v1223 = vadd.f32 %v1216, %v1007
        %v1224 = vadd.f32 %v1217, %v1007
        %v1225 = vadd.f32 %v1218, %v1007
        %v1226 = vmax.f32 %v1219, 0.0
        %v1227 = vmax.f32 %v1220, 0.0
        %v1228 = vmax.f32 %v1221, 0.0
        %v1229 = vmax.f32 %v1222, 0.0
        %v1230 = vmax.f32 %v1223, 0.0
        %v1231 = vmax.f32 %v1224, 0.0
        %v1232 = vmax.f32 %v1225, 0.0
        %1233 = vst [vmem:[%s850] sm:$0xff] %v1226
        %1234 = vst [vmem:[%s850 + $0x8] sm:$0xff] %v1227
        %1235 = vst [vmem:[%s850 + $0x10] sm:$0xff] %v1228
        %1236 = vst [vmem:[%s850 + $0x18] sm:$0xff] %v1229
        %1237 = vst [vmem:[%s850 + $0x20] sm:$0xff] %v1230
        %1238 = vst [vmem:[%s850 + $0x28] sm:$0xff] %v1231
        %1239 = vst.msk [vmem:[%s850 + $0x30] sm:$0xff] %vm560, %v1232
        %v1240 = vld [vmem:[%s882] sm:$0xff]
        %v1241 = vld [vmem:[%s882 + $0x8] sm:$0xff]
        %v1242 = vld [vmem:[%s882 + $0x10] sm:$0xff]
        %v1243 = vld [vmem:[%s882 + $0x18] sm:$0xff]
        %v1244 = vld [vmem:[%s882 + $0x20] sm:$0xff]
        %v1245 = vld [vmem:[%s882 + $0x28] sm:$0xff]
        %v1246 = vld [vmem:[%s882 + $0x30] sm:$0xff]
        %v1247 = vmul.f32 %v1240, %v995
        %v1248 = vmul.f32 %v1241, %v995
        %v1249 = vmul.f32 %v1242, %v995
        %v1250 = vmul.f32 %v1243, %v995
        %v1251 = vmul.f32 %v1244, %v995
        %v1252 = vmul.f32 %v1245, %v995
        %v1253 = vmul.f32 %v1246, %v995
        %v1254 = vadd.f32 %v1247, %v1007
        %v1255 = vadd.f32 %v1248, %v1007
        %v1256 = vadd.f32 %v1249, %v1007
        %v1257 = vadd.f32 %v1250, %v1007
        %v1258 = vadd.f32 %v1251, %v1007
        %v1259 = vadd.f32 %v1252, %v1007
        %v1260 = vadd.f32 %v1253, %v1007
        %v1261 = vmax.f32 %v1254, 0.0
        %v1262 = vmax.f32 %v1255, 0.0
        %v1263 = vmax.f32 %v1256, 0.0
        %v1264 = vmax.f32 %v1257, 0.0
        %v1265 = vmax.f32 %v1258, 0.0
        %v1266 = vmax.f32 %v1259, 0.0
        %v1267 = vmax.f32 %v1260, 0.0
        %1268 = vst [vmem:[%s882] sm:$0xff] %v1261
        %1269 = vst [vmem:[%s882 + $0x8] sm:$0xff] %v1262
        %1270 = vst [vmem:[%s882 + $0x10] sm:$0xff] %v1263
        %1271 = vst [vmem:[%s882 + $0x18] sm:$0xff] %v1264
        %1272 = vst [vmem:[%s882 + $0x20] sm:$0xff] %v1265
        %1273 = vst [vmem:[%s882 + $0x28] sm:$0xff] %v1266
        %1274 = vst.msk [vmem:[%s882 + $0x30] sm:$0xff] %vm560, %v1267
      $region48: #{decoder_forward.12} parent=39 // pred_fallthru
        _
      // Predicated region
      $region49: #{decoder_forward.12} parent=39 // pred_check
        %p1275 = pneg %p153
      $region50: #{decoder_forward.12} parent=39 // pred_check_branch
        %1277 = sbr.rel (%p1275) target = $region52
      $region51: #{decoder_forward.12} parent=39 // pred_region
        _
      $region52: #{decoder_forward.12} parent=39 // pred_fallthru
        _
      // Predicated region
      $region53: #{decoder_forward.12} parent=39 // pred_check
        %p1278 = pneg %p153
      $region54: #{decoder_forward.12} parent=39 // pred_check_branch
        %1280 = sbr.rel (%p1278) target = $region56
      $region55: #{decoder_forward.12} parent=39 // pred_region
        _
      $region56: #{decoder_forward.12} parent=39 // pred_fallthru
        _
    $region40: #{decoder_forward.12} parent=5 // pred_fallthru
      _
    %p1281 = scmp.le.s32.totalorder 2, %s11
    // Predicated region
    $region57: #{decoder_forward.12} parent=5 // pred_check
      %p1282 = pneg %p1281
    $region58: #{decoder_forward.12} parent=5 // pred_check_branch
      %1284 = sbr.rel (%p1282) target = $region60
    $region59: #{decoder_forward.12} parent=5 // pred_region
      %s1285 = ssub.s32 %s11, 2
    $region60: #{decoder_forward.12} parent=5 // pred_fallthru
      _
  $region6: #{decoder_forward.12} parent=0 // loop_footer
    %s15 = sadd.s32 1, %s11
  $region7: #{decoder_forward.12} parent=0 // loop_footer_branch
    %10 = sbr.rel target = $region3
  $region8: #{decoder_forward.12} parent=0 // loop_exit
    _

// kernel: decoder_forward.13
$region0: #{decoder_forward.13}
  #allocation0 [shape = 'u32[]', space=smem, size = 0x4, offset = 0x4, fixed_abs, tag = 'smem constant byte address 0x4 - core index']
  #allocation1 [shape = 'u32[144,128]{1,0:T(1,128)}', space=vmem, size = 0x12000, scoped, tag = 'internal scratch']
  %s0 = inlined_call_operand.vmem [shape: bf16[2,14,18,896], index: 0, kind: input, shape index: {}]
  %s1 = inlined_call_operand.vmem [shape: bf16[12,18], index: 1, kind: input, shape index: {}]
  %s2 = inlined_call_operand.vmem [shape: f32[2,14,12,896], index: 2, kind: output, shape index: {}]
  %s3 = sld [smem:[#allocation0]]
  $region41: #{decoder_forward.13} parent=0
    _
  %s5 = ssub.s32 1, %s3
  %s6 = scalar_select 0, %s5, %s3
  loop: start=0, step=1, limit=30
  $region2: #{decoder_forward.13} parent=0 // loop_pre_header
    _
  $region3: #{decoder_forward.13} parent=0 // loop_header
    %s8 = sphi 0, %s12
    %p9 = scmp.ge.s32.totalorder %s8, 30
    %s15 = sphi 0, %s27
    %s16 = sphi 0, %s23
    %s17 = sphi 0, %s15
    %s18 = sphi 0, %s16
    %s19 = sphi 0, %s17
    %s20 = sphi 0, %s18
    %s32 = sphi 0, %s34
    %s35 = sphi 0, %s32
    %s36 = sphi 0, %s35
    %s52 = sphi 0, %s36
    %s56 = sphi 0, %s56
    %s58 = sphi 0, %s56
    %s59 = sphi 0, %s58
    %s73 = sphi 0, %s59
    %s81 = sphi 0, %s83
    %s84 = sphi 0, %s81
    %s85 = sphi 0, %s84
    %s101 = sphi 0, %s85
  $region4: #{decoder_forward.13} parent=0 // loop_header_branch
    %11 = sbr.rel (%p9) target = $region8
  $region5: #{decoder_forward.13} parent=0 // loop_body
    %s13 = ssub.s32 %s8, 1
    %s14 = ssub.s32 %s8, 2
    %s21 = sadd.s32 1, %s16
    %p22 = scmp.ge.s32.totalorder %s21, 14
    %s23 = scalar_select %p22, 0, %s21
    %s24 = sadd.s32 1, %s15
    %s25 = scalar_select %p22, %s24, %s15
    %p26 = scmp.ge.s32.totalorder %s25, 2
    %s27 = scalar_select %p26, 0, %s25
    %s28 = ssub.s32 %s15, %s27
    %s29 = ssub.s32 %s16, %s23
    %s30 = sor.u32 %s28, %s29
    %p31 = scmp.eq.s32.totalorder %s30, 0
    %s33 = sadd.s32 %s32, 1
    %s34 = scalar_select %p31, %s32, %s33
    %p37 = pneg %p31
    %p38 = scmp.eq.s32.totalorder %s8, 27
    %p39 = por %p37, %p38
    %p40 = scmp.ne.s32.totalorder %s32, %s35
    %p41 = scmp.eq.s32.totalorder %s8, 0
    %p42 = por %p40, %p41
    %p43 = scmp.ne.s32.totalorder %s32, %s35
    %p44 = scmp.eq.s32.totalorder %s13, 27
    %p45 = por %p43, %p44
    %p46 = scmp.ne.s32.totalorder %s35, %s36
    %p47 = scmp.eq.s32.totalorder %s13, 0
    %p48 = por %p46, %p47
    %p49 = scmp.ne.s32.totalorder %s35, %s36
    %p50 = scmp.eq.s32.totalorder %s14, 27
    %p51 = por %p49, %p50
    %p53 = scmp.ne.s32.totalorder %s36, %s52
    %p54 = scmp.eq.s32.totalorder %s14, 0
    %p55 = por %p53, %p54
    %s57 = sadd.s32 %s56, 1
    %p60 = scmp.eq.s32.totalorder %s8, 27
    %p61 = scmp.ne.s32.totalorder %s56, %s58
    %p62 = scmp.eq.s32.totalorder %s8, 0
    %p63 = por %p61, %p62
    %p64 = scmp.ne.s32.totalorder %s56, %s58
    %p65 = scmp.eq.s32.totalorder %s13, 27
    %p66 = por %p64, %p65
    %p67 = scmp.ne.s32.totalorder %s58, %s59
    %p68 = scmp.eq.s32.totalorder %s13, 0
    %p69 = por %p67, %p68
    %p70 = scmp.ne.s32.totalorder %s58, %s59
    %p71 = scmp.eq.s32.totalorder %s14, 27
    %p72 = por %p70, %p71
    %p74 = scmp.ne.s32.totalorder %s59, %s73
    %p75 = scmp.eq.s32.totalorder %s14, 0
    %p76 = por %p74, %p75
    %s77 = ssub.s32 %s15, %s27
    %s78 = ssub.s32 %s16, %s23
    %s79 = sor.u32 %s77, %s78
    %p80 = scmp.eq.s32.totalorder %s79, 0
    %s82 = sadd.s32 %s81, 1
    %s83 = scalar_select %p80, %s81, %s82
    %p86 = pneg %p80
    %p87 = scmp.eq.s32.totalorder %s8, 27
    %p88 = por %p86, %p87
    %p89 = scmp.ne.s32.totalorder %s81, %s84
    %p90 = scmp.eq.s32.totalorder %s8, 0
    %p91 = por %p89, %p90
    %p92 = scmp.ne.s32.totalorder %s81, %s84
    %p93 = scmp.eq.s32.totalorder %s13, 27
    %p94 = por %p92, %p93
    %p95 = scmp.ne.s32.totalorder %s84, %s85
    %p96 = scmp.eq.s32.totalorder %s13, 0
    %p97 = por %p95, %p96
    %p98 = scmp.ne.s32.totalorder %s84, %s85
    %p99 = scmp.eq.s32.totalorder %s14, 27
    %p100 = por %p98, %p99
    %p102 = scmp.ne.s32.totalorder %s85, %s101
    %p103 = scmp.eq.s32.totalorder %s14, 0
    %p104 = por %p102, %p103
    %p105 = scmp.le.s32.totalorder 1, %s8
    %p106 = scmp.lt.s32.totalorder %s8, 29
    %p107 = pnand %p105, %p106
    %p108 = pneg %p107
    // Predicated region
    $region9: #{decoder_forward.13} parent=5 // pred_check
      _
    $region10: #{decoder_forward.13} parent=5 // pred_check_branch
      %110 = sbr.rel (%p107) target = $region12
    $region11: #{decoder_forward.13} parent=5 // pred_region
      %s111 = ssub.s32 %s8, 1
      // Predicated region
      $region13: #{decoder_forward.13} parent=11 // pred_check
        %p112 = pneg %p69
      $region14: #{decoder_forward.13} parent=11 // pred_check_branch
        %114 = sbr.rel (%p112) target = $region16
      $region15: #{decoder_forward.13} parent=11 // pred_region
        _
      $region16: #{decoder_forward.13} parent=11 // pred_fallthru
        _
    $region12: #{decoder_forward.13} parent=5 // pred_fallthru
      _
    %p115 = scmp.lt.s32.totalorder %s8, 28
    // Predicated region
    $region17: #{decoder_forward.13} parent=5 // pred_check
      %p116 = pneg %p115
    $region18: #{decoder_forward.13} parent=5 // pred_check_branch
      %118 = sbr.rel (%p116) target = $region20
    $region19: #{decoder_forward.13} parent=5 // pred_region
      // Predicated region
      $region21: #{decoder_forward.13} parent=19 // pred_check
        %p119 = pneg %p42
      $region22: #{decoder_forward.13} parent=19 // pred_check_branch
        %121 = sbr.rel (%p119) target = $region24
      $region23: #{decoder_forward.13} parent=19 // pred_region
        %p122 = scmp.lt.s32.totalorder %s15, 1
        %s123 = scalar_select %p122, %s15, 1
        %p124 = scmp.lt.s32.totalorder %s16, 13
        %s125 = scalar_select %p124, %s16, 13
        %s126 = smul.addr %s125, 21
        %s127 = smul.addr %s123, 294
        %s128 = sadd.s32 %s126, %s127
        %s129 = smul.addr %s128, 4
        %s130 = scalar_lea.vmem %s0, %s129
      $region24: #{decoder_forward.13} parent=19 // pred_fallthru
        _
    $region20: #{decoder_forward.13} parent=5 // pred_fallthru
      _
    %p131 = scmp.le.s32.totalorder 1, %s8
    %p132 = scmp.lt.s32.totalorder %s8, 29
    %p133 = pnand %p131, %p132
    %p134 = pneg %p133
    // Predicated region
    $region25: #{decoder_forward.13} parent=5 // pred_check
      _
    $region26: #{decoder_forward.13} parent=5 // pred_check_branch
      %136 = sbr.rel (%p133) target = $region28
    $region27: #{decoder_forward.13} parent=5 // pred_region
      %s137 = ssub.s32 %s8, 1
      %p138 = scmp.lt.s32.totalorder %s17, 1
      %s139 = scalar_select %p138, %s17, 1
      %p140 = scmp.lt.s32.totalorder %s18, 13
      %s141 = scalar_select %p140, %s18, 13
      %s142 = smul.addr %s141, 21
      %s143 = smul.addr %s139, 294
      %s144 = sadd.s32 %s142, %s143
      %s145 = smul.addr %s144, 4
      %s146 = scalar_lea.vmem %s0, %s145
      %p147 = pneg %p48
      %p148 = pneg %p45
      %p149 = pneg %p69
      %p150 = pneg %p66
      %p151 = pneg %p97
      %p152 = pneg %p94
      %p153 = scmp.lt.s32.totalorder %s17, 1
      %s154 = scalar_select %p153, %s17, 1
      %p155 = scmp.lt.s32.totalorder %s18, 13
      %s156 = scalar_select %p155, %s18, 13
      %s157 = smul.addr %s156, 14
      %s158 = smul.addr %s154, 196
      %s159 = sadd.s32 %s157, %s158
      %s160 = smul.addr %s159, 8
      %s161 = scalar_lea.vmem %s2, %s160
      %p162 = scmp.lt.s32.totalorder %s17, 1
      %s163 = scalar_select %p162, %s17, 1
      %p164 = scmp.lt.s32.totalorder %s18, 13
      %s165 = scalar_select %p164, %s18, 13
      %s166 = smul.addr %s165, 21
      %s167 = smul.addr %s163, 294
      %s168 = sadd.s32 %s166, %s167
      %s169 = smul.addr %s168, 4
      %s170 = scalar_lea.vmem %s0, %s169
      %p171 = scmp.lt.s32.totalorder %s17, 1
      %s172 = scalar_select %p171, %s17, 1
      %p173 = scmp.lt.s32.totalorder %s18, 13
      %s174 = scalar_select %p173, %s18, 13
      %s175 = smul.addr %s174, 14
      %s176 = smul.addr %s172, 196
      %s177 = sadd.s32 %s175, %s176
      %s178 = smul.addr %s177, 8
      %s179 = scalar_lea.vmem %s2, %s178
      %v181 = vld [vmem:[%s1] sm:$0xf]
      %v182 = vld [vmem:[%s1 + $0x4] sm:$0x3]
      %v183 = vld [vmem:[%s170] sm:$0xff]
      %v184 = vld [vmem:[%s170 + $0x8] sm:$0xff]
      %v185 = vld [vmem:[%s170 + $0x10] sm:$0xff]
      %v186 = vld [vmem:[%s170 + $0x18] sm:$0xf]
      %v187 = vld [vmem:[%s170 + $0x1c] sm:$0xff]
      %v188 = vld [vmem:[%s170 + $0x24] sm:$0xff]
      %v189 = vld [vmem:[%s170 + $0x2c] sm:$0xff]
      %v190 = vld [vmem:[%s170 + $0x34] sm:$0xf]
      %v191 = vld [vmem:[%s170 + $0x38] sm:$0x11]
      %v192 = vld [vmem:[%s170 + $0x40] sm:$0x11]
      %v193 = vld [vmem:[%s170 + $0x48] sm:$0x11]
      %v194 = vld [vmem:[%s170 + $0x50] sm:$0x1]
      %v197 = vunpack.c.l.b16 %v181
      %v198 = vunpack.c.l.b16 %v182
      %v199 = vpack.c.b16 %v198, %v197
      %v212 = vunpack.c.l.b16 %v183
      %v213 = vunpack.c.h.b16 %v183
      %v214 = vunpack.c.l.b16 %v184
      %v215 = vunpack.c.h.b16 %v184
      %v216 = vunpack.c.l.b16 %v185
      %v217 = vunpack.c.h.b16 %v185
      %v218 = vunpack.c.l.b16 %v186
      %v219 = vunpack.c.l.b16 %v187
      %v220 = vunpack.c.h.b16 %v187
      %v221 = vunpack.c.l.b16 %v188
      %v222 = vunpack.c.h.b16 %v188
      %v223 = vunpack.c.l.b16 %v189
      %v224 = vunpack.c.h.b16 %v189
      %v225 = vunpack.c.l.b16 %v190
      %v226 = vunpack.c.l.b16 %v191
      %v227 = vunpack.c.h.b16 %v191
      %v228 = vunpack.c.l.b16 %v192
      %v229 = vunpack.c.h.b16 %v192
      %v230 = vunpack.c.l.b16 %v193
      %v231 = vunpack.c.h.b16 %v193
      %v232 = vunpack.c.l.b16 %v194
      %v233 = vpack.c.b16 %v219, %v212
      %v234 = vpack.c.b16 %v220, %v213
      %v235 = vpack.c.b16 %v221, %v214
      %v236 = vpack.c.b16 %v222, %v215
      %v237 = vpack.c.b16 %v223, %v216
      %v238 = vpack.c.b16 %v224, %v217
      %v239 = vpack.c.b16 %v225, %v218
      %v240 = vpack.c.b16 %v226, %v226
      %v241 = vpack.c.b16 %v227, %v227
      %v242 = vpack.c.b16 %v228, %v228
      %v243 = vpack.c.b16 %v229, %v229
      %v244 = vpack.c.b16 %v230, %v230
      %v245 = vpack.c.b16 %v231, %v231
      %v246 = vpack.c.b16 %v232, %v232
      %vm254 = vcmask 146432
      %v256 = vsel %vm254, %v199, 0
      %vm258 = vcmask 1040384
      %v260 = vsel %vm258, %v240, 0
      %v263 = vsel %vm258, %v241, 0
      %v266 = vsel %vm258, %v242, 0
      %v269 = vsel %vm258, %v243, 0
      %v272 = vsel %vm258, %v244, 0
      %v275 = vsel %vm258, %v245, 0
      %v278 = vsel %vm258, %v246, 0
      %280 = vmatprep.subr.bf16.mxu0 %v234
      %281 = vmatpush1.bf16.msra.mxu0 %v233
      %282 = vmatprep.subr.bf16.mxu0 %v263
      %283 = vmatpush1.bf16.msra.mxu0 %v260
      %284 = vmatprep.subr.bf16.mxu0 0
      %285 = vmatpush1.bf16.msra.mxu0 0
      %286 = vmatprep.subr.bf16.mxu0 0
      %287 = vmatpush1.bf16.msra.mxu0 0
      %288 = vmatprep.subr.bf16.mxu0 0
      %289 = vmatpush1.bf16.msra.mxu0 0
      %290 = vmatprep.subr.bf16.mxu0 0
      %291 = vmatpush1.bf16.msra.mxu0 0
      %292 = vmatprep.subr.bf16.mxu0 0
      %293 = vmatpush1.bf16.msra.mxu0 0
      %294 = vmatprep.subr.bf16.mxu0 0
      %295 = vmatpush1.bf16.msra.mxu0 0
      %296 = vmatprep.subr.bf16.mxu0 0
      %297 = vmatpush1.bf16.msra.mxu0 0
      %298 = vmatprep.subr.bf16.mxu0 0
      %299 = vmatpush1.bf16.msra.mxu0 0
      %300 = vmatprep.subr.bf16.mxu0 0
      %301 = vmatpush1.bf16.msra.mxu0 0
      %302 = vmatprep.subr.bf16.mxu0 0
      %303 = vmatpush1.bf16.msra.mxu0 0
      %304 = vmatprep.subr.bf16.mxu0 0
      %305 = vmatpush1.bf16.msra.mxu0 0
      %306 = vmatprep.subr.bf16.mxu0 0
      %307 = vmatpush1.bf16.msra.mxu0 0
      %308 = vmatprep.subr.bf16.mxu0 0
      %309 = vmatpush1.bf16.msra.mxu0 0
      %310 = vmatprep.subr.bf16.mxu0 0
      %311 = vmatpush1.bf16.msra.mxu0 0
      %312 = vmatprep.mubr.bf16.mxu0 0
      %313 = vmatmul.mubr.bf16.gmra.mrb[0].mxu0 %v256
      %v314 = vpop.f32.mrb[0].mxu0
      %v315 = vadd.f32 0.0, %v314
      %v316 = vpop.f32.mrb[0].mxu0
      %v317 = vadd.f32 0.0, %v316
      %v318 = vpop.f32.mrb[0].mxu0
      %v319 = vadd.f32 0.0, %v318
      %v320 = vpop.f32.mrb[0].mxu0
      %v321 = vadd.f32 0.0, %v320
      %322 = vdwg.mxu0
      %323 = vmatprep.subr.bf16.mxu0 %v236
      %324 = vmatpush1.bf16.msra.mxu0 %v235
      %325 = vmatprep.subr.bf16.mxu0 %v269
      %326 = vmatpush1.bf16.msra.mxu0 %v266
      %327 = vmatprep.subr.bf16.mxu0 0
      %328 = vmatpush1.bf16.msra.mxu0 0
      %329 = vmatprep.subr.bf16.mxu0 0
      %330 = vmatpush1.bf16.msra.mxu0 0
      %331 = vmatprep.subr.bf16.mxu0 0
      %332 = vmatpush1.bf16.msra.mxu0 0
      %333 = vmatprep.subr.bf16.mxu0 0
      %334 = vmatpush1.bf16.msra.mxu0 0
      %335 = vmatprep.subr.bf16.mxu0 0
      %336 = vmatpush1.bf16.msra.mxu0 0
      %337 = vmatprep.subr.bf16.mxu0 0
      %338 = vmatpush1.bf16.msra.mxu0 0
      %339 = vmatprep.subr.bf16.mxu0 0
      %340 = vmatpush1.bf16.msra.mxu0 0
      %341 = vmatprep.subr.bf16.mxu0 0
      %342 = vmatpush1.bf16.msra.mxu0 0
      %343 = vmatprep.subr.bf16.mxu0 0
      %344 = vmatpush1.bf16.msra.mxu0 0
      %345 = vmatprep.subr.bf16.mxu0 0
      %346 = vmatpush1.bf16.msra.mxu0 0
      %347 = vmatprep.subr.bf16.mxu0 0
      %348 = vmatpush1.bf16.msra.mxu0 0
      %349 = vmatprep.subr.bf16.mxu0 0
      %350 = vmatpush1.bf16.msra.mxu0 0
      %351 = vmatprep.subr.bf16.mxu0 0
      %352 = vmatpush1.bf16.msra.mxu0 0
      %353 = vmatprep.subr.bf16.mxu0 0
      %354 = vmatpush1.bf16.msra.mxu0 0
      %355 = vmatprep.mubr.bf16.mxu0 0
      %356 = vmatmul.mubr.bf16.gmra.mrb[0].mxu0 %v256
      %v357 = vpop.f32.mrb[0].mxu0
      %v358 = vadd.f32 0.0, %v357
      %v359 = vpop.f32.mrb[0].mxu0
      %v360 = vadd.f32 0.0, %v359
      %v361 = vpop.f32.mrb[0].mxu0
      %v362 = vadd.f32 0.0, %v361
      %v363 = vpop.f32.mrb[0].mxu0
      %v364 = vadd.f32 0.0, %v363
      %365 = vdwg.mxu0
      %366 = vmatprep.subr.bf16.mxu0 %v238
      %367 = vmatpush1.bf16.msra.mxu0 %v237
      %368 = vmatprep.subr.bf16.mxu0 %v275
      %369 = vmatpush1.bf16.msra.mxu0 %v272
      %370 = vmatprep.subr.bf16.mxu0 0
      %371 = vmatpush1.bf16.msra.mxu0 0
      %372 = vmatprep.subr.bf16.mxu0 0
      %373 = vmatpush1.bf16.msra.mxu0 0
      %374 = vmatprep.subr.bf16.mxu0 0
      %375 = vmatpush1.bf16.msra.mxu0 0
      %376 = vmatprep.subr.bf16.mxu0 0
      %377 = vmatpush1.bf16.msra.mxu0 0
      %378 = vmatprep.subr.bf16.mxu0 0
      %379 = vmatpush1.bf16.msra.mxu0 0
      %380 = vmatprep.subr.bf16.mxu0 0
      %381 = vmatpush1.bf16.msra.mxu0 0
      %382 = vmatprep.subr.bf16.mxu0 0
      %383 = vmatpush1.bf16.msra.mxu0 0
      %384 = vmatprep.subr.bf16.mxu0 0
      %385 = vmatpush1.bf16.msra.mxu0 0
      %386 = vmatprep.subr.bf16.mxu0 0
      %387 = vmatpush1.bf16.msra.mxu0 0
      %388 = vmatprep.subr.bf16.mxu0 0
      %389 = vmatpush1.bf16.msra.mxu0 0
      %390 = vmatprep.subr.bf16.mxu0 0
      %391 = vmatpush1.bf16.msra.mxu0 0
      %392 = vmatprep.subr.bf16.mxu0 0
      %393 = vmatpush1.bf16.msra.mxu0 0
      %394 = vmatprep.subr.bf16.mxu0 0
      %395 = vmatpush1.bf16.msra.mxu0 0
      %396 = vmatprep.subr.bf16.mxu0 0
      %397 = vmatpush1.bf16.msra.mxu0 0
      %398 = vmatprep.mubr.bf16.mxu0 0
      %399 = vmatmul.mubr.bf16.gmra.mrb[0].mxu0 %v256
      %v400 = vpop.f32.mrb[0].mxu0
      %v401 = vadd.f32 0.0, %v400
      %v402 = vpop.f32.mrb[0].mxu0
      %v403 = vadd.f32 0.0, %v402
      %v404 = vpop.f32.mrb[0].mxu0
      %v405 = vadd.f32 0.0, %v404
      %v406 = vpop.f32.mrb[0].mxu0
      %v407 = vadd.f32 0.0, %v406
      %408 = vdwg.mxu0
      %409 = vmatprep.subr.bf16.mxu0 0
      %410 = vmatpush1.bf16.msra.mxu0 %v239
      %411 = vmatprep.subr.bf16.mxu0 0
      %412 = vmatpush1.bf16.msra.mxu0 %v278
      %413 = vmatprep.subr.bf16.mxu0 0
      %414 = vmatpush1.bf16.msra.mxu0 0
      %415 = vmatprep.subr.bf16.mxu0 0
      %416 = vmatpush1.bf16.msra.mxu0 0
      %417 = vmatprep.subr.bf16.mxu0 0
      %418 = vmatpush1.bf16.msra.mxu0 0
      %419 = vmatprep.subr.bf16.mxu0 0
      %420 = vmatpush1.bf16.msra.mxu0 0
      %421 = vmatprep.subr.bf16.mxu0 0
      %422 = vmatpush1.bf16.msra.mxu0 0
      %423 = vmatprep.subr.bf16.mxu0 0
      %424 = vmatpush1.bf16.msra.mxu0 0
      %425 = vmatprep.subr.bf16.mxu0 0
      %426 = vmatpush1.bf16.msra.mxu0 0
      %427 = vmatprep.subr.bf16.mxu0 0
      %428 = vmatpush1.bf16.msra.mxu0 0
      %429 = vmatprep.subr.bf16.mxu0 0
      %430 = vmatpush1.bf16.msra.mxu0 0
      %431 = vmatprep.subr.bf16.mxu0 0
      %432 = vmatpush1.bf16.msra.mxu0 0
      %433 = vmatprep.subr.bf16.mxu0 0
      %434 = vmatpush1.bf16.msra.mxu0 0
      %435 = vmatprep.subr.bf16.mxu0 0
      %436 = vmatpush1.bf16.msra.mxu0 0
      %437 = vmatprep.subr.bf16.mxu0 0
      %438 = vmatpush1.bf16.msra.mxu0 0
      %439 = vmatprep.subr.bf16.mxu0 0
      %440 = vmatpush1.bf16.msra.mxu0 0
      %441 = vmatprep.mubr.bf16.mxu0 0
      %442 = vmatmul.mubr.bf16.gmra.mrb[0].mxu0 %v256
      %v443 = vpop.f32.mrb[0].mxu0
      %v444 = vadd.f32 0.0, %v443
      %v445 = vpop.f32.mrb[0].mxu0
      %v446 = vpop.f32.mrb[0].mxu0
      %v447 = vadd.f32 0.0, %v446
      %v448 = vpop.f32.mrb[0].mxu0
      %449 = vdwg.mxu0
      %v450 = vtanh.pop %v315
      %v451 = vtanh.pop %v317
      %v452 = vtanh.pop %v358
      %v453 = vtanh.pop %v360
      %v454 = vtanh.pop %v401
      %v455 = vtanh.pop %v403
      %v456 = vtanh.pop %v444
      %v457 = vtanh.pop %v319
      %v458 = vtanh.pop %v321
      %v459 = vtanh.pop %v362
      %v460 = vtanh.pop %v364
      %v461 = vtanh.pop %v405
      %v462 = vtanh.pop %v407
      %v463 = vtanh.pop %v447
      %464 = vst [vmem:[%s179] sm:$0xff] %v450
      %465 = vst [vmem:[%s179 + $0x8] sm:$0xff] %v451
      %466 = vst [vmem:[%s179 + $0x10] sm:$0xff] %v452
      %467 = vst [vmem:[%s179 + $0x18] sm:$0xff] %v453
      %468 = vst [vmem:[%s179 + $0x20] sm:$0xff] %v454
      %469 = vst [vmem:[%s179 + $0x28] sm:$0xff] %v455
      %470 = vst [vmem:[%s179 + $0x30] sm:$0xff] %v456
      %471 = vst [vmem:[%s179 + $0x38] sm:$0xf] %v457
      %472 = vst [vmem:[%s179 + $0x40] sm:$0xf] %v458
      %473 = vst [vmem:[%s179 + $0x48] sm:$0xf] %v459
      %474 = vst [vmem:[%s179 + $0x50] sm:$0xf] %v460
      %475 = vst [vmem:[%s179 + $0x58] sm:$0xf] %v461
      %476 = vst [vmem:[%s179 + $0x60] sm:$0xf] %v462
      %477 = vst [vmem:[%s179 + $0x68] sm:$0xf] %v463
      %p478 = scmp.lt.s32.totalorder %s17, 1
      %s479 = scalar_select %p478, %s17, 1
      %p480 = scmp.lt.s32.totalorder %s18, 13
      %s481 = scalar_select %p480, %s18, 13
      %s482 = smul.addr %s481, 14
      %s483 = smul.addr %s479, 196
      %s484 = sadd.s32 %s482, %s483
      %s485 = smul.addr %s484, 8
      %s486 = scalar_lea.vmem %s2, %s485
      // Predicated region
      $region29: #{decoder_forward.13} parent=27 // pred_check
        %p487 = pneg %p94
      $region30: #{decoder_forward.13} parent=27 // pred_check_branch
        %489 = sbr.rel (%p487) target = $region32
      $region31: #{decoder_forward.13} parent=27 // pred_region
        _
      $region32: #{decoder_forward.13} parent=27 // pred_fallthru
        _
    $region28: #{decoder_forward.13} parent=5 // pred_fallthru
      _
    %p490 = scmp.le.s32.totalorder 2, %s8
    // Predicated region
    $region33: #{decoder_forward.13} parent=5 // pred_check
      %p491 = pneg %p490
    $region34: #{decoder_forward.13} parent=5 // pred_check_branch
      %493 = sbr.rel (%p491) target = $region36
    $region35: #{decoder_forward.13} parent=5 // pred_region
      %s494 = ssub.s32 %s8, 2
      // Predicated region
      $region37: #{decoder_forward.13} parent=35 // pred_check
        %p495 = pneg %p100
      $region38: #{decoder_forward.13} parent=35 // pred_check_branch
        %497 = sbr.rel (%p495) target = $region40
      $region39: #{decoder_forward.13} parent=35 // pred_region
        %p498 = scmp.lt.s32.totalorder %s19, 1
        %s499 = scalar_select %p498, %s19, 1
        %p500 = scmp.lt.s32.totalorder %s20, 13
        %s501 = scalar_select %p500, %s20, 13
        %s502 = smul.addr %s501, 14
        %s503 = smul.addr %s499, 196
        %s504 = sadd.s32 %s502, %s503
        %s505 = smul.addr %s504, 8
        %s506 = scalar_lea.vmem %s2, %s505
      $region40: #{decoder_forward.13} parent=35 // pred_fallthru
        _
    $region36: #{decoder_forward.13} parent=5 // pred_fallthru
      _
  $region6: #{decoder_forward.13} parent=0 // loop_footer
    %s12 = sadd.s32 1, %s8
  $region7: #{decoder_forward.13} parent=0 // loop_footer_branch
    %7 = sbr.rel target = $region3
  $region8: #{decoder_forward.13} parent=0 // loop_exit
    _

</llo_original>
